<compile_context>
chip_gen: v7x
topology: tpu7x:2x2x1
jax: 0.10.0
libtpu: 0.0.40
codegen_flags: <defaults>
</compile_context>

<pallas_src>
import numpy as np

import jax
import jax.numpy as jnp
from jax.experimental import pallas as pl
from jax.experimental.pallas import tpu as pltpu


# ----------------------------------------------------------------------------
# Raw (PyTorch-layout) parameters
# ----------------------------------------------------------------------------
def init_raw_params(key):
    ks = jax.random.split(key, 10)
    s = 0.05

    def rnd(k, shape):
        return jax.random.normal(k, shape, jnp.float32) * s

    return {
        "conv1_w": rnd(ks[0], (6, 1, 5, 5)),
        "conv1_b": rnd(ks[1], (6,)),
        "conv2_w": rnd(ks[2], (16, 6, 5, 5)),
        "conv2_b": rnd(ks[3], (16,)),
        "fc1_w": rnd(ks[4], (120, 2704)),   # PyTorch Linear: (out, in), 2704 = 16*13*13
        "fc1_b": rnd(ks[5], (120,)),
        "fc2_w": rnd(ks[6], (84, 120)),
        "fc2_b": rnd(ks[7], (84,)),
        "fc3_w": rnd(ks[8], (9, 84)),
        "fc3_b": rnd(ks[9], (9,)),
    }


# ----------------------------------------------------------------------------
# One-time weight preparation (banded conv weights, pooling selection matrices,
# pre-transposed / pre-permuted FC weights).  Runs once at init, off the hot path.
# ----------------------------------------------------------------------------
def prepare_params(raw):
    w1 = np.asarray(raw["conv1_w"])   # (6, 1, 5, 5)
    b1 = np.asarray(raw["conv1_b"])
    w2 = np.asarray(raw["conv2_w"])   # (16, 6, 5, 5)
    b2 = np.asarray(raw["conv2_b"])
    fc1_w = np.asarray(raw["fc1_w"])  # (120, 2704)
    fc1_b = np.asarray(raw["fc1_b"])
    fc2_w = np.asarray(raw["fc2_w"])  # (84, 120)
    fc2_b = np.asarray(raw["fc2_b"])
    fc3_w = np.asarray(raw["fc3_w"])  # (9, 84)
    fc3_b = np.asarray(raw["fc3_b"])

    # conv1 banded weights: out1[ho, co*64 + wo] = sum_kh x[ho+kh, :] @ W1b[kh]
    # W1b[kh][w', co*64 + wo] = w1[co, 0, kh, w'-wo]  for 0 <= w'-wo <= 4, wo < 60.
    W1b = np.zeros((5, 64, 6 * 64), np.float32)
    wo = np.arange(60)
    for kh in range(5):
        for kw in range(5):
            for co in range(6):
                W1b[kh, wo + kw, co * 64 + wo] = w1[co, 0, kh, kw]
    b1w = np.repeat(b1, 64)[None, :].astype(np.float32)            # (1, 384)

    # pool1 selection matrices (60x60 -> 30x30 per channel, lane stride 64 -> 32)
    Ph1 = np.zeros((30, 59), np.float32)
    Ph1[np.arange(30), 2 * np.arange(30)] = 1.0
    PwE1 = np.zeros((384, 192), np.float32)
    PwO1 = np.zeros((384, 192), np.float32)
    j1 = np.arange(30)
    for c in range(6):
        PwE1[c * 64 + 2 * j1, c * 32 + j1] = 1.0
        PwO1[c * 64 + 2 * j1 + 1, c * 32 + j1] = 1.0

    # conv2 banded weights: out2[ho, co*32 + wo] = sum_kh s2[ho+kh, :] @ W2b[kh]
    # W2b[kh][ci*32 + w', co*32 + wo] = w2[co, ci, kh, w'-wo]  for 0 <= w'-wo <= 4, wo < 26.
    W2b = np.zeros((5, 6 * 32, 16 * 32), np.float32)
    wo2 = np.arange(26)
    for kh in range(5):
        for kw in range(5):
            for co in range(16):
                for ci in range(6):
                    W2b[kh, ci * 32 + wo2 + kw, co * 32 + wo2] = w2[co, ci, kh, kw]
    b2w = np.repeat(b2, 32)[None, :].astype(np.float32)            # (1, 512)

    # pool2 selection matrices (26x26 -> 13x13 per channel, lane stride 32 -> 16)
    Ph2 = np.zeros((13, 25), np.float32)
    Ph2[np.arange(13), 2 * np.arange(13)] = 1.0
    PwE2 = np.zeros((512, 256), np.float32)
    PwO2 = np.zeros((512, 256), np.float32)
    j2 = np.arange(13)
    for c in range(16):
        PwE2[c * 32 + 2 * j2, c * 16 + j2] = 1.0
        PwO2[c * 32 + 2 * j2 + 1, c * 16 + j2] = 1.0

    # fc1 weights permuted to the kernel's (h, co*16 + w) layout.
    # torch flatten index of s4[co, h, w] is co*169 + h*13 + w.
    Wfc1 = np.zeros((13, 256, 120), np.float32)
    wloc = np.arange(13)
    for h in range(13):
        for co in range(16):
            Wfc1[h, co * 16 + wloc, :] = fc1_w[:, co * 169 + h * 13 + wloc].T
    bfc1 = fc1_b[None, :].astype(np.float32)                        # (1, 120)

    Wfc2 = fc2_w.T.astype(np.float32)                               # (120, 84)
    bfc2 = fc2_b[None, :].astype(np.float32)
    Wfc3 = fc3_w.T.astype(np.float32)                               # (84, 9)
    bfc3 = fc3_b[None, :].astype(np.float32)

    prep = dict(W1b=W1b, b1w=b1w, Ph1=Ph1, PwE1=PwE1, PwO1=PwO1,
                W2b=W2b, b2w=b2w, Ph2=Ph2, PwE2=PwE2, PwO2=PwO2,
                Wfc1=Wfc1, bfc1=bfc1, Wfc2=Wfc2, bfc2=bfc2,
                Wfc3=Wfc3, bfc3=bfc3)
    return {k: jnp.asarray(v) for k, v in prep.items()}


# ----------------------------------------------------------------------------
# Fused Pallas kernel: the whole network for one sample, entirely in VMEM.
# ----------------------------------------------------------------------------
def _lenet_kernel(x_ref, w1b_ref, b1w_ref, ph1_ref, pwe1_ref, pwo1_ref,
                  w2b_ref, b2w_ref, ph2_ref, pwe2_ref, pwo2_ref,
                  wfc1_ref, bfc1_ref, wfc2_ref, bfc2_ref, wfc3_ref, bfc3_ref,
                  o_ref):
    f32 = jnp.float32

    def leaky(v):
        return jnp.where(v > 0, v, 0.01 * v)

    def mm(a, b):
        return jnp.dot(a, b, preferred_element_type=f32)

    x = x_ref[0]                                        # (64, 64), H=sublanes, W=lanes

    # ---- conv1 (valid, stride 1) as 5 banded MXU matmuls over kh ----
    acc1 = mm(x[0:60, :], w1b_ref[0])                   # (60, 6*64)
    for kh in range(1, 5):
        acc1 = acc1 + mm(x[kh:kh + 60, :], w1b_ref[kh])
    a1 = leaky(acc1 + b1w_ref[...])                     # lane = co*64 + wo

    # ---- maxpool 2x2 -> (30, 6*32) ----
    m1 = jnp.maximum(a1[0:59, :], a1[1:60, :])          # vertical pair-max
    m1 = mm(ph1_ref[...], m1)                           # keep even rows -> (30, 384)
    s2 = jnp.maximum(mm(m1, pwe1_ref[...]),             # horizontal pair-max + lane repack
                     mm(m1, pwo1_ref[...]))             # (30, 192), lane = ci*32 + w

    # ---- conv2 as 5 banded MXU matmuls over kh ----
    acc2 = mm(s2[0:26, :], w2b_ref[0])                  # (26, 16*32)
    for kh in range(1, 5):
        acc2 = acc2 + mm(s2[kh:kh + 26, :], w2b_ref[kh])
    a2 = leaky(acc2 + b2w_ref[...])                     # lane = co*32 + wo

    # ---- maxpool 2x2 -> (13, 16*16) ----
    m2 = jnp.maximum(a2[0:25, :], a2[1:26, :])
    m2 = mm(ph2_ref[...], m2)                           # (13, 512)
    s4 = jnp.maximum(mm(m2, pwe2_ref[...]),
                     mm(m2, pwo2_ref[...]))             # (13, 256), lane = co*16 + w (w<13)

    # ---- fc1: contraction over both (row, lane) dims as 13 accumulated matmuls ----
    f5 = bfc1_ref[...]                                  # (1, 120)
    for h in range(13):
        f5 = f5 + mm(s4[h:h + 1, :], wfc1_ref[h])
    f5 = leaky(f5)

    # ---- fc2 / fc3 ----
    f6 = leaky(mm(f5, wfc2_ref[...]) + bfc2_ref[...])   # (1, 84)
    out = mm(f6, wfc3_ref[...]) + bfc3_ref[...]         # (1, 9)
    o_ref[0] = out


# ----------------------------------------------------------------------------
# Host wrapper: one pallas_call for the whole network.
# ----------------------------------------------------------------------------
_WEIGHT_KEYS = ("W1b", "b1w", "Ph1", "PwE1", "PwO1",
                "W2b", "b2w", "Ph2", "PwE2", "PwO2",
                "Wfc1", "bfc1", "Wfc2", "bfc2", "Wfc3", "bfc3")


def net_forward(prep, x):
    # x: (N, 1, 64, 64) float32, NCHW with Cin=1
    n = x.shape[0]
    x2 = x.reshape(n, 64, 64)
    weights = [prep[k] for k in _WEIGHT_KEYS]

    def full_spec(arr):
        nd = arr.ndim
        return pl.BlockSpec(arr.shape, lambda i, _nd=nd: (0,) * _nd)

    in_specs = [pl.BlockSpec((1, 64, 64), lambda i: (i, 0, 0))]
    in_specs += [full_spec(w) for w in weights]

    out3 = pl.pallas_call(
        _lenet_kernel,
        out_shape=jax.ShapeDtypeStruct((n, 1, 9), jnp.float32),
        grid=(n,),
        in_specs=in_specs,
        out_specs=pl.BlockSpec((1, 1, 9), lambda i: (i, 0, 0)),
        compiler_params=pltpu.CompilerParams(
            dimension_semantics=("parallel",),
            vmem_limit_bytes=32 * 1024 * 1024,
        ),
    )(x2, *weights)
    return out3.reshape(n, 9)


# ----------------------------------------------------------------------------
# Plain-JAX reference (for a loose in-script sanity check)
# ----------------------------------------------------------------------------
def reference_forward(raw, x):
    def leaky(v):
        return jnp.where(v > 0, v, 0.01 * v)

    def conv(x_, w, b):
        cout, cin, k, _ = w.shape
        n, c, hh, ww = x_.shape
        ho, wo = hh - k + 1, ww - k + 1
        patches = []
        for di in range(k):
            for dj in range(k):
                patches.append(x_[:, :, di:di + ho, dj:dj + wo])
        p = jnp.stack(patches, axis=2)                    # (N, C, k*k, Ho, Wo)
        p = p.transpose(0, 3, 4, 1, 2).reshape(n * ho * wo, c * k * k)
        y = p @ w.reshape(cout, -1).T + b
        return y.reshape(n, ho, wo, cout).transpose(0, 3, 1, 2)

    def pool(v):
        return jnp.maximum(
            jnp.maximum(v[:, :, 0::2, 0::2], v[:, :, 0::2, 1::2]),
            jnp.maximum(v[:, :, 1::2, 0::2], v[:, :, 1::2, 1::2]))

    c1 = leaky(conv(x, raw["conv1_w"], raw["conv1_b"]))
    s2 = pool(c1)
    c3 = leaky(conv(s2, raw["conv2_w"], raw["conv2_b"]))
    s4 = pool(c3)
    flat = s4.reshape(x.shape[0], -1)
    f5 = leaky(flat @ raw["fc1_w"].T + raw["fc1_b"])
    f6 = leaky(f5 @ raw["fc2_w"].T + raw["fc2_b"])
    return f6 @ raw["fc3_w"].T + raw["fc3_b"]


if __name__ == "__main__":
    key = jax.random.PRNGKey(0)
    k_param, k_x = jax.random.split(key)
    raw = init_raw_params(k_param)
    prep = prepare_params(raw)            # one-time: banded / permuted weights
    # fc1 expects 2704 = 16*13*13 input features => spatial size must be 64x64.
    x = jax.random.normal(k_x, (2, 1, 64, 64), jnp.float32)

    fwd = jax.jit(net_forward)
    out = jax.block_until_ready(fwd(prep, x))
    assert out.shape == (2, 9) and out.dtype == jnp.float32
    assert bool(jnp.all(jnp.isfinite(out)))

    # Loose sanity check vs. a plain-JAX reference (tolerant of MXU f32-pass rounding).
    ref = jax.block_until_ready(reference_forward(raw, x))
    scale = float(jnp.max(jnp.abs(ref)))
    err = float(jnp.max(jnp.abs(out - ref)))
    assert err <= 0.1 * max(scale, 1e-3), f"mismatch: max_abs_err={err}, ref_scale={scale}"

    print("KERNEL_OK")
</pallas_src>

<mosaic_0001>
module attributes {stable_mosaic.version = 11 : i64} {
  func.func @_lenet_kernel(%arg0: i32, %arg1: memref<1x64x64xf32, #tpu.memory_space<vmem>>, %arg2: memref<5x64x384xf32, #tpu.memory_space<vmem>>, %arg3: memref<1x384xf32, #tpu.memory_space<vmem>>, %arg4: memref<30x59xf32, #tpu.memory_space<vmem>>, %arg5: memref<384x192xf32, #tpu.memory_space<vmem>>, %arg6: memref<384x192xf32, #tpu.memory_space<vmem>>, %arg7: memref<5x192x512xf32, #tpu.memory_space<vmem>>, %arg8: memref<1x512xf32, #tpu.memory_space<vmem>>, %arg9: memref<13x25xf32, #tpu.memory_space<vmem>>, %arg10: memref<512x256xf32, #tpu.memory_space<vmem>>, %arg11: memref<512x256xf32, #tpu.memory_space<vmem>>, %arg12: memref<13x256x120xf32, #tpu.memory_space<vmem>>, %arg13: memref<1x120xf32, #tpu.memory_space<vmem>>, %arg14: memref<120x84xf32, #tpu.memory_space<vmem>>, %arg15: memref<1x84xf32, #tpu.memory_space<vmem>>, %arg16: memref<84x9xf32, #tpu.memory_space<vmem>>, %arg17: memref<1x9xf32, #tpu.memory_space<vmem>>, %arg18: memref<1x1x9xf32, #tpu.memory_space<vmem>>) attributes {dimension_semantics = [#tpu.dimension_semantics<parallel>], iteration_bounds = array<i64: 2>, scalar_prefetch = 0 : i64, scratch_operands = 0 : i64, tpu.core_type = #tpu.core_type<tc>, window_params = [{transform_indices = @transform_0, window_bounds = array<i64: 1, 64, 64>}, {pipeline_mode = #tpu.pipeline_mode<synchronous>, transform_indices = @transform_1, window_bounds = array<i64: 5, 64, 384>}, {pipeline_mode = #tpu.pipeline_mode<synchronous>, transform_indices = @transform_2, window_bounds = array<i64: 1, 384>}, {pipeline_mode = #tpu.pipeline_mode<synchronous>, transform_indices = @transform_3, window_bounds = array<i64: 30, 59>}, {pipeline_mode = #tpu.pipeline_mode<synchronous>, transform_indices = @transform_4, window_bounds = array<i64: 384, 192>}, {pipeline_mode = #tpu.pipeline_mode<synchronous>, transform_indices = @transform_5, window_bounds = array<i64: 384, 192>}, {pipeline_mode = #tpu.pipeline_mode<synchronous>, transform_indices = @transform_6, window_bounds = array<i64: 5, 192, 512>}, {pipeline_mode = #tpu.pipeline_mode<synchronous>, transform_indices = @transform_7, window_bounds = array<i64: 1, 512>}, {pipeline_mode = #tpu.pipeline_mode<synchronous>, transform_indices = @transform_8, window_bounds = array<i64: 13, 25>}, {pipeline_mode = #tpu.pipeline_mode<synchronous>, transform_indices = @transform_9, window_bounds = array<i64: 512, 256>}, {pipeline_mode = #tpu.pipeline_mode<synchronous>, transform_indices = @transform_10, window_bounds = array<i64: 512, 256>}, {pipeline_mode = #tpu.pipeline_mode<synchronous>, transform_indices = @transform_11, window_bounds = array<i64: 13, 256, 120>}, {pipeline_mode = #tpu.pipeline_mode<synchronous>, transform_indices = @transform_12, window_bounds = array<i64: 1, 120>}, {pipeline_mode = #tpu.pipeline_mode<synchronous>, transform_indices = @transform_13, window_bounds = array<i64: 120, 84>}, {pipeline_mode = #tpu.pipeline_mode<synchronous>, transform_indices = @transform_14, window_bounds = array<i64: 1, 84>}, {pipeline_mode = #tpu.pipeline_mode<synchronous>, transform_indices = @transform_15, window_bounds = array<i64: 84, 9>}, {pipeline_mode = #tpu.pipeline_mode<synchronous>, transform_indices = @transform_16, window_bounds = array<i64: 1, 9>}, {transform_indices = @transform_17, window_bounds = array<i64: 1, 1, 9>}]} {
    %c0 = arith.constant 0 : index
    %c0_0 = arith.constant 0 : index
    %c0_1 = arith.constant 0 : index
    %0 = vector.load %arg1[%c0, %c0_0, %c0_1] : memref<1x64x64xf32, #tpu.memory_space<vmem>>, vector<1x64x64xf32>
    %1 = vector.shape_cast %0 : vector<1x64x64xf32> to vector<64x64xf32>
    %2 = vector.extract_strided_slice %1 {offsets = [0, 0], sizes = [60, 64], strides = [1, 1]} : vector<64x64xf32> to vector<60x64xf32>
    %c0_2 = arith.constant 0 : index
    %c0_3 = arith.constant 0 : index
    %c0_4 = arith.constant 0 : index
    %3 = vector.load %arg2[%c0_2, %c0_3, %c0_4] : memref<5x64x384xf32, #tpu.memory_space<vmem>>, vector<1x64x384xf32>
    %4 = vector.shape_cast %3 : vector<1x64x384xf32> to vector<64x384xf32>
    %cst = arith.constant dense<0.000000e+00> : vector<60x384xf32>
    %5 = tpu.matmul %2, %4, %cst {dimension_numbers = #tpu.dot_dimension_numbers<[1], [0], [0], [1], [0, 0, 1, 1], [], []>} : vector<60x64xf32>, vector<64x384xf32>, vector<60x384xf32> -> vector<60x384xf32>
    %6 = vector.extract_strided_slice %1 {offsets = [1, 0], sizes = [60, 64], strides = [1, 1]} : vector<64x64xf32> to vector<60x64xf32>
    %c1 = arith.constant 1 : index
    %c0_5 = arith.constant 0 : index
    %c0_6 = arith.constant 0 : index
    %7 = vector.load %arg2[%c1, %c0_5, %c0_6] : memref<5x64x384xf32, #tpu.memory_space<vmem>>, vector<1x64x384xf32>
    %8 = vector.shape_cast %7 : vector<1x64x384xf32> to vector<64x384xf32>
    %cst_7 = arith.constant dense<0.000000e+00> : vector<60x384xf32>
    %9 = tpu.matmul %6, %8, %cst_7 {dimension_numbers = #tpu.dot_dimension_numbers<[1], [0], [0], [1], [0, 0, 1, 1], [], []>} : vector<60x64xf32>, vector<64x384xf32>, vector<60x384xf32> -> vector<60x384xf32>
    %10 = arith.addf %5, %9 : vector<60x384xf32>
    %11 = vector.extract_strided_slice %1 {offsets = [2, 0], sizes = [60, 64], strides = [1, 1]} : vector<64x64xf32> to vector<60x64xf32>
    %c2 = arith.constant 2 : index
    %c0_8 = arith.constant 0 : index
    %c0_9 = arith.constant 0 : index
    %12 = vector.load %arg2[%c2, %c0_8, %c0_9] : memref<5x64x384xf32, #tpu.memory_space<vmem>>, vector<1x64x384xf32>
    %13 = vector.shape_cast %12 : vector<1x64x384xf32> to vector<64x384xf32>
    %cst_10 = arith.constant dense<0.000000e+00> : vector<60x384xf32>
    %14 = tpu.matmul %11, %13, %cst_10 {dimension_numbers = #tpu.dot_dimension_numbers<[1], [0], [0], [1], [0, 0, 1, 1], [], []>} : vector<60x64xf32>, vector<64x384xf32>, vector<60x384xf32> -> vector<60x384xf32>
    %15 = arith.addf %10, %14 : vector<60x384xf32>
    %16 = vector.extract_strided_slice %1 {offsets = [3, 0], sizes = [60, 64], strides = [1, 1]} : vector<64x64xf32> to vector<60x64xf32>
    %c3 = arith.constant 3 : index
    %c0_11 = arith.constant 0 : index
    %c0_12 = arith.constant 0 : index
    %17 = vector.load %arg2[%c3, %c0_11, %c0_12] : memref<5x64x384xf32, #tpu.memory_space<vmem>>, vector<1x64x384xf32>
    %18 = vector.shape_cast %17 : vector<1x64x384xf32> to vector<64x384xf32>
    %cst_13 = arith.constant dense<0.000000e+00> : vector<60x384xf32>
    %19 = tpu.matmul %16, %18, %cst_13 {dimension_numbers = #tpu.dot_dimension_numbers<[1], [0], [0], [1], [0, 0, 1, 1], [], []>} : vector<60x64xf32>, vector<64x384xf32>, vector<60x384xf32> -> vector<60x384xf32>
    %20 = arith.addf %15, %19 : vector<60x384xf32>
    %21 = vector.extract_strided_slice %1 {offsets = [4, 0], sizes = [60, 64], strides = [1, 1]} : vector<64x64xf32> to vector<60x64xf32>
    %c4 = arith.constant 4 : index
    %c0_14 = arith.constant 0 : index
    %c0_15 = arith.constant 0 : index
    %22 = vector.load %arg2[%c4, %c0_14, %c0_15] : memref<5x64x384xf32, #tpu.memory_space<vmem>>, vector<1x64x384xf32>
    %23 = vector.shape_cast %22 : vector<1x64x384xf32> to vector<64x384xf32>
    %cst_16 = arith.constant dense<0.000000e+00> : vector<60x384xf32>
    %24 = tpu.matmul %21, %23, %cst_16 {dimension_numbers = #tpu.dot_dimension_numbers<[1], [0], [0], [1], [0, 0, 1, 1], [], []>} : vector<60x64xf32>, vector<64x384xf32>, vector<60x384xf32> -> vector<60x384xf32>
    %25 = arith.addf %20, %24 : vector<60x384xf32>
    %c0_17 = arith.constant 0 : index
    %c0_18 = arith.constant 0 : index
    %26 = vector.load %arg3[%c0_17, %c0_18] : memref<1x384xf32, #tpu.memory_space<vmem>>, vector<1x384xf32>
    %27 = vector.broadcast %26 : vector<1x384xf32> to vector<60x384xf32>
    %28 = arith.addf %25, %27 : vector<60x384xf32>
    %cst_19 = arith.constant 0.000000e+00 : f32
    %29 = vector.broadcast %cst_19 : f32 to vector<60x384xf32>
    %30 = arith.cmpf ogt, %28, %29 : vector<60x384xf32>
    %cst_20 = arith.constant 0.00999999977 : f32
    %31 = vector.broadcast %cst_20 : f32 to vector<60x384xf32>
    %32 = arith.mulf %31, %28 : vector<60x384xf32>
    %33 = arith.select %30, %28, %32 : vector<60x384xi1>, vector<60x384xf32>
    %34 = vector.extract_strided_slice %33 {offsets = [0, 0], sizes = [59, 384], strides = [1, 1]} : vector<60x384xf32> to vector<59x384xf32>
    %35 = vector.extract_strided_slice %33 {offsets = [1, 0], sizes = [59, 384], strides = [1, 1]} : vector<60x384xf32> to vector<59x384xf32>
    %36 = arith.maximumf %34, %35 : vector<59x384xf32>
    %c0_21 = arith.constant 0 : index
    %c0_22 = arith.constant 0 : index
    %37 = vector.load %arg4[%c0_21, %c0_22] : memref<30x59xf32, #tpu.memory_space<vmem>>, vector<30x59xf32>
    %cst_23 = arith.constant dense<0.000000e+00> : vector<30x384xf32>
    %38 = tpu.matmul %37, %36, %cst_23 {dimension_numbers = #tpu.dot_dimension_numbers<[1], [0], [0], [1], [0, 0, 1, 1], [], []>} : vector<30x59xf32>, vector<59x384xf32>, vector<30x384xf32> -> vector<30x384xf32>
    %c0_24 = arith.constant 0 : index
    %c0_25 = arith.constant 0 : index
    %39 = vector.load %arg5[%c0_24, %c0_25] : memref<384x192xf32, #tpu.memory_space<vmem>>, vector<384x192xf32>
    %cst_26 = arith.constant dense<0.000000e+00> : vector<30x192xf32>
    %40 = tpu.matmul %38, %39, %cst_26 {dimension_numbers = #tpu.dot_dimension_numbers<[1], [0], [0], [1], [0, 0, 1, 1], [], []>} : vector<30x384xf32>, vector<384x192xf32>, vector<30x192xf32> -> vector<30x192xf32>
    %c0_27 = arith.constant 0 : index
    %c0_28 = arith.constant 0 : index
    %41 = vector.load %arg6[%c0_27, %c0_28] : memref<384x192xf32, #tpu.memory_space<vmem>>, vector<384x192xf32>
    %cst_29 = arith.constant dense<0.000000e+00> : vector<30x192xf32>
    %42 = tpu.matmul %38, %41, %cst_29 {dimension_numbers = #tpu.dot_dimension_numbers<[1], [0], [0], [1], [0, 0, 1, 1], [], []>} : vector<30x384xf32>, vector<384x192xf32>, vector<30x192xf32> -> vector<30x192xf32>
    %43 = arith.maximumf %40, %42 : vector<30x192xf32>
    %44 = vector.extract_strided_slice %43 {offsets = [0, 0], sizes = [26, 192], strides = [1, 1]} : vector<30x192xf32> to vector<26x192xf32>
    %c0_30 = arith.constant 0 : index
    %c0_31 = arith.constant 0 : index
    %c0_32 = arith.constant 0 : index
    %45 = vector.load %arg7[%c0_30, %c0_31, %c0_32] : memref<5x192x512xf32, #tpu.memory_space<vmem>>, vector<1x192x512xf32>
    %46 = vector.shape_cast %45 : vector<1x192x512xf32> to vector<192x512xf32>
    %cst_33 = arith.constant dense<0.000000e+00> : vector<26x512xf32>
    %47 = tpu.matmul %44, %46, %cst_33 {dimension_numbers = #tpu.dot_dimension_numbers<[1], [0], [0], [1], [0, 0, 1, 1], [], []>} : vector<26x192xf32>, vector<192x512xf32>, vector<26x512xf32> -> vector<26x512xf32>
    %48 = vector.extract_strided_slice %43 {offsets = [1, 0], sizes = [26, 192], strides = [1, 1]} : vector<30x192xf32> to vector<26x192xf32>
    %c1_34 = arith.constant 1 : index
    %c0_35 = arith.constant 0 : index
    %c0_36 = arith.constant 0 : index
    %49 = vector.load %arg7[%c1_34, %c0_35, %c0_36] : memref<5x192x512xf32, #tpu.memory_space<vmem>>, vector<1x192x512xf32>
    %50 = vector.shape_cast %49 : vector<1x192x512xf32> to vector<192x512xf32>
    %cst_37 = arith.constant dense<0.000000e+00> : vector<26x512xf32>
    %51 = tpu.matmul %48, %50, %cst_37 {dimension_numbers = #tpu.dot_dimension_numbers<[1], [0], [0], [1], [0, 0, 1, 1], [], []>} : vector<26x192xf32>, vector<192x512xf32>, vector<26x512xf32> -> vector<26x512xf32>
    %52 = arith.addf %47, %51 : vector<26x512xf32>
    %53 = vector.extract_strided_slice %43 {offsets = [2, 0], sizes = [26, 192], strides = [1, 1]} : vector<30x192xf32> to vector<26x192xf32>
    %c2_38 = arith.constant 2 : index
    %c0_39 = arith.constant 0 : index
    %c0_40 = arith.constant 0 : index
    %54 = vector.load %arg7[%c2_38, %c0_39, %c0_40] : memref<5x192x512xf32, #tpu.memory_space<vmem>>, vector<1x192x512xf32>
    %55 = vector.shape_cast %54 : vector<1x192x512xf32> to vector<192x512xf32>
    %cst_41 = arith.constant dense<0.000000e+00> : vector<26x512xf32>
    %56 = tpu.matmul %53, %55, %cst_41 {dimension_numbers = #tpu.dot_dimension_numbers<[1], [0], [0], [1], [0, 0, 1, 1], [], []>} : vector<26x192xf32>, vector<192x512xf32>, vector<26x512xf32> -> vector<26x512xf32>
    %57 = arith.addf %52, %56 : vector<26x512xf32>
    %58 = vector.extract_strided_slice %43 {offsets = [3, 0], sizes = [26, 192], strides = [1, 1]} : vector<30x192xf32> to vector<26x192xf32>
    %c3_42 = arith.constant 3 : index
    %c0_43 = arith.constant 0 : index
    %c0_44 = arith.constant 0 : index
    %59 = vector.load %arg7[%c3_42, %c0_43, %c0_44] : memref<5x192x512xf32, #tpu.memory_space<vmem>>, vector<1x192x512xf32>
    %60 = vector.shape_cast %59 : vector<1x192x512xf32> to vector<192x512xf32>
    %cst_45 = arith.constant dense<0.000000e+00> : vector<26x512xf32>
    %61 = tpu.matmul %58, %60, %cst_45 {dimension_numbers = #tpu.dot_dimension_numbers<[1], [0], [0], [1], [0, 0, 1, 1], [], []>} : vector<26x192xf32>, vector<192x512xf32>, vector<26x512xf32> -> vector<26x512xf32>
    %62 = arith.addf %57, %61 : vector<26x512xf32>
    %63 = vector.extract_strided_slice %43 {offsets = [4, 0], sizes = [26, 192], strides = [1, 1]} : vector<30x192xf32> to vector<26x192xf32>
    %c4_46 = arith.constant 4 : index
    %c0_47 = arith.constant 0 : index
    %c0_48 = arith.constant 0 : index
    %64 = vector.load %arg7[%c4_46, %c0_47, %c0_48] : memref<5x192x512xf32, #tpu.memory_space<vmem>>, vector<1x192x512xf32>
    %65 = vector.shape_cast %64 : vector<1x192x512xf32> to vector<192x512xf32>
    %cst_49 = arith.constant dense<0.000000e+00> : vector<26x512xf32>
    %66 = tpu.matmul %63, %65, %cst_49 {dimension_numbers = #tpu.dot_dimension_numbers<[1], [0], [0], [1], [0, 0, 1, 1], [], []>} : vector<26x192xf32>, vector<192x512xf32>, vector<26x512xf32> -> vector<26x512xf32>
    %67 = arith.addf %62, %66 : vector<26x512xf32>
    %c0_50 = arith.constant 0 : index
    %c0_51 = arith.constant 0 : index
    %68 = vector.load %arg8[%c0_50, %c0_51] : memref<1x512xf32, #tpu.memory_space<vmem>>, vector<1x512xf32>
    %69 = vector.broadcast %68 : vector<1x512xf32> to vector<26x512xf32>
    %70 = arith.addf %67, %69 : vector<26x512xf32>
    %cst_52 = arith.constant 0.000000e+00 : f32
    %71 = vector.broadcast %cst_52 : f32 to vector<26x512xf32>
    %72 = arith.cmpf ogt, %70, %71 : vector<26x512xf32>
    %cst_53 = arith.constant 0.00999999977 : f32
    %73 = vector.broadcast %cst_53 : f32 to vector<26x512xf32>
    %74 = arith.mulf %73, %70 : vector<26x512xf32>
    %75 = arith.select %72, %70, %74 : vector<26x512xi1>, vector<26x512xf32>
    %76 = vector.extract_strided_slice %75 {offsets = [0, 0], sizes = [25, 512], strides = [1, 1]} : vector<26x512xf32> to vector<25x512xf32>
    %77 = vector.extract_strided_slice %75 {offsets = [1, 0], sizes = [25, 512], strides = [1, 1]} : vector<26x512xf32> to vector<25x512xf32>
    %78 = arith.maximumf %76, %77 : vector<25x512xf32>
    %c0_54 = arith.constant 0 : index
    %c0_55 = arith.constant 0 : index
    %79 = vector.load %arg9[%c0_54, %c0_55] : memref<13x25xf32, #tpu.memory_space<vmem>>, vector<13x25xf32>
    %cst_56 = arith.constant dense<0.000000e+00> : vector<13x512xf32>
    %80 = tpu.matmul %79, %78, %cst_56 {dimension_numbers = #tpu.dot_dimension_numbers<[1], [0], [0], [1], [0, 0, 1, 1], [], []>} : vector<13x25xf32>, vector<25x512xf32>, vector<13x512xf32> -> vector<13x512xf32>
    %c0_57 = arith.constant 0 : index
    %c0_58 = arith.constant 0 : index
    %81 = vector.load %arg10[%c0_57, %c0_58] : memref<512x256xf32, #tpu.memory_space<vmem>>, vector<512x256xf32>
    %cst_59 = arith.constant dense<0.000000e+00> : vector<13x256xf32>
    %82 = tpu.matmul %80, %81, %cst_59 {dimension_numbers = #tpu.dot_dimension_numbers<[1], [0], [0], [1], [0, 0, 1, 1], [], []>} : vector<13x512xf32>, vector<512x256xf32>, vector<13x256xf32> -> vector<13x256xf32>
    %c0_60 = arith.constant 0 : index
    %c0_61 = arith.constant 0 : index
    %83 = vector.load %arg11[%c0_60, %c0_61] : memref<512x256xf32, #tpu.memory_space<vmem>>, vector<512x256xf32>
    %cst_62 = arith.constant dense<0.000000e+00> : vector<13x256xf32>
    %84 = tpu.matmul %80, %83, %cst_62 {dimension_numbers = #tpu.dot_dimension_numbers<[1], [0], [0], [1], [0, 0, 1, 1], [], []>} : vector<13x512xf32>, vector<512x256xf32>, vector<13x256xf32> -> vector<13x256xf32>
    %85 = arith.maximumf %82, %84 : vector<13x256xf32>
    %c0_63 = arith.constant 0 : index
    %c0_64 = arith.constant 0 : index
    %86 = vector.load %arg13[%c0_63, %c0_64] : memref<1x120xf32, #tpu.memory_space<vmem>>, vector<1x120xf32>
    %87 = vector.extract_strided_slice %85 {offsets = [0, 0], sizes = [1, 256], strides = [1, 1]} : vector<13x256xf32> to vector<1x256xf32>
    %c0_65 = arith.constant 0 : index
    %c0_66 = arith.constant 0 : index
    %c0_67 = arith.constant 0 : index
    %88 = vector.load %arg12[%c0_65, %c0_66, %c0_67] : memref<13x256x120xf32, #tpu.memory_space<vmem>>, vector<1x256x120xf32>
    %89 = vector.shape_cast %88 : vector<1x256x120xf32> to vector<256x120xf32>
    %cst_68 = arith.constant dense<0.000000e+00> : vector<1x120xf32>
    %90 = tpu.matmul %87, %89, %cst_68 {dimension_numbers = #tpu.dot_dimension_numbers<[1], [0], [0], [1], [0, 0, 1, 1], [], []>} : vector<1x256xf32>, vector<256x120xf32>, vector<1x120xf32> -> vector<1x120xf32>
    %91 = arith.addf %86, %90 : vector<1x120xf32>
    %92 = vector.extract_strided_slice %85 {offsets = [1, 0], sizes = [1, 256], strides = [1, 1]} : vector<13x256xf32> to vector<1x256xf32>
    %c1_69 = arith.constant 1 : index
    %c0_70 = arith.constant 0 : index
    %c0_71 = arith.constant 0 : index
    %93 = vector.load %arg12[%c1_69, %c0_70, %c0_71] : memref<13x256x120xf32, #tpu.memory_space<vmem>>, vector<1x256x120xf32>
    %94 = vector.shape_cast %93 : vector<1x256x120xf32> to vector<256x120xf32>
    %cst_72 = arith.constant dense<0.000000e+00> : vector<1x120xf32>
    %95 = tpu.matmul %92, %94, %cst_72 {dimension_numbers = #tpu.dot_dimension_numbers<[1], [0], [0], [1], [0, 0, 1, 1], [], []>} : vector<1x256xf32>, vector<256x120xf32>, vector<1x120xf32> -> vector<1x120xf32>
    %96 = arith.addf %91, %95 : vector<1x120xf32>
    %97 = vector.extract_strided_slice %85 {offsets = [2, 0], sizes = [1, 256], strides = [1, 1]} : vector<13x256xf32> to vector<1x256xf32>
    %c2_73 = arith.constant 2 : index
    %c0_74 = arith.constant 0 : index
    %c0_75 = arith.constant 0 : index
    %98 = vector.load %arg12[%c2_73, %c0_74, %c0_75] : memref<13x256x120xf32, #tpu.memory_space<vmem>>, vector<1x256x120xf32>
    %99 = vector.shape_cast %98 : vector<1x256x120xf32> to vector<256x120xf32>
    %cst_76 = arith.constant dense<0.000000e+00> : vector<1x120xf32>
    %100 = tpu.matmul %97, %99, %cst_76 {dimension_numbers = #tpu.dot_dimension_numbers<[1], [0], [0], [1], [0, 0, 1, 1], [], []>} : vector<1x256xf32>, vector<256x120xf32>, vector<1x120xf32> -> vector<1x120xf32>
    %101 = arith.addf %96, %100 : vector<1x120xf32>
    %102 = vector.extract_strided_slice %85 {offsets = [3, 0], sizes = [1, 256], strides = [1, 1]} : vector<13x256xf32> to vector<1x256xf32>
    %c3_77 = arith.constant 3 : index
    %c0_78 = arith.constant 0 : index
    %c0_79 = arith.constant 0 : index
    %103 = vector.load %arg12[%c3_77, %c0_78, %c0_79] : memref<13x256x120xf32, #tpu.memory_space<vmem>>, vector<1x256x120xf32>
    %104 = vector.shape_cast %103 : vector<1x256x120xf32> to vector<256x120xf32>
    %cst_80 = arith.constant dense<0.000000e+00> : vector<1x120xf32>
    %105 = tpu.matmul %102, %104, %cst_80 {dimension_numbers = #tpu.dot_dimension_numbers<[1], [0], [0], [1], [0, 0, 1, 1], [], []>} : vector<1x256xf32>, vector<256x120xf32>, vector<1x120xf32> -> vector<1x120xf32>
    %106 = arith.addf %101, %105 : vector<1x120xf32>
    %107 = vector.extract_strided_slice %85 {offsets = [4, 0], sizes = [1, 256], strides = [1, 1]} : vector<13x256xf32> to vector<1x256xf32>
    %c4_81 = arith.constant 4 : index
    %c0_82 = arith.constant 0 : index
    %c0_83 = arith.constant 0 : index
    %108 = vector.load %arg12[%c4_81, %c0_82, %c0_83] : memref<13x256x120xf32, #tpu.memory_space<vmem>>, vector<1x256x120xf32>
    %109 = vector.shape_cast %108 : vector<1x256x120xf32> to vector<256x120xf32>
    %cst_84 = arith.constant dense<0.000000e+00> : vector<1x120xf32>
    %110 = tpu.matmul %107, %109, %cst_84 {dimension_numbers = #tpu.dot_dimension_numbers<[1], [0], [0], [1], [0, 0, 1, 1], [], []>} : vector<1x256xf32>, vector<256x120xf32>, vector<1x120xf32> -> vector<1x120xf32>
    %111 = arith.addf %106, %110 : vector<1x120xf32>
    %112 = vector.extract_strided_slice %85 {offsets = [5, 0], sizes = [1, 256], strides = [1, 1]} : vector<13x256xf32> to vector<1x256xf32>
    %c5 = arith.constant 5 : index
    %c0_85 = arith.constant 0 : index
    %c0_86 = arith.constant 0 : index
    %113 = vector.load %arg12[%c5, %c0_85, %c0_86] : memref<13x256x120xf32, #tpu.memory_space<vmem>>, vector<1x256x120xf32>
    %114 = vector.shape_cast %113 : vector<1x256x120xf32> to vector<256x120xf32>
    %cst_87 = arith.constant dense<0.000000e+00> : vector<1x120xf32>
    %115 = tpu.matmul %112, %114, %cst_87 {dimension_numbers = #tpu.dot_dimension_numbers<[1], [0], [0], [1], [0, 0, 1, 1], [], []>} : vector<1x256xf32>, vector<256x120xf32>, vector<1x120xf32> -> vector<1x120xf32>
    %116 = arith.addf %111, %115 : vector<1x120xf32>
    %117 = vector.extract_strided_slice %85 {offsets = [6, 0], sizes = [1, 256], strides = [1, 1]} : vector<13x256xf32> to vector<1x256xf32>
    %c6 = arith.constant 6 : index
    %c0_88 = arith.constant 0 : index
    %c0_89 = arith.constant 0 : index
    %118 = vector.load %arg12[%c6, %c0_88, %c0_89] : memref<13x256x120xf32, #tpu.memory_space<vmem>>, vector<1x256x120xf32>
    %119 = vector.shape_cast %118 : vector<1x256x120xf32> to vector<256x120xf32>
    %cst_90 = arith.constant dense<0.000000e+00> : vector<1x120xf32>
    %120 = tpu.matmul %117, %119, %cst_90 {dimension_numbers = #tpu.dot_dimension_numbers<[1], [0], [0], [1], [0, 0, 1, 1], [], []>} : vector<1x256xf32>, vector<256x120xf32>, vector<1x120xf32> -> vector<1x120xf32>
    %121 = arith.addf %116, %120 : vector<1x120xf32>
    %122 = vector.extract_strided_slice %85 {offsets = [7, 0], sizes = [1, 256], strides = [1, 1]} : vector<13x256xf32> to vector<1x256xf32>
    %c7 = arith.constant 7 : index
    %c0_91 = arith.constant 0 : index
    %c0_92 = arith.constant 0 : index
    %123 = vector.load %arg12[%c7, %c0_91, %c0_92] : memref<13x256x120xf32, #tpu.memory_space<vmem>>, vector<1x256x120xf32>
    %124 = vector.shape_cast %123 : vector<1x256x120xf32> to vector<256x120xf32>
    %cst_93 = arith.constant dense<0.000000e+00> : vector<1x120xf32>
    %125 = tpu.matmul %122, %124, %cst_93 {dimension_numbers = #tpu.dot_dimension_numbers<[1], [0], [0], [1], [0, 0, 1, 1], [], []>} : vector<1x256xf32>, vector<256x120xf32>, vector<1x120xf32> -> vector<1x120xf32>
    %126 = arith.addf %121, %125 : vector<1x120xf32>
    %127 = vector.extract_strided_slice %85 {offsets = [8, 0], sizes = [1, 256], strides = [1, 1]} : vector<13x256xf32> to vector<1x256xf32>
    %c8 = arith.constant 8 : index
    %c0_94 = arith.constant 0 : index
    %c0_95 = arith.constant 0 : index
    %128 = vector.load %arg12[%c8, %c0_94, %c0_95] : memref<13x256x120xf32, #tpu.memory_space<vmem>>, vector<1x256x120xf32>
    %129 = vector.shape_cast %128 : vector<1x256x120xf32> to vector<256x120xf32>
    %cst_96 = arith.constant dense<0.000000e+00> : vector<1x120xf32>
    %130 = tpu.matmul %127, %129, %cst_96 {dimension_numbers = #tpu.dot_dimension_numbers<[1], [0], [0], [1], [0, 0, 1, 1], [], []>} : vector<1x256xf32>, vector<256x120xf32>, vector<1x120xf32> -> vector<1x120xf32>
    %131 = arith.addf %126, %130 : vector<1x120xf32>
    %132 = vector.extract_strided_slice %85 {offsets = [9, 0], sizes = [1, 256], strides = [1, 1]} : vector<13x256xf32> to vector<1x256xf32>
    %c9 = arith.constant 9 : index
    %c0_97 = arith.constant 0 : index
    %c0_98 = arith.constant 0 : index
    %133 = vector.load %arg12[%c9, %c0_97, %c0_98] : memref<13x256x120xf32, #tpu.memory_space<vmem>>, vector<1x256x120xf32>
    %134 = vector.shape_cast %133 : vector<1x256x120xf32> to vector<256x120xf32>
    %cst_99 = arith.constant dense<0.000000e+00> : vector<1x120xf32>
    %135 = tpu.matmul %132, %134, %cst_99 {dimension_numbers = #tpu.dot_dimension_numbers<[1], [0], [0], [1], [0, 0, 1, 1], [], []>} : vector<1x256xf32>, vector<256x120xf32>, vector<1x120xf32> -> vector<1x120xf32>
    %136 = arith.addf %131, %135 : vector<1x120xf32>
    %137 = vector.extract_strided_slice %85 {offsets = [10, 0], sizes = [1, 256], strides = [1, 1]} : vector<13x256xf32> to vector<1x256xf32>
    %c10 = arith.constant 10 : index
    %c0_100 = arith.constant 0 : index
    %c0_101 = arith.constant 0 : index
    %138 = vector.load %arg12[%c10, %c0_100, %c0_101] : memref<13x256x120xf32, #tpu.memory_space<vmem>>, vector<1x256x120xf32>
    %139 = vector.shape_cast %138 : vector<1x256x120xf32> to vector<256x120xf32>
    %cst_102 = arith.constant dense<0.000000e+00> : vector<1x120xf32>
    %140 = tpu.matmul %137, %139, %cst_102 {dimension_numbers = #tpu.dot_dimension_numbers<[1], [0], [0], [1], [0, 0, 1, 1], [], []>} : vector<1x256xf32>, vector<256x120xf32>, vector<1x120xf32> -> vector<1x120xf32>
    %141 = arith.addf %136, %140 : vector<1x120xf32>
    %142 = vector.extract_strided_slice %85 {offsets = [11, 0], sizes = [1, 256], strides = [1, 1]} : vector<13x256xf32> to vector<1x256xf32>
    %c11 = arith.constant 11 : index
    %c0_103 = arith.constant 0 : index
    %c0_104 = arith.constant 0 : index
    %143 = vector.load %arg12[%c11, %c0_103, %c0_104] : memref<13x256x120xf32, #tpu.memory_space<vmem>>, vector<1x256x120xf32>
    %144 = vector.shape_cast %143 : vector<1x256x120xf32> to vector<256x120xf32>
    %cst_105 = arith.constant dense<0.000000e+00> : vector<1x120xf32>
    %145 = tpu.matmul %142, %144, %cst_105 {dimension_numbers = #tpu.dot_dimension_numbers<[1], [0], [0], [1], [0, 0, 1, 1], [], []>} : vector<1x256xf32>, vector<256x120xf32>, vector<1x120xf32> -> vector<1x120xf32>
    %146 = arith.addf %141, %145 : vector<1x120xf32>
    %147 = vector.extract_strided_slice %85 {offsets = [12, 0], sizes = [1, 256], strides = [1, 1]} : vector<13x256xf32> to vector<1x256xf32>
    %c12 = arith.constant 12 : index
    %c0_106 = arith.constant 0 : index
    %c0_107 = arith.constant 0 : index
    %148 = vector.load %arg12[%c12, %c0_106, %c0_107] : memref<13x256x120xf32, #tpu.memory_space<vmem>>, vector<1x256x120xf32>
    %149 = vector.shape_cast %148 : vector<1x256x120xf32> to vector<256x120xf32>
    %cst_108 = arith.constant dense<0.000000e+00> : vector<1x120xf32>
    %150 = tpu.matmul %147, %149, %cst_108 {dimension_numbers = #tpu.dot_dimension_numbers<[1], [0], [0], [1], [0, 0, 1, 1], [], []>} : vector<1x256xf32>, vector<256x120xf32>, vector<1x120xf32> -> vector<1x120xf32>
    %151 = arith.addf %146, %150 : vector<1x120xf32>
    %cst_109 = arith.constant 0.000000e+00 : f32
    %152 = vector.broadcast %cst_109 : f32 to vector<1x120xf32>
    %153 = arith.cmpf ogt, %151, %152 : vector<1x120xf32>
    %cst_110 = arith.constant 0.00999999977 : f32
    %154 = vector.broadcast %cst_110 : f32 to vector<1x120xf32>
    %155 = arith.mulf %154, %151 : vector<1x120xf32>
    %156 = arith.select %153, %151, %155 : vector<1x120xi1>, vector<1x120xf32>
    %c0_111 = arith.constant 0 : index
    %c0_112 = arith.constant 0 : index
    %157 = vector.load %arg14[%c0_111, %c0_112] : memref<120x84xf32, #tpu.memory_space<vmem>>, vector<120x84xf32>
    %cst_113 = arith.constant dense<0.000000e+00> : vector<1x84xf32>
    %158 = tpu.matmul %156, %157, %cst_113 {dimension_numbers = #tpu.dot_dimension_numbers<[1], [0], [0], [1], [0, 0, 1, 1], [], []>} : vector<1x120xf32>, vector<120x84xf32>, vector<1x84xf32> -> vector<1x84xf32>
    %c0_114 = arith.constant 0 : index
    %c0_115 = arith.constant 0 : index
    %159 = vector.load %arg15[%c0_114, %c0_115] : memref<1x84xf32, #tpu.memory_space<vmem>>, vector<1x84xf32>
    %160 = arith.addf %158, %159 : vector<1x84xf32>
    %cst_116 = arith.constant 0.000000e+00 : f32
    %161 = vector.broadcast %cst_116 : f32 to vector<1x84xf32>
    %162 = arith.cmpf ogt, %160, %161 : vector<1x84xf32>
    %cst_117 = arith.constant 0.00999999977 : f32
    %163 = vector.broadcast %cst_117 : f32 to vector<1x84xf32>
    %164 = arith.mulf %163, %160 : vector<1x84xf32>
    %165 = arith.select %162, %160, %164 : vector<1x84xi1>, vector<1x84xf32>
    %c0_118 = arith.constant 0 : index
    %c0_119 = arith.constant 0 : index
    %166 = vector.load %arg16[%c0_118, %c0_119] : memref<84x9xf32, #tpu.memory_space<vmem>>, vector<84x9xf32>
    %cst_120 = arith.constant dense<0.000000e+00> : vector<1x9xf32>
    %167 = tpu.matmul %165, %166, %cst_120 {dimension_numbers = #tpu.dot_dimension_numbers<[1], [0], [0], [1], [0, 0, 1, 1], [], []>} : vector<1x84xf32>, vector<84x9xf32>, vector<1x9xf32> -> vector<1x9xf32>
    %c0_121 = arith.constant 0 : index
    %c0_122 = arith.constant 0 : index
    %168 = vector.load %arg17[%c0_121, %c0_122] : memref<1x9xf32, #tpu.memory_space<vmem>>, vector<1x9xf32>
    %169 = arith.addf %167, %168 : vector<1x9xf32>
    %c0_123 = arith.constant 0 : index
    %c0_124 = arith.constant 0 : index
    %c0_125 = arith.constant 0 : index
    %170 = vector.load %arg18[%c0_123, %c0_124, %c0_125] : memref<1x1x9xf32, #tpu.memory_space<vmem>>, vector<1x1x9xf32>
    %171 = vector.shape_cast %170 : vector<1x1x9xf32> to vector<1x9xf32>
    %172 = vector.shape_cast %169 : vector<1x9xf32> to vector<1x1x9xf32>
    tpu.vector_store %arg18[%c0_123, %c0_124, %c0_125], %172 {strides = array<i32>} : memref<1x1x9xf32, #tpu.memory_space<vmem>>, vector<1x1x9xf32>,
    return
  }
  func.func @transform_0(%arg0: i32) -> (i32, i32, i32) {
    %c0_i32 = arith.constant 0 : i32
    %c0_i32_0 = arith.constant 0 : i32
    %c0_i32_1 = arith.constant 0 : i32
    return %arg0, %c0_i32, %c0_i32_0 : i32, i32, i32
  }
  func.func @transform_1(%arg0: i32) -> (i32, i32, i32) {
    %c0_i32 = arith.constant 0 : i32
    %c0_i32_0 = arith.constant 0 : i32
    %c0_i32_1 = arith.constant 0 : i32
    %c0_i32_2 = arith.constant 0 : i32
    return %c0_i32, %c0_i32_0, %c0_i32_1 : i32, i32, i32
  }
  func.func @transform_2(%arg0: i32) -> (i32, i32) {
    %c0_i32 = arith.constant 0 : i32
    %c0_i32_0 = arith.constant 0 : i32
    %c0_i32_1 = arith.constant 0 : i32
    return %c0_i32, %c0_i32_0 : i32, i32
  }
  func.func @transform_3(%arg0: i32) -> (i32, i32) {
    %c0_i32 = arith.constant 0 : i32
    %c0_i32_0 = arith.constant 0 : i32
    %c0_i32_1 = arith.constant 0 : i32
    return %c0_i32, %c0_i32_0 : i32, i32
  }
  func.func @transform_4(%arg0: i32) -> (i32, i32) {
    %c0_i32 = arith.constant 0 : i32
    %c0_i32_0 = arith.constant 0 : i32
    %c0_i32_1 = arith.constant 0 : i32
    return %c0_i32, %c0_i32_0 : i32, i32
  }
  func.func @transform_5(%arg0: i32) -> (i32, i32) {
    %c0_i32 = arith.constant 0 : i32
    %c0_i32_0 = arith.constant 0 : i32
    %c0_i32_1 = arith.constant 0 : i32
    return %c0_i32, %c0_i32_0 : i32, i32
  }
  func.func @transform_6(%arg0: i32) -> (i32, i32, i32) {
    %c0_i32 = arith.constant 0 : i32
    %c0_i32_0 = arith.constant 0 : i32
    %c0_i32_1 = arith.constant 0 : i32
    %c0_i32_2 = arith.constant 0 : i32
    return %c0_i32, %c0_i32_0, %c0_i32_1 : i32, i32, i32
  }
  func.func @transform_7(%arg0: i32) -> (i32, i32) {
    %c0_i32 = arith.constant 0 : i32
    %c0_i32_0 = arith.constant 0 : i32
    %c0_i32_1 = arith.constant 0 : i32
    return %c0_i32, %c0_i32_0 : i32, i32
  }
  func.func @transform_8(%arg0: i32) -> (i32, i32) {
    %c0_i32 = arith.constant 0 : i32
    %c0_i32_0 = arith.constant 0 : i32
    %c0_i32_1 = arith.constant 0 : i32
    return %c0_i32, %c0_i32_0 : i32, i32
  }
  func.func @transform_9(%arg0: i32) -> (i32, i32) {
    %c0_i32 = arith.constant 0 : i32
    %c0_i32_0 = arith.constant 0 : i32
    %c0_i32_1 = arith.constant 0 : i32
    return %c0_i32, %c0_i32_0 : i32, i32
  }
  func.func @transform_10(%arg0: i32) -> (i32, i32) {
    %c0_i32 = arith.constant 0 : i32
    %c0_i32_0 = arith.constant 0 : i32
    %c0_i32_1 = arith.constant 0 : i32
    return %c0_i32, %c0_i32_0 : i32, i32
  }
  func.func @transform_11(%arg0: i32) -> (i32, i32, i32) {
    %c0_i32 = arith.constant 0 : i32
    %c0_i32_0 = arith.constant 0 : i32
    %c0_i32_1 = arith.constant 0 : i32
    %c0_i32_2 = arith.constant 0 : i32
    return %c0_i32, %c0_i32_0, %c0_i32_1 : i32, i32, i32
  }
  func.func @transform_12(%arg0: i32) -> (i32, i32) {
    %c0_i32 = arith.constant 0 : i32
    %c0_i32_0 = arith.constant 0 : i32
    %c0_i32_1 = arith.constant 0 : i32
    return %c0_i32, %c0_i32_0 : i32, i32
  }
  func.func @transform_13(%arg0: i32) -> (i32, i32) {
    %c0_i32 = arith.constant 0 : i32
    %c0_i32_0 = arith.constant 0 : i32
    %c0_i32_1 = arith.constant 0 : i32
    return %c0_i32, %c0_i32_0 : i32, i32
  }
  func.func @transform_14(%arg0: i32) -> (i32, i32) {
    %c0_i32 = arith.constant 0 : i32
    %c0_i32_0 = arith.constant 0 : i32
    %c0_i32_1 = arith.constant 0 : i32
    return %c0_i32, %c0_i32_0 : i32, i32
  }
  func.func @transform_15(%arg0: i32) -> (i32, i32) {
    %c0_i32 = arith.constant 0 : i32
    %c0_i32_0 = arith.constant 0 : i32
    %c0_i32_1 = arith.constant 0 : i32
    return %c0_i32, %c0_i32_0 : i32, i32
  }
  func.func @transform_16(%arg0: i32) -> (i32, i32) {
    %c0_i32 = arith.constant 0 : i32
    %c0_i32_0 = arith.constant 0 : i32
    %c0_i32_1 = arith.constant 0 : i32
    return %c0_i32, %c0_i32_0 : i32, i32
  }
  func.func @transform_17(%arg0: i32) -> (i32, i32, i32) {
    %c0_i32 = arith.constant 0 : i32
    %c0_i32_0 = arith.constant 0 : i32
    %c0_i32_1 = arith.constant 0 : i32
    return %arg0, %c0_i32, %c0_i32_0 : i32, i32, i32
  }
}

</mosaic_0001>

<llo_original>
// kernel: net_forward.1
$region0: #{net_forward.1}
  #allocation0 [shape = 'u32[]', space=smem, size = 0x4, offset = 0x4, fixed_abs, tag = 'smem constant byte address 0x4 - core index']
  #allocation1 [shape = 'u32[144,128]{1,0:T(1,128)}', space=vmem, size = 0x12000, scoped, tag = 'internal scratch']
  %s0 = inlined_call_operand.vmem [shape: f32[2,64,64], index: 0, kind: input, shape index: {}]
  %s1 = inlined_call_operand.vmem [shape: f32[5,64,384], index: 1, kind: input, shape index: {}]
  %s2 = inlined_call_operand.vmem [shape: f32[1,384], index: 2, kind: input, shape index: {}]
  %s3 = inlined_call_operand.vmem [shape: f32[30,59], index: 3, kind: input, shape index: {}]
  %s4 = inlined_call_operand.vmem [shape: f32[384,192], index: 4, kind: input, shape index: {}]
  %s5 = inlined_call_operand.vmem [shape: f32[384,192], index: 5, kind: input, shape index: {}]
  %s6 = inlined_call_operand.vmem [shape: f32[5,192,512], index: 6, kind: input, shape index: {}]
  %s7 = inlined_call_operand.vmem [shape: f32[1,512], index: 7, kind: input, shape index: {}]
  %s8 = inlined_call_operand.vmem [shape: f32[13,25], index: 8, kind: input, shape index: {}]
  %s9 = inlined_call_operand.vmem [shape: f32[512,256], index: 9, kind: input, shape index: {}]
  %s10 = inlined_call_operand.vmem [shape: f32[512,256], index: 10, kind: input, shape index: {}]
  %s11 = inlined_call_operand.vmem [shape: f32[13,256,120], index: 11, kind: input, shape index: {}]
  %s12 = inlined_call_operand.vmem [shape: f32[1,120], index: 12, kind: input, shape index: {}]
  %s13 = inlined_call_operand.vmem [shape: f32[120,84], index: 13, kind: input, shape index: {}]
  %s14 = inlined_call_operand.vmem [shape: f32[1,84], index: 14, kind: input, shape index: {}]
  %s15 = inlined_call_operand.vmem [shape: f32[84,9], index: 15, kind: input, shape index: {}]
  %s16 = inlined_call_operand.vmem [shape: f32[1,9], index: 16, kind: input, shape index: {}]
  %s17 = inlined_call_operand.hbm [shape: f32[2,1,9], index: 17, kind: output, shape index: {}]
  %s18 = sld [smem:[#allocation0]]
  $region101: #{net_forward.1} parent=0
    _
  %s20 = ssub.s32 1, %s18
  %s21 = scalar_select 0, %s20, %s18
  $region1: #{net_forward.1} parent=0
    #allocation2 [shape = 'u8[1024]{0}', space=vmem, size = 0x400, scoped, tag = 'output window, operand 0']
    #allocation3 [shape = 's32[2]{0}', space=sflag, size = 0x8, scoped, tag = 'scoped memory for net_forward.1']
    %22 = vsyncpa [#allocation3], 0
    %s23 = scalar_lea.sflag [#allocation3], 1
    %24 = vsyncpa %s23, 0
    loop: start=0, step=1, limit=4
    $region2: #{net_forward.1} parent=1 // loop_pre_header
      _
    $region3: #{net_forward.1} parent=1 // loop_header
      %s26 = sphi 0, %s30
      %p27 = scmp.ge.s32.totalorder %s26, 4
      %s36 = sphi 0, %s38
      %s39 = sphi 0, %s36
      %s40 = sphi 0, %s39
      %s56 = sphi 0, %s40
      %s60 = sphi 0, %s60
      %s62 = sphi 0, %s60
      %s63 = sphi 0, %s62
      %s77 = sphi 0, %s63
      %s81 = sphi 0, %s81
      %s83 = sphi 0, %s81
      %s84 = sphi 0, %s83
      %s98 = sphi 0, %s84
      %s102 = sphi 0, %s102
      %s104 = sphi 0, %s102
      %s105 = sphi 0, %s104
      %s119 = sphi 0, %s105
      %s123 = sphi 0, %s123
      %s125 = sphi 0, %s123
      %s126 = sphi 0, %s125
      %s140 = sphi 0, %s126
      %s144 = sphi 0, %s144
      %s146 = sphi 0, %s144
      %s147 = sphi 0, %s146
      %s161 = sphi 0, %s147
      %s165 = sphi 0, %s165
      %s167 = sphi 0, %s165
      %s168 = sphi 0, %s167
      %s182 = sphi 0, %s168
      %s186 = sphi 0, %s186
      %s188 = sphi 0, %s186
      %s189 = sphi 0, %s188
      %s203 = sphi 0, %s189
      %s207 = sphi 0, %s207
      %s209 = sphi 0, %s207
      %s210 = sphi 0, %s209
      %s224 = sphi 0, %s210
      %s228 = sphi 0, %s228
      %s230 = sphi 0, %s228
      %s231 = sphi 0, %s230
      %s245 = sphi 0, %s231
      %s249 = sphi 0, %s249
      %s251 = sphi 0, %s249
      %s252 = sphi 0, %s251
      %s266 = sphi 0, %s252
      %s270 = sphi 0, %s270
      %s272 = sphi 0, %s270
      %s273 = sphi 0, %s272
      %s287 = sphi 0, %s273
      %s291 = sphi 0, %s291
      %s293 = sphi 0, %s291
      %s294 = sphi 0, %s293
      %s308 = sphi 0, %s294
      %s312 = sphi 0, %s312
      %s314 = sphi 0, %s312
      %s315 = sphi 0, %s314
      %s329 = sphi 0, %s315
      %s333 = sphi 0, %s333
      %s335 = sphi 0, %s333
      %s336 = sphi 0, %s335
      %s350 = sphi 0, %s336
      %s354 = sphi 0, %s354
      %s356 = sphi 0, %s354
      %s357 = sphi 0, %s356
      %s371 = sphi 0, %s357
      %s375 = sphi 0, %s375
      %s377 = sphi 0, %s375
      %s378 = sphi 0, %s377
      %s392 = sphi 0, %s378
      %s398 = sphi 0, %s400
      %s401 = sphi 0, %s398
      %s402 = sphi 0, %s401
      %s418 = sphi 0, %s402
    $region4: #{net_forward.1} parent=1 // loop_header_branch
      %29 = sbr.rel (%p27) target = $region8
    $region5: #{net_forward.1} parent=1 // loop_body
      %s31 = ssub.s32 %s26, 1
      %s32 = ssub.s32 %s26, 2
      %s33 = sadd.s32 %s26, 1
      %s34 = ssub.s32 %s26, %s33
      %p35 = scmp.eq.s32.totalorder %s34, 0
      %s37 = sadd.s32 %s36, 1
      %s38 = scalar_select %p35, %s36, %s37
      %p41 = pneg %p35
      %p42 = scmp.eq.s32.totalorder %s26, 1
      %p43 = por %p41, %p42
      %p44 = scmp.ne.s32.totalorder %s36, %s39
      %p45 = scmp.eq.s32.totalorder %s26, 0
      %p46 = por %p44, %p45
      %p47 = scmp.ne.s32.totalorder %s36, %s39
      %p48 = scmp.eq.s32.totalorder %s31, 1
      %p49 = por %p47, %p48
      %p50 = scmp.ne.s32.totalorder %s39, %s40
      %p51 = scmp.eq.s32.totalorder %s31, 0
      %p52 = por %p50, %p51
      %p53 = scmp.ne.s32.totalorder %s39, %s40
      %p54 = scmp.eq.s32.totalorder %s32, 1
      %p55 = por %p53, %p54
      %p57 = scmp.ne.s32.totalorder %s40, %s56
      %p58 = scmp.eq.s32.totalorder %s32, 0
      %p59 = por %p57, %p58
      %s61 = sadd.s32 %s60, 1
      %p64 = scmp.eq.s32.totalorder %s26, 1
      %p65 = scmp.ne.s32.totalorder %s60, %s62
      %p66 = scmp.eq.s32.totalorder %s26, 0
      %p67 = por %p65, %p66
      %p68 = scmp.ne.s32.totalorder %s60, %s62
      %p69 = scmp.eq.s32.totalorder %s31, 1
      %p70 = por %p68, %p69
      %p71 = scmp.ne.s32.totalorder %s62, %s63
      %p72 = scmp.eq.s32.totalorder %s31, 0
      %p73 = por %p71, %p72
      %p74 = scmp.ne.s32.totalorder %s62, %s63
      %p75 = scmp.eq.s32.totalorder %s32, 1
      %p76 = por %p74, %p75
      %p78 = scmp.ne.s32.totalorder %s63, %s77
      %p79 = scmp.eq.s32.totalorder %s32, 0
      %p80 = por %p78, %p79
      %s82 = sadd.s32 %s81, 1
      %p85 = scmp.eq.s32.totalorder %s26, 1
      %p86 = scmp.ne.s32.totalorder %s81, %s83
      %p87 = scmp.eq.s32.totalorder %s26, 0
      %p88 = por %p86, %p87
      %p89 = scmp.ne.s32.totalorder %s81, %s83
      %p90 = scmp.eq.s32.totalorder %s31, 1
      %p91 = por %p89, %p90
      %p92 = scmp.ne.s32.totalorder %s83, %s84
      %p93 = scmp.eq.s32.totalorder %s31, 0
      %p94 = por %p92, %p93
      %p95 = scmp.ne.s32.totalorder %s83, %s84
      %p96 = scmp.eq.s32.totalorder %s32, 1
      %p97 = por %p95, %p96
      %p99 = scmp.ne.s32.totalorder %s84, %s98
      %p100 = scmp.eq.s32.totalorder %s32, 0
      %p101 = por %p99, %p100
      %s103 = sadd.s32 %s102, 1
      %p106 = scmp.eq.s32.totalorder %s26, 1
      %p107 = scmp.ne.s32.totalorder %s102, %s104
      %p108 = scmp.eq.s32.totalorder %s26, 0
      %p109 = por %p107, %p108
      %p110 = scmp.ne.s32.totalorder %s102, %s104
      %p111 = scmp.eq.s32.totalorder %s31, 1
      %p112 = por %p110, %p111
      %p113 = scmp.ne.s32.totalorder %s104, %s105
      %p114 = scmp.eq.s32.totalorder %s31, 0
      %p115 = por %p113, %p114
      %p116 = scmp.ne.s32.totalorder %s104, %s105
      %p117 = scmp.eq.s32.totalorder %s32, 1
      %p118 = por %p116, %p117
      %p120 = scmp.ne.s32.totalorder %s105, %s119
      %p121 = scmp.eq.s32.totalorder %s32, 0
      %p122 = por %p120, %p121
      %s124 = sadd.s32 %s123, 1
      %p127 = scmp.eq.s32.totalorder %s26, 1
      %p128 = scmp.ne.s32.totalorder %s123, %s125
      %p129 = scmp.eq.s32.totalorder %s26, 0
      %p130 = por %p128, %p129
      %p131 = scmp.ne.s32.totalorder %s123, %s125
      %p132 = scmp.eq.s32.totalorder %s31, 1
      %p133 = por %p131, %p132
      %p134 = scmp.ne.s32.totalorder %s125, %s126
      %p135 = scmp.eq.s32.totalorder %s31, 0
      %p136 = por %p134, %p135
      %p137 = scmp.ne.s32.totalorder %s125, %s126
      %p138 = scmp.eq.s32.totalorder %s32, 1
      %p139 = por %p137, %p138
      %p141 = scmp.ne.s32.totalorder %s126, %s140
      %p142 = scmp.eq.s32.totalorder %s32, 0
      %p143 = por %p141, %p142
      %s145 = sadd.s32 %s144, 1
      %p148 = scmp.eq.s32.totalorder %s26, 1
      %p149 = scmp.ne.s32.totalorder %s144, %s146
      %p150 = scmp.eq.s32.totalorder %s26, 0
      %p151 = por %p149, %p150
      %p152 = scmp.ne.s32.totalorder %s144, %s146
      %p153 = scmp.eq.s32.totalorder %s31, 1
      %p154 = por %p152, %p153
      %p155 = scmp.ne.s32.totalorder %s146, %s147
      %p156 = scmp.eq.s32.totalorder %s31, 0
      %p157 = por %p155, %p156
      %p158 = scmp.ne.s32.totalorder %s146, %s147
      %p159 = scmp.eq.s32.totalorder %s32, 1
      %p160 = por %p158, %p159
      %p162 = scmp.ne.s32.totalorder %s147, %s161
      %p163 = scmp.eq.s32.totalorder %s32, 0
      %p164 = por %p162, %p163
      %s166 = sadd.s32 %s165, 1
      %p169 = scmp.eq.s32.totalorder %s26, 1
      %p170 = scmp.ne.s32.totalorder %s165, %s167
      %p171 = scmp.eq.s32.totalorder %s26, 0
      %p172 = por %p170, %p171
      %p173 = scmp.ne.s32.totalorder %s165, %s167
      %p174 = scmp.eq.s32.totalorder %s31, 1
      %p175 = por %p173, %p174
      %p176 = scmp.ne.s32.totalorder %s167, %s168
      %p177 = scmp.eq.s32.totalorder %s31, 0
      %p178 = por %p176, %p177
      %p179 = scmp.ne.s32.totalorder %s167, %s168
      %p180 = scmp.eq.s32.totalorder %s32, 1
      %p181 = por %p179, %p180
      %p183 = scmp.ne.s32.totalorder %s168, %s182
      %p184 = scmp.eq.s32.totalorder %s32, 0
      %p185 = por %p183, %p184
      %s187 = sadd.s32 %s186, 1
      %p190 = scmp.eq.s32.totalorder %s26, 1
      %p191 = scmp.ne.s32.totalorder %s186, %s188
      %p192 = scmp.eq.s32.totalorder %s26, 0
      %p193 = por %p191, %p192
      %p194 = scmp.ne.s32.totalorder %s186, %s188
      %p195 = scmp.eq.s32.totalorder %s31, 1
      %p196 = por %p194, %p195
      %p197 = scmp.ne.s32.totalorder %s188, %s189
      %p198 = scmp.eq.s32.totalorder %s31, 0
      %p199 = por %p197, %p198
      %p200 = scmp.ne.s32.totalorder %s188, %s189
      %p201 = scmp.eq.s32.totalorder %s32, 1
      %p202 = por %p200, %p201
      %p204 = scmp.ne.s32.totalorder %s189, %s203
      %p205 = scmp.eq.s32.totalorder %s32, 0
      %p206 = por %p204, %p205
      %s208 = sadd.s32 %s207, 1
      %p211 = scmp.eq.s32.totalorder %s26, 1
      %p212 = scmp.ne.s32.totalorder %s207, %s209
      %p213 = scmp.eq.s32.totalorder %s26, 0
      %p214 = por %p212, %p213
      %p215 = scmp.ne.s32.totalorder %s207, %s209
      %p216 = scmp.eq.s32.totalorder %s31, 1
      %p217 = por %p215, %p216
      %p218 = scmp.ne.s32.totalorder %s209, %s210
      %p219 = scmp.eq.s32.totalorder %s31, 0
      %p220 = por %p218, %p219
      %p221 = scmp.ne.s32.totalorder %s209, %s210
      %p222 = scmp.eq.s32.totalorder %s32, 1
      %p223 = por %p221, %p222
      %p225 = scmp.ne.s32.totalorder %s210, %s224
      %p226 = scmp.eq.s32.totalorder %s32, 0
      %p227 = por %p225, %p226
      %s229 = sadd.s32 %s228, 1
      %p232 = scmp.eq.s32.totalorder %s26, 1
      %p233 = scmp.ne.s32.totalorder %s228, %s230
      %p234 = scmp.eq.s32.totalorder %s26, 0
      %p235 = por %p233, %p234
      %p236 = scmp.ne.s32.totalorder %s228, %s230
      %p237 = scmp.eq.s32.totalorder %s31, 1
      %p238 = por %p236, %p237
      %p239 = scmp.ne.s32.totalorder %s230, %s231
      %p240 = scmp.eq.s32.totalorder %s31, 0
      %p241 = por %p239, %p240
      %p242 = scmp.ne.s32.totalorder %s230, %s231
      %p243 = scmp.eq.s32.totalorder %s32, 1
      %p244 = por %p242, %p243
      %p246 = scmp.ne.s32.totalorder %s231, %s245
      %p247 = scmp.eq.s32.totalorder %s32, 0
      %p248 = por %p246, %p247
      %s250 = sadd.s32 %s249, 1
      %p253 = scmp.eq.s32.totalorder %s26, 1
      %p254 = scmp.ne.s32.totalorder %s249, %s251
      %p255 = scmp.eq.s32.totalorder %s26, 0
      %p256 = por %p254, %p255
      %p257 = scmp.ne.s32.totalorder %s249, %s251
      %p258 = scmp.eq.s32.totalorder %s31, 1
      %p259 = por %p257, %p258
      %p260 = scmp.ne.s32.totalorder %s251, %s252
      %p261 = scmp.eq.s32.totalorder %s31, 0
      %p262 = por %p260, %p261
      %p263 = scmp.ne.s32.totalorder %s251, %s252
      %p264 = scmp.eq.s32.totalorder %s32, 1
      %p265 = por %p263, %p264
      %p267 = scmp.ne.s32.totalorder %s252, %s266
      %p268 = scmp.eq.s32.totalorder %s32, 0
      %p269 = por %p267, %p268
      %s271 = sadd.s32 %s270, 1
      %p274 = scmp.eq.s32.totalorder %s26, 1
      %p275 = scmp.ne.s32.totalorder %s270, %s272
      %p276 = scmp.eq.s32.totalorder %s26, 0
      %p277 = por %p275, %p276
      %p278 = scmp.ne.s32.totalorder %s270, %s272
      %p279 = scmp.eq.s32.totalorder %s31, 1
      %p280 = por %p278, %p279
      %p281 = scmp.ne.s32.totalorder %s272, %s273
      %p282 = scmp.eq.s32.totalorder %s31, 0
      %p283 = por %p281, %p282
      %p284 = scmp.ne.s32.totalorder %s272, %s273
      %p285 = scmp.eq.s32.totalorder %s32, 1
      %p286 = por %p284, %p285
      %p288 = scmp.ne.s32.totalorder %s273, %s287
      %p289 = scmp.eq.s32.totalorder %s32, 0
      %p290 = por %p288, %p289
      %s292 = sadd.s32 %s291, 1
      %p295 = scmp.eq.s32.totalorder %s26, 1
      %p296 = scmp.ne.s32.totalorder %s291, %s293
      %p297 = scmp.eq.s32.totalorder %s26, 0
      %p298 = por %p296, %p297
      %p299 = scmp.ne.s32.totalorder %s291, %s293
      %p300 = scmp.eq.s32.totalorder %s31, 1
      %p301 = por %p299, %p300
      %p302 = scmp.ne.s32.totalorder %s293, %s294
      %p303 = scmp.eq.s32.totalorder %s31, 0
      %p304 = por %p302, %p303
      %p305 = scmp.ne.s32.totalorder %s293, %s294
      %p306 = scmp.eq.s32.totalorder %s32, 1
      %p307 = por %p305, %p306
      %p309 = scmp.ne.s32.totalorder %s294, %s308
      %p310 = scmp.eq.s32.totalorder %s32, 0
      %p311 = por %p309, %p310
      %s313 = sadd.s32 %s312, 1
      %p316 = scmp.eq.s32.totalorder %s26, 1
      %p317 = scmp.ne.s32.totalorder %s312, %s314
      %p318 = scmp.eq.s32.totalorder %s26, 0
      %p319 = por %p317, %p318
      %p320 = scmp.ne.s32.totalorder %s312, %s314
      %p321 = scmp.eq.s32.totalorder %s31, 1
      %p322 = por %p320, %p321
      %p323 = scmp.ne.s32.totalorder %s314, %s315
      %p324 = scmp.eq.s32.totalorder %s31, 0
      %p325 = por %p323, %p324
      %p326 = scmp.ne.s32.totalorder %s314, %s315
      %p327 = scmp.eq.s32.totalorder %s32, 1
      %p328 = por %p326, %p327
      %p330 = scmp.ne.s32.totalorder %s315, %s329
      %p331 = scmp.eq.s32.totalorder %s32, 0
      %p332 = por %p330, %p331
      %s334 = sadd.s32 %s333, 1
      %p337 = scmp.eq.s32.totalorder %s26, 1
      %p338 = scmp.ne.s32.totalorder %s333, %s335
      %p339 = scmp.eq.s32.totalorder %s26, 0
      %p340 = por %p338, %p339
      %p341 = scmp.ne.s32.totalorder %s333, %s335
      %p342 = scmp.eq.s32.totalorder %s31, 1
      %p343 = por %p341, %p342
      %p344 = scmp.ne.s32.totalorder %s335, %s336
      %p345 = scmp.eq.s32.totalorder %s31, 0
      %p346 = por %p344, %p345
      %p347 = scmp.ne.s32.totalorder %s335, %s336
      %p348 = scmp.eq.s32.totalorder %s32, 1
      %p349 = por %p347, %p348
      %p351 = scmp.ne.s32.totalorder %s336, %s350
      %p352 = scmp.eq.s32.totalorder %s32, 0
      %p353 = por %p351, %p352
      %s355 = sadd.s32 %s354, 1
      %p358 = scmp.eq.s32.totalorder %s26, 1
      %p359 = scmp.ne.s32.totalorder %s354, %s356
      %p360 = scmp.eq.s32.totalorder %s26, 0
      %p361 = por %p359, %p360
      %p362 = scmp.ne.s32.totalorder %s354, %s356
      %p363 = scmp.eq.s32.totalorder %s31, 1
      %p364 = por %p362, %p363
      %p365 = scmp.ne.s32.totalorder %s356, %s357
      %p366 = scmp.eq.s32.totalorder %s31, 0
      %p367 = por %p365, %p366
      %p368 = scmp.ne.s32.totalorder %s356, %s357
      %p369 = scmp.eq.s32.totalorder %s32, 1
      %p370 = por %p368, %p369
      %p372 = scmp.ne.s32.totalorder %s357, %s371
      %p373 = scmp.eq.s32.totalorder %s32, 0
      %p374 = por %p372, %p373
      %s376 = sadd.s32 %s375, 1
      %p379 = scmp.eq.s32.totalorder %s26, 1
      %p380 = scmp.ne.s32.totalorder %s375, %s377
      %p381 = scmp.eq.s32.totalorder %s26, 0
      %p382 = por %p380, %p381
      %p383 = scmp.ne.s32.totalorder %s375, %s377
      %p384 = scmp.eq.s32.totalorder %s31, 1
      %p385 = por %p383, %p384
      %p386 = scmp.ne.s32.totalorder %s377, %s378
      %p387 = scmp.eq.s32.totalorder %s31, 0
      %p388 = por %p386, %p387
      %p389 = scmp.ne.s32.totalorder %s377, %s378
      %p390 = scmp.eq.s32.totalorder %s32, 1
      %p391 = por %p389, %p390
      %p393 = scmp.ne.s32.totalorder %s378, %s392
      %p394 = scmp.eq.s32.totalorder %s32, 0
      %p395 = por %p393, %p394
      %s396 = ssub.s32 %s26, %s33
      %p397 = scmp.eq.s32.totalorder %s396, 0
      %s399 = sadd.s32 %s398, 1
      %s400 = scalar_select %p397, %s398, %s399
      %p403 = pneg %p397
      %p404 = scmp.eq.s32.totalorder %s26, 1
      %p405 = por %p403, %p404
      %p406 = scmp.ne.s32.totalorder %s398, %s401
      %p407 = scmp.eq.s32.totalorder %s26, 0
      %p408 = por %p406, %p407
      %p409 = scmp.ne.s32.totalorder %s398, %s401
      %p410 = scmp.eq.s32.totalorder %s31, 1
      %p411 = por %p409, %p410
      %p412 = scmp.ne.s32.totalorder %s401, %s402
      %p413 = scmp.eq.s32.totalorder %s31, 0
      %p414 = por %p412, %p413
      %p415 = scmp.ne.s32.totalorder %s401, %s402
      %p416 = scmp.eq.s32.totalorder %s32, 1
      %p417 = por %p415, %p416
      %p419 = scmp.ne.s32.totalorder %s402, %s418
      %p420 = scmp.eq.s32.totalorder %s32, 0
      %p421 = por %p419, %p420
      %p422 = scmp.le.s32.totalorder 1, %s26
      %p423 = scmp.lt.s32.totalorder %s26, 3
      %p424 = pnand %p422, %p423
      %p425 = pneg %p424
      // Predicated region
      $region9: #{net_forward.1} parent=5 // pred_check
        _
      $region10: #{net_forward.1} parent=5 // pred_check_branch
        %427 = sbr.rel (%p424) target = $region12
      $region11: #{net_forward.1} parent=5 // pred_region
        %s428 = ssub.s32 %s26, 1
        // Predicated region
        $region13: #{net_forward.1} parent=11 // pred_check
          %p429 = pneg %p73
        $region14: #{net_forward.1} parent=11 // pred_check_branch
          %431 = sbr.rel (%p429) target = $region16
        $region15: #{net_forward.1} parent=11 // pred_region
          _
        $region16: #{net_forward.1} parent=11 // pred_fallthru
          _
        // Predicated region
        $region17: #{net_forward.1} parent=11 // pred_check
          %p432 = pneg %p94
        $region18: #{net_forward.1} parent=11 // pred_check_branch
          %434 = sbr.rel (%p432) target = $region20
        $region19: #{net_forward.1} parent=11 // pred_region
          _
        $region20: #{net_forward.1} parent=11 // pred_fallthru
          _
        // Predicated region
        $region21: #{net_forward.1} parent=11 // pred_check
          %p435 = pneg %p115
        $region22: #{net_forward.1} parent=11 // pred_check_branch
          %437 = sbr.rel (%p435) target = $region24
        $region23: #{net_forward.1} parent=11 // pred_region
          _
        $region24: #{net_forward.1} parent=11 // pred_fallthru
          _
        // Predicated region
        $region25: #{net_forward.1} parent=11 // pred_check
          %p438 = pneg %p136
        $region26: #{net_forward.1} parent=11 // pred_check_branch
          %440 = sbr.rel (%p438) target = $region28
        $region27: #{net_forward.1} parent=11 // pred_region
          _
        $region28: #{net_forward.1} parent=11 // pred_fallthru
          _
        // Predicated region
        $region29: #{net_forward.1} parent=11 // pred_check
          %p441 = pneg %p157
        $region30: #{net_forward.1} parent=11 // pred_check_branch
          %443 = sbr.rel (%p441) target = $region32
        $region31: #{net_forward.1} parent=11 // pred_region
          _
        $region32: #{net_forward.1} parent=11 // pred_fallthru
          _
        // Predicated region
        $region33: #{net_forward.1} parent=11 // pred_check
          %p444 = pneg %p178
        $region34: #{net_forward.1} parent=11 // pred_check_branch
          %446 = sbr.rel (%p444) target = $region36
        $region35: #{net_forward.1} parent=11 // pred_region
          _
        $region36: #{net_forward.1} parent=11 // pred_fallthru
          _
        // Predicated region
        $region37: #{net_forward.1} parent=11 // pred_check
          %p447 = pneg %p199
        $region38: #{net_forward.1} parent=11 // pred_check_branch
          %449 = sbr.rel (%p447) target = $region40
        $region39: #{net_forward.1} parent=11 // pred_region
          _
        $region40: #{net_forward.1} parent=11 // pred_fallthru
          _
        // Predicated region
        $region41: #{net_forward.1} parent=11 // pred_check
          %p450 = pneg %p220
        $region42: #{net_forward.1} parent=11 // pred_check_branch
          %452 = sbr.rel (%p450) target = $region44
        $region43: #{net_forward.1} parent=11 // pred_region
          _
        $region44: #{net_forward.1} parent=11 // pred_fallthru
          _
        // Predicated region
        $region45: #{net_forward.1} parent=11 // pred_check
          %p453 = pneg %p241
        $region46: #{net_forward.1} parent=11 // pred_check_branch
          %455 = sbr.rel (%p453) target = $region48
        $region47: #{net_forward.1} parent=11 // pred_region
          _
        $region48: #{net_forward.1} parent=11 // pred_fallthru
          _
        // Predicated region
        $region49: #{net_forward.1} parent=11 // pred_check
          %p456 = pneg %p262
        $region50: #{net_forward.1} parent=11 // pred_check_branch
          %458 = sbr.rel (%p456) target = $region52
        $region51: #{net_forward.1} parent=11 // pred_region
          _
        $region52: #{net_forward.1} parent=11 // pred_fallthru
          _
        // Predicated region
        $region53: #{net_forward.1} parent=11 // pred_check
          %p459 = pneg %p283
        $region54: #{net_forward.1} parent=11 // pred_check_branch
          %461 = sbr.rel (%p459) target = $region56
        $region55: #{net_forward.1} parent=11 // pred_region
          _
        $region56: #{net_forward.1} parent=11 // pred_fallthru
          _
        // Predicated region
        $region57: #{net_forward.1} parent=11 // pred_check
          %p462 = pneg %p304
        $region58: #{net_forward.1} parent=11 // pred_check_branch
          %464 = sbr.rel (%p462) target = $region60
        $region59: #{net_forward.1} parent=11 // pred_region
          _
        $region60: #{net_forward.1} parent=11 // pred_fallthru
          _
        // Predicated region
        $region61: #{net_forward.1} parent=11 // pred_check
          %p465 = pneg %p325
        $region62: #{net_forward.1} parent=11 // pred_check_branch
          %467 = sbr.rel (%p465) target = $region64
        $region63: #{net_forward.1} parent=11 // pred_region
          _
        $region64: #{net_forward.1} parent=11 // pred_fallthru
          _
        // Predicated region
        $region65: #{net_forward.1} parent=11 // pred_check
          %p468 = pneg %p346
        $region66: #{net_forward.1} parent=11 // pred_check_branch
          %470 = sbr.rel (%p468) target = $region68
        $region67: #{net_forward.1} parent=11 // pred_region
          _
        $region68: #{net_forward.1} parent=11 // pred_fallthru
          _
        // Predicated region
        $region69: #{net_forward.1} parent=11 // pred_check
          %p471 = pneg %p367
        $region70: #{net_forward.1} parent=11 // pred_check_branch
          %473 = sbr.rel (%p471) target = $region72
        $region71: #{net_forward.1} parent=11 // pred_region
          _
        $region72: #{net_forward.1} parent=11 // pred_fallthru
          _
        // Predicated region
        $region73: #{net_forward.1} parent=11 // pred_check
          %p474 = pneg %p388
        $region74: #{net_forward.1} parent=11 // pred_check_branch
          %476 = sbr.rel (%p474) target = $region76
        $region75: #{net_forward.1} parent=11 // pred_region
          _
        $region76: #{net_forward.1} parent=11 // pred_fallthru
          _
      $region12: #{net_forward.1} parent=5 // pred_fallthru
        _
      %p477 = scmp.lt.s32.totalorder %s26, 2
      // Predicated region
      $region77: #{net_forward.1} parent=5 // pred_check
        %p478 = pneg %p477
      $region78: #{net_forward.1} parent=5 // pred_check_branch
        %480 = sbr.rel (%p478) target = $region80
      $region79: #{net_forward.1} parent=5 // pred_region
        // Predicated region
        $region81: #{net_forward.1} parent=79 // pred_check
          %p481 = pneg %p46
        $region82: #{net_forward.1} parent=79 // pred_check_branch
          %483 = sbr.rel (%p481) target = $region84
        $region83: #{net_forward.1} parent=79 // pred_region
          %p484 = scmp.lt.s32.totalorder %s26, 1
          %s485 = scalar_select %p484, %s26, 1
          %s486 = smul.addr %s485, 8
          %s487 = smul.addr %s486, 8
          %s488 = scalar_lea.vmem %s0, %s487
        $region84: #{net_forward.1} parent=79 // pred_fallthru
          _
      $region80: #{net_forward.1} parent=5 // pred_fallthru
        _
      %p489 = scmp.le.s32.totalorder 1, %s26
      %p490 = scmp.lt.s32.totalorder %s26, 3
      %p491 = pnand %p489, %p490
      %p492 = pneg %p491
      // Predicated region
      $region85: #{net_forward.1} parent=5 // pred_check
        _
      $region86: #{net_forward.1} parent=5 // pred_check_branch
        %494 = sbr.rel (%p491) target = $region88
      $region87: #{net_forward.1} parent=5 // pred_region
        %s495 = ssub.s32 %s26, 1
        %p496 = scmp.lt.s32.totalorder %s31, 1
        %s497 = scalar_select %p496, %s31, 1
        %s498 = smul.addr %s497, 8
        %s499 = smul.addr %s498, 8
        %s500 = scalar_lea.vmem %s0, %s499
        %p501 = pneg %p52
        %p502 = pneg %p49
        %p503 = pneg %p73
        %p504 = pneg %p70
        %p505 = pneg %p94
        %p506 = pneg %p91
        %p507 = pneg %p115
        %p508 = pneg %p112
        %p509 = pneg %p136
        %p510 = pneg %p133
        %p511 = pneg %p157
        %p512 = pneg %p154
        %p513 = pneg %p178
        %p514 = pneg %p175
        %p515 = pneg %p199
        %p516 = pneg %p196
        %p517 = pneg %p220
        %p518 = pneg %p217
        %p519 = pneg %p241
        %p520 = pneg %p238
        %p521 = pneg %p262
        %p522 = pneg %p259
        %p523 = pneg %p283
        %p524 = pneg %p280
        %p525 = pneg %p304
        %p526 = pneg %p301
        %p527 = pneg %p325
        %p528 = pneg %p322
        %p529 = pneg %p346
        %p530 = pneg %p343
        %p531 = pneg %p367
        %p532 = pneg %p364
        %p533 = pneg %p388
        %p534 = pneg %p385
        %p535 = pneg %p414
        %p536 = pneg %p411
        %s537 = sand.u32 %s401, 1
        %s538 = scalar_lea.sflag [#allocation3], %s537
        %s539 = sand.u32 %s401, 1
        %s540 = scalar_lea.vmem [#allocation2], %s539
        %p541 = scmp.lt.s32.totalorder %s31, 1
        %s542 = scalar_select %p541, %s31, 1
        %s543 = smul.addr %s542, 8
        %s544 = smul.addr %s543, 8
        %s545 = scalar_lea.vmem %s0, %s544
        %v546 = vld [vmem:[%s545] sm:$0xff]
        %v547 = vld [vmem:[%s545 + $0x8] sm:$0xff]
        %v548 = vld [vmem:[%s545 + $0x10] sm:$0xff]
        %v549 = vld [vmem:[%s545 + $0x18] sm:$0xff]
        %v550 = vld [vmem:[%s545 + $0x20] sm:$0xff]
        %v551 = vld [vmem:[%s545 + $0x28] sm:$0xff]
        %v552 = vld [vmem:[%s545 + $0x30] sm:$0xff]
        %v553 = vld [vmem:[%s545 + $0x38] sm:$0xff]
        %v554 = vld [vmem:[%s1] sm:$0xff]
        %v555 = vld [vmem:[%s1 + $0x8] sm:$0xff]
        %v556 = vld [vmem:[%s1 + $0x10] sm:$0xff]
        %v557 = vld [vmem:[%s1 + $0x18] sm:$0xff]
        %v558 = vld [vmem:[%s1 + $0x20] sm:$0xff]
        %v559 = vld [vmem:[%s1 + $0x28] sm:$0xff]
        %v560 = vld [vmem:[%s1 + $0x30] sm:$0xff]
        %v561 = vld [vmem:[%s1 + $0x38] sm:$0xff]
        %v562 = vld [vmem:[%s1 + $0x40] sm:$0xff]
        %v563 = vld [vmem:[%s1 + $0x48] sm:$0xff]
        %v564 = vld [vmem:[%s1 + $0x50] sm:$0xff]
        %v565 = vld [vmem:[%s1 + $0x58] sm:$0xff]
        %v566 = vld [vmem:[%s1 + $0x60] sm:$0xff]
        %v567 = vld [vmem:[%s1 + $0x68] sm:$0xff]
        %v568 = vld [vmem:[%s1 + $0x70] sm:$0xff]
        %v569 = vld [vmem:[%s1 + $0x78] sm:$0xff]
        %v570 = vld [vmem:[%s1 + $0x80] sm:$0xff]
        %v571 = vld [vmem:[%s1 + $0x88] sm:$0xff]
        %v572 = vld [vmem:[%s1 + $0x90] sm:$0xff]
        %v573 = vld [vmem:[%s1 + $0x98] sm:$0xff]
        %v574 = vld [vmem:[%s1 + $0xa0] sm:$0xff]
        %v575 = vld [vmem:[%s1 + $0xa8] sm:$0xff]
        %v576 = vld [vmem:[%s1 + $0xb0] sm:$0xff]
        %v577 = vld [vmem:[%s1 + $0xb8] sm:$0xff]
        %s578 = scalar_lea.vmem %s1, 192
        %v579 = vld [vmem:[%s578] sm:$0xff]
        %v580 = vld [vmem:[%s578 + $0x8] sm:$0xff]
        %v581 = vld [vmem:[%s578 + $0x10] sm:$0xff]
        %v582 = vld [vmem:[%s578 + $0x18] sm:$0xff]
        %v583 = vld [vmem:[%s578 + $0x20] sm:$0xff]
        %v584 = vld [vmem:[%s578 + $0x28] sm:$0xff]
        %v585 = vld [vmem:[%s578 + $0x30] sm:$0xff]
        %v586 = vld [vmem:[%s578 + $0x38] sm:$0xff]
        %v587 = vld [vmem:[%s578 + $0x40] sm:$0xff]
        %v588 = vld [vmem:[%s578 + $0x48] sm:$0xff]
        %v589 = vld [vmem:[%s578 + $0x50] sm:$0xff]
        %v590 = vld [vmem:[%s578 + $0x58] sm:$0xff]
        %v591 = vld [vmem:[%s578 + $0x60] sm:$0xff]
        %v592 = vld [vmem:[%s578 + $0x68] sm:$0xff]
        %v593 = vld [vmem:[%s578 + $0x70] sm:$0xff]
        %v594 = vld [vmem:[%s578 + $0x78] sm:$0xff]
        %v595 = vld [vmem:[%s578 + $0x80] sm:$0xff]
        %v596 = vld [vmem:[%s578 + $0x88] sm:$0xff]
        %v597 = vld [vmem:[%s578 + $0x90] sm:$0xff]
        %v598 = vld [vmem:[%s578 + $0x98] sm:$0xff]
        %v599 = vld [vmem:[%s578 + $0xa0] sm:$0xff]
        %v600 = vld [vmem:[%s578 + $0xa8] sm:$0xff]
        %v601 = vld [vmem:[%s578 + $0xb0] sm:$0xff]
        %v602 = vld [vmem:[%s578 + $0xb8] sm:$0xff]
        %vm611 = vcmask 1046528
        %v612 = vrot.slane %v546, 1
        %v613 = vrot.slane %v547, 1
        %v614 = vsel %vm611, %v612, %v613
        %v615 = vrot.slane %v548, 1
        %v616 = vsel %vm611, %v613, %v615
        %v617 = vrot.slane %v549, 1
        %v618 = vsel %vm611, %v615, %v617
        %v619 = vrot.slane %v550, 1
        %v620 = vsel %vm611, %v617, %v619
        %v621 = vrot.slane %v551, 1
        %v622 = vsel %vm611, %v619, %v621
        %v623 = vrot.slane %v552, 1
        %v624 = vsel %vm611, %v621, %v623
        %v625 = vrot.slane %v553, 1
        %v626 = vsel %vm611, %v623, %v625
        %vm627 = vcmask 523264
        %v628 = vsel %vm627, %v614, 0
        %v630 = vsel %vm627, %v616, 0
        %v632 = vsel %vm627, %v618, 0
        %v634 = vsel %vm627, %v620, 0
        %v636 = vsel %vm627, %v622, 0
        %v638 = vsel %vm627, %v624, 0
        %v640 = vsel %vm627, %v626, 0
        %v642 = vsel %vm627, %v625, 0
        %644 = vmatprep.subr.mxu0 %v580
        %645 = vmatpush1.msra.mxu0 %v579
        %646 = vmatprep.subr.mxu0 %v583
        %647 = vmatpush1.msra.mxu0 %v582
        %648 = vmatprep.subr.mxu0 %v586
        %649 = vmatpush1.msra.mxu0 %v585
        %650 = vmatprep.subr.mxu0 %v589
        %651 = vmatpush1.msra.mxu0 %v588
        %652 = vmatprep.subr.mxu0 %v592
        %653 = vmatpush1.msra.mxu0 %v591
        %654 = vmatprep.subr.mxu0 %v595
        %655 = vmatpush1.msra.mxu0 %v594
        %656 = vmatprep.subr.mxu0 %v598
        %657 = vmatpush1.msra.mxu0 %v597
        %658 = vmatprep.subr.mxu0 %v601
        %659 = vmatpush1.msra.mxu0 %v600
        %660 = vmatprep.subr.mxu0 0.0
        %661 = vmatpush1.msra.mxu0 0.0
        %662 = vmatprep.subr.mxu0 0.0
        %663 = vmatpush1.msra.mxu0 0.0
        %664 = vmatprep.subr.mxu0 0.0
        %665 = vmatpush1.msra.mxu0 0.0
        %666 = vmatprep.subr.mxu0 0.0
        %667 = vmatpush1.msra.mxu0 0.0
        %668 = vmatprep.subr.mxu0 0.0
        %669 = vmatpush1.msra.mxu0 0.0
        %670 = vmatprep.subr.mxu0 0.0
        %671 = vmatpush1.msra.mxu0 0.0
        %672 = vmatprep.subr.mxu0 0.0
        %673 = vmatpush1.msra.mxu0 0.0
        %674 = vmatprep.subr.mxu0 0.0
        %675 = vmatpush1.msra.mxu0 0.0
        %676 = vmatprep.subr.mxu0 0.0
        %677 = vmatpush1.msra.mxu0 0.0
        %678 = vmatprep.subr.mxu0 0.0
        %679 = vmatpush1.msra.mxu0 0.0
        %680 = vmatprep.subr.mxu0 0.0
        %681 = vmatpush1.msra.mxu0 0.0
        %682 = vmatprep.subr.mxu0 0.0
        %683 = vmatpush1.msra.mxu0 0.0
        %684 = vmatprep.subr.mxu0 0.0
        %685 = vmatpush1.msra.mxu0 0.0
        %686 = vmatprep.subr.mxu0 0.0
        %687 = vmatpush1.msra.mxu0 0.0
        %688 = vmatprep.subr.mxu0 0.0
        %689 = vmatpush1.msra.mxu0 0.0
        %690 = vmatprep.subr.mxu0 0.0
        %691 = vmatpush1.msra.mxu0 0.0
        %692 = vmatprep.subr.mxu0 0.0
        %693 = vmatpush1.msra.mxu0 0.0
        %694 = vmatprep.subr.mxu0 0.0
        %695 = vmatpush1.msra.mxu0 0.0
        %696 = vmatprep.subr.mxu0 0.0
        %697 = vmatpush1.msra.mxu0 0.0
        %698 = vmatprep.subr.mxu0 0.0
        %699 = vmatpush1.msra.mxu0 0.0
        %700 = vmatprep.subr.mxu0 0.0
        %701 = vmatpush1.msra.mxu0 0.0
        %702 = vmatprep.subr.mxu0 0.0
        %703 = vmatpush1.msra.mxu0 0.0
        %704 = vmatprep.subr.mxu0 0.0
        %705 = vmatpush1.msra.mxu0 0.0
        %706 = vmatprep.subr.mxu0 0.0
        %707 = vmatpush1.msra.mxu0 0.0
        %708 = vmatprep.mubr.f32.mxu0 0.0
        %709 = vmatmul.mubr.f32.gmra.mrb[0].mxu0 %v628
        %v710 = vpop.f32.mrb[0].mxu0
        %v711 = vadd.f32 0.0, %v710
        %v712 = vpop.f32.mrb[0].mxu0
        %v713 = vadd.f32 0.0, %v712
        %714 = vmatprep.mubr.f32.mxu0 0.0
        %715 = vmatmul.mubr.f32.gmra.mrb[0].mxu0 %v630
        %v716 = vpop.f32.mrb[0].mxu0
        %v717 = vadd.f32 0.0, %v716
        %v718 = vpop.f32.mrb[0].mxu0
        %v719 = vadd.f32 0.0, %v718
        %720 = vmatprep.mubr.f32.mxu0 0.0
        %721 = vmatmul.mubr.f32.gmra.mrb[0].mxu0 %v632
        %v722 = vpop.f32.mrb[0].mxu0
        %v723 = vadd.f32 0.0, %v722
        %v724 = vpop.f32.mrb[0].mxu0
        %v725 = vadd.f32 0.0, %v724
        %726 = vmatprep.mubr.f32.mxu0 0.0
        %727 = vmatmul.mubr.f32.gmra.mrb[0].mxu0 %v634
        %v728 = vpop.f32.mrb[0].mxu0
        %v729 = vadd.f32 0.0, %v728
        %v730 = vpop.f32.mrb[0].mxu0
        %v731 = vadd.f32 0.0, %v730
        %732 = vmatprep.mubr.f32.mxu0 0.0
        %733 = vmatmul.mubr.f32.gmra.mrb[0].mxu0 %v636
        %v734 = vpop.f32.mrb[0].mxu0
        %v735 = vadd.f32 0.0, %v734
        %v736 = vpop.f32.mrb[0].mxu0
        %v737 = vadd.f32 0.0, %v736
        %738 = vmatprep.mubr.f32.mxu0 0.0
        %739 = vmatmul.mubr.f32.gmra.mrb[0].mxu0 %v638
        %v740 = vpop.f32.mrb[0].mxu0
        %v741 = vadd.f32 0.0, %v740
        %v742 = vpop.f32.mrb[0].mxu0
        %v743 = vadd.f32 0.0, %v742
        %744 = vmatprep.mubr.f32.mxu0 0.0
        %745 = vmatmul.mubr.f32.gmra.mrb[0].mxu0 %v640
        %v746 = vpop.f32.mrb[0].mxu0
        %v747 = vadd.f32 0.0, %v746
        %v748 = vpop.f32.mrb[0].mxu0
        %v749 = vadd.f32 0.0, %v748
        %750 = vmatprep.mubr.f32.mxu0 0.0
        %751 = vmatmul.mubr.f32.gmra.mrb[0].mxu0 %v642
        %v752 = vpop.f32.mrb[0].mxu0
        %v753 = vadd.f32 0.0, %v752
        %v754 = vpop.f32.mrb[0].mxu0
        %v755 = vadd.f32 0.0, %v754
        %756 = vdwg.mxu0
        %757 = vmatprep.subr.mxu0 0.0
        %758 = vmatpush1.msra.mxu0 %v581
        %759 = vmatprep.subr.mxu0 0.0
        %760 = vmatpush1.msra.mxu0 %v584
        %761 = vmatprep.subr.mxu0 0.0
        %762 = vmatpush1.msra.mxu0 %v587
        %763 = vmatprep.subr.mxu0 0.0
        %764 = vmatpush1.msra.mxu0 %v590
        %765 = vmatprep.subr.mxu0 0.0
        %766 = vmatpush1.msra.mxu0 %v593
        %767 = vmatprep.subr.mxu0 0.0
        %768 = vmatpush1.msra.mxu0 %v596
        %769 = vmatprep.subr.mxu0 0.0
        %770 = vmatpush1.msra.mxu0 %v599
        %771 = vmatprep.subr.mxu0 0.0
        %772 = vmatpush1.msra.mxu0 %v602
        %773 = vmatprep.subr.mxu0 0.0
        %774 = vmatpush1.msra.mxu0 0.0
        %775 = vmatprep.subr.mxu0 0.0
        %776 = vmatpush1.msra.mxu0 0.0
        %777 = vmatprep.subr.mxu0 0.0
        %778 = vmatpush1.msra.mxu0 0.0
        %779 = vmatprep.subr.mxu0 0.0
        %780 = vmatpush1.msra.mxu0 0.0
        %781 = vmatprep.subr.mxu0 0.0
        %782 = vmatpush1.msra.mxu0 0.0
        %783 = vmatprep.subr.mxu0 0.0
        %784 = vmatpush1.msra.mxu0 0.0
        %785 = vmatprep.subr.mxu0 0.0
        %786 = vmatpush1.msra.mxu0 0.0
        %787 = vmatprep.subr.mxu0 0.0
        %788 = vmatpush1.msra.mxu0 0.0
        %789 = vmatprep.subr.mxu0 0.0
        %790 = vmatpush1.msra.mxu0 0.0
        %791 = vmatprep.subr.mxu0 0.0
        %792 = vmatpush1.msra.mxu0 0.0
        %793 = vmatprep.subr.mxu0 0.0
        %794 = vmatpush1.msra.mxu0 0.0
        %795 = vmatprep.subr.mxu0 0.0
        %796 = vmatpush1.msra.mxu0 0.0
        %797 = vmatprep.subr.mxu0 0.0
        %798 = vmatpush1.msra.mxu0 0.0
        %799 = vmatprep.subr.mxu0 0.0
        %800 = vmatpush1.msra.mxu0 0.0
        %801 = vmatprep.subr.mxu0 0.0
        %802 = vmatpush1.msra.mxu0 0.0
        %803 = vmatprep.subr.mxu0 0.0
        %804 = vmatpush1.msra.mxu0 0.0
        %805 = vmatprep.subr.mxu0 0.0
        %806 = vmatpush1.msra.mxu0 0.0
        %807 = vmatprep.subr.mxu0 0.0
        %808 = vmatpush1.msra.mxu0 0.0
        %809 = vmatprep.subr.mxu0 0.0
        %810 = vmatpush1.msra.mxu0 0.0
        %811 = vmatprep.subr.mxu0 0.0
        %812 = vmatpush1.msra.mxu0 0.0
        %813 = vmatprep.subr.mxu0 0.0
        %814 = vmatpush1.msra.mxu0 0.0
        %815 = vmatprep.subr.mxu0 0.0
        %816 = vmatpush1.msra.mxu0 0.0
        %817 = vmatprep.subr.mxu0 0.0
        %818 = vmatpush1.msra.mxu0 0.0
        %819 = vmatprep.subr.mxu0 0.0
        %820 = vmatpush1.msra.mxu0 0.0
        %821 = vmatprep.mubr.f32.mxu0 0.0
        %822 = vmatmul.mubr.f32.gmra.mrb[0].mxu0 %v628
        %v823 = vpop.f32.mrb[0].mxu0
        %v824 = vadd.f32 0.0, %v823
        %v825 = vpop.f32.mrb[0].mxu0
        %826 = vmatprep.mubr.f32.mxu0 0.0
        %827 = vmatmul.mubr.f32.gmra.mrb[0].mxu0 %v630
        %v828 = vpop.f32.mrb[0].mxu0
        %v829 = vadd.f32 0.0, %v828
        %v830 = vpop.f32.mrb[0].mxu0
        %831 = vmatprep.mubr.f32.mxu0 0.0
        %832 = vmatmul.mubr.f32.gmra.mrb[0].mxu0 %v632
        %v833 = vpop.f32.mrb[0].mxu0
        %v834 = vadd.f32 0.0, %v833
        %v835 = vpop.f32.mrb[0].mxu0
        %836 = vmatprep.mubr.f32.mxu0 0.0
        %837 = vmatmul.mubr.f32.gmra.mrb[0].mxu0 %v634
        %v838 = vpop.f32.mrb[0].mxu0
        %v839 = vadd.f32 0.0, %v838
        %v840 = vpop.f32.mrb[0].mxu0
        %841 = vmatprep.mubr.f32.mxu0 0.0
        %842 = vmatmul.mubr.f32.gmra.mrb[0].mxu0 %v636
        %v843 = vpop.f32.mrb[0].mxu0
        %v844 = vadd.f32 0.0, %v843
        %v845 = vpop.f32.mrb[0].mxu0
        %846 = vmatprep.mubr.f32.mxu0 0.0
        %847 = vmatmul.mubr.f32.gmra.mrb[0].mxu0 %v638
        %v848 = vpop.f32.mrb[0].mxu0
        %v849 = vadd.f32 0.0, %v848
        %v850 = vpop.f32.mrb[0].mxu0
        %851 = vmatprep.mubr.f32.mxu0 0.0
        %852 = vmatmul.mubr.f32.gmra.mrb[0].mxu0 %v640
        %v853 = vpop.f32.mrb[0].mxu0
        %v854 = vadd.f32 0.0, %v853
        %v855 = vpop.f32.mrb[0].mxu0
        %856 = vmatprep.mubr.f32.mxu0 0.0
        %857 = vmatmul.mubr.f32.gmra.mrb[0].mxu0 %v642
        %v858 = vpop.f32.mrb[0].mxu0
        %v859 = vadd.f32 0.0, %v858
        %v860 = vpop.f32.mrb[0].mxu0
        %861 = vdwg.mxu0
        %v862 = vsel %vm627, %v546, 0
        %v864 = vsel %vm627, %v547, 0
        %v866 = vsel %vm627, %v548, 0
        %v868 = vsel %vm627, %v549, 0
        %v870 = vsel %vm627, %v550, 0
        %v872 = vsel %vm627, %v551, 0
        %v874 = vsel %vm627, %v552, 0
        %v876 = vsel %vm627, %v553, 0
        %878 = vmatprep.subr.mxu0 %v555
        %879 = vmatpush1.msra.mxu0 %v554
        %880 = vmatprep.subr.mxu0 %v558
        %881 = vmatpush1.msra.mxu0 %v557
        %882 = vmatprep.subr.mxu0 %v561
        %883 = vmatpush1.msra.mxu0 %v560
        %884 = vmatprep.subr.mxu0 %v564
        %885 = vmatpush1.msra.mxu0 %v563
        %886 = vmatprep.subr.mxu0 %v567
        %887 = vmatpush1.msra.mxu0 %v566
        %888 = vmatprep.subr.mxu0 %v570
        %889 = vmatpush1.msra.mxu0 %v569
        %890 = vmatprep.subr.mxu0 %v573
        %891 = vmatpush1.msra.mxu0 %v572
        %892 = vmatprep.subr.mxu0 %v576
        %893 = vmatpush1.msra.mxu0 %v575
        %894 = vmatprep.subr.mxu0 0.0
        %895 = vmatpush1.msra.mxu0 0.0
        %896 = vmatprep.subr.mxu0 0.0
        %897 = vmatpush1.msra.mxu0 0.0
        %898 = vmatprep.subr.mxu0 0.0
        %899 = vmatpush1.msra.mxu0 0.0
        %900 = vmatprep.subr.mxu0 0.0
        %901 = vmatpush1.msra.mxu0 0.0
        %902 = vmatprep.subr.mxu0 0.0
        %903 = vmatpush1.msra.mxu0 0.0
        %904 = vmatprep.subr.mxu0 0.0
        %905 = vmatpush1.msra.mxu0 0.0
        %906 = vmatprep.subr.mxu0 0.0
        %907 = vmatpush1.msra.mxu0 0.0
        %908 = vmatprep.subr.mxu0 0.0
        %909 = vmatpush1.msra.mxu0 0.0
        %910 = vmatprep.subr.mxu0 0.0
        %911 = vmatpush1.msra.mxu0 0.0
        %912 = vmatprep.subr.mxu0 0.0
        %913 = vmatpush1.msra.mxu0 0.0
        %914 = vmatprep.subr.mxu0 0.0
        %915 = vmatpush1.msra.mxu0 0.0
        %916 = vmatprep.subr.mxu0 0.0
        %917 = vmatpush1.msra.mxu0 0.0
        %918 = vmatprep.subr.mxu0 0.0
        %919 = vmatpush1.msra.mxu0 0.0
        %920 = vmatprep.subr.mxu0 0.0
        %921 = vmatpush1.msra.mxu0 0.0
        %922 = vmatprep.subr.mxu0 0.0
        %923 = vmatpush1.msra.mxu0 0.0
        %924 = vmatprep.subr.mxu0 0.0
        %925 = vmatpush1.msra.mxu0 0.0
        %926 = vmatprep.subr.mxu0 0.0
        %927 = vmatpush1.msra.mxu0 0.0
        %928 = vmatprep.subr.mxu0 0.0
        %929 = vmatpush1.msra.mxu0 0.0
        %930 = vmatprep.subr.mxu0 0.0
        %931 = vmatpush1.msra.mxu0 0.0
        %932 = vmatprep.subr.mxu0 0.0
        %933 = vmatpush1.msra.mxu0 0.0
        %934 = vmatprep.subr.mxu0 0.0
        %935 = vmatpush1.msra.mxu0 0.0
        %936 = vmatprep.subr.mxu0 0.0
        %937 = vmatpush1.msra.mxu0 0.0
        %938 = vmatprep.subr.mxu0 0.0
        %939 = vmatpush1.msra.mxu0 0.0
        %940 = vmatprep.subr.mxu0 0.0
        %941 = vmatpush1.msra.mxu0 0.0
        %942 = vmatprep.mubr.f32.mxu0 0.0
        %943 = vmatmul.mubr.f32.gmra.mrb[0].mxu0 %v862
        %v944 = vpop.f32.mrb[0].mxu0
        %v945 = vadd.f32 %v711, %v944
        %v946 = vpop.f32.mrb[0].mxu0
        %v947 = vadd.f32 %v713, %v946
        %948 = vmatprep.mubr.f32.mxu0 0.0
        %949 = vmatmul.mubr.f32.gmra.mrb[0].mxu0 %v864
        %v950 = vpop.f32.mrb[0].mxu0
        %v951 = vadd.f32 %v717, %v950
        %v952 = vpop.f32.mrb[0].mxu0
        %v953 = vadd.f32 %v719, %v952
        %954 = vmatprep.mubr.f32.mxu0 0.0
        %955 = vmatmul.mubr.f32.gmra.mrb[0].mxu0 %v866
        %v956 = vpop.f32.mrb[0].mxu0
        %v957 = vadd.f32 %v723, %v956
        %v958 = vpop.f32.mrb[0].mxu0
        %v959 = vadd.f32 %v725, %v958
        %960 = vmatprep.mubr.f32.mxu0 0.0
        %961 = vmatmul.mubr.f32.gmra.mrb[0].mxu0 %v868
        %v962 = vpop.f32.mrb[0].mxu0
        %v963 = vadd.f32 %v729, %v962
        %v964 = vpop.f32.mrb[0].mxu0
        %v965 = vadd.f32 %v731, %v964
        %966 = vmatprep.mubr.f32.mxu0 0.0
        %967 = vmatmul.mubr.f32.gmra.mrb[0].mxu0 %v870
        %v968 = vpop.f32.mrb[0].mxu0
        %v969 = vadd.f32 %v735, %v968
        %v970 = vpop.f32.mrb[0].mxu0
        %v971 = vadd.f32 %v737, %v970
        %972 = vmatprep.mubr.f32.mxu0 0.0
        %973 = vmatmul.mubr.f32.gmra.mrb[0].mxu0 %v872
        %v974 = vpop.f32.mrb[0].mxu0
        %v975 = vadd.f32 %v741, %v974
        %v976 = vpop.f32.mrb[0].mxu0
        %v977 = vadd.f32 %v743, %v976
        %978 = vmatprep.mubr.f32.mxu0 0.0
        %979 = vmatmul.mubr.f32.gmra.mrb[0].mxu0 %v874
        %v980 = vpop.f32.mrb[0].mxu0
        %v981 = vadd.f32 %v747, %v980
        %v982 = vpop.f32.mrb[0].mxu0
        %v983 = vadd.f32 %v749, %v982
        %984 = vmatprep.mubr.f32.mxu0 0.0
        %985 = vmatmul.mubr.f32.gmra.mrb[0].mxu0 %v876
        %v986 = vpop.f32.mrb[0].mxu0
        %v987 = vadd.f32 %v753, %v986
        %v988 = vpop.f32.mrb[0].mxu0
        %v989 = vadd.f32 %v755, %v988
        %990 = vdwg.mxu0
        %991 = vmatprep.subr.mxu0 0.0
        %992 = vmatpush1.msra.mxu0 %v556
        %993 = vmatprep.subr.mxu0 0.0
        %994 = vmatpush1.msra.mxu0 %v559
        %995 = vmatprep.subr.mxu0 0.0
        %996 = vmatpush1.msra.mxu0 %v562
        %997 = vmatprep.subr.mxu0 0.0
        %998 = vmatpush1.msra.mxu0 %v565
        %999 = vmatprep.subr.mxu0 0.0
        %1000 = vmatpush1.msra.mxu0 %v568
        %1001 = vmatprep.subr.mxu0 0.0
        %1002 = vmatpush1.msra.mxu0 %v571
        %1003 = vmatprep.subr.mxu0 0.0
        %1004 = vmatpush1.msra.mxu0 %v574
        %1005 = vmatprep.subr.mxu0 0.0
        %1006 = vmatpush1.msra.mxu0 %v577
        %1007 = vmatprep.subr.mxu0 0.0
        %1008 = vmatpush1.msra.mxu0 0.0
        %1009 = vmatprep.subr.mxu0 0.0
        %1010 = vmatpush1.msra.mxu0 0.0
        %1011 = vmatprep.subr.mxu0 0.0
        %1012 = vmatpush1.msra.mxu0 0.0
        %1013 = vmatprep.subr.mxu0 0.0
        %1014 = vmatpush1.msra.mxu0 0.0
        %1015 = vmatprep.subr.mxu0 0.0
        %1016 = vmatpush1.msra.mxu0 0.0
        %1017 = vmatprep.subr.mxu0 0.0
        %1018 = vmatpush1.msra.mxu0 0.0
        %1019 = vmatprep.subr.mxu0 0.0
        %1020 = vmatpush1.msra.mxu0 0.0
        %1021 = vmatprep.subr.mxu0 0.0
        %1022 = vmatpush1.msra.mxu0 0.0
        %1023 = vmatprep.subr.mxu0 0.0
        %1024 = vmatpush1.msra.mxu0 0.0
        %1025 = vmatprep.subr.mxu0 0.0
        %1026 = vmatpush1.msra.mxu0 0.0
        %1027 = vmatprep.subr.mxu0 0.0
        %1028 = vmatpush1.msra.mxu0 0.0
        %1029 = vmatprep.subr.mxu0 0.0
        %1030 = vmatpush1.msra.mxu0 0.0
        %1031 = vmatprep.subr.mxu0 0.0
        %1032 = vmatpush1.msra.mxu0 0.0
        %1033 = vmatprep.subr.mxu0 0.0
        %1034 = vmatpush1.msra.mxu0 0.0
        %1035 = vmatprep.subr.mxu0 0.0
        %1036 = vmatpush1.msra.mxu0 0.0
        %1037 = vmatprep.subr.mxu0 0.0
        %1038 = vmatpush1.msra.mxu0 0.0
        %1039 = vmatprep.subr.mxu0 0.0
        %1040 = vmatpush1.msra.mxu0 0.0
        %1041 = vmatprep.subr.mxu0 0.0
        %1042 = vmatpush1.msra.mxu0 0.0
        %1043 = vmatprep.subr.mxu0 0.0
        %1044 = vmatpush1.msra.mxu0 0.0
        %1045 = vmatprep.subr.mxu0 0.0
        %1046 = vmatpush1.msra.mxu0 0.0
        %1047 = vmatprep.subr.mxu0 0.0
        %1048 = vmatpush1.msra.mxu0 0.0
        %1049 = vmatprep.subr.mxu0 0.0
        %1050 = vmatpush1.msra.mxu0 0.0
        %1051 = vmatprep.subr.mxu0 0.0
        %1052 = vmatpush1.msra.mxu0 0.0
        %1053 = vmatprep.subr.mxu0 0.0
        %1054 = vmatpush1.msra.mxu0 0.0
        %1055 = vmatprep.mubr.f32.mxu0 0.0
        %1056 = vmatmul.mubr.f32.gmra.mrb[0].mxu0 %v862
        %v1057 = vpop.f32.mrb[0].mxu0
        %v1058 = vadd.f32 %v824, %v1057
        %v1059 = vpop.f32.mrb[0].mxu0
        %1060 = vmatprep.mubr.f32.mxu0 0.0
        %1061 = vmatmul.mubr.f32.gmra.mrb[0].mxu0 %v864
        %v1062 = vpop.f32.mrb[0].mxu0
        %v1063 = vadd.f32 %v829, %v1062
        %v1064 = vpop.f32.mrb[0].mxu0
        %1065 = vmatprep.mubr.f32.mxu0 0.0
        %1066 = vmatmul.mubr.f32.gmra.mrb[0].mxu0 %v866
        %v1067 = vpop.f32.mrb[0].mxu0
        %v1068 = vadd.f32 %v834, %v1067
        %v1069 = vpop.f32.mrb[0].mxu0
        %1070 = vmatprep.mubr.f32.mxu0 0.0
        %1071 = vmatmul.mubr.f32.gmra.mrb[0].mxu0 %v868
        %v1072 = vpop.f32.mrb[0].mxu0
        %v1073 = vadd.f32 %v839, %v1072
        %v1074 = vpop.f32.mrb[0].mxu0
        %1075 = vmatprep.mubr.f32.mxu0 0.0
        %1076 = vmatmul.mubr.f32.gmra.mrb[0].mxu0 %v870
        %v1077 = vpop.f32.mrb[0].mxu0
        %v1078 = vadd.f32 %v844, %v1077
        %v1079 = vpop.f32.mrb[0].mxu0
        %1080 = vmatprep.mubr.f32.mxu0 0.0
        %1081 = vmatmul.mubr.f32.gmra.mrb[0].mxu0 %v872
        %v1082 = vpop.f32.mrb[0].mxu0
        %v1083 = vadd.f32 %v849, %v1082
        %v1084 = vpop.f32.mrb[0].mxu0
        %1085 = vmatprep.mubr.f32.mxu0 0.0
        %1086 = vmatmul.mubr.f32.gmra.mrb[0].mxu0 %v874
        %v1087 = vpop.f32.mrb[0].mxu0
        %v1088 = vadd.f32 %v854, %v1087
        %v1089 = vpop.f32.mrb[0].mxu0
        %1090 = vmatprep.mubr.f32.mxu0 0.0
        %1091 = vmatmul.mubr.f32.gmra.mrb[0].mxu0 %v876
        %v1092 = vpop.f32.mrb[0].mxu0
        %v1093 = vadd.f32 %v859, %v1092
        %v1094 = vpop.f32.mrb[0].mxu0
        %1095 = vdwg.mxu0
        %s1096 = scalar_lea.vmem %s1, 384
        %v1097 = vld [vmem:[%s1096] sm:$0xff]
        %v1098 = vld [vmem:[%s1096 + $0x8] sm:$0xff]
        %v1099 = vld [vmem:[%s1096 + $0x10] sm:$0xff]
        %v1100 = vld [vmem:[%s1096 + $0x18] sm:$0xff]
        %v1101 = vld [vmem:[%s1096 + $0x20] sm:$0xff]
        %v1102 = vld [vmem:[%s1096 + $0x28] sm:$0xff]
        %v1103 = vld [vmem:[%s1096 + $0x30] sm:$0xff]
        %v1104 = vld [vmem:[%s1096 + $0x38] sm:$0xff]
        %v1105 = vld [vmem:[%s1096 + $0x40] sm:$0xff]
        %v1106 = vld [vmem:[%s1096 + $0x48] sm:$0xff]
        %v1107 = vld [vmem:[%s1096 + $0x50] sm:$0xff]
        %v1108 = vld [vmem:[%s1096 + $0x58] sm:$0xff]
        %v1109 = vld [vmem:[%s1096 + $0x60] sm:$0xff]
        %v1110 = vld [vmem:[%s1096 + $0x68] sm:$0xff]
        %v1111 = vld [vmem:[%s1096 + $0x70] sm:$0xff]
        %v1112 = vld [vmem:[%s1096 + $0x78] sm:$0xff]
        %v1113 = vld [vmem:[%s1096 + $0x80] sm:$0xff]
        %v1114 = vld [vmem:[%s1096 + $0x88] sm:$0xff]
        %v1115 = vld [vmem:[%s1096 + $0x90] sm:$0xff]
        %v1116 = vld [vmem:[%s1096 + $0x98] sm:$0xff]
        %v1117 = vld [vmem:[%s1096 + $0xa0] sm:$0xff]
        %v1118 = vld [vmem:[%s1096 + $0xa8] sm:$0xff]
        %v1119 = vld [vmem:[%s1096 + $0xb0] sm:$0xff]
        %v1120 = vld [vmem:[%s1096 + $0xb8] sm:$0xff]
        %vm1121 = vcmask 1045504
        %v1122 = vrot.slane %v546, 2
        %v1123 = vrot.slane %v547, 2
        %v1124 = vsel %vm1121, %v1122, %v1123
        %v1125 = vrot.slane %v548, 2
        %v1126 = vsel %vm1121, %v1123, %v1125
        %v1127 = vrot.slane %v549, 2
        %v1128 = vsel %vm1121, %v1125, %v1127
        %v1129 = vrot.slane %v550, 2
        %v1130 = vsel %vm1121, %v1127, %v1129
        %v1131 = vrot.slane %v551, 2
        %v1132 = vsel %vm1121, %v1129, %v1131
        %v1133 = vrot.slane %v552, 2
        %v1134 = vsel %vm1121, %v1131, %v1133
        %v1135 = vrot.slane %v553, 2
        %v1136 = vsel %vm1121, %v1133, %v1135
        %v1137 = vsel %vm627, %v1124, 0
        %v1139 = vsel %vm627, %v1126, 0
        %v1141 = vsel %vm627, %v1128, 0
        %v1143 = vsel %vm627, %v1130, 0
        %v1145 = vsel %vm627, %v1132, 0
        %v1147 = vsel %vm627, %v1134, 0
        %v1149 = vsel %vm627, %v1136, 0
        %v1151 = vsel %vm627, %v1135, 0
        %1153 = vmatprep.subr.mxu0 %v1098
        %1154 = vmatpush1.msra.mxu0 %v1097
        %1155 = vmatprep.subr.mxu0 %v1101
        %1156 = vmatpush1.msra.mxu0 %v1100
        %1157 = vmatprep.subr.mxu0 %v1104
        %1158 = vmatpush1.msra.mxu0 %v1103
        %1159 = vmatprep.subr.mxu0 %v1107
        %1160 = vmatpush1.msra.mxu0 %v1106
        %1161 = vmatprep.subr.mxu0 %v1110
        %1162 = vmatpush1.msra.mxu0 %v1109
        %1163 = vmatprep.subr.mxu0 %v1113
        %1164 = vmatpush1.msra.mxu0 %v1112
        %1165 = vmatprep.subr.mxu0 %v1116
        %1166 = vmatpush1.msra.mxu0 %v1115
        %1167 = vmatprep.subr.mxu0 %v1119
        %1168 = vmatpush1.msra.mxu0 %v1118
        %1169 = vmatprep.subr.mxu0 0.0
        %1170 = vmatpush1.msra.mxu0 0.0
        %1171 = vmatprep.subr.mxu0 0.0
        %1172 = vmatpush1.msra.mxu0 0.0
        %1173 = vmatprep.subr.mxu0 0.0
        %1174 = vmatpush1.msra.mxu0 0.0
        %1175 = vmatprep.subr.mxu0 0.0
        %1176 = vmatpush1.msra.mxu0 0.0
        %1177 = vmatprep.subr.mxu0 0.0
        %1178 = vmatpush1.msra.mxu0 0.0
        %1179 = vmatprep.subr.mxu0 0.0
        %1180 = vmatpush1.msra.mxu0 0.0
        %1181 = vmatprep.subr.mxu0 0.0
        %1182 = vmatpush1.msra.mxu0 0.0
        %1183 = vmatprep.subr.mxu0 0.0
        %1184 = vmatpush1.msra.mxu0 0.0
        %1185 = vmatprep.subr.mxu0 0.0
        %1186 = vmatpush1.msra.mxu0 0.0
        %1187 = vmatprep.subr.mxu0 0.0
        %1188 = vmatpush1.msra.mxu0 0.0
        %1189 = vmatprep.subr.mxu0 0.0
        %1190 = vmatpush1.msra.mxu0 0.0
        %1191 = vmatprep.subr.mxu0 0.0
        %1192 = vmatpush1.msra.mxu0 0.0
        %1193 = vmatprep.subr.mxu0 0.0
        %1194 = vmatpush1.msra.mxu0 0.0
        %1195 = vmatprep.subr.mxu0 0.0
        %1196 = vmatpush1.msra.mxu0 0.0
        %1197 = vmatprep.subr.mxu0 0.0
        %1198 = vmatpush1.msra.mxu0 0.0
        %1199 = vmatprep.subr.mxu0 0.0
        %1200 = vmatpush1.msra.mxu0 0.0
        %1201 = vmatprep.subr.mxu0 0.0
        %1202 = vmatpush1.msra.mxu0 0.0
        %1203 = vmatprep.subr.mxu0 0.0
        %1204 = vmatpush1.msra.mxu0 0.0
        %1205 = vmatprep.subr.mxu0 0.0
        %1206 = vmatpush1.msra.mxu0 0.0
        %1207 = vmatprep.subr.mxu0 0.0
        %1208 = vmatpush1.msra.mxu0 0.0
        %1209 = vmatprep.subr.mxu0 0.0
        %1210 = vmatpush1.msra.mxu0 0.0
        %1211 = vmatprep.subr.mxu0 0.0
        %1212 = vmatpush1.msra.mxu0 0.0
        %1213 = vmatprep.subr.mxu0 0.0
        %1214 = vmatpush1.msra.mxu0 0.0
        %1215 = vmatprep.subr.mxu0 0.0
        %1216 = vmatpush1.msra.mxu0 0.0
        %1217 = vmatprep.mubr.f32.mxu0 0.0
        %1218 = vmatmul.mubr.f32.gmra.mrb[0].mxu0 %v1137
        %v1219 = vpop.f32.mrb[0].mxu0
        %v1220 = vadd.f32 0.0, %v1219
        %v1221 = vpop.f32.mrb[0].mxu0
        %v1222 = vadd.f32 0.0, %v1221
        %1223 = vmatprep.mubr.f32.mxu0 0.0
        %1224 = vmatmul.mubr.f32.gmra.mrb[0].mxu0 %v1139
        %v1225 = vpop.f32.mrb[0].mxu0
        %v1226 = vadd.f32 0.0, %v1225
        %v1227 = vpop.f32.mrb[0].mxu0
        %v1228 = vadd.f32 0.0, %v1227
        %1229 = vmatprep.mubr.f32.mxu0 0.0
        %1230 = vmatmul.mubr.f32.gmra.mrb[0].mxu0 %v1141
        %v1231 = vpop.f32.mrb[0].mxu0
        %v1232 = vadd.f32 0.0, %v1231
        %v1233 = vpop.f32.mrb[0].mxu0
        %v1234 = vadd.f32 0.0, %v1233
        %1235 = vmatprep.mubr.f32.mxu0 0.0
        %1236 = vmatmul.mubr.f32.gmra.mrb[0].mxu0 %v1143
        %v1237 = vpop.f32.mrb[0].mxu0
        %v1238 = vadd.f32 0.0, %v1237
        %v1239 = vpop.f32.mrb[0].mxu0
        %v1240 = vadd.f32 0.0, %v1239
        %1241 = vmatprep.mubr.f32.mxu0 0.0
        %1242 = vmatmul.mubr.f32.gmra.mrb[0].mxu0 %v1145
        %v1243 = vpop.f32.mrb[0].mxu0
        %v1244 = vadd.f32 0.0, %v1243
        %v1245 = vpop.f32.mrb[0].mxu0
        %v1246 = vadd.f32 0.0, %v1245
        %1247 = vmatprep.mubr.f32.mxu0 0.0
        %1248 = vmatmul.mubr.f32.gmra.mrb[0].mxu0 %v1147
        %v1249 = vpop.f32.mrb[0].mxu0
        %v1250 = vadd.f32 0.0, %v1249
        %v1251 = vpop.f32.mrb[0].mxu0
        %v1252 = vadd.f32 0.0, %v1251
        %1253 = vmatprep.mubr.f32.mxu0 0.0
        %1254 = vmatmul.mubr.f32.gmra.mrb[0].mxu0 %v1149
        %v1255 = vpop.f32.mrb[0].mxu0
        %v1256 = vadd.f32 0.0, %v1255
        %v1257 = vpop.f32.mrb[0].mxu0
        %v1258 = vadd.f32 0.0, %v1257
        %1259 = vmatprep.mubr.f32.mxu0 0.0
        %1260 = vmatmul.mubr.f32.gmra.mrb[0].mxu0 %v1151
        %v1261 = vpop.f32.mrb[0].mxu0
        %v1262 = vadd.f32 0.0, %v1261
        %v1263 = vpop.f32.mrb[0].mxu0
        %v1264 = vadd.f32 0.0, %v1263
        %1265 = vdwg.mxu0
        %1266 = vmatprep.subr.mxu0 0.0
        %1267 = vmatpush1.msra.mxu0 %v1099
        %1268 = vmatprep.subr.mxu0 0.0
        %1269 = vmatpush1.msra.mxu0 %v1102
        %1270 = vmatprep.subr.mxu0 0.0
        %1271 = vmatpush1.msra.mxu0 %v1105
        %1272 = vmatprep.subr.mxu0 0.0
        %1273 = vmatpush1.msra.mxu0 %v1108
        %1274 = vmatprep.subr.mxu0 0.0
        %1275 = vmatpush1.msra.mxu0 %v1111
        %1276 = vmatprep.subr.mxu0 0.0
        %1277 = vmatpush1.msra.mxu0 %v1114
        %1278 = vmatprep.subr.mxu0 0.0
        %1279 = vmatpush1.msra.mxu0 %v1117
        %1280 = vmatprep.subr.mxu0 0.0
        %1281 = vmatpush1.msra.mxu0 %v1120
        %1282 = vmatprep.subr.mxu0 0.0
        %1283 = vmatpush1.msra.mxu0 0.0
        %1284 = vmatprep.subr.mxu0 0.0
        %1285 = vmatpush1.msra.mxu0 0.0
        %1286 = vmatprep.subr.mxu0 0.0
        %1287 = vmatpush1.msra.mxu0 0.0
        %1288 = vmatprep.subr.mxu0 0.0
        %1289 = vmatpush1.msra.mxu0 0.0
        %1290 = vmatprep.subr.mxu0 0.0
        %1291 = vmatpush1.msra.mxu0 0.0
        %1292 = vmatprep.subr.mxu0 0.0
        %1293 = vmatpush1.msra.mxu0 0.0
        %1294 = vmatprep.subr.mxu0 0.0
        %1295 = vmatpush1.msra.mxu0 0.0
        %1296 = vmatprep.subr.mxu0 0.0
        %1297 = vmatpush1.msra.mxu0 0.0
        %1298 = vmatprep.subr.mxu0 0.0
        %1299 = vmatpush1.msra.mxu0 0.0
        %1300 = vmatprep.subr.mxu0 0.0
        %1301 = vmatpush1.msra.mxu0 0.0
        %1302 = vmatprep.subr.mxu0 0.0
        %1303 = vmatpush1.msra.mxu0 0.0
        %1304 = vmatprep.subr.mxu0 0.0
        %1305 = vmatpush1.msra.mxu0 0.0
        %1306 = vmatprep.subr.mxu0 0.0
        %1307 = vmatpush1.msra.mxu0 0.0
        %1308 = vmatprep.subr.mxu0 0.0
        %1309 = vmatpush1.msra.mxu0 0.0
        %1310 = vmatprep.subr.mxu0 0.0
        %1311 = vmatpush1.msra.mxu0 0.0
        %1312 = vmatprep.subr.mxu0 0.0
        %1313 = vmatpush1.msra.mxu0 0.0
        %1314 = vmatprep.subr.mxu0 0.0
        %1315 = vmatpush1.msra.mxu0 0.0
        %1316 = vmatprep.subr.mxu0 0.0
        %1317 = vmatpush1.msra.mxu0 0.0
        %1318 = vmatprep.subr.mxu0 0.0
        %1319 = vmatpush1.msra.mxu0 0.0
        %1320 = vmatprep.subr.mxu0 0.0
        %1321 = vmatpush1.msra.mxu0 0.0
        %1322 = vmatprep.subr.mxu0 0.0
        %1323 = vmatpush1.msra.mxu0 0.0
        %1324 = vmatprep.subr.mxu0 0.0
        %1325 = vmatpush1.msra.mxu0 0.0
        %1326 = vmatprep.subr.mxu0 0.0
        %1327 = vmatpush1.msra.mxu0 0.0
        %1328 = vmatprep.subr.mxu0 0.0
        %1329 = vmatpush1.msra.mxu0 0.0
        %1330 = vmatprep.mubr.f32.mxu0 0.0
        %1331 = vmatmul.mubr.f32.gmra.mrb[0].mxu0 %v1137
        %v1332 = vpop.f32.mrb[0].mxu0
        %v1333 = vadd.f32 0.0, %v1332
        %v1334 = vpop.f32.mrb[0].mxu0
        %1335 = vmatprep.mubr.f32.mxu0 0.0
        %1336 = vmatmul.mubr.f32.gmra.mrb[0].mxu0 %v1139
        %v1337 = vpop.f32.mrb[0].mxu0
        %v1338 = vadd.f32 0.0, %v1337
        %v1339 = vpop.f32.mrb[0].mxu0
        %1340 = vmatprep.mubr.f32.mxu0 0.0
        %1341 = vmatmul.mubr.f32.gmra.mrb[0].mxu0 %v1141
        %v1342 = vpop.f32.mrb[0].mxu0
        %v1343 = vadd.f32 0.0, %v1342
        %v1344 = vpop.f32.mrb[0].mxu0
        %1345 = vmatprep.mubr.f32.mxu0 0.0
        %1346 = vmatmul.mubr.f32.gmra.mrb[0].mxu0 %v1143
        %v1347 = vpop.f32.mrb[0].mxu0
        %v1348 = vadd.f32 0.0, %v1347
        %v1349 = vpop.f32.mrb[0].mxu0
        %1350 = vmatprep.mubr.f32.mxu0 0.0
        %1351 = vmatmul.mubr.f32.gmra.mrb[0].mxu0 %v1145
        %v1352 = vpop.f32.mrb[0].mxu0
        %v1353 = vadd.f32 0.0, %v1352
        %v1354 = vpop.f32.mrb[0].mxu0
        %1355 = vmatprep.mubr.f32.mxu0 0.0
        %1356 = vmatmul.mubr.f32.gmra.mrb[0].mxu0 %v1147
        %v1357 = vpop.f32.mrb[0].mxu0
        %v1358 = vadd.f32 0.0, %v1357
        %v1359 = vpop.f32.mrb[0].mxu0
        %1360 = vmatprep.mubr.f32.mxu0 0.0
        %1361 = vmatmul.mubr.f32.gmra.mrb[0].mxu0 %v1149
        %v1362 = vpop.f32.mrb[0].mxu0
        %v1363 = vadd.f32 0.0, %v1362
        %v1364 = vpop.f32.mrb[0].mxu0
        %1365 = vmatprep.mubr.f32.mxu0 0.0
        %1366 = vmatmul.mubr.f32.gmra.mrb[0].mxu0 %v1151
        %v1367 = vpop.f32.mrb[0].mxu0
        %v1368 = vadd.f32 0.0, %v1367
        %v1369 = vpop.f32.mrb[0].mxu0
        %1370 = vdwg.mxu0
        %v1371 = vadd.f32 %v945, %v1220
        %v1372 = vadd.f32 %v947, %v1222
        %v1373 = vadd.f32 %v1058, %v1333
        %v1374 = vadd.f32 %v951, %v1226
        %v1375 = vadd.f32 %v953, %v1228
        %v1376 = vadd.f32 %v1063, %v1338
        %v1377 = vadd.f32 %v957, %v1232
        %v1378 = vadd.f32 %v959, %v1234
        %v1379 = vadd.f32 %v1068, %v1343
        %v1380 = vadd.f32 %v963, %v1238
        %v1381 = vadd.f32 %v965, %v1240
        %v1382 = vadd.f32 %v1073, %v1348
        %v1383 = vadd.f32 %v969, %v1244
        %v1384 = vadd.f32 %v971, %v1246
        %v1385 = vadd.f32 %v1078, %v1353
        %v1386 = vadd.f32 %v975, %v1250
        %v1387 = vadd.f32 %v977, %v1252
        %v1388 = vadd.f32 %v1083, %v1358
        %v1389 = vadd.f32 %v981, %v1256
        %v1390 = vadd.f32 %v983, %v1258
        %v1391 = vadd.f32 %v1088, %v1363
        %v1392 = vadd.f32 %v987, %v1262
        %v1393 = vadd.f32 %v989, %v1264
        %v1394 = vadd.f32 %v1093, %v1368
        %s1395 = scalar_lea.vmem %s1, 576
        %v1396 = vld [vmem:[%s1395] sm:$0xff]
        %v1397 = vld [vmem:[%s1395 + $0x8] sm:$0xff]
        %v1398 = vld [vmem:[%s1395 + $0x10] sm:$0xff]
        %v1399 = vld [vmem:[%s1395 + $0x18] sm:$0xff]
        %v1400 = vld [vmem:[%s1395 + $0x20] sm:$0xff]
        %v1401 = vld [vmem:[%s1395 + $0x28] sm:$0xff]
        %v1402 = vld [vmem:[%s1395 + $0x30] sm:$0xff]
        %v1403 = vld [vmem:[%s1395 + $0x38] sm:$0xff]
        %v1404 = vld [vmem:[%s1395 + $0x40] sm:$0xff]
        %v1405 = vld [vmem:[%s1395 + $0x48] sm:$0xff]
        %v1406 = vld [vmem:[%s1395 + $0x50] sm:$0xff]
        %v1407 = vld [vmem:[%s1395 + $0x58] sm:$0xff]
        %v1408 = vld [vmem:[%s1395 + $0x60] sm:$0xff]
        %v1409 = vld [vmem:[%s1395 + $0x68] sm:$0xff]
        %v1410 = vld [vmem:[%s1395 + $0x70] sm:$0xff]
        %v1411 = vld [vmem:[%s1395 + $0x78] sm:$0xff]
        %v1412 = vld [vmem:[%s1395 + $0x80] sm:$0xff]
        %v1413 = vld [vmem:[%s1395 + $0x88] sm:$0xff]
        %v1414 = vld [vmem:[%s1395 + $0x90] sm:$0xff]
        %v1415 = vld [vmem:[%s1395 + $0x98] sm:$0xff]
        %v1416 = vld [vmem:[%s1395 + $0xa0] sm:$0xff]
        %v1417 = vld [vmem:[%s1395 + $0xa8] sm:$0xff]
        %v1418 = vld [vmem:[%s1395 + $0xb0] sm:$0xff]
        %v1419 = vld [vmem:[%s1395 + $0xb8] sm:$0xff]
        %vm1420 = vcmask 1044480
        %v1421 = vrot.slane %v546, 3
        %v1422 = vrot.slane %v547, 3
        %v1423 = vsel %vm1420, %v1421, %v1422
        %v1424 = vrot.slane %v548, 3
        %v1425 = vsel %vm1420, %v1422, %v1424
        %v1426 = vrot.slane %v549, 3
        %v1427 = vsel %vm1420, %v1424, %v1426
        %v1428 = vrot.slane %v550, 3
        %v1429 = vsel %vm1420, %v1426, %v1428
        %v1430 = vrot.slane %v551, 3
        %v1431 = vsel %vm1420, %v1428, %v1430
        %v1432 = vrot.slane %v552, 3
        %v1433 = vsel %vm1420, %v1430, %v1432
        %v1434 = vrot.slane %v553, 3
        %v1435 = vsel %vm1420, %v1432, %v1434
        %v1436 = vsel %vm627, %v1423, 0
        %v1438 = vsel %vm627, %v1425, 0
        %v1440 = vsel %vm627, %v1427, 0
        %v1442 = vsel %vm627, %v1429, 0
        %v1444 = vsel %vm627, %v1431, 0
        %v1446 = vsel %vm627, %v1433, 0
        %v1448 = vsel %vm627, %v1435, 0
        %v1450 = vsel %vm627, %v1434, 0
        %1452 = vmatprep.subr.mxu0 %v1397
        %1453 = vmatpush1.msra.mxu0 %v1396
        %1454 = vmatprep.subr.mxu0 %v1400
        %1455 = vmatpush1.msra.mxu0 %v1399
        %1456 = vmatprep.subr.mxu0 %v1403
        %1457 = vmatpush1.msra.mxu0 %v1402
        %1458 = vmatprep.subr.mxu0 %v1406
        %1459 = vmatpush1.msra.mxu0 %v1405
        %1460 = vmatprep.subr.mxu0 %v1409
        %1461 = vmatpush1.msra.mxu0 %v1408
        %1462 = vmatprep.subr.mxu0 %v1412
        %1463 = vmatpush1.msra.mxu0 %v1411
        %1464 = vmatprep.subr.mxu0 %v1415
        %1465 = vmatpush1.msra.mxu0 %v1414
        %1466 = vmatprep.subr.mxu0 %v1418
        %1467 = vmatpush1.msra.mxu0 %v1417
        %1468 = vmatprep.subr.mxu0 0.0
        %1469 = vmatpush1.msra.mxu0 0.0
        %1470 = vmatprep.subr.mxu0 0.0
        %1471 = vmatpush1.msra.mxu0 0.0
        %1472 = vmatprep.subr.mxu0 0.0
        %1473 = vmatpush1.msra.mxu0 0.0
        %1474 = vmatprep.subr.mxu0 0.0
        %1475 = vmatpush1.msra.mxu0 0.0
        %1476 = vmatprep.subr.mxu0 0.0
        %1477 = vmatpush1.msra.mxu0 0.0
        %1478 = vmatprep.subr.mxu0 0.0
        %1479 = vmatpush1.msra.mxu0 0.0
        %1480 = vmatprep.subr.mxu0 0.0
        %1481 = vmatpush1.msra.mxu0 0.0
        %1482 = vmatprep.subr.mxu0 0.0
        %1483 = vmatpush1.msra.mxu0 0.0
        %1484 = vmatprep.subr.mxu0 0.0
        %1485 = vmatpush1.msra.mxu0 0.0
        %1486 = vmatprep.subr.mxu0 0.0
        %1487 = vmatpush1.msra.mxu0 0.0
        %1488 = vmatprep.subr.mxu0 0.0
        %1489 = vmatpush1.msra.mxu0 0.0
        %1490 = vmatprep.subr.mxu0 0.0
        %1491 = vmatpush1.msra.mxu0 0.0
        %1492 = vmatprep.subr.mxu0 0.0
        %1493 = vmatpush1.msra.mxu0 0.0
        %1494 = vmatprep.subr.mxu0 0.0
        %1495 = vmatpush1.msra.mxu0 0.0
        %1496 = vmatprep.subr.mxu0 0.0
        %1497 = vmatpush1.msra.mxu0 0.0
        %1498 = vmatprep.subr.mxu0 0.0
        %1499 = vmatpush1.msra.mxu0 0.0
        %1500 = vmatprep.subr.mxu0 0.0
        %1501 = vmatpush1.msra.mxu0 0.0
        %1502 = vmatprep.subr.mxu0 0.0
        %1503 = vmatpush1.msra.mxu0 0.0
        %1504 = vmatprep.subr.mxu0 0.0
        %1505 = vmatpush1.msra.mxu0 0.0
        %1506 = vmatprep.subr.mxu0 0.0
        %1507 = vmatpush1.msra.mxu0 0.0
        %1508 = vmatprep.subr.mxu0 0.0
        %1509 = vmatpush1.msra.mxu0 0.0
        %1510 = vmatprep.subr.mxu0 0.0
        %1511 = vmatpush1.msra.mxu0 0.0
        %1512 = vmatprep.subr.mxu0 0.0
        %1513 = vmatpush1.msra.mxu0 0.0
        %1514 = vmatprep.subr.mxu0 0.0
        %1515 = vmatpush1.msra.mxu0 0.0
        %1516 = vmatprep.mubr.f32.mxu0 0.0
        %1517 = vmatmul.mubr.f32.gmra.mrb[0].mxu0 %v1436
        %v1518 = vpop.f32.mrb[0].mxu0
        %v1519 = vadd.f32 0.0, %v1518
        %v1520 = vpop.f32.mrb[0].mxu0
        %v1521 = vadd.f32 0.0, %v1520
        %1522 = vmatprep.mubr.f32.mxu0 0.0
        %1523 = vmatmul.mubr.f32.gmra.mrb[0].mxu0 %v1438
        %v1524 = vpop.f32.mrb[0].mxu0
        %v1525 = vadd.f32 0.0, %v1524
        %v1526 = vpop.f32.mrb[0].mxu0
        %v1527 = vadd.f32 0.0, %v1526
        %1528 = vmatprep.mubr.f32.mxu0 0.0
        %1529 = vmatmul.mubr.f32.gmra.mrb[0].mxu0 %v1440
        %v1530 = vpop.f32.mrb[0].mxu0
        %v1531 = vadd.f32 0.0, %v1530
        %v1532 = vpop.f32.mrb[0].mxu0
        %v1533 = vadd.f32 0.0, %v1532
        %1534 = vmatprep.mubr.f32.mxu0 0.0
        %1535 = vmatmul.mubr.f32.gmra.mrb[0].mxu0 %v1442
        %v1536 = vpop.f32.mrb[0].mxu0
        %v1537 = vadd.f32 0.0, %v1536
        %v1538 = vpop.f32.mrb[0].mxu0
        %v1539 = vadd.f32 0.0, %v1538
        %1540 = vmatprep.mubr.f32.mxu0 0.0
        %1541 = vmatmul.mubr.f32.gmra.mrb[0].mxu0 %v1444
        %v1542 = vpop.f32.mrb[0].mxu0
        %v1543 = vadd.f32 0.0, %v1542
        %v1544 = vpop.f32.mrb[0].mxu0
        %v1545 = vadd.f32 0.0, %v1544
        %1546 = vmatprep.mubr.f32.mxu0 0.0
        %1547 = vmatmul.mubr.f32.gmra.mrb[0].mxu0 %v1446
        %v1548 = vpop.f32.mrb[0].mxu0
        %v1549 = vadd.f32 0.0, %v1548
        %v1550 = vpop.f32.mrb[0].mxu0
        %v1551 = vadd.f32 0.0, %v1550
        %1552 = vmatprep.mubr.f32.mxu0 0.0
        %1553 = vmatmul.mubr.f32.gmra.mrb[0].mxu0 %v1448
        %v1554 = vpop.f32.mrb[0].mxu0
        %v1555 = vadd.f32 0.0, %v1554
        %v1556 = vpop.f32.mrb[0].mxu0
        %v1557 = vadd.f32 0.0, %v1556
        %1558 = vmatprep.mubr.f32.mxu0 0.0
        %1559 = vmatmul.mubr.f32.gmra.mrb[0].mxu0 %v1450
        %v1560 = vpop.f32.mrb[0].mxu0
        %v1561 = vadd.f32 0.0, %v1560
        %v1562 = vpop.f32.mrb[0].mxu0
        %v1563 = vadd.f32 0.0, %v1562
        %1564 = vdwg.mxu0
        %1565 = vmatprep.subr.mxu0 0.0
        %1566 = vmatpush1.msra.mxu0 %v1398
        %1567 = vmatprep.subr.mxu0 0.0
        %1568 = vmatpush1.msra.mxu0 %v1401
        %1569 = vmatprep.subr.mxu0 0.0
        %1570 = vmatpush1.msra.mxu0 %v1404
        %1571 = vmatprep.subr.mxu0 0.0
        %1572 = vmatpush1.msra.mxu0 %v1407
        %1573 = vmatprep.subr.mxu0 0.0
        %1574 = vmatpush1.msra.mxu0 %v1410
        %1575 = vmatprep.subr.mxu0 0.0
        %1576 = vmatpush1.msra.mxu0 %v1413
        %1577 = vmatprep.subr.mxu0 0.0
        %1578 = vmatpush1.msra.mxu0 %v1416
        %1579 = vmatprep.subr.mxu0 0.0
        %1580 = vmatpush1.msra.mxu0 %v1419
        %1581 = vmatprep.subr.mxu0 0.0
        %1582 = vmatpush1.msra.mxu0 0.0
        %1583 = vmatprep.subr.mxu0 0.0
        %1584 = vmatpush1.msra.mxu0 0.0
        %1585 = vmatprep.subr.mxu0 0.0
        %1586 = vmatpush1.msra.mxu0 0.0
        %1587 = vmatprep.subr.mxu0 0.0
        %1588 = vmatpush1.msra.mxu0 0.0
        %1589 = vmatprep.subr.mxu0 0.0
        %1590 = vmatpush1.msra.mxu0 0.0
        %1591 = vmatprep.subr.mxu0 0.0
        %1592 = vmatpush1.msra.mxu0 0.0
        %1593 = vmatprep.subr.mxu0 0.0
        %1594 = vmatpush1.msra.mxu0 0.0
        %1595 = vmatprep.subr.mxu0 0.0
        %1596 = vmatpush1.msra.mxu0 0.0
        %1597 = vmatprep.subr.mxu0 0.0
        %1598 = vmatpush1.msra.mxu0 0.0
        %1599 = vmatprep.subr.mxu0 0.0
        %1600 = vmatpush1.msra.mxu0 0.0
        %1601 = vmatprep.subr.mxu0 0.0
        %1602 = vmatpush1.msra.mxu0 0.0
        %1603 = vmatprep.subr.mxu0 0.0
        %1604 = vmatpush1.msra.mxu0 0.0
        %1605 = vmatprep.subr.mxu0 0.0
        %1606 = vmatpush1.msra.mxu0 0.0
        %1607 = vmatprep.subr.mxu0 0.0
        %1608 = vmatpush1.msra.mxu0 0.0
        %1609 = vmatprep.subr.mxu0 0.0
        %1610 = vmatpush1.msra.mxu0 0.0
        %1611 = vmatprep.subr.mxu0 0.0
        %1612 = vmatpush1.msra.mxu0 0.0
        %1613 = vmatprep.subr.mxu0 0.0
        %1614 = vmatpush1.msra.mxu0 0.0
        %1615 = vmatprep.subr.mxu0 0.0
        %1616 = vmatpush1.msra.mxu0 0.0
        %1617 = vmatprep.subr.mxu0 0.0
        %1618 = vmatpush1.msra.mxu0 0.0
        %1619 = vmatprep.subr.mxu0 0.0
        %1620 = vmatpush1.msra.mxu0 0.0
        %1621 = vmatprep.subr.mxu0 0.0
        %1622 = vmatpush1.msra.mxu0 0.0
        %1623 = vmatprep.subr.mxu0 0.0
        %1624 = vmatpush1.msra.mxu0 0.0
        %1625 = vmatprep.subr.mxu0 0.0
        %1626 = vmatpush1.msra.mxu0 0.0
        %1627 = vmatprep.subr.mxu0 0.0
        %1628 = vmatpush1.msra.mxu0 0.0
        %1629 = vmatprep.mubr.f32.mxu0 0.0
        %1630 = vmatmul.mubr.f32.gmra.mrb[0].mxu0 %v1436
        %v1631 = vpop.f32.mrb[0].mxu0
        %v1632 = vadd.f32 0.0, %v1631
        %v1633 = vpop.f32.mrb[0].mxu0
        %1634 = vmatprep.mubr.f32.mxu0 0.0
        %1635 = vmatmul.mubr.f32.gmra.mrb[0].mxu0 %v1438
        %v1636 = vpop.f32.mrb[0].mxu0
        %v1637 = vadd.f32 0.0, %v1636
        %v1638 = vpop.f32.mrb[0].mxu0
        %1639 = vmatprep.mubr.f32.mxu0 0.0
        %1640 = vmatmul.mubr.f32.gmra.mrb[0].mxu0 %v1440
        %v1641 = vpop.f32.mrb[0].mxu0
        %v1642 = vadd.f32 0.0, %v1641
        %v1643 = vpop.f32.mrb[0].mxu0
        %1644 = vmatprep.mubr.f32.mxu0 0.0
        %1645 = vmatmul.mubr.f32.gmra.mrb[0].mxu0 %v1442
        %v1646 = vpop.f32.mrb[0].mxu0
        %v1647 = vadd.f32 0.0, %v1646
        %v1648 = vpop.f32.mrb[0].mxu0
        %1649 = vmatprep.mubr.f32.mxu0 0.0
        %1650 = vmatmul.mubr.f32.gmra.mrb[0].mxu0 %v1444
        %v1651 = vpop.f32.mrb[0].mxu0
        %v1652 = vadd.f32 0.0, %v1651
        %v1653 = vpop.f32.mrb[0].mxu0
        %1654 = vmatprep.mubr.f32.mxu0 0.0
        %1655 = vmatmul.mubr.f32.gmra.mrb[0].mxu0 %v1446
        %v1656 = vpop.f32.mrb[0].mxu0
        %v1657 = vadd.f32 0.0, %v1656
        %v1658 = vpop.f32.mrb[0].mxu0
        %1659 = vmatprep.mubr.f32.mxu0 0.0
        %1660 = vmatmul.mubr.f32.gmra.mrb[0].mxu0 %v1448
        %v1661 = vpop.f32.mrb[0].mxu0
        %v1662 = vadd.f32 0.0, %v1661
        %v1663 = vpop.f32.mrb[0].mxu0
        %1664 = vmatprep.mubr.f32.mxu0 0.0
        %1665 = vmatmul.mubr.f32.gmra.mrb[0].mxu0 %v1450
        %v1666 = vpop.f32.mrb[0].mxu0
        %v1667 = vadd.f32 0.0, %v1666
        %v1668 = vpop.f32.mrb[0].mxu0
        %1669 = vdwg.mxu0
        %v1670 = vadd.f32 %v1371, %v1519
        %v1671 = vadd.f32 %v1372, %v1521
        %v1672 = vadd.f32 %v1373, %v1632
        %v1673 = vadd.f32 %v1374, %v1525
        %v1674 = vadd.f32 %v1375, %v1527
        %v1675 = vadd.f32 %v1376, %v1637
        %v1676 = vadd.f32 %v1377, %v1531
        %v1677 = vadd.f32 %v1378, %v1533
        %v1678 = vadd.f32 %v1379, %v1642
        %v1679 = vadd.f32 %v1380, %v1537
        %v1680 = vadd.f32 %v1381, %v1539
        %v1681 = vadd.f32 %v1382, %v1647
        %v1682 = vadd.f32 %v1383, %v1543
        %v1683 = vadd.f32 %v1384, %v1545
        %v1684 = vadd.f32 %v1385, %v1652
        %v1685 = vadd.f32 %v1386, %v1549
        %v1686 = vadd.f32 %v1387, %v1551
        %v1687 = vadd.f32 %v1388, %v1657
        %v1688 = vadd.f32 %v1389, %v1555
        %v1689 = vadd.f32 %v1390, %v1557
        %v1690 = vadd.f32 %v1391, %v1662
        %v1691 = vadd.f32 %v1392, %v1561
        %v1692 = vadd.f32 %v1393, %v1563
        %v1693 = vadd.f32 %v1394, %v1667
        %s1694 = scalar_lea.vmem %s1, 768
        %v1695 = vld [vmem:[%s1694] sm:$0xff]
        %v1696 = vld [vmem:[%s1694 + $0x8] sm:$0xff]
        %v1697 = vld [vmem:[%s1694 + $0x10] sm:$0xff]
        %v1698 = vld [vmem:[%s1694 + $0x18] sm:$0xff]
        %v1699 = vld [vmem:[%s1694 + $0x20] sm:$0xff]
        %v1700 = vld [vmem:[%s1694 + $0x28] sm:$0xff]
        %v1701 = vld [vmem:[%s1694 + $0x30] sm:$0xff]
        %v1702 = vld [vmem:[%s1694 + $0x38] sm:$0xff]
        %v1703 = vld [vmem:[%s1694 + $0x40] sm:$0xff]
        %v1704 = vld [vmem:[%s1694 + $0x48] sm:$0xff]
        %v1705 = vld [vmem:[%s1694 + $0x50] sm:$0xff]
        %v1706 = vld [vmem:[%s1694 + $0x58] sm:$0xff]
        %v1707 = vld [vmem:[%s1694 + $0x60] sm:$0xff]
        %v1708 = vld [vmem:[%s1694 + $0x68] sm:$0xff]
        %v1709 = vld [vmem:[%s1694 + $0x70] sm:$0xff]
        %v1710 = vld [vmem:[%s1694 + $0x78] sm:$0xff]
        %v1711 = vld [vmem:[%s1694 + $0x80] sm:$0xff]
        %v1712 = vld [vmem:[%s1694 + $0x88] sm:$0xff]
        %v1713 = vld [vmem:[%s1694 + $0x90] sm:$0xff]
        %v1714 = vld [vmem:[%s1694 + $0x98] sm:$0xff]
        %v1715 = vld [vmem:[%s1694 + $0xa0] sm:$0xff]
        %v1716 = vld [vmem:[%s1694 + $0xa8] sm:$0xff]
        %v1717 = vld [vmem:[%s1694 + $0xb0] sm:$0xff]
        %v1718 = vld [vmem:[%s1694 + $0xb8] sm:$0xff]
        %vm1719 = vcmask 1043456
        %v1720 = vrot.slane %v546, 4
        %v1721 = vrot.slane %v547, 4
        %v1722 = vsel %vm1719, %v1720, %v1721
        %v1723 = vrot.slane %v548, 4
        %v1724 = vsel %vm1719, %v1721, %v1723
        %v1725 = vrot.slane %v549, 4
        %v1726 = vsel %vm1719, %v1723, %v1725
        %v1727 = vrot.slane %v550, 4
        %v1728 = vsel %vm1719, %v1725, %v1727
        %v1729 = vrot.slane %v551, 4
        %v1730 = vsel %vm1719, %v1727, %v1729
        %v1731 = vrot.slane %v552, 4
        %v1732 = vsel %vm1719, %v1729, %v1731
        %v1733 = vrot.slane %v553, 4
        %v1734 = vsel %vm1719, %v1731, %v1733
        %v1735 = vsel %vm627, %v1722, 0
        %v1737 = vsel %vm627, %v1724, 0
        %v1739 = vsel %vm627, %v1726, 0
        %v1741 = vsel %vm627, %v1728, 0
        %v1743 = vsel %vm627, %v1730, 0
        %v1745 = vsel %vm627, %v1732, 0
        %v1747 = vsel %vm627, %v1734, 0
        %v1749 = vsel %vm627, %v1733, 0
        %1751 = vmatprep.subr.mxu0 %v1696
        %1752 = vmatpush1.msra.mxu0 %v1695
        %1753 = vmatprep.subr.mxu0 %v1699
        %1754 = vmatpush1.msra.mxu0 %v1698
        %1755 = vmatprep.subr.mxu0 %v1702
        %1756 = vmatpush1.msra.mxu0 %v1701
        %1757 = vmatprep.subr.mxu0 %v1705
        %1758 = vmatpush1.msra.mxu0 %v1704
        %1759 = vmatprep.subr.mxu0 %v1708
        %1760 = vmatpush1.msra.mxu0 %v1707
        %1761 = vmatprep.subr.mxu0 %v1711
        %1762 = vmatpush1.msra.mxu0 %v1710
        %1763 = vmatprep.subr.mxu0 %v1714
        %1764 = vmatpush1.msra.mxu0 %v1713
        %1765 = vmatprep.subr.mxu0 %v1717
        %1766 = vmatpush1.msra.mxu0 %v1716
        %1767 = vmatprep.subr.mxu0 0.0
        %1768 = vmatpush1.msra.mxu0 0.0
        %1769 = vmatprep.subr.mxu0 0.0
        %1770 = vmatpush1.msra.mxu0 0.0
        %1771 = vmatprep.subr.mxu0 0.0
        %1772 = vmatpush1.msra.mxu0 0.0
        %1773 = vmatprep.subr.mxu0 0.0
        %1774 = vmatpush1.msra.mxu0 0.0
        %1775 = vmatprep.subr.mxu0 0.0
        %1776 = vmatpush1.msra.mxu0 0.0
        %1777 = vmatprep.subr.mxu0 0.0
        %1778 = vmatpush1.msra.mxu0 0.0
        %1779 = vmatprep.subr.mxu0 0.0
        %1780 = vmatpush1.msra.mxu0 0.0
        %1781 = vmatprep.subr.mxu0 0.0
        %1782 = vmatpush1.msra.mxu0 0.0
        %1783 = vmatprep.subr.mxu0 0.0
        %1784 = vmatpush1.msra.mxu0 0.0
        %1785 = vmatprep.subr.mxu0 0.0
        %1786 = vmatpush1.msra.mxu0 0.0
        %1787 = vmatprep.subr.mxu0 0.0
        %1788 = vmatpush1.msra.mxu0 0.0
        %1789 = vmatprep.subr.mxu0 0.0
        %1790 = vmatpush1.msra.mxu0 0.0
        %1791 = vmatprep.subr.mxu0 0.0
        %1792 = vmatpush1.msra.mxu0 0.0
        %1793 = vmatprep.subr.mxu0 0.0
        %1794 = vmatpush1.msra.mxu0 0.0
        %1795 = vmatprep.subr.mxu0 0.0
        %1796 = vmatpush1.msra.mxu0 0.0
        %1797 = vmatprep.subr.mxu0 0.0
        %1798 = vmatpush1.msra.mxu0 0.0
        %1799 = vmatprep.subr.mxu0 0.0
        %1800 = vmatpush1.msra.mxu0 0.0
        %1801 = vmatprep.subr.mxu0 0.0
        %1802 = vmatpush1.msra.mxu0 0.0
        %1803 = vmatprep.subr.mxu0 0.0
        %1804 = vmatpush1.msra.mxu0 0.0
        %1805 = vmatprep.subr.mxu0 0.0
        %1806 = vmatpush1.msra.mxu0 0.0
        %1807 = vmatprep.subr.mxu0 0.0
        %1808 = vmatpush1.msra.mxu0 0.0
        %1809 = vmatprep.subr.mxu0 0.0
        %1810 = vmatpush1.msra.mxu0 0.0
        %1811 = vmatprep.subr.mxu0 0.0
        %1812 = vmatpush1.msra.mxu0 0.0
        %1813 = vmatprep.subr.mxu0 0.0
        %1814 = vmatpush1.msra.mxu0 0.0
        %1815 = vmatprep.mubr.f32.mxu0 0.0
        %1816 = vmatmul.mubr.f32.gmra.mrb[0].mxu0 %v1735
        %v1817 = vpop.f32.mrb[0].mxu0
        %v1818 = vadd.f32 0.0, %v1817
        %v1819 = vpop.f32.mrb[0].mxu0
        %v1820 = vadd.f32 0.0, %v1819
        %1821 = vmatprep.mubr.f32.mxu0 0.0
        %1822 = vmatmul.mubr.f32.gmra.mrb[0].mxu0 %v1737
        %v1823 = vpop.f32.mrb[0].mxu0
        %v1824 = vadd.f32 0.0, %v1823
        %v1825 = vpop.f32.mrb[0].mxu0
        %v1826 = vadd.f32 0.0, %v1825
        %1827 = vmatprep.mubr.f32.mxu0 0.0
        %1828 = vmatmul.mubr.f32.gmra.mrb[0].mxu0 %v1739
        %v1829 = vpop.f32.mrb[0].mxu0
        %v1830 = vadd.f32 0.0, %v1829
        %v1831 = vpop.f32.mrb[0].mxu0
        %v1832 = vadd.f32 0.0, %v1831
        %1833 = vmatprep.mubr.f32.mxu0 0.0
        %1834 = vmatmul.mubr.f32.gmra.mrb[0].mxu0 %v1741
        %v1835 = vpop.f32.mrb[0].mxu0
        %v1836 = vadd.f32 0.0, %v1835
        %v1837 = vpop.f32.mrb[0].mxu0
        %v1838 = vadd.f32 0.0, %v1837
        %1839 = vmatprep.mubr.f32.mxu0 0.0
        %1840 = vmatmul.mubr.f32.gmra.mrb[0].mxu0 %v1743
        %v1841 = vpop.f32.mrb[0].mxu0
        %v1842 = vadd.f32 0.0, %v1841
        %v1843 = vpop.f32.mrb[0].mxu0
        %v1844 = vadd.f32 0.0, %v1843
        %1845 = vmatprep.mubr.f32.mxu0 0.0
        %1846 = vmatmul.mubr.f32.gmra.mrb[0].mxu0 %v1745
        %v1847 = vpop.f32.mrb[0].mxu0
        %v1848 = vadd.f32 0.0, %v1847
        %v1849 = vpop.f32.mrb[0].mxu0
        %v1850 = vadd.f32 0.0, %v1849
        %1851 = vmatprep.mubr.f32.mxu0 0.0
        %1852 = vmatmul.mubr.f32.gmra.mrb[0].mxu0 %v1747
        %v1853 = vpop.f32.mrb[0].mxu0
        %v1854 = vadd.f32 0.0, %v1853
        %v1855 = vpop.f32.mrb[0].mxu0
        %v1856 = vadd.f32 0.0, %v1855
        %1857 = vmatprep.mubr.f32.mxu0 0.0
        %1858 = vmatmul.mubr.f32.gmra.mrb[0].mxu0 %v1749
        %v1859 = vpop.f32.mrb[0].mxu0
        %v1860 = vadd.f32 0.0, %v1859
        %v1861 = vpop.f32.mrb[0].mxu0
        %v1862 = vadd.f32 0.0, %v1861
        %1863 = vdwg.mxu0
        %1864 = vmatprep.subr.mxu0 0.0
        %1865 = vmatpush1.msra.mxu0 %v1697
        %1866 = vmatprep.subr.mxu0 0.0
        %1867 = vmatpush1.msra.mxu0 %v1700
        %1868 = vmatprep.subr.mxu0 0.0
        %1869 = vmatpush1.msra.mxu0 %v1703
        %1870 = vmatprep.subr.mxu0 0.0
        %1871 = vmatpush1.msra.mxu0 %v1706
        %1872 = vmatprep.subr.mxu0 0.0
        %1873 = vmatpush1.msra.mxu0 %v1709
        %1874 = vmatprep.subr.mxu0 0.0
        %1875 = vmatpush1.msra.mxu0 %v1712
        %1876 = vmatprep.subr.mxu0 0.0
        %1877 = vmatpush1.msra.mxu0 %v1715
        %1878 = vmatprep.subr.mxu0 0.0
        %1879 = vmatpush1.msra.mxu0 %v1718
        %1880 = vmatprep.subr.mxu0 0.0
        %1881 = vmatpush1.msra.mxu0 0.0
        %1882 = vmatprep.subr.mxu0 0.0
        %1883 = vmatpush1.msra.mxu0 0.0
        %1884 = vmatprep.subr.mxu0 0.0
        %1885 = vmatpush1.msra.mxu0 0.0
        %1886 = vmatprep.subr.mxu0 0.0
        %1887 = vmatpush1.msra.mxu0 0.0
        %1888 = vmatprep.subr.mxu0 0.0
        %1889 = vmatpush1.msra.mxu0 0.0
        %1890 = vmatprep.subr.mxu0 0.0
        %1891 = vmatpush1.msra.mxu0 0.0
        %1892 = vmatprep.subr.mxu0 0.0
        %1893 = vmatpush1.msra.mxu0 0.0
        %1894 = vmatprep.subr.mxu0 0.0
        %1895 = vmatpush1.msra.mxu0 0.0
        %1896 = vmatprep.subr.mxu0 0.0
        %1897 = vmatpush1.msra.mxu0 0.0
        %1898 = vmatprep.subr.mxu0 0.0
        %1899 = vmatpush1.msra.mxu0 0.0
        %1900 = vmatprep.subr.mxu0 0.0
        %1901 = vmatpush1.msra.mxu0 0.0
        %1902 = vmatprep.subr.mxu0 0.0
        %1903 = vmatpush1.msra.mxu0 0.0
        %1904 = vmatprep.subr.mxu0 0.0
        %1905 = vmatpush1.msra.mxu0 0.0
        %1906 = vmatprep.subr.mxu0 0.0
        %1907 = vmatpush1.msra.mxu0 0.0
        %1908 = vmatprep.subr.mxu0 0.0
        %1909 = vmatpush1.msra.mxu0 0.0
        %1910 = vmatprep.subr.mxu0 0.0
        %1911 = vmatpush1.msra.mxu0 0.0
        %1912 = vmatprep.subr.mxu0 0.0
        %1913 = vmatpush1.msra.mxu0 0.0
        %1914 = vmatprep.subr.mxu0 0.0
        %1915 = vmatpush1.msra.mxu0 0.0
        %1916 = vmatprep.subr.mxu0 0.0
        %1917 = vmatpush1.msra.mxu0 0.0
        %1918 = vmatprep.subr.mxu0 0.0
        %1919 = vmatpush1.msra.mxu0 0.0
        %1920 = vmatprep.subr.mxu0 0.0
        %1921 = vmatpush1.msra.mxu0 0.0
        %1922 = vmatprep.subr.mxu0 0.0
        %1923 = vmatpush1.msra.mxu0 0.0
        %1924 = vmatprep.subr.mxu0 0.0
        %1925 = vmatpush1.msra.mxu0 0.0
        %1926 = vmatprep.subr.mxu0 0.0
        %1927 = vmatpush1.msra.mxu0 0.0
        %1928 = vmatprep.mubr.f32.mxu0 0.0
        %1929 = vmatmul.mubr.f32.gmra.mrb[0].mxu0 %v1735
        %v1930 = vpop.f32.mrb[0].mxu0
        %v1931 = vadd.f32 0.0, %v1930
        %v1932 = vpop.f32.mrb[0].mxu0
        %1933 = vmatprep.mubr.f32.mxu0 0.0
        %1934 = vmatmul.mubr.f32.gmra.mrb[0].mxu0 %v1737
        %v1935 = vpop.f32.mrb[0].mxu0
        %v1936 = vadd.f32 0.0, %v1935
        %v1937 = vpop.f32.mrb[0].mxu0
        %1938 = vmatprep.mubr.f32.mxu0 0.0
        %1939 = vmatmul.mubr.f32.gmra.mrb[0].mxu0 %v1739
        %v1940 = vpop.f32.mrb[0].mxu0
        %v1941 = vadd.f32 0.0, %v1940
        %v1942 = vpop.f32.mrb[0].mxu0
        %1943 = vmatprep.mubr.f32.mxu0 0.0
        %1944 = vmatmul.mubr.f32.gmra.mrb[0].mxu0 %v1741
        %v1945 = vpop.f32.mrb[0].mxu0
        %v1946 = vadd.f32 0.0, %v1945
        %v1947 = vpop.f32.mrb[0].mxu0
        %1948 = vmatprep.mubr.f32.mxu0 0.0
        %1949 = vmatmul.mubr.f32.gmra.mrb[0].mxu0 %v1743
        %v1950 = vpop.f32.mrb[0].mxu0
        %v1951 = vadd.f32 0.0, %v1950
        %v1952 = vpop.f32.mrb[0].mxu0
        %1953 = vmatprep.mubr.f32.mxu0 0.0
        %1954 = vmatmul.mubr.f32.gmra.mrb[0].mxu0 %v1745
        %v1955 = vpop.f32.mrb[0].mxu0
        %v1956 = vadd.f32 0.0, %v1955
        %v1957 = vpop.f32.mrb[0].mxu0
        %1958 = vmatprep.mubr.f32.mxu0 0.0
        %1959 = vmatmul.mubr.f32.gmra.mrb[0].mxu0 %v1747
        %v1960 = vpop.f32.mrb[0].mxu0
        %v1961 = vadd.f32 0.0, %v1960
        %v1962 = vpop.f32.mrb[0].mxu0
        %1963 = vmatprep.mubr.f32.mxu0 0.0
        %1964 = vmatmul.mubr.f32.gmra.mrb[0].mxu0 %v1749
        %v1965 = vpop.f32.mrb[0].mxu0
        %v1966 = vadd.f32 0.0, %v1965
        %v1967 = vpop.f32.mrb[0].mxu0
        %1968 = vdwg.mxu0
        %v1969 = vadd.f32 %v1670, %v1818
        %v1970 = vadd.f32 %v1671, %v1820
        %v1971 = vadd.f32 %v1672, %v1931
        %v1972 = vadd.f32 %v1673, %v1824
        %v1973 = vadd.f32 %v1674, %v1826
        %v1974 = vadd.f32 %v1675, %v1936
        %v1975 = vadd.f32 %v1676, %v1830
        %v1976 = vadd.f32 %v1677, %v1832
        %v1977 = vadd.f32 %v1678, %v1941
        %v1978 = vadd.f32 %v1679, %v1836
        %v1979 = vadd.f32 %v1680, %v1838
        %v1980 = vadd.f32 %v1681, %v1946
        %v1981 = vadd.f32 %v1682, %v1842
        %v1982 = vadd.f32 %v1683, %v1844
        %v1983 = vadd.f32 %v1684, %v1951
        %v1984 = vadd.f32 %v1685, %v1848
        %v1985 = vadd.f32 %v1686, %v1850
        %v1986 = vadd.f32 %v1687, %v1956
        %v1987 = vadd.f32 %v1688, %v1854
        %v1988 = vadd.f32 %v1689, %v1856
        %v1989 = vadd.f32 %v1690, %v1961
        %v1990 = vadd.f32 %v1691, %v1860
        %v1991 = vadd.f32 %v1692, %v1862
        %v1992 = vadd.f32 %v1693, %v1966
        %v1993 = vld [vmem:[%s2] sm:$0x7]
        %v1995 = vlaneseq
        %v1996 = vshrl.u32 %v1995, 7
        %v1997 = vsub.s32 0, %v1996
        %v1998 = vrot.slane %v1993, %v1997
        %v1999 = vlaneseq
        %v2000 = vshrl.u32 %v1999, 7
        %v2001 = vsub.s32 1, %v2000
        %v2002 = vrot.slane %v1993, %v2001
        %v2003 = vlaneseq
        %v2004 = vshrl.u32 %v2003, 7
        %v2005 = vsub.s32 2, %v2004
        %v2006 = vrot.slane %v1993, %v2005
        %v2010 = vadd.f32 %v1969, %v1998
        %v2011 = vadd.f32 %v1970, %v2002
        %v2012 = vadd.f32 %v1971, %v2006
        %v2013 = vadd.f32 %v1972, %v1998
        %v2014 = vadd.f32 %v1973, %v2002
        %v2015 = vadd.f32 %v1974, %v2006
        %v2016 = vadd.f32 %v1975, %v1998
        %v2017 = vadd.f32 %v1976, %v2002
        %v2018 = vadd.f32 %v1977, %v2006
        %v2019 = vadd.f32 %v1978, %v1998
        %v2020 = vadd.f32 %v1979, %v2002
        %v2021 = vadd.f32 %v1980, %v2006
        %v2022 = vadd.f32 %v1981, %v1998
        %v2023 = vadd.f32 %v1982, %v2002
        %v2024 = vadd.f32 %v1983, %v2006
        %v2025 = vadd.f32 %v1984, %v1998
        %v2026 = vadd.f32 %v1985, %v2002
        %v2027 = vadd.f32 %v1986, %v2006
        %v2028 = vadd.f32 %v1987, %v1998
        %v2029 = vadd.f32 %v1988, %v2002
        %v2030 = vadd.f32 %v1989, %v2006
        %v2031 = vadd.f32 %v1990, %v1998
        %v2032 = vadd.f32 %v1991, %v2002
        %v2033 = vadd.f32 %v1992, %v2006
        %vm2034 = vcmp.gt.f32.partialorder %v2010, 0.0
        %vm2035 = vcmp.gt.f32.partialorder %v2011, 0.0
        %vm2036 = vcmp.gt.f32.partialorder %v2012, 0.0
        %vm2037 = vcmp.gt.f32.partialorder %v2013, 0.0
        %vm2038 = vcmp.gt.f32.partialorder %v2014, 0.0
        %vm2039 = vcmp.gt.f32.partialorder %v2015, 0.0
        %vm2040 = vcmp.gt.f32.partialorder %v2016, 0.0
        %vm2041 = vcmp.gt.f32.partialorder %v2017, 0.0
        %vm2042 = vcmp.gt.f32.partialorder %v2018, 0.0
        %vm2043 = vcmp.gt.f32.partialorder %v2019, 0.0
        %vm2044 = vcmp.gt.f32.partialorder %v2020, 0.0
        %vm2045 = vcmp.gt.f32.partialorder %v2021, 0.0
        %vm2046 = vcmp.gt.f32.partialorder %v2022, 0.0
        %vm2047 = vcmp.gt.f32.partialorder %v2023, 0.0
        %vm2048 = vcmp.gt.f32.partialorder %v2024, 0.0
        %vm2049 = vcmp.gt.f32.partialorder %v2025, 0.0
        %vm2050 = vcmp.gt.f32.partialorder %v2026, 0.0
        %vm2051 = vcmp.gt.f32.partialorder %v2027, 0.0
        %vm2052 = vcmp.gt.f32.partialorder %v2028, 0.0
        %vm2053 = vcmp.gt.f32.partialorder %v2029, 0.0
        %vm2054 = vcmp.gt.f32.partialorder %v2030, 0.0
        %vm2055 = vcmp.gt.f32.partialorder %v2031, 0.0
        %vm2056 = vcmp.gt.f32.partialorder %v2032, 0.0
        %vm2057 = vcmp.gt.f32.partialorder %v2033, 0.0
        %v2058 = vmul.f32 %v2010, 0.01
        %v2059 = vmul.f32 %v2011, 0.01
        %v2060 = vmul.f32 %v2012, 0.01
        %v2061 = vmul.f32 %v2013, 0.01
        %v2062 = vmul.f32 %v2014, 0.01
        %v2063 = vmul.f32 %v2015, 0.01
        %v2064 = vmul.f32 %v2016, 0.01
        %v2065 = vmul.f32 %v2017, 0.01
        %v2066 = vmul.f32 %v2018, 0.01
        %v2067 = vmul.f32 %v2019, 0.01
        %v2068 = vmul.f32 %v2020, 0.01
        %v2069 = vmul.f32 %v2021, 0.01
        %v2070 = vmul.f32 %v2022, 0.01
        %v2071 = vmul.f32 %v2023, 0.01
        %v2072 = vmul.f32 %v2024, 0.01
        %v2073 = vmul.f32 %v2025, 0.01
        %v2074 = vmul.f32 %v2026, 0.01
        %v2075 = vmul.f32 %v2027, 0.01
        %v2076 = vmul.f32 %v2028, 0.01
        %v2077 = vmul.f32 %v2029, 0.01
        %v2078 = vmul.f32 %v2030, 0.01
        %v2079 = vmul.f32 %v2031, 0.01
        %v2080 = vmul.f32 %v2032, 0.01
        %v2081 = vmul.f32 %v2033, 0.01
        %v2082 = vsel %vm2034, %v2010, %v2058
        %v2083 = vsel %vm2035, %v2011, %v2059
        %v2084 = vsel %vm2036, %v2012, %v2060
        %v2085 = vsel %vm2037, %v2013, %v2061
        %v2086 = vsel %vm2038, %v2014, %v2062
        %v2087 = vsel %vm2039, %v2015, %v2063
        %v2088 = vsel %vm2040, %v2016, %v2064
        %v2089 = vsel %vm2041, %v2017, %v2065
        %v2090 = vsel %vm2042, %v2018, %v2066
        %v2091 = vsel %vm2043, %v2019, %v2067
        %v2092 = vsel %vm2044, %v2020, %v2068
        %v2093 = vsel %vm2045, %v2021, %v2069
        %v2094 = vsel %vm2046, %v2022, %v2070
        %v2095 = vsel %vm2047, %v2023, %v2071
        %v2096 = vsel %vm2048, %v2024, %v2072
        %v2097 = vsel %vm2049, %v2025, %v2073
        %v2098 = vsel %vm2050, %v2026, %v2074
        %v2099 = vsel %vm2051, %v2027, %v2075
        %v2100 = vsel %vm2052, %v2028, %v2076
        %v2101 = vsel %vm2053, %v2029, %v2077
        %v2102 = vsel %vm2054, %v2030, %v2078
        %v2103 = vsel %vm2055, %v2031, %v2079
        %v2104 = vsel %vm2056, %v2032, %v2080
        %v2105 = vsel %vm2057, %v2033, %v2081
        %v2130 = vrot.slane %v2082, 1
        %v2131 = vrot.slane %v2085, 1
        %v2132 = vsel %vm611, %v2130, %v2131
        %v2133 = vrot.slane %v2083, 1
        %v2134 = vrot.slane %v2086, 1
        %v2135 = vsel %vm611, %v2133, %v2134
        %v2136 = vrot.slane %v2084, 1
        %v2137 = vrot.slane %v2087, 1
        %v2138 = vsel %vm611, %v2136, %v2137
        %v2139 = vrot.slane %v2088, 1
        %v2140 = vsel %vm611, %v2131, %v2139
        %v2141 = vrot.slane %v2089, 1
        %v2142 = vsel %vm611, %v2134, %v2141
        %v2143 = vrot.slane %v2090, 1
        %v2144 = vsel %vm611, %v2137, %v2143
        %v2145 = vrot.slane %v2091, 1
        %v2146 = vsel %vm611, %v2139, %v2145
        %v2147 = vrot.slane %v2092, 1
        %v2148 = vsel %vm611, %v2141, %v2147
        %v2149 = vrot.slane %v2093, 1
        %v2150 = vsel %vm611, %v2143, %v2149
        %v2151 = vrot.slane %v2094, 1
        %v2152 = vsel %vm611, %v2145, %v2151
        %v2153 = vrot.slane %v2095, 1
        %v2154 = vsel %vm611, %v2147, %v2153
        %v2155 = vrot.slane %v2096, 1
        %v2156 = vsel %vm611, %v2149, %v2155
        %v2157 = vrot.slane %v2097, 1
        %v2158 = vsel %vm611, %v2151, %v2157
        %v2159 = vrot.slane %v2098, 1
        %v2160 = vsel %vm611, %v2153, %v2159
        %v2161 = vrot.slane %v2099, 1
        %v2162 = vsel %vm611, %v2155, %v2161
        %v2163 = vrot.slane %v2100, 1
        %v2164 = vsel %vm611, %v2157, %v2163
        %v2165 = vrot.slane %v2101, 1
        %v2166 = vsel %vm611, %v2159, %v2165
        %v2167 = vrot.slane %v2102, 1
        %v2168 = vsel %vm611, %v2161, %v2167
        %v2169 = vrot.slane %v2103, 1
        %v2170 = vsel %vm611, %v2163, %v2169
        %v2171 = vrot.slane %v2104, 1
        %v2172 = vsel %vm611, %v2165, %v2171
        %v2173 = vrot.slane %v2105, 1
        %v2174 = vsel %vm611, %v2167, %v2173
        %v2199 = vmax.f32 %v2082, %v2132
        %v2200 = vmax.f32 %v2083, %v2135
        %v2201 = vmax.f32 %v2084, %v2138
        %v2202 = vmax.f32 %v2085, %v2140
        %v2203 = vmax.f32 %v2086, %v2142
        %v2204 = vmax.f32 %v2087, %v2144
        %v2205 = vmax.f32 %v2088, %v2146
        %v2206 = vmax.f32 %v2089, %v2148
        %v2207 = vmax.f32 %v2090, %v2150
        %v2208 = vmax.f32 %v2091, %v2152
        %v2209 = vmax.f32 %v2092, %v2154
        %v2210 = vmax.f32 %v2093, %v2156
        %v2211 = vmax.f32 %v2094, %v2158
        %v2212 = vmax.f32 %v2095, %v2160
        %v2213 = vmax.f32 %v2096, %v2162
        %v2214 = vmax.f32 %v2097, %v2164
        %v2215 = vmax.f32 %v2098, %v2166
        %v2216 = vmax.f32 %v2099, %v2168
        %v2217 = vmax.f32 %v2100, %v2170
        %v2218 = vmax.f32 %v2101, %v2172
        %v2219 = vmax.f32 %v2102, %v2174
        %v2220 = vmax.f32 %v2103, %v2169
        %v2221 = vmax.f32 %v2104, %v2171
        %v2222 = vmax.f32 %v2105, %v2173
        %v2223 = vld [vmem:[%s3] sm:$0xff]
        %v2224 = vld [vmem:[%s3 + $0x8] sm:$0xff]
        %v2225 = vld [vmem:[%s3 + $0x10] sm:$0xff]
        %v2226 = vld [vmem:[%s3 + $0x18] sm:$0x3f]
        %vm2227 = vcmask 482304
        %v2229 = vsel %vm2227, %v2223, 0
        %v2232 = vsel %vm2227, %v2224, 0
        %v2235 = vsel %vm2227, %v2225, 0
        %v2238 = vsel %vm2227, %v2226, 0
        %vm2240 = vcmask 1042432
        %v2242 = vsel %vm2240, %v2220, 0
        %v2245 = vsel %vm2240, %v2221, 0
        %v2248 = vsel %vm2240, %v2222, 0
        %2250 = vmatprep.subr.mxu0 %v2200
        %2251 = vmatpush1.msra.mxu0 %v2199
        %2252 = vmatprep.subr.mxu0 %v2203
        %2253 = vmatpush1.msra.mxu0 %v2202
        %2254 = vmatprep.subr.mxu0 %v2206
        %2255 = vmatpush1.msra.mxu0 %v2205
        %2256 = vmatprep.subr.mxu0 %v2209
        %2257 = vmatpush1.msra.mxu0 %v2208
        %2258 = vmatprep.subr.mxu0 %v2212
        %2259 = vmatpush1.msra.mxu0 %v2211
        %2260 = vmatprep.subr.mxu0 %v2215
        %2261 = vmatpush1.msra.mxu0 %v2214
        %2262 = vmatprep.subr.mxu0 %v2218
        %2263 = vmatpush1.msra.mxu0 %v2217
        %2264 = vmatprep.subr.mxu0 %v2245
        %2265 = vmatpush1.msra.mxu0 %v2242
        %2266 = vmatprep.subr.mxu0 0.0
        %2267 = vmatpush1.msra.mxu0 0.0
        %2268 = vmatprep.subr.mxu0 0.0
        %2269 = vmatpush1.msra.mxu0 0.0
        %2270 = vmatprep.subr.mxu0 0.0
        %2271 = vmatpush1.msra.mxu0 0.0
        %2272 = vmatprep.subr.mxu0 0.0
        %2273 = vmatpush1.msra.mxu0 0.0
        %2274 = vmatprep.subr.mxu0 0.0
        %2275 = vmatpush1.msra.mxu0 0.0
        %2276 = vmatprep.subr.mxu0 0.0
        %2277 = vmatpush1.msra.mxu0 0.0
        %2278 = vmatprep.subr.mxu0 0.0
        %2279 = vmatpush1.msra.mxu0 0.0
        %2280 = vmatprep.subr.mxu0 0.0
        %2281 = vmatpush1.msra.mxu0 0.0
        %2282 = vmatprep.subr.mxu0 0.0
        %2283 = vmatpush1.msra.mxu0 0.0
        %2284 = vmatprep.subr.mxu0 0.0
        %2285 = vmatpush1.msra.mxu0 0.0
        %2286 = vmatprep.subr.mxu0 0.0
        %2287 = vmatpush1.msra.mxu0 0.0
        %2288 = vmatprep.subr.mxu0 0.0
        %2289 = vmatpush1.msra.mxu0 0.0
        %2290 = vmatprep.subr.mxu0 0.0
        %2291 = vmatpush1.msra.mxu0 0.0
        %2292 = vmatprep.subr.mxu0 0.0
        %2293 = vmatpush1.msra.mxu0 0.0
        %2294 = vmatprep.subr.mxu0 0.0
        %2295 = vmatpush1.msra.mxu0 0.0
        %2296 = vmatprep.subr.mxu0 0.0
        %2297 = vmatpush1.msra.mxu0 0.0
        %2298 = vmatprep.subr.mxu0 0.0
        %2299 = vmatpush1.msra.mxu0 0.0
        %2300 = vmatprep.subr.mxu0 0.0
        %2301 = vmatpush1.msra.mxu0 0.0
        %2302 = vmatprep.subr.mxu0 0.0
        %2303 = vmatpush1.msra.mxu0 0.0
        %2304 = vmatprep.subr.mxu0 0.0
        %2305 = vmatpush1.msra.mxu0 0.0
        %2306 = vmatprep.subr.mxu0 0.0
        %2307 = vmatpush1.msra.mxu0 0.0
        %2308 = vmatprep.subr.mxu0 0.0
        %2309 = vmatpush1.msra.mxu0 0.0
        %2310 = vmatprep.subr.mxu0 0.0
        %2311 = vmatpush1.msra.mxu0 0.0
        %2312 = vmatprep.subr.mxu0 0.0
        %2313 = vmatpush1.msra.mxu0 0.0
        %2314 = vmatprep.mubr.f32.mxu0 0.0
        %2315 = vmatmul.mubr.f32.gmra.mrb[0].mxu0 %v2229
        %v2316 = vpop.f32.mrb[0].mxu0
        %v2317 = vadd.f32 0.0, %v2316
        %v2318 = vpop.f32.mrb[0].mxu0
        %v2319 = vadd.f32 0.0, %v2318
        %2320 = vmatprep.mubr.f32.mxu0 0.0
        %2321 = vmatmul.mubr.f32.gmra.mrb[0].mxu0 %v2232
        %v2322 = vpop.f32.mrb[0].mxu0
        %v2323 = vadd.f32 0.0, %v2322
        %v2324 = vpop.f32.mrb[0].mxu0
        %v2325 = vadd.f32 0.0, %v2324
        %2326 = vmatprep.mubr.f32.mxu0 0.0
        %2327 = vmatmul.mubr.f32.gmra.mrb[0].mxu0 %v2235
        %v2328 = vpop.f32.mrb[0].mxu0
        %v2329 = vadd.f32 0.0, %v2328
        %v2330 = vpop.f32.mrb[0].mxu0
        %v2331 = vadd.f32 0.0, %v2330
        %2332 = vmatprep.mubr.f32.mxu0 0.0
        %2333 = vmatmul.mubr.f32.gmra.mrb[0].mxu0 %v2238
        %v2334 = vpop.f32.mrb[0].mxu0
        %v2335 = vadd.f32 0.0, %v2334
        %v2336 = vpop.f32.mrb[0].mxu0
        %v2337 = vadd.f32 0.0, %v2336
        %2338 = vdwg.mxu0
        %2339 = vmatprep.subr.mxu0 0.0
        %2340 = vmatpush1.msra.mxu0 %v2201
        %2341 = vmatprep.subr.mxu0 0.0
        %2342 = vmatpush1.msra.mxu0 %v2204
        %2343 = vmatprep.subr.mxu0 0.0
        %2344 = vmatpush1.msra.mxu0 %v2207
        %2345 = vmatprep.subr.mxu0 0.0
        %2346 = vmatpush1.msra.mxu0 %v2210
        %2347 = vmatprep.subr.mxu0 0.0
        %2348 = vmatpush1.msra.mxu0 %v2213
        %2349 = vmatprep.subr.mxu0 0.0
        %2350 = vmatpush1.msra.mxu0 %v2216
        %2351 = vmatprep.subr.mxu0 0.0
        %2352 = vmatpush1.msra.mxu0 %v2219
        %2353 = vmatprep.subr.mxu0 0.0
        %2354 = vmatpush1.msra.mxu0 %v2248
        %2355 = vmatprep.subr.mxu0 0.0
        %2356 = vmatpush1.msra.mxu0 0.0
        %2357 = vmatprep.subr.mxu0 0.0
        %2358 = vmatpush1.msra.mxu0 0.0
        %2359 = vmatprep.subr.mxu0 0.0
        %2360 = vmatpush1.msra.mxu0 0.0
        %2361 = vmatprep.subr.mxu0 0.0
        %2362 = vmatpush1.msra.mxu0 0.0
        %2363 = vmatprep.subr.mxu0 0.0
        %2364 = vmatpush1.msra.mxu0 0.0
        %2365 = vmatprep.subr.mxu0 0.0
        %2366 = vmatpush1.msra.mxu0 0.0
        %2367 = vmatprep.subr.mxu0 0.0
        %2368 = vmatpush1.msra.mxu0 0.0
        %2369 = vmatprep.subr.mxu0 0.0
        %2370 = vmatpush1.msra.mxu0 0.0
        %2371 = vmatprep.subr.mxu0 0.0
        %2372 = vmatpush1.msra.mxu0 0.0
        %2373 = vmatprep.subr.mxu0 0.0
        %2374 = vmatpush1.msra.mxu0 0.0
        %2375 = vmatprep.subr.mxu0 0.0
        %2376 = vmatpush1.msra.mxu0 0.0
        %2377 = vmatprep.subr.mxu0 0.0
        %2378 = vmatpush1.msra.mxu0 0.0
        %2379 = vmatprep.subr.mxu0 0.0
        %2380 = vmatpush1.msra.mxu0 0.0
        %2381 = vmatprep.subr.mxu0 0.0
        %2382 = vmatpush1.msra.mxu0 0.0
        %2383 = vmatprep.subr.mxu0 0.0
        %2384 = vmatpush1.msra.mxu0 0.0
        %2385 = vmatprep.subr.mxu0 0.0
        %2386 = vmatpush1.msra.mxu0 0.0
        %2387 = vmatprep.subr.mxu0 0.0
        %2388 = vmatpush1.msra.mxu0 0.0
        %2389 = vmatprep.subr.mxu0 0.0
        %2390 = vmatpush1.msra.mxu0 0.0
        %2391 = vmatprep.subr.mxu0 0.0
        %2392 = vmatpush1.msra.mxu0 0.0
        %2393 = vmatprep.subr.mxu0 0.0
        %2394 = vmatpush1.msra.mxu0 0.0
        %2395 = vmatprep.subr.mxu0 0.0
        %2396 = vmatpush1.msra.mxu0 0.0
        %2397 = vmatprep.subr.mxu0 0.0
        %2398 = vmatpush1.msra.mxu0 0.0
        %2399 = vmatprep.subr.mxu0 0.0
        %2400 = vmatpush1.msra.mxu0 0.0
        %2401 = vmatprep.subr.mxu0 0.0
        %2402 = vmatpush1.msra.mxu0 0.0
        %2403 = vmatprep.mubr.f32.mxu0 0.0
        %2404 = vmatmul.mubr.f32.gmra.mrb[0].mxu0 %v2229
        %v2405 = vpop.f32.mrb[0].mxu0
        %v2406 = vadd.f32 0.0, %v2405
        %v2407 = vpop.f32.mrb[0].mxu0
        %2408 = vmatprep.mubr.f32.mxu0 0.0
        %2409 = vmatmul.mubr.f32.gmra.mrb[0].mxu0 %v2232
        %v2410 = vpop.f32.mrb[0].mxu0
        %v2411 = vadd.f32 0.0, %v2410
        %v2412 = vpop.f32.mrb[0].mxu0
        %2413 = vmatprep.mubr.f32.mxu0 0.0
        %2414 = vmatmul.mubr.f32.gmra.mrb[0].mxu0 %v2235
        %v2415 = vpop.f32.mrb[0].mxu0
        %v2416 = vadd.f32 0.0, %v2415
        %v2417 = vpop.f32.mrb[0].mxu0
        %2418 = vmatprep.mubr.f32.mxu0 0.0
        %2419 = vmatmul.mubr.f32.gmra.mrb[0].mxu0 %v2238
        %v2420 = vpop.f32.mrb[0].mxu0
        %v2421 = vadd.f32 0.0, %v2420
        %v2422 = vpop.f32.mrb[0].mxu0
        %2423 = vdwg.mxu0
        %v2424 = vld [vmem:[%s4] sm:$0xff]
        %v2425 = vld [vmem:[%s4 + $0x8] sm:$0xff]
        %v2426 = vld [vmem:[%s4 + $0x10] sm:$0xff]
        %v2427 = vld [vmem:[%s4 + $0x18] sm:$0xff]
        %v2428 = vld [vmem:[%s4 + $0x20] sm:$0xff]
        %v2429 = vld [vmem:[%s4 + $0x28] sm:$0xff]
        %v2430 = vld [vmem:[%s4 + $0x30] sm:$0xff]
        %v2431 = vld [vmem:[%s4 + $0x38] sm:$0xff]
        %v2432 = vld [vmem:[%s4 + $0x40] sm:$0xff]
        %v2433 = vld [vmem:[%s4 + $0x48] sm:$0xff]
        %v2434 = vld [vmem:[%s4 + $0x50] sm:$0xff]
        %v2435 = vld [vmem:[%s4 + $0x58] sm:$0xff]
        %v2436 = vld [vmem:[%s4 + $0x60] sm:$0xff]
        %v2437 = vld [vmem:[%s4 + $0x68] sm:$0xff]
        %v2438 = vld [vmem:[%s4 + $0x70] sm:$0xff]
        %v2439 = vld [vmem:[%s4 + $0x78] sm:$0xff]
        %v2440 = vld [vmem:[%s4 + $0x80] sm:$0xff]
        %v2441 = vld [vmem:[%s4 + $0x88] sm:$0xff]
        %v2442 = vld [vmem:[%s4 + $0x90] sm:$0xff]
        %v2443 = vld [vmem:[%s4 + $0x98] sm:$0xff]
        %v2444 = vld [vmem:[%s4 + $0xa0] sm:$0xff]
        %v2445 = vld [vmem:[%s4 + $0xa8] sm:$0xff]
        %v2446 = vld [vmem:[%s4 + $0xb0] sm:$0xff]
        %v2447 = vld [vmem:[%s4 + $0xb8] sm:$0xff]
        %v2448 = vld [vmem:[%s4 + $0xc0] sm:$0xff]
        %v2449 = vld [vmem:[%s4 + $0xc8] sm:$0xff]
        %v2450 = vld [vmem:[%s4 + $0xd0] sm:$0xff]
        %v2451 = vld [vmem:[%s4 + $0xd8] sm:$0xff]
        %v2452 = vld [vmem:[%s4 + $0xe0] sm:$0xff]
        %v2453 = vld [vmem:[%s4 + $0xe8] sm:$0xff]
        %v2454 = vld [vmem:[%s4 + $0xf0] sm:$0xff]
        %v2455 = vld [vmem:[%s4 + $0xf8] sm:$0xff]
        %v2456 = vld [vmem:[%s4 + $0x100] sm:$0xff]
        %v2457 = vld [vmem:[%s4 + $0x108] sm:$0xff]
        %v2458 = vld [vmem:[%s4 + $0x110] sm:$0xff]
        %v2459 = vld [vmem:[%s4 + $0x118] sm:$0xff]
        %v2460 = vld [vmem:[%s4 + $0x120] sm:$0xff]
        %v2461 = vld [vmem:[%s4 + $0x128] sm:$0xff]
        %v2462 = vld [vmem:[%s4 + $0x130] sm:$0xff]
        %v2463 = vld [vmem:[%s4 + $0x138] sm:$0xff]
        %v2464 = vld [vmem:[%s4 + $0x140] sm:$0xff]
        %v2465 = vld [vmem:[%s4 + $0x148] sm:$0xff]
        %v2466 = vld [vmem:[%s4 + $0x150] sm:$0xff]
        %v2467 = vld [vmem:[%s4 + $0x158] sm:$0xff]
        %v2468 = vld [vmem:[%s4 + $0x160] sm:$0xff]
        %v2469 = vld [vmem:[%s4 + $0x168] sm:$0xff]
        %v2470 = vld [vmem:[%s4 + $0x170] sm:$0xff]
        %v2471 = vld [vmem:[%s4 + $0x178] sm:$0xff]
        %v2472 = vld [vmem:[%s4 + $0x180] sm:$0xff]
        %v2473 = vld [vmem:[%s4 + $0x188] sm:$0xff]
        %v2474 = vld [vmem:[%s4 + $0x190] sm:$0xff]
        %v2475 = vld [vmem:[%s4 + $0x198] sm:$0xff]
        %v2476 = vld [vmem:[%s4 + $0x1a0] sm:$0xff]
        %v2477 = vld [vmem:[%s4 + $0x1a8] sm:$0xff]
        %v2478 = vld [vmem:[%s4 + $0x1b0] sm:$0xff]
        %v2479 = vld [vmem:[%s4 + $0x1b8] sm:$0xff]
        %v2480 = vld [vmem:[%s4 + $0x1c0] sm:$0xff]
        %v2481 = vld [vmem:[%s4 + $0x1c8] sm:$0xff]
        %v2482 = vld [vmem:[%s4 + $0x1d0] sm:$0xff]
        %v2483 = vld [vmem:[%s4 + $0x1d8] sm:$0xff]
        %v2484 = vld [vmem:[%s4 + $0x1e0] sm:$0xff]
        %v2485 = vld [vmem:[%s4 + $0x1e8] sm:$0xff]
        %v2486 = vld [vmem:[%s4 + $0x1f0] sm:$0xff]
        %v2487 = vld [vmem:[%s4 + $0x1f8] sm:$0xff]
        %v2488 = vld [vmem:[%s4 + $0x200] sm:$0xff]
        %v2489 = vld [vmem:[%s4 + $0x208] sm:$0xff]
        %v2490 = vld [vmem:[%s4 + $0x210] sm:$0xff]
        %v2491 = vld [vmem:[%s4 + $0x218] sm:$0xff]
        %v2492 = vld [vmem:[%s4 + $0x220] sm:$0xff]
        %v2493 = vld [vmem:[%s4 + $0x228] sm:$0xff]
        %v2494 = vld [vmem:[%s4 + $0x230] sm:$0xff]
        %v2495 = vld [vmem:[%s4 + $0x238] sm:$0xff]
        %v2496 = vld [vmem:[%s4 + $0x240] sm:$0xff]
        %v2497 = vld [vmem:[%s4 + $0x248] sm:$0xff]
        %v2498 = vld [vmem:[%s4 + $0x250] sm:$0xff]
        %v2499 = vld [vmem:[%s4 + $0x258] sm:$0xff]
        %v2500 = vld [vmem:[%s4 + $0x260] sm:$0xff]
        %v2501 = vld [vmem:[%s4 + $0x268] sm:$0xff]
        %v2502 = vld [vmem:[%s4 + $0x270] sm:$0xff]
        %v2503 = vld [vmem:[%s4 + $0x278] sm:$0xff]
        %v2504 = vld [vmem:[%s4 + $0x280] sm:$0xff]
        %v2505 = vld [vmem:[%s4 + $0x288] sm:$0xff]
        %v2506 = vld [vmem:[%s4 + $0x290] sm:$0xff]
        %v2507 = vld [vmem:[%s4 + $0x298] sm:$0xff]
        %v2508 = vld [vmem:[%s4 + $0x2a0] sm:$0xff]
        %v2509 = vld [vmem:[%s4 + $0x2a8] sm:$0xff]
        %v2510 = vld [vmem:[%s4 + $0x2b0] sm:$0xff]
        %v2511 = vld [vmem:[%s4 + $0x2b8] sm:$0xff]
        %v2512 = vld [vmem:[%s4 + $0x2c0] sm:$0xff]
        %v2513 = vld [vmem:[%s4 + $0x2c8] sm:$0xff]
        %v2514 = vld [vmem:[%s4 + $0x2d0] sm:$0xff]
        %v2515 = vld [vmem:[%s4 + $0x2d8] sm:$0xff]
        %v2516 = vld [vmem:[%s4 + $0x2e0] sm:$0xff]
        %v2517 = vld [vmem:[%s4 + $0x2e8] sm:$0xff]
        %v2518 = vld [vmem:[%s4 + $0x2f0] sm:$0xff]
        %v2519 = vld [vmem:[%s4 + $0x2f8] sm:$0xff]
        %2520 = vmatprep.subr.mxu0 %v2425
        %2521 = vmatpush1.msra.mxu0 %v2424
        %2522 = vmatprep.subr.mxu0 %v2427
        %2523 = vmatpush1.msra.mxu0 %v2426
        %2524 = vmatprep.subr.mxu0 %v2429
        %2525 = vmatpush1.msra.mxu0 %v2428
        %2526 = vmatprep.subr.mxu0 %v2431
        %2527 = vmatpush1.msra.mxu0 %v2430
        %2528 = vmatprep.subr.mxu0 %v2433
        %2529 = vmatpush1.msra.mxu0 %v2432
        %2530 = vmatprep.subr.mxu0 %v2435
        %2531 = vmatpush1.msra.mxu0 %v2434
        %2532 = vmatprep.subr.mxu0 %v2437
        %2533 = vmatpush1.msra.mxu0 %v2436
        %2534 = vmatprep.subr.mxu0 %v2439
        %2535 = vmatpush1.msra.mxu0 %v2438
        %2536 = vmatprep.subr.mxu0 %v2441
        %2537 = vmatpush1.msra.mxu0 %v2440
        %2538 = vmatprep.subr.mxu0 %v2443
        %2539 = vmatpush1.msra.mxu0 %v2442
        %2540 = vmatprep.subr.mxu0 %v2445
        %2541 = vmatpush1.msra.mxu0 %v2444
        %2542 = vmatprep.subr.mxu0 %v2447
        %2543 = vmatpush1.msra.mxu0 %v2446
        %2544 = vmatprep.subr.mxu0 %v2449
        %2545 = vmatpush1.msra.mxu0 %v2448
        %2546 = vmatprep.subr.mxu0 %v2451
        %2547 = vmatpush1.msra.mxu0 %v2450
        %2548 = vmatprep.subr.mxu0 %v2453
        %2549 = vmatpush1.msra.mxu0 %v2452
        %2550 = vmatprep.subr.mxu0 %v2455
        %2551 = vmatpush1.msra.mxu0 %v2454
        %2552 = vmatprep.subr.mxu0 %v2457
        %2553 = vmatpush1.msra.mxu0 %v2456
        %2554 = vmatprep.subr.mxu0 %v2459
        %2555 = vmatpush1.msra.mxu0 %v2458
        %2556 = vmatprep.subr.mxu0 %v2461
        %2557 = vmatpush1.msra.mxu0 %v2460
        %2558 = vmatprep.subr.mxu0 %v2463
        %2559 = vmatpush1.msra.mxu0 %v2462
        %2560 = vmatprep.subr.mxu0 %v2465
        %2561 = vmatpush1.msra.mxu0 %v2464
        %2562 = vmatprep.subr.mxu0 %v2467
        %2563 = vmatpush1.msra.mxu0 %v2466
        %2564 = vmatprep.subr.mxu0 %v2469
        %2565 = vmatpush1.msra.mxu0 %v2468
        %2566 = vmatprep.subr.mxu0 %v2471
        %2567 = vmatpush1.msra.mxu0 %v2470
        %2568 = vmatprep.subr.mxu0 %v2473
        %2569 = vmatpush1.msra.mxu0 %v2472
        %2570 = vmatprep.subr.mxu0 %v2475
        %2571 = vmatpush1.msra.mxu0 %v2474
        %2572 = vmatprep.subr.mxu0 %v2477
        %2573 = vmatpush1.msra.mxu0 %v2476
        %2574 = vmatprep.subr.mxu0 %v2479
        %2575 = vmatpush1.msra.mxu0 %v2478
        %2576 = vmatprep.subr.mxu0 %v2481
        %2577 = vmatpush1.msra.mxu0 %v2480
        %2578 = vmatprep.subr.mxu0 %v2483
        %2579 = vmatpush1.msra.mxu0 %v2482
        %2580 = vmatprep.subr.mxu0 %v2485
        %2581 = vmatpush1.msra.mxu0 %v2484
        %2582 = vmatprep.subr.mxu0 %v2487
        %2583 = vmatpush1.msra.mxu0 %v2486
        %2584 = vmatprep.mubr.f32.mxu0 %v2319
        %2585 = vmatmul.mubr.f32.gmra.mrb[0].mxu0 %v2317
        %v2586 = vpop.f32.mrb[0].mxu0
        %v2587 = vadd.f32 0.0, %v2586
        %v2588 = vpop.f32.mrb[0].mxu0
        %v2589 = vadd.f32 0.0, %v2588
        %2590 = vmatprep.mubr.f32.mxu0 %v2325
        %2591 = vmatmul.mubr.f32.gmra.mrb[0].mxu0 %v2323
        %v2592 = vpop.f32.mrb[0].mxu0
        %v2593 = vadd.f32 0.0, %v2592
        %v2594 = vpop.f32.mrb[0].mxu0
        %v2595 = vadd.f32 0.0, %v2594
        %2596 = vmatprep.mubr.f32.mxu0 %v2331
        %2597 = vmatmul.mubr.f32.gmra.mrb[0].mxu0 %v2329
        %v2598 = vpop.f32.mrb[0].mxu0
        %v2599 = vadd.f32 0.0, %v2598
        %v2600 = vpop.f32.mrb[0].mxu0
        %v2601 = vadd.f32 0.0, %v2600
        %2602 = vmatprep.mubr.f32.mxu0 %v2337
        %2603 = vmatmul.mubr.f32.gmra.mrb[0].mxu0 %v2335
        %v2604 = vpop.f32.mrb[0].mxu0
        %v2605 = vadd.f32 0.0, %v2604
        %v2606 = vpop.f32.mrb[0].mxu0
        %v2607 = vadd.f32 0.0, %v2606
        %2608 = vdwg.mxu0
        %2609 = vmatprep.subr.mxu0 %v2489
        %2610 = vmatpush1.msra.mxu0 %v2488
        %2611 = vmatprep.subr.mxu0 %v2491
        %2612 = vmatpush1.msra.mxu0 %v2490
        %2613 = vmatprep.subr.mxu0 %v2493
        %2614 = vmatpush1.msra.mxu0 %v2492
        %2615 = vmatprep.subr.mxu0 %v2495
        %2616 = vmatpush1.msra.mxu0 %v2494
        %2617 = vmatprep.subr.mxu0 %v2497
        %2618 = vmatpush1.msra.mxu0 %v2496
        %2619 = vmatprep.subr.mxu0 %v2499
        %2620 = vmatpush1.msra.mxu0 %v2498
        %2621 = vmatprep.subr.mxu0 %v2501
        %2622 = vmatpush1.msra.mxu0 %v2500
        %2623 = vmatprep.subr.mxu0 %v2503
        %2624 = vmatpush1.msra.mxu0 %v2502
        %2625 = vmatprep.subr.mxu0 %v2505
        %2626 = vmatpush1.msra.mxu0 %v2504
        %2627 = vmatprep.subr.mxu0 %v2507
        %2628 = vmatpush1.msra.mxu0 %v2506
        %2629 = vmatprep.subr.mxu0 %v2509
        %2630 = vmatpush1.msra.mxu0 %v2508
        %2631 = vmatprep.subr.mxu0 %v2511
        %2632 = vmatpush1.msra.mxu0 %v2510
        %2633 = vmatprep.subr.mxu0 %v2513
        %2634 = vmatpush1.msra.mxu0 %v2512
        %2635 = vmatprep.subr.mxu0 %v2515
        %2636 = vmatpush1.msra.mxu0 %v2514
        %2637 = vmatprep.subr.mxu0 %v2517
        %2638 = vmatpush1.msra.mxu0 %v2516
        %2639 = vmatprep.subr.mxu0 %v2519
        %2640 = vmatpush1.msra.mxu0 %v2518
        %2641 = vmatprep.subr.mxu0 0.0
        %2642 = vmatpush1.msra.mxu0 0.0
        %2643 = vmatprep.subr.mxu0 0.0
        %2644 = vmatpush1.msra.mxu0 0.0
        %2645 = vmatprep.subr.mxu0 0.0
        %2646 = vmatpush1.msra.mxu0 0.0
        %2647 = vmatprep.subr.mxu0 0.0
        %2648 = vmatpush1.msra.mxu0 0.0
        %2649 = vmatprep.subr.mxu0 0.0
        %2650 = vmatpush1.msra.mxu0 0.0
        %2651 = vmatprep.subr.mxu0 0.0
        %2652 = vmatpush1.msra.mxu0 0.0
        %2653 = vmatprep.subr.mxu0 0.0
        %2654 = vmatpush1.msra.mxu0 0.0
        %2655 = vmatprep.subr.mxu0 0.0
        %2656 = vmatpush1.msra.mxu0 0.0
        %2657 = vmatprep.subr.mxu0 0.0
        %2658 = vmatpush1.msra.mxu0 0.0
        %2659 = vmatprep.subr.mxu0 0.0
        %2660 = vmatpush1.msra.mxu0 0.0
        %2661 = vmatprep.subr.mxu0 0.0
        %2662 = vmatpush1.msra.mxu0 0.0
        %2663 = vmatprep.subr.mxu0 0.0
        %2664 = vmatpush1.msra.mxu0 0.0
        %2665 = vmatprep.subr.mxu0 0.0
        %2666 = vmatpush1.msra.mxu0 0.0
        %2667 = vmatprep.subr.mxu0 0.0
        %2668 = vmatpush1.msra.mxu0 0.0
        %2669 = vmatprep.subr.mxu0 0.0
        %2670 = vmatpush1.msra.mxu0 0.0
        %2671 = vmatprep.subr.mxu0 0.0
        %2672 = vmatpush1.msra.mxu0 0.0
        %2673 = vmatprep.mubr.f32.mxu0 0.0
        %2674 = vmatmul.mubr.f32.gmra.mrb[0].mxu0 %v2406
        %v2675 = vpop.f32.mrb[0].mxu0
        %v2676 = vadd.f32 %v2587, %v2675
        %v2677 = vpop.f32.mrb[0].mxu0
        %v2678 = vadd.f32 %v2589, %v2677
        %2679 = vmatprep.mubr.f32.mxu0 0.0
        %2680 = vmatmul.mubr.f32.gmra.mrb[0].mxu0 %v2411
        %v2681 = vpop.f32.mrb[0].mxu0
        %v2682 = vadd.f32 %v2593, %v2681
        %v2683 = vpop.f32.mrb[0].mxu0
        %v2684 = vadd.f32 %v2595, %v2683
        %2685 = vmatprep.mubr.f32.mxu0 0.0
        %2686 = vmatmul.mubr.f32.gmra.mrb[0].mxu0 %v2416
        %v2687 = vpop.f32.mrb[0].mxu0
        %v2688 = vadd.f32 %v2599, %v2687
        %v2689 = vpop.f32.mrb[0].mxu0
        %v2690 = vadd.f32 %v2601, %v2689
        %2691 = vmatprep.mubr.f32.mxu0 0.0
        %2692 = vmatmul.mubr.f32.gmra.mrb[0].mxu0 %v2421
        %v2693 = vpop.f32.mrb[0].mxu0
        %v2694 = vadd.f32 %v2605, %v2693
        %v2695 = vpop.f32.mrb[0].mxu0
        %v2696 = vadd.f32 %v2607, %v2695
        %2697 = vdwg.mxu0
        %v2698 = vld [vmem:[%s5] sm:$0xff]
        %v2699 = vld [vmem:[%s5 + $0x8] sm:$0xff]
        %v2700 = vld [vmem:[%s5 + $0x10] sm:$0xff]
        %v2701 = vld [vmem:[%s5 + $0x18] sm:$0xff]
        %v2702 = vld [vmem:[%s5 + $0x20] sm:$0xff]
        %v2703 = vld [vmem:[%s5 + $0x28] sm:$0xff]
        %v2704 = vld [vmem:[%s5 + $0x30] sm:$0xff]
        %v2705 = vld [vmem:[%s5 + $0x38] sm:$0xff]
        %v2706 = vld [vmem:[%s5 + $0x40] sm:$0xff]
        %v2707 = vld [vmem:[%s5 + $0x48] sm:$0xff]
        %v2708 = vld [vmem:[%s5 + $0x50] sm:$0xff]
        %v2709 = vld [vmem:[%s5 + $0x58] sm:$0xff]
        %v2710 = vld [vmem:[%s5 + $0x60] sm:$0xff]
        %v2711 = vld [vmem:[%s5 + $0x68] sm:$0xff]
        %v2712 = vld [vmem:[%s5 + $0x70] sm:$0xff]
        %v2713 = vld [vmem:[%s5 + $0x78] sm:$0xff]
        %v2714 = vld [vmem:[%s5 + $0x80] sm:$0xff]
        %v2715 = vld [vmem:[%s5 + $0x88] sm:$0xff]
        %v2716 = vld [vmem:[%s5 + $0x90] sm:$0xff]
        %v2717 = vld [vmem:[%s5 + $0x98] sm:$0xff]
        %v2718 = vld [vmem:[%s5 + $0xa0] sm:$0xff]
        %v2719 = vld [vmem:[%s5 + $0xa8] sm:$0xff]
        %v2720 = vld [vmem:[%s5 + $0xb0] sm:$0xff]
        %v2721 = vld [vmem:[%s5 + $0xb8] sm:$0xff]
        %v2722 = vld [vmem:[%s5 + $0xc0] sm:$0xff]
        %v2723 = vld [vmem:[%s5 + $0xc8] sm:$0xff]
        %v2724 = vld [vmem:[%s5 + $0xd0] sm:$0xff]
        %v2725 = vld [vmem:[%s5 + $0xd8] sm:$0xff]
        %v2726 = vld [vmem:[%s5 + $0xe0] sm:$0xff]
        %v2727 = vld [vmem:[%s5 + $0xe8] sm:$0xff]
        %v2728 = vld [vmem:[%s5 + $0xf0] sm:$0xff]
        %v2729 = vld [vmem:[%s5 + $0xf8] sm:$0xff]
        %v2730 = vld [vmem:[%s5 + $0x100] sm:$0xff]
        %v2731 = vld [vmem:[%s5 + $0x108] sm:$0xff]
        %v2732 = vld [vmem:[%s5 + $0x110] sm:$0xff]
        %v2733 = vld [vmem:[%s5 + $0x118] sm:$0xff]
        %v2734 = vld [vmem:[%s5 + $0x120] sm:$0xff]
        %v2735 = vld [vmem:[%s5 + $0x128] sm:$0xff]
        %v2736 = vld [vmem:[%s5 + $0x130] sm:$0xff]
        %v2737 = vld [vmem:[%s5 + $0x138] sm:$0xff]
        %v2738 = vld [vmem:[%s5 + $0x140] sm:$0xff]
        %v2739 = vld [vmem:[%s5 + $0x148] sm:$0xff]
        %v2740 = vld [vmem:[%s5 + $0x150] sm:$0xff]
        %v2741 = vld [vmem:[%s5 + $0x158] sm:$0xff]
        %v2742 = vld [vmem:[%s5 + $0x160] sm:$0xff]
        %v2743 = vld [vmem:[%s5 + $0x168] sm:$0xff]
        %v2744 = vld [vmem:[%s5 + $0x170] sm:$0xff]
        %v2745 = vld [vmem:[%s5 + $0x178] sm:$0xff]
        %v2746 = vld [vmem:[%s5 + $0x180] sm:$0xff]
        %v2747 = vld [vmem:[%s5 + $0x188] sm:$0xff]
        %v2748 = vld [vmem:[%s5 + $0x190] sm:$0xff]
        %v2749 = vld [vmem:[%s5 + $0x198] sm:$0xff]
        %v2750 = vld [vmem:[%s5 + $0x1a0] sm:$0xff]
        %v2751 = vld [vmem:[%s5 + $0x1a8] sm:$0xff]
        %v2752 = vld [vmem:[%s5 + $0x1b0] sm:$0xff]
        %v2753 = vld [vmem:[%s5 + $0x1b8] sm:$0xff]
        %v2754 = vld [vmem:[%s5 + $0x1c0] sm:$0xff]
        %v2755 = vld [vmem:[%s5 + $0x1c8] sm:$0xff]
        %v2756 = vld [vmem:[%s5 + $0x1d0] sm:$0xff]
        %v2757 = vld [vmem:[%s5 + $0x1d8] sm:$0xff]
        %v2758 = vld [vmem:[%s5 + $0x1e0] sm:$0xff]
        %v2759 = vld [vmem:[%s5 + $0x1e8] sm:$0xff]
        %v2760 = vld [vmem:[%s5 + $0x1f0] sm:$0xff]
        %v2761 = vld [vmem:[%s5 + $0x1f8] sm:$0xff]
        %v2762 = vld [vmem:[%s5 + $0x200] sm:$0xff]
        %v2763 = vld [vmem:[%s5 + $0x208] sm:$0xff]
        %v2764 = vld [vmem:[%s5 + $0x210] sm:$0xff]
        %v2765 = vld [vmem:[%s5 + $0x218] sm:$0xff]
        %v2766 = vld [vmem:[%s5 + $0x220] sm:$0xff]
        %v2767 = vld [vmem:[%s5 + $0x228] sm:$0xff]
        %v2768 = vld [vmem:[%s5 + $0x230] sm:$0xff]
        %v2769 = vld [vmem:[%s5 + $0x238] sm:$0xff]
        %v2770 = vld [vmem:[%s5 + $0x240] sm:$0xff]
        %v2771 = vld [vmem:[%s5 + $0x248] sm:$0xff]
        %v2772 = vld [vmem:[%s5 + $0x250] sm:$0xff]
        %v2773 = vld [vmem:[%s5 + $0x258] sm:$0xff]
        %v2774 = vld [vmem:[%s5 + $0x260] sm:$0xff]
        %v2775 = vld [vmem:[%s5 + $0x268] sm:$0xff]
        %v2776 = vld [vmem:[%s5 + $0x270] sm:$0xff]
        %v2777 = vld [vmem:[%s5 + $0x278] sm:$0xff]
        %v2778 = vld [vmem:[%s5 + $0x280] sm:$0xff]
        %v2779 = vld [vmem:[%s5 + $0x288] sm:$0xff]
        %v2780 = vld [vmem:[%s5 + $0x290] sm:$0xff]
        %v2781 = vld [vmem:[%s5 + $0x298] sm:$0xff]
        %v2782 = vld [vmem:[%s5 + $0x2a0] sm:$0xff]
        %v2783 = vld [vmem:[%s5 + $0x2a8] sm:$0xff]
        %v2784 = vld [vmem:[%s5 + $0x2b0] sm:$0xff]
        %v2785 = vld [vmem:[%s5 + $0x2b8] sm:$0xff]
        %v2786 = vld [vmem:[%s5 + $0x2c0] sm:$0xff]
        %v2787 = vld [vmem:[%s5 + $0x2c8] sm:$0xff]
        %v2788 = vld [vmem:[%s5 + $0x2d0] sm:$0xff]
        %v2789 = vld [vmem:[%s5 + $0x2d8] sm:$0xff]
        %v2790 = vld [vmem:[%s5 + $0x2e0] sm:$0xff]
        %v2791 = vld [vmem:[%s5 + $0x2e8] sm:$0xff]
        %v2792 = vld [vmem:[%s5 + $0x2f0] sm:$0xff]
        %v2793 = vld [vmem:[%s5 + $0x2f8] sm:$0xff]
        %2794 = vmatprep.subr.mxu0 %v2699
        %2795 = vmatpush1.msra.mxu0 %v2698
        %2796 = vmatprep.subr.mxu0 %v2701
        %2797 = vmatpush1.msra.mxu0 %v2700
        %2798 = vmatprep.subr.mxu0 %v2703
        %2799 = vmatpush1.msra.mxu0 %v2702
        %2800 = vmatprep.subr.mxu0 %v2705
        %2801 = vmatpush1.msra.mxu0 %v2704
        %2802 = vmatprep.subr.mxu0 %v2707
        %2803 = vmatpush1.msra.mxu0 %v2706
        %2804 = vmatprep.subr.mxu0 %v2709
        %2805 = vmatpush1.msra.mxu0 %v2708
        %2806 = vmatprep.subr.mxu0 %v2711
        %2807 = vmatpush1.msra.mxu0 %v2710
        %2808 = vmatprep.subr.mxu0 %v2713
        %2809 = vmatpush1.msra.mxu0 %v2712
        %2810 = vmatprep.subr.mxu0 %v2715
        %2811 = vmatpush1.msra.mxu0 %v2714
        %2812 = vmatprep.subr.mxu0 %v2717
        %2813 = vmatpush1.msra.mxu0 %v2716
        %2814 = vmatprep.subr.mxu0 %v2719
        %2815 = vmatpush1.msra.mxu0 %v2718
        %2816 = vmatprep.subr.mxu0 %v2721
        %2817 = vmatpush1.msra.mxu0 %v2720
        %2818 = vmatprep.subr.mxu0 %v2723
        %2819 = vmatpush1.msra.mxu0 %v2722
        %2820 = vmatprep.subr.mxu0 %v2725
        %2821 = vmatpush1.msra.mxu0 %v2724
        %2822 = vmatprep.subr.mxu0 %v2727
        %2823 = vmatpush1.msra.mxu0 %v2726
        %2824 = vmatprep.subr.mxu0 %v2729
        %2825 = vmatpush1.msra.mxu0 %v2728
        %2826 = vmatprep.subr.mxu0 %v2731
        %2827 = vmatpush1.msra.mxu0 %v2730
        %2828 = vmatprep.subr.mxu0 %v2733
        %2829 = vmatpush1.msra.mxu0 %v2732
        %2830 = vmatprep.subr.mxu0 %v2735
        %2831 = vmatpush1.msra.mxu0 %v2734
        %2832 = vmatprep.subr.mxu0 %v2737
        %2833 = vmatpush1.msra.mxu0 %v2736
        %2834 = vmatprep.subr.mxu0 %v2739
        %2835 = vmatpush1.msra.mxu0 %v2738
        %2836 = vmatprep.subr.mxu0 %v2741
        %2837 = vmatpush1.msra.mxu0 %v2740
        %2838 = vmatprep.subr.mxu0 %v2743
        %2839 = vmatpush1.msra.mxu0 %v2742
        %2840 = vmatprep.subr.mxu0 %v2745
        %2841 = vmatpush1.msra.mxu0 %v2744
        %2842 = vmatprep.subr.mxu0 %v2747
        %2843 = vmatpush1.msra.mxu0 %v2746
        %2844 = vmatprep.subr.mxu0 %v2749
        %2845 = vmatpush1.msra.mxu0 %v2748
        %2846 = vmatprep.subr.mxu0 %v2751
        %2847 = vmatpush1.msra.mxu0 %v2750
        %2848 = vmatprep.subr.mxu0 %v2753
        %2849 = vmatpush1.msra.mxu0 %v2752
        %2850 = vmatprep.subr.mxu0 %v2755
        %2851 = vmatpush1.msra.mxu0 %v2754
        %2852 = vmatprep.subr.mxu0 %v2757
        %2853 = vmatpush1.msra.mxu0 %v2756
        %2854 = vmatprep.subr.mxu0 %v2759
        %2855 = vmatpush1.msra.mxu0 %v2758
        %2856 = vmatprep.subr.mxu0 %v2761
        %2857 = vmatpush1.msra.mxu0 %v2760
        %2858 = vmatprep.mubr.f32.mxu0 %v2319
        %2859 = vmatmul.mubr.f32.gmra.mrb[0].mxu0 %v2317
        %v2860 = vpop.f32.mrb[0].mxu0
        %v2861 = vadd.f32 0.0, %v2860
        %v2862 = vpop.f32.mrb[0].mxu0
        %v2863 = vadd.f32 0.0, %v2862
        %2864 = vmatprep.mubr.f32.mxu0 %v2325
        %2865 = vmatmul.mubr.f32.gmra.mrb[0].mxu0 %v2323
        %v2866 = vpop.f32.mrb[0].mxu0
        %v2867 = vadd.f32 0.0, %v2866
        %v2868 = vpop.f32.mrb[0].mxu0
        %v2869 = vadd.f32 0.0, %v2868
        %2870 = vmatprep.mubr.f32.mxu0 %v2331
        %2871 = vmatmul.mubr.f32.gmra.mrb[0].mxu0 %v2329
        %v2872 = vpop.f32.mrb[0].mxu0
        %v2873 = vadd.f32 0.0, %v2872
        %v2874 = vpop.f32.mrb[0].mxu0
        %v2875 = vadd.f32 0.0, %v2874
        %2876 = vmatprep.mubr.f32.mxu0 %v2337
        %2877 = vmatmul.mubr.f32.gmra.mrb[0].mxu0 %v2335
        %v2878 = vpop.f32.mrb[0].mxu0
        %v2879 = vadd.f32 0.0, %v2878
        %v2880 = vpop.f32.mrb[0].mxu0
        %v2881 = vadd.f32 0.0, %v2880
        %2882 = vdwg.mxu0
        %2883 = vmatprep.subr.mxu0 %v2763
        %2884 = vmatpush1.msra.mxu0 %v2762
        %2885 = vmatprep.subr.mxu0 %v2765
        %2886 = vmatpush1.msra.mxu0 %v2764
        %2887 = vmatprep.subr.mxu0 %v2767
        %2888 = vmatpush1.msra.mxu0 %v2766
        %2889 = vmatprep.subr.mxu0 %v2769
        %2890 = vmatpush1.msra.mxu0 %v2768
        %2891 = vmatprep.subr.mxu0 %v2771
        %2892 = vmatpush1.msra.mxu0 %v2770
        %2893 = vmatprep.subr.mxu0 %v2773
        %2894 = vmatpush1.msra.mxu0 %v2772
        %2895 = vmatprep.subr.mxu0 %v2775
        %2896 = vmatpush1.msra.mxu0 %v2774
        %2897 = vmatprep.subr.mxu0 %v2777
        %2898 = vmatpush1.msra.mxu0 %v2776
        %2899 = vmatprep.subr.mxu0 %v2779
        %2900 = vmatpush1.msra.mxu0 %v2778
        %2901 = vmatprep.subr.mxu0 %v2781
        %2902 = vmatpush1.msra.mxu0 %v2780
        %2903 = vmatprep.subr.mxu0 %v2783
        %2904 = vmatpush1.msra.mxu0 %v2782
        %2905 = vmatprep.subr.mxu0 %v2785
        %2906 = vmatpush1.msra.mxu0 %v2784
        %2907 = vmatprep.subr.mxu0 %v2787
        %2908 = vmatpush1.msra.mxu0 %v2786
        %2909 = vmatprep.subr.mxu0 %v2789
        %2910 = vmatpush1.msra.mxu0 %v2788
        %2911 = vmatprep.subr.mxu0 %v2791
        %2912 = vmatpush1.msra.mxu0 %v2790
        %2913 = vmatprep.subr.mxu0 %v2793
        %2914 = vmatpush1.msra.mxu0 %v2792
        %2915 = vmatprep.subr.mxu0 0.0
        %2916 = vmatpush1.msra.mxu0 0.0
        %2917 = vmatprep.subr.mxu0 0.0
        %2918 = vmatpush1.msra.mxu0 0.0
        %2919 = vmatprep.subr.mxu0 0.0
        %2920 = vmatpush1.msra.mxu0 0.0
        %2921 = vmatprep.subr.mxu0 0.0
        %2922 = vmatpush1.msra.mxu0 0.0
        %2923 = vmatprep.subr.mxu0 0.0
        %2924 = vmatpush1.msra.mxu0 0.0
        %2925 = vmatprep.subr.mxu0 0.0
        %2926 = vmatpush1.msra.mxu0 0.0
        %2927 = vmatprep.subr.mxu0 0.0
        %2928 = vmatpush1.msra.mxu0 0.0
        %2929 = vmatprep.subr.mxu0 0.0
        %2930 = vmatpush1.msra.mxu0 0.0
        %2931 = vmatprep.subr.mxu0 0.0
        %2932 = vmatpush1.msra.mxu0 0.0
        %2933 = vmatprep.subr.mxu0 0.0
        %2934 = vmatpush1.msra.mxu0 0.0
        %2935 = vmatprep.subr.mxu0 0.0
        %2936 = vmatpush1.msra.mxu0 0.0
        %2937 = vmatprep.subr.mxu0 0.0
        %2938 = vmatpush1.msra.mxu0 0.0
        %2939 = vmatprep.subr.mxu0 0.0
        %2940 = vmatpush1.msra.mxu0 0.0
        %2941 = vmatprep.subr.mxu0 0.0
        %2942 = vmatpush1.msra.mxu0 0.0
        %2943 = vmatprep.subr.mxu0 0.0
        %2944 = vmatpush1.msra.mxu0 0.0
        %2945 = vmatprep.subr.mxu0 0.0
        %2946 = vmatpush1.msra.mxu0 0.0
        %2947 = vmatprep.mubr.f32.mxu0 0.0
        %2948 = vmatmul.mubr.f32.gmra.mrb[0].mxu0 %v2406
        %v2949 = vpop.f32.mrb[0].mxu0
        %v2950 = vadd.f32 %v2861, %v2949
        %v2951 = vpop.f32.mrb[0].mxu0
        %v2952 = vadd.f32 %v2863, %v2951
        %2953 = vmatprep.mubr.f32.mxu0 0.0
        %2954 = vmatmul.mubr.f32.gmra.mrb[0].mxu0 %v2411
        %v2955 = vpop.f32.mrb[0].mxu0
        %v2956 = vadd.f32 %v2867, %v2955
        %v2957 = vpop.f32.mrb[0].mxu0
        %v2958 = vadd.f32 %v2869, %v2957
        %2959 = vmatprep.mubr.f32.mxu0 0.0
        %2960 = vmatmul.mubr.f32.gmra.mrb[0].mxu0 %v2416
        %v2961 = vpop.f32.mrb[0].mxu0
        %v2962 = vadd.f32 %v2873, %v2961
        %v2963 = vpop.f32.mrb[0].mxu0
        %v2964 = vadd.f32 %v2875, %v2963
        %2965 = vmatprep.mubr.f32.mxu0 0.0
        %2966 = vmatmul.mubr.f32.gmra.mrb[0].mxu0 %v2421
        %v2967 = vpop.f32.mrb[0].mxu0
        %v2968 = vadd.f32 %v2879, %v2967
        %v2969 = vpop.f32.mrb[0].mxu0
        %v2970 = vadd.f32 %v2881, %v2969
        %2971 = vdwg.mxu0
        %v2972 = vmax.f32 %v2676, %v2950
        %v2973 = vmax.f32 %v2678, %v2952
        %v2974 = vmax.f32 %v2682, %v2956
        %v2975 = vmax.f32 %v2684, %v2958
        %v2976 = vmax.f32 %v2688, %v2962
        %v2977 = vmax.f32 %v2690, %v2964
        %v2978 = vmax.f32 %v2694, %v2968
        %v2979 = vmax.f32 %v2696, %v2970
        %v2980 = vld [vmem:[%s6] sm:$0xff]
        %v2981 = vld [vmem:[%s6 + $0x8] sm:$0xff]
        %v2982 = vld [vmem:[%s6 + $0x10] sm:$0xff]
        %v2983 = vld [vmem:[%s6 + $0x18] sm:$0xff]
        %v2984 = vld [vmem:[%s6 + $0x20] sm:$0xff]
        %v2985 = vld [vmem:[%s6 + $0x28] sm:$0xff]
        %v2986 = vld [vmem:[%s6 + $0x30] sm:$0xff]
        %v2987 = vld [vmem:[%s6 + $0x38] sm:$0xff]
        %v2988 = vld [vmem:[%s6 + $0x40] sm:$0xff]
        %v2989 = vld [vmem:[%s6 + $0x48] sm:$0xff]
        %v2990 = vld [vmem:[%s6 + $0x50] sm:$0xff]
        %v2991 = vld [vmem:[%s6 + $0x58] sm:$0xff]
        %v2992 = vld [vmem:[%s6 + $0x60] sm:$0xff]
        %v2993 = vld [vmem:[%s6 + $0x68] sm:$0xff]
        %v2994 = vld [vmem:[%s6 + $0x70] sm:$0xff]
        %v2995 = vld [vmem:[%s6 + $0x78] sm:$0xff]
        %v2996 = vld [vmem:[%s6 + $0x80] sm:$0xff]
        %v2997 = vld [vmem:[%s6 + $0x88] sm:$0xff]
        %v2998 = vld [vmem:[%s6 + $0x90] sm:$0xff]
        %v2999 = vld [vmem:[%s6 + $0x98] sm:$0xff]
        %v3000 = vld [vmem:[%s6 + $0xa0] sm:$0xff]
        %v3001 = vld [vmem:[%s6 + $0xa8] sm:$0xff]
        %v3002 = vld [vmem:[%s6 + $0xb0] sm:$0xff]
        %v3003 = vld [vmem:[%s6 + $0xb8] sm:$0xff]
        %v3004 = vld [vmem:[%s6 + $0xc0] sm:$0xff]
        %v3005 = vld [vmem:[%s6 + $0xc8] sm:$0xff]
        %v3006 = vld [vmem:[%s6 + $0xd0] sm:$0xff]
        %v3007 = vld [vmem:[%s6 + $0xd8] sm:$0xff]
        %v3008 = vld [vmem:[%s6 + $0xe0] sm:$0xff]
        %v3009 = vld [vmem:[%s6 + $0xe8] sm:$0xff]
        %v3010 = vld [vmem:[%s6 + $0xf0] sm:$0xff]
        %v3011 = vld [vmem:[%s6 + $0xf8] sm:$0xff]
        %v3012 = vld [vmem:[%s6 + $0x100] sm:$0xff]
        %v3013 = vld [vmem:[%s6 + $0x108] sm:$0xff]
        %v3014 = vld [vmem:[%s6 + $0x110] sm:$0xff]
        %v3015 = vld [vmem:[%s6 + $0x118] sm:$0xff]
        %v3016 = vld [vmem:[%s6 + $0x120] sm:$0xff]
        %v3017 = vld [vmem:[%s6 + $0x128] sm:$0xff]
        %v3018 = vld [vmem:[%s6 + $0x130] sm:$0xff]
        %v3019 = vld [vmem:[%s6 + $0x138] sm:$0xff]
        %v3020 = vld [vmem:[%s6 + $0x140] sm:$0xff]
        %v3021 = vld [vmem:[%s6 + $0x148] sm:$0xff]
        %v3022 = vld [vmem:[%s6 + $0x150] sm:$0xff]
        %v3023 = vld [vmem:[%s6 + $0x158] sm:$0xff]
        %v3024 = vld [vmem:[%s6 + $0x160] sm:$0xff]
        %v3025 = vld [vmem:[%s6 + $0x168] sm:$0xff]
        %v3026 = vld [vmem:[%s6 + $0x170] sm:$0xff]
        %v3027 = vld [vmem:[%s6 + $0x178] sm:$0xff]
        %v3028 = vld [vmem:[%s6 + $0x180] sm:$0xff]
        %v3029 = vld [vmem:[%s6 + $0x188] sm:$0xff]
        %v3030 = vld [vmem:[%s6 + $0x190] sm:$0xff]
        %v3031 = vld [vmem:[%s6 + $0x198] sm:$0xff]
        %v3032 = vld [vmem:[%s6 + $0x1a0] sm:$0xff]
        %v3033 = vld [vmem:[%s6 + $0x1a8] sm:$0xff]
        %v3034 = vld [vmem:[%s6 + $0x1b0] sm:$0xff]
        %v3035 = vld [vmem:[%s6 + $0x1b8] sm:$0xff]
        %v3036 = vld [vmem:[%s6 + $0x1c0] sm:$0xff]
        %v3037 = vld [vmem:[%s6 + $0x1c8] sm:$0xff]
        %v3038 = vld [vmem:[%s6 + $0x1d0] sm:$0xff]
        %v3039 = vld [vmem:[%s6 + $0x1d8] sm:$0xff]
        %v3040 = vld [vmem:[%s6 + $0x1e0] sm:$0xff]
        %v3041 = vld [vmem:[%s6 + $0x1e8] sm:$0xff]
        %v3042 = vld [vmem:[%s6 + $0x1f0] sm:$0xff]
        %v3043 = vld [vmem:[%s6 + $0x1f8] sm:$0xff]
        %v3044 = vld [vmem:[%s6 + $0x200] sm:$0xff]
        %v3045 = vld [vmem:[%s6 + $0x208] sm:$0xff]
        %v3046 = vld [vmem:[%s6 + $0x210] sm:$0xff]
        %v3047 = vld [vmem:[%s6 + $0x218] sm:$0xff]
        %v3048 = vld [vmem:[%s6 + $0x220] sm:$0xff]
        %v3049 = vld [vmem:[%s6 + $0x228] sm:$0xff]
        %v3050 = vld [vmem:[%s6 + $0x230] sm:$0xff]
        %v3051 = vld [vmem:[%s6 + $0x238] sm:$0xff]
        %v3052 = vld [vmem:[%s6 + $0x240] sm:$0xff]
        %v3053 = vld [vmem:[%s6 + $0x248] sm:$0xff]
        %v3054 = vld [vmem:[%s6 + $0x250] sm:$0xff]
        %v3055 = vld [vmem:[%s6 + $0x258] sm:$0xff]
        %v3056 = vld [vmem:[%s6 + $0x260] sm:$0xff]
        %v3057 = vld [vmem:[%s6 + $0x268] sm:$0xff]
        %v3058 = vld [vmem:[%s6 + $0x270] sm:$0xff]
        %v3059 = vld [vmem:[%s6 + $0x278] sm:$0xff]
        %v3060 = vld [vmem:[%s6 + $0x280] sm:$0xff]
        %v3061 = vld [vmem:[%s6 + $0x288] sm:$0xff]
        %v3062 = vld [vmem:[%s6 + $0x290] sm:$0xff]
        %v3063 = vld [vmem:[%s6 + $0x298] sm:$0xff]
        %v3064 = vld [vmem:[%s6 + $0x2a0] sm:$0xff]
        %v3065 = vld [vmem:[%s6 + $0x2a8] sm:$0xff]
        %v3066 = vld [vmem:[%s6 + $0x2b0] sm:$0xff]
        %v3067 = vld [vmem:[%s6 + $0x2b8] sm:$0xff]
        %v3068 = vld [vmem:[%s6 + $0x2c0] sm:$0xff]
        %v3069 = vld [vmem:[%s6 + $0x2c8] sm:$0xff]
        %v3070 = vld [vmem:[%s6 + $0x2d0] sm:$0xff]
        %v3071 = vld [vmem:[%s6 + $0x2d8] sm:$0xff]
        %v3072 = vld [vmem:[%s6 + $0x2e0] sm:$0xff]
        %v3073 = vld [vmem:[%s6 + $0x2e8] sm:$0xff]
        %v3074 = vld [vmem:[%s6 + $0x2f0] sm:$0xff]
        %v3075 = vld [vmem:[%s6 + $0x2f8] sm:$0xff]
        %s3076 = scalar_lea.vmem %s6, 768
        %v3077 = vld [vmem:[%s3076] sm:$0xff]
        %v3078 = vld [vmem:[%s3076 + $0x8] sm:$0xff]
        %v3079 = vld [vmem:[%s3076 + $0x10] sm:$0xff]
        %v3080 = vld [vmem:[%s3076 + $0x18] sm:$0xff]
        %v3081 = vld [vmem:[%s3076 + $0x20] sm:$0xff]
        %v3082 = vld [vmem:[%s3076 + $0x28] sm:$0xff]
        %v3083 = vld [vmem:[%s3076 + $0x30] sm:$0xff]
        %v3084 = vld [vmem:[%s3076 + $0x38] sm:$0xff]
        %v3085 = vld [vmem:[%s3076 + $0x40] sm:$0xff]
        %v3086 = vld [vmem:[%s3076 + $0x48] sm:$0xff]
        %v3087 = vld [vmem:[%s3076 + $0x50] sm:$0xff]
        %v3088 = vld [vmem:[%s3076 + $0x58] sm:$0xff]
        %v3089 = vld [vmem:[%s3076 + $0x60] sm:$0xff]
        %v3090 = vld [vmem:[%s3076 + $0x68] sm:$0xff]
        %v3091 = vld [vmem:[%s3076 + $0x70] sm:$0xff]
        %v3092 = vld [vmem:[%s3076 + $0x78] sm:$0xff]
        %v3093 = vld [vmem:[%s3076 + $0x80] sm:$0xff]
        %v3094 = vld [vmem:[%s3076 + $0x88] sm:$0xff]
        %v3095 = vld [vmem:[%s3076 + $0x90] sm:$0xff]
        %v3096 = vld [vmem:[%s3076 + $0x98] sm:$0xff]
        %v3097 = vld [vmem:[%s3076 + $0xa0] sm:$0xff]
        %v3098 = vld [vmem:[%s3076 + $0xa8] sm:$0xff]
        %v3099 = vld [vmem:[%s3076 + $0xb0] sm:$0xff]
        %v3100 = vld [vmem:[%s3076 + $0xb8] sm:$0xff]
        %v3101 = vld [vmem:[%s3076 + $0xc0] sm:$0xff]
        %v3102 = vld [vmem:[%s3076 + $0xc8] sm:$0xff]
        %v3103 = vld [vmem:[%s3076 + $0xd0] sm:$0xff]
        %v3104 = vld [vmem:[%s3076 + $0xd8] sm:$0xff]
        %v3105 = vld [vmem:[%s3076 + $0xe0] sm:$0xff]
        %v3106 = vld [vmem:[%s3076 + $0xe8] sm:$0xff]
        %v3107 = vld [vmem:[%s3076 + $0xf0] sm:$0xff]
        %v3108 = vld [vmem:[%s3076 + $0xf8] sm:$0xff]
        %v3109 = vld [vmem:[%s3076 + $0x100] sm:$0xff]
        %v3110 = vld [vmem:[%s3076 + $0x108] sm:$0xff]
        %v3111 = vld [vmem:[%s3076 + $0x110] sm:$0xff]
        %v3112 = vld [vmem:[%s3076 + $0x118] sm:$0xff]
        %v3113 = vld [vmem:[%s3076 + $0x120] sm:$0xff]
        %v3114 = vld [vmem:[%s3076 + $0x128] sm:$0xff]
        %v3115 = vld [vmem:[%s3076 + $0x130] sm:$0xff]
        %v3116 = vld [vmem:[%s3076 + $0x138] sm:$0xff]
        %v3117 = vld [vmem:[%s3076 + $0x140] sm:$0xff]
        %v3118 = vld [vmem:[%s3076 + $0x148] sm:$0xff]
        %v3119 = vld [vmem:[%s3076 + $0x150] sm:$0xff]
        %v3120 = vld [vmem:[%s3076 + $0x158] sm:$0xff]
        %v3121 = vld [vmem:[%s3076 + $0x160] sm:$0xff]
        %v3122 = vld [vmem:[%s3076 + $0x168] sm:$0xff]
        %v3123 = vld [vmem:[%s3076 + $0x170] sm:$0xff]
        %v3124 = vld [vmem:[%s3076 + $0x178] sm:$0xff]
        %v3125 = vld [vmem:[%s3076 + $0x180] sm:$0xff]
        %v3126 = vld [vmem:[%s3076 + $0x188] sm:$0xff]
        %v3127 = vld [vmem:[%s3076 + $0x190] sm:$0xff]
        %v3128 = vld [vmem:[%s3076 + $0x198] sm:$0xff]
        %v3129 = vld [vmem:[%s3076 + $0x1a0] sm:$0xff]
        %v3130 = vld [vmem:[%s3076 + $0x1a8] sm:$0xff]
        %v3131 = vld [vmem:[%s3076 + $0x1b0] sm:$0xff]
        %v3132 = vld [vmem:[%s3076 + $0x1b8] sm:$0xff]
        %v3133 = vld [vmem:[%s3076 + $0x1c0] sm:$0xff]
        %v3134 = vld [vmem:[%s3076 + $0x1c8] sm:$0xff]
        %v3135 = vld [vmem:[%s3076 + $0x1d0] sm:$0xff]
        %v3136 = vld [vmem:[%s3076 + $0x1d8] sm:$0xff]
        %v3137 = vld [vmem:[%s3076 + $0x1e0] sm:$0xff]
        %v3138 = vld [vmem:[%s3076 + $0x1e8] sm:$0xff]
        %v3139 = vld [vmem:[%s3076 + $0x1f0] sm:$0xff]
        %v3140 = vld [vmem:[%s3076 + $0x1f8] sm:$0xff]
        %v3141 = vld [vmem:[%s3076 + $0x200] sm:$0xff]
        %v3142 = vld [vmem:[%s3076 + $0x208] sm:$0xff]
        %v3143 = vld [vmem:[%s3076 + $0x210] sm:$0xff]
        %v3144 = vld [vmem:[%s3076 + $0x218] sm:$0xff]
        %v3145 = vld [vmem:[%s3076 + $0x220] sm:$0xff]
        %v3146 = vld [vmem:[%s3076 + $0x228] sm:$0xff]
        %v3147 = vld [vmem:[%s3076 + $0x230] sm:$0xff]
        %v3148 = vld [vmem:[%s3076 + $0x238] sm:$0xff]
        %v3149 = vld [vmem:[%s3076 + $0x240] sm:$0xff]
        %v3150 = vld [vmem:[%s3076 + $0x248] sm:$0xff]
        %v3151 = vld [vmem:[%s3076 + $0x250] sm:$0xff]
        %v3152 = vld [vmem:[%s3076 + $0x258] sm:$0xff]
        %v3153 = vld [vmem:[%s3076 + $0x260] sm:$0xff]
        %v3154 = vld [vmem:[%s3076 + $0x268] sm:$0xff]
        %v3155 = vld [vmem:[%s3076 + $0x270] sm:$0xff]
        %v3156 = vld [vmem:[%s3076 + $0x278] sm:$0xff]
        %v3157 = vld [vmem:[%s3076 + $0x280] sm:$0xff]
        %v3158 = vld [vmem:[%s3076 + $0x288] sm:$0xff]
        %v3159 = vld [vmem:[%s3076 + $0x290] sm:$0xff]
        %v3160 = vld [vmem:[%s3076 + $0x298] sm:$0xff]
        %v3161 = vld [vmem:[%s3076 + $0x2a0] sm:$0xff]
        %v3162 = vld [vmem:[%s3076 + $0x2a8] sm:$0xff]
        %v3163 = vld [vmem:[%s3076 + $0x2b0] sm:$0xff]
        %v3164 = vld [vmem:[%s3076 + $0x2b8] sm:$0xff]
        %v3165 = vld [vmem:[%s3076 + $0x2c0] sm:$0xff]
        %v3166 = vld [vmem:[%s3076 + $0x2c8] sm:$0xff]
        %v3167 = vld [vmem:[%s3076 + $0x2d0] sm:$0xff]
        %v3168 = vld [vmem:[%s3076 + $0x2d8] sm:$0xff]
        %v3169 = vld [vmem:[%s3076 + $0x2e0] sm:$0xff]
        %v3170 = vld [vmem:[%s3076 + $0x2e8] sm:$0xff]
        %v3171 = vld [vmem:[%s3076 + $0x2f0] sm:$0xff]
        %v3172 = vld [vmem:[%s3076 + $0x2f8] sm:$0xff]
        %v3181 = vrot.slane %v2972, 1
        %v3182 = vrot.slane %v2974, 1
        %v3183 = vsel %vm611, %v3181, %v3182
        %v3184 = vrot.slane %v2973, 1
        %v3185 = vrot.slane %v2975, 1
        %v3186 = vsel %vm611, %v3184, %v3185
        %v3187 = vrot.slane %v2976, 1
        %v3188 = vsel %vm611, %v3182, %v3187
        %v3189 = vrot.slane %v2977, 1
        %v3190 = vsel %vm611, %v3185, %v3189
        %v3191 = vrot.slane %v2978, 1
        %v3192 = vsel %vm611, %v3187, %v3191
        %v3193 = vrot.slane %v2979, 1
        %v3194 = vsel %vm611, %v3189, %v3193
        %v3199 = vsel %vm627, %v3186, 0
        %v3201 = vsel %vm627, %v3190, 0
        %v3203 = vsel %vm627, %v3194, 0
        %v3205 = vsel %vm627, %v3193, 0
        %3207 = vmatprep.subr.mxu0 %v3078
        %3208 = vmatpush1.msra.mxu0 %v3077
        %3209 = vmatprep.subr.mxu0 %v3082
        %3210 = vmatpush1.msra.mxu0 %v3081
        %3211 = vmatprep.subr.mxu0 %v3086
        %3212 = vmatpush1.msra.mxu0 %v3085
        %3213 = vmatprep.subr.mxu0 %v3090
        %3214 = vmatpush1.msra.mxu0 %v3089
        %3215 = vmatprep.subr.mxu0 %v3094
        %3216 = vmatpush1.msra.mxu0 %v3093
        %3217 = vmatprep.subr.mxu0 %v3098
        %3218 = vmatpush1.msra.mxu0 %v3097
        %3219 = vmatprep.subr.mxu0 %v3102
        %3220 = vmatpush1.msra.mxu0 %v3101
        %3221 = vmatprep.subr.mxu0 %v3106
        %3222 = vmatpush1.msra.mxu0 %v3105
        %3223 = vmatprep.subr.mxu0 %v3110
        %3224 = vmatpush1.msra.mxu0 %v3109
        %3225 = vmatprep.subr.mxu0 %v3114
        %3226 = vmatpush1.msra.mxu0 %v3113
        %3227 = vmatprep.subr.mxu0 %v3118
        %3228 = vmatpush1.msra.mxu0 %v3117
        %3229 = vmatprep.subr.mxu0 %v3122
        %3230 = vmatpush1.msra.mxu0 %v3121
        %3231 = vmatprep.subr.mxu0 %v3126
        %3232 = vmatpush1.msra.mxu0 %v3125
        %3233 = vmatprep.subr.mxu0 %v3130
        %3234 = vmatpush1.msra.mxu0 %v3129
        %3235 = vmatprep.subr.mxu0 %v3134
        %3236 = vmatpush1.msra.mxu0 %v3133
        %3237 = vmatprep.subr.mxu0 %v3138
        %3238 = vmatpush1.msra.mxu0 %v3137
        %3239 = vmatprep.subr.mxu0 %v3142
        %3240 = vmatpush1.msra.mxu0 %v3141
        %3241 = vmatprep.subr.mxu0 %v3146
        %3242 = vmatpush1.msra.mxu0 %v3145
        %3243 = vmatprep.subr.mxu0 %v3150
        %3244 = vmatpush1.msra.mxu0 %v3149
        %3245 = vmatprep.subr.mxu0 %v3154
        %3246 = vmatpush1.msra.mxu0 %v3153
        %3247 = vmatprep.subr.mxu0 %v3158
        %3248 = vmatpush1.msra.mxu0 %v3157
        %3249 = vmatprep.subr.mxu0 %v3162
        %3250 = vmatpush1.msra.mxu0 %v3161
        %3251 = vmatprep.subr.mxu0 %v3166
        %3252 = vmatpush1.msra.mxu0 %v3165
        %3253 = vmatprep.subr.mxu0 %v3170
        %3254 = vmatpush1.msra.mxu0 %v3169
        %3255 = vmatprep.subr.mxu0 0.0
        %3256 = vmatpush1.msra.mxu0 0.0
        %3257 = vmatprep.subr.mxu0 0.0
        %3258 = vmatpush1.msra.mxu0 0.0
        %3259 = vmatprep.subr.mxu0 0.0
        %3260 = vmatpush1.msra.mxu0 0.0
        %3261 = vmatprep.subr.mxu0 0.0
        %3262 = vmatpush1.msra.mxu0 0.0
        %3263 = vmatprep.subr.mxu0 0.0
        %3264 = vmatpush1.msra.mxu0 0.0
        %3265 = vmatprep.subr.mxu0 0.0
        %3266 = vmatpush1.msra.mxu0 0.0
        %3267 = vmatprep.subr.mxu0 0.0
        %3268 = vmatpush1.msra.mxu0 0.0
        %3269 = vmatprep.subr.mxu0 0.0
        %3270 = vmatpush1.msra.mxu0 0.0
        %3271 = vmatprep.mubr.f32.mxu0 %v3199
        %3272 = vmatmul.mubr.f32.gmra.mrb[0].mxu0 %v3183
        %v3273 = vpop.f32.mrb[0].mxu0
        %v3274 = vadd.f32 0.0, %v3273
        %v3275 = vpop.f32.mrb[0].mxu0
        %v3276 = vadd.f32 0.0, %v3275
        %3277 = vmatprep.mubr.f32.mxu0 %v3201
        %3278 = vmatmul.mubr.f32.gmra.mrb[0].mxu0 %v3188
        %v3279 = vpop.f32.mrb[0].mxu0
        %v3280 = vadd.f32 0.0, %v3279
        %v3281 = vpop.f32.mrb[0].mxu0
        %v3282 = vadd.f32 0.0, %v3281
        %3283 = vmatprep.mubr.f32.mxu0 %v3203
        %3284 = vmatmul.mubr.f32.gmra.mrb[0].mxu0 %v3192
        %v3285 = vpop.f32.mrb[0].mxu0
        %v3286 = vadd.f32 0.0, %v3285
        %v3287 = vpop.f32.mrb[0].mxu0
        %v3288 = vadd.f32 0.0, %v3287
        %3289 = vmatprep.mubr.f32.mxu0 %v3205
        %3290 = vmatmul.mubr.f32.gmra.mrb[0].mxu0 %v3191
        %v3291 = vpop.f32.mrb[0].mxu0
        %v3292 = vadd.f32 0.0, %v3291
        %v3293 = vpop.f32.mrb[0].mxu0
        %v3294 = vadd.f32 0.0, %v3293
        %3295 = vdwg.mxu0
        %3296 = vmatprep.subr.mxu0 %v3080
        %3297 = vmatpush1.msra.mxu0 %v3079
        %3298 = vmatprep.subr.mxu0 %v3084
        %3299 = vmatpush1.msra.mxu0 %v3083
        %3300 = vmatprep.subr.mxu0 %v3088
        %3301 = vmatpush1.msra.mxu0 %v3087
        %3302 = vmatprep.subr.mxu0 %v3092
        %3303 = vmatpush1.msra.mxu0 %v3091
        %3304 = vmatprep.subr.mxu0 %v3096
        %3305 = vmatpush1.msra.mxu0 %v3095
        %3306 = vmatprep.subr.mxu0 %v3100
        %3307 = vmatpush1.msra.mxu0 %v3099
        %3308 = vmatprep.subr.mxu0 %v3104
        %3309 = vmatpush1.msra.mxu0 %v3103
        %3310 = vmatprep.subr.mxu0 %v3108
        %3311 = vmatpush1.msra.mxu0 %v3107
        %3312 = vmatprep.subr.mxu0 %v3112
        %3313 = vmatpush1.msra.mxu0 %v3111
        %3314 = vmatprep.subr.mxu0 %v3116
        %3315 = vmatpush1.msra.mxu0 %v3115
        %3316 = vmatprep.subr.mxu0 %v3120
        %3317 = vmatpush1.msra.mxu0 %v3119
        %3318 = vmatprep.subr.mxu0 %v3124
        %3319 = vmatpush1.msra.mxu0 %v3123
        %3320 = vmatprep.subr.mxu0 %v3128
        %3321 = vmatpush1.msra.mxu0 %v3127
        %3322 = vmatprep.subr.mxu0 %v3132
        %3323 = vmatpush1.msra.mxu0 %v3131
        %3324 = vmatprep.subr.mxu0 %v3136
        %3325 = vmatpush1.msra.mxu0 %v3135
        %3326 = vmatprep.subr.mxu0 %v3140
        %3327 = vmatpush1.msra.mxu0 %v3139
        %3328 = vmatprep.subr.mxu0 %v3144
        %3329 = vmatpush1.msra.mxu0 %v3143
        %3330 = vmatprep.subr.mxu0 %v3148
        %3331 = vmatpush1.msra.mxu0 %v3147
        %3332 = vmatprep.subr.mxu0 %v3152
        %3333 = vmatpush1.msra.mxu0 %v3151
        %3334 = vmatprep.subr.mxu0 %v3156
        %3335 = vmatpush1.msra.mxu0 %v3155
        %3336 = vmatprep.subr.mxu0 %v3160
        %3337 = vmatpush1.msra.mxu0 %v3159
        %3338 = vmatprep.subr.mxu0 %v3164
        %3339 = vmatpush1.msra.mxu0 %v3163
        %3340 = vmatprep.subr.mxu0 %v3168
        %3341 = vmatpush1.msra.mxu0 %v3167
        %3342 = vmatprep.subr.mxu0 %v3172
        %3343 = vmatpush1.msra.mxu0 %v3171
        %3344 = vmatprep.subr.mxu0 0.0
        %3345 = vmatpush1.msra.mxu0 0.0
        %3346 = vmatprep.subr.mxu0 0.0
        %3347 = vmatpush1.msra.mxu0 0.0
        %3348 = vmatprep.subr.mxu0 0.0
        %3349 = vmatpush1.msra.mxu0 0.0
        %3350 = vmatprep.subr.mxu0 0.0
        %3351 = vmatpush1.msra.mxu0 0.0
        %3352 = vmatprep.subr.mxu0 0.0
        %3353 = vmatpush1.msra.mxu0 0.0
        %3354 = vmatprep.subr.mxu0 0.0
        %3355 = vmatpush1.msra.mxu0 0.0
        %3356 = vmatprep.subr.mxu0 0.0
        %3357 = vmatpush1.msra.mxu0 0.0
        %3358 = vmatprep.subr.mxu0 0.0
        %3359 = vmatpush1.msra.mxu0 0.0
        %3360 = vmatprep.mubr.f32.mxu0 %v3199
        %3361 = vmatmul.mubr.f32.gmra.mrb[0].mxu0 %v3183
        %v3362 = vpop.f32.mrb[0].mxu0
        %v3363 = vadd.f32 0.0, %v3362
        %v3364 = vpop.f32.mrb[0].mxu0
        %v3365 = vadd.f32 0.0, %v3364
        %3366 = vmatprep.mubr.f32.mxu0 %v3201
        %3367 = vmatmul.mubr.f32.gmra.mrb[0].mxu0 %v3188
        %v3368 = vpop.f32.mrb[0].mxu0
        %v3369 = vadd.f32 0.0, %v3368
        %v3370 = vpop.f32.mrb[0].mxu0
        %v3371 = vadd.f32 0.0, %v3370
        %3372 = vmatprep.mubr.f32.mxu0 %v3203
        %3373 = vmatmul.mubr.f32.gmra.mrb[0].mxu0 %v3192
        %v3374 = vpop.f32.mrb[0].mxu0
        %v3375 = vadd.f32 0.0, %v3374
        %v3376 = vpop.f32.mrb[0].mxu0
        %v3377 = vadd.f32 0.0, %v3376
        %3378 = vmatprep.mubr.f32.mxu0 %v3205
        %3379 = vmatmul.mubr.f32.gmra.mrb[0].mxu0 %v3191
        %v3380 = vpop.f32.mrb[0].mxu0
        %v3381 = vadd.f32 0.0, %v3380
        %v3382 = vpop.f32.mrb[0].mxu0
        %v3383 = vadd.f32 0.0, %v3382
        %3384 = vdwg.mxu0
        %v3385 = vsel %vm627, %v2973, 0
        %v3387 = vsel %vm627, %v2975, 0
        %v3389 = vsel %vm627, %v2977, 0
        %v3391 = vsel %vm627, %v2979, 0
        %3393 = vmatprep.subr.mxu0 %v2981
        %3394 = vmatpush1.msra.mxu0 %v2980
        %3395 = vmatprep.subr.mxu0 %v2985
        %3396 = vmatpush1.msra.mxu0 %v2984
        %3397 = vmatprep.subr.mxu0 %v2989
        %3398 = vmatpush1.msra.mxu0 %v2988
        %3399 = vmatprep.subr.mxu0 %v2993
        %3400 = vmatpush1.msra.mxu0 %v2992
        %3401 = vmatprep.subr.mxu0 %v2997
        %3402 = vmatpush1.msra.mxu0 %v2996
        %3403 = vmatprep.subr.mxu0 %v3001
        %3404 = vmatpush1.msra.mxu0 %v3000
        %3405 = vmatprep.subr.mxu0 %v3005
        %3406 = vmatpush1.msra.mxu0 %v3004
        %3407 = vmatprep.subr.mxu0 %v3009
        %3408 = vmatpush1.msra.mxu0 %v3008
        %3409 = vmatprep.subr.mxu0 %v3013
        %3410 = vmatpush1.msra.mxu0 %v3012
        %3411 = vmatprep.subr.mxu0 %v3017
        %3412 = vmatpush1.msra.mxu0 %v3016
        %3413 = vmatprep.subr.mxu0 %v3021
        %3414 = vmatpush1.msra.mxu0 %v3020
        %3415 = vmatprep.subr.mxu0 %v3025
        %3416 = vmatpush1.msra.mxu0 %v3024
        %3417 = vmatprep.subr.mxu0 %v3029
        %3418 = vmatpush1.msra.mxu0 %v3028
        %3419 = vmatprep.subr.mxu0 %v3033
        %3420 = vmatpush1.msra.mxu0 %v3032
        %3421 = vmatprep.subr.mxu0 %v3037
        %3422 = vmatpush1.msra.mxu0 %v3036
        %3423 = vmatprep.subr.mxu0 %v3041
        %3424 = vmatpush1.msra.mxu0 %v3040
        %3425 = vmatprep.subr.mxu0 %v3045
        %3426 = vmatpush1.msra.mxu0 %v3044
        %3427 = vmatprep.subr.mxu0 %v3049
        %3428 = vmatpush1.msra.mxu0 %v3048
        %3429 = vmatprep.subr.mxu0 %v3053
        %3430 = vmatpush1.msra.mxu0 %v3052
        %3431 = vmatprep.subr.mxu0 %v3057
        %3432 = vmatpush1.msra.mxu0 %v3056
        %3433 = vmatprep.subr.mxu0 %v3061
        %3434 = vmatpush1.msra.mxu0 %v3060
        %3435 = vmatprep.subr.mxu0 %v3065
        %3436 = vmatpush1.msra.mxu0 %v3064
        %3437 = vmatprep.subr.mxu0 %v3069
        %3438 = vmatpush1.msra.mxu0 %v3068
        %3439 = vmatprep.subr.mxu0 %v3073
        %3440 = vmatpush1.msra.mxu0 %v3072
        %3441 = vmatprep.subr.mxu0 0.0
        %3442 = vmatpush1.msra.mxu0 0.0
        %3443 = vmatprep.subr.mxu0 0.0
        %3444 = vmatpush1.msra.mxu0 0.0
        %3445 = vmatprep.subr.mxu0 0.0
        %3446 = vmatpush1.msra.mxu0 0.0
        %3447 = vmatprep.subr.mxu0 0.0
        %3448 = vmatpush1.msra.mxu0 0.0
        %3449 = vmatprep.subr.mxu0 0.0
        %3450 = vmatpush1.msra.mxu0 0.0
        %3451 = vmatprep.subr.mxu0 0.0
        %3452 = vmatpush1.msra.mxu0 0.0
        %3453 = vmatprep.subr.mxu0 0.0
        %3454 = vmatpush1.msra.mxu0 0.0
        %3455 = vmatprep.subr.mxu0 0.0
        %3456 = vmatpush1.msra.mxu0 0.0
        %3457 = vmatprep.mubr.f32.mxu0 %v3385
        %3458 = vmatmul.mubr.f32.gmra.mrb[0].mxu0 %v2972
        %v3459 = vpop.f32.mrb[0].mxu0
        %v3460 = vadd.f32 %v3274, %v3459
        %v3461 = vpop.f32.mrb[0].mxu0
        %v3462 = vadd.f32 %v3276, %v3461
        %3463 = vmatprep.mubr.f32.mxu0 %v3387
        %3464 = vmatmul.mubr.f32.gmra.mrb[0].mxu0 %v2974
        %v3465 = vpop.f32.mrb[0].mxu0
        %v3466 = vadd.f32 %v3280, %v3465
        %v3467 = vpop.f32.mrb[0].mxu0
        %v3468 = vadd.f32 %v3282, %v3467
        %3469 = vmatprep.mubr.f32.mxu0 %v3389
        %3470 = vmatmul.mubr.f32.gmra.mrb[0].mxu0 %v2976
        %v3471 = vpop.f32.mrb[0].mxu0
        %v3472 = vadd.f32 %v3286, %v3471
        %v3473 = vpop.f32.mrb[0].mxu0
        %v3474 = vadd.f32 %v3288, %v3473
        %3475 = vmatprep.mubr.f32.mxu0 %v3391
        %3476 = vmatmul.mubr.f32.gmra.mrb[0].mxu0 %v2978
        %v3477 = vpop.f32.mrb[0].mxu0
        %v3478 = vadd.f32 %v3292, %v3477
        %v3479 = vpop.f32.mrb[0].mxu0
        %v3480 = vadd.f32 %v3294, %v3479
        %3481 = vdwg.mxu0
        %3482 = vmatprep.subr.mxu0 %v2983
        %3483 = vmatpush1.msra.mxu0 %v2982
        %3484 = vmatprep.subr.mxu0 %v2987
        %3485 = vmatpush1.msra.mxu0 %v2986
        %3486 = vmatprep.subr.mxu0 %v2991
        %3487 = vmatpush1.msra.mxu0 %v2990
        %3488 = vmatprep.subr.mxu0 %v2995
        %3489 = vmatpush1.msra.mxu0 %v2994
        %3490 = vmatprep.subr.mxu0 %v2999
        %3491 = vmatpush1.msra.mxu0 %v2998
        %3492 = vmatprep.subr.mxu0 %v3003
        %3493 = vmatpush1.msra.mxu0 %v3002
        %3494 = vmatprep.subr.mxu0 %v3007
        %3495 = vmatpush1.msra.mxu0 %v3006
        %3496 = vmatprep.subr.mxu0 %v3011
        %3497 = vmatpush1.msra.mxu0 %v3010
        %3498 = vmatprep.subr.mxu0 %v3015
        %3499 = vmatpush1.msra.mxu0 %v3014
        %3500 = vmatprep.subr.mxu0 %v3019
        %3501 = vmatpush1.msra.mxu0 %v3018
        %3502 = vmatprep.subr.mxu0 %v3023
        %3503 = vmatpush1.msra.mxu0 %v3022
        %3504 = vmatprep.subr.mxu0 %v3027
        %3505 = vmatpush1.msra.mxu0 %v3026
        %3506 = vmatprep.subr.mxu0 %v3031
        %3507 = vmatpush1.msra.mxu0 %v3030
        %3508 = vmatprep.subr.mxu0 %v3035
        %3509 = vmatpush1.msra.mxu0 %v3034
        %3510 = vmatprep.subr.mxu0 %v3039
        %3511 = vmatpush1.msra.mxu0 %v3038
        %3512 = vmatprep.subr.mxu0 %v3043
        %3513 = vmatpush1.msra.mxu0 %v3042
        %3514 = vmatprep.subr.mxu0 %v3047
        %3515 = vmatpush1.msra.mxu0 %v3046
        %3516 = vmatprep.subr.mxu0 %v3051
        %3517 = vmatpush1.msra.mxu0 %v3050
        %3518 = vmatprep.subr.mxu0 %v3055
        %3519 = vmatpush1.msra.mxu0 %v3054
        %3520 = vmatprep.subr.mxu0 %v3059
        %3521 = vmatpush1.msra.mxu0 %v3058
        %3522 = vmatprep.subr.mxu0 %v3063
        %3523 = vmatpush1.msra.mxu0 %v3062
        %3524 = vmatprep.subr.mxu0 %v3067
        %3525 = vmatpush1.msra.mxu0 %v3066
        %3526 = vmatprep.subr.mxu0 %v3071
        %3527 = vmatpush1.msra.mxu0 %v3070
        %3528 = vmatprep.subr.mxu0 %v3075
        %3529 = vmatpush1.msra.mxu0 %v3074
        %3530 = vmatprep.subr.mxu0 0.0
        %3531 = vmatpush1.msra.mxu0 0.0
        %3532 = vmatprep.subr.mxu0 0.0
        %3533 = vmatpush1.msra.mxu0 0.0
        %3534 = vmatprep.subr.mxu0 0.0
        %3535 = vmatpush1.msra.mxu0 0.0
        %3536 = vmatprep.subr.mxu0 0.0
        %3537 = vmatpush1.msra.mxu0 0.0
        %3538 = vmatprep.subr.mxu0 0.0
        %3539 = vmatpush1.msra.mxu0 0.0
        %3540 = vmatprep.subr.mxu0 0.0
        %3541 = vmatpush1.msra.mxu0 0.0
        %3542 = vmatprep.subr.mxu0 0.0
        %3543 = vmatpush1.msra.mxu0 0.0
        %3544 = vmatprep.subr.mxu0 0.0
        %3545 = vmatpush1.msra.mxu0 0.0
        %3546 = vmatprep.mubr.f32.mxu0 %v3385
        %3547 = vmatmul.mubr.f32.gmra.mrb[0].mxu0 %v2972
        %v3548 = vpop.f32.mrb[0].mxu0
        %v3549 = vadd.f32 %v3363, %v3548
        %v3550 = vpop.f32.mrb[0].mxu0
        %v3551 = vadd.f32 %v3365, %v3550
        %3552 = vmatprep.mubr.f32.mxu0 %v3387
        %3553 = vmatmul.mubr.f32.gmra.mrb[0].mxu0 %v2974
        %v3554 = vpop.f32.mrb[0].mxu0
        %v3555 = vadd.f32 %v3369, %v3554
        %v3556 = vpop.f32.mrb[0].mxu0
        %v3557 = vadd.f32 %v3371, %v3556
        %3558 = vmatprep.mubr.f32.mxu0 %v3389
        %3559 = vmatmul.mubr.f32.gmra.mrb[0].mxu0 %v2976
        %v3560 = vpop.f32.mrb[0].mxu0
        %v3561 = vadd.f32 %v3375, %v3560
        %v3562 = vpop.f32.mrb[0].mxu0
        %v3563 = vadd.f32 %v3377, %v3562
        %3564 = vmatprep.mubr.f32.mxu0 %v3391
        %3565 = vmatmul.mubr.f32.gmra.mrb[0].mxu0 %v2978
        %v3566 = vpop.f32.mrb[0].mxu0
        %v3567 = vadd.f32 %v3381, %v3566
        %v3568 = vpop.f32.mrb[0].mxu0
        %v3569 = vadd.f32 %v3383, %v3568
        %3570 = vdwg.mxu0
        %s3571 = scalar_lea.vmem %s6, 1536
        %v3572 = vld [vmem:[%s3571] sm:$0xff]
        %v3573 = vld [vmem:[%s3571 + $0x8] sm:$0xff]
        %v3574 = vld [vmem:[%s3571 + $0x10] sm:$0xff]
        %v3575 = vld [vmem:[%s3571 + $0x18] sm:$0xff]
        %v3576 = vld [vmem:[%s3571 + $0x20] sm:$0xff]
        %v3577 = vld [vmem:[%s3571 + $0x28] sm:$0xff]
        %v3578 = vld [vmem:[%s3571 + $0x30] sm:$0xff]
        %v3579 = vld [vmem:[%s3571 + $0x38] sm:$0xff]
        %v3580 = vld [vmem:[%s3571 + $0x40] sm:$0xff]
        %v3581 = vld [vmem:[%s3571 + $0x48] sm:$0xff]
        %v3582 = vld [vmem:[%s3571 + $0x50] sm:$0xff]
        %v3583 = vld [vmem:[%s3571 + $0x58] sm:$0xff]
        %v3584 = vld [vmem:[%s3571 + $0x60] sm:$0xff]
        %v3585 = vld [vmem:[%s3571 + $0x68] sm:$0xff]
        %v3586 = vld [vmem:[%s3571 + $0x70] sm:$0xff]
        %v3587 = vld [vmem:[%s3571 + $0x78] sm:$0xff]
        %v3588 = vld [vmem:[%s3571 + $0x80] sm:$0xff]
        %v3589 = vld [vmem:[%s3571 + $0x88] sm:$0xff]
        %v3590 = vld [vmem:[%s3571 + $0x90] sm:$0xff]
        %v3591 = vld [vmem:[%s3571 + $0x98] sm:$0xff]
        %v3592 = vld [vmem:[%s3571 + $0xa0] sm:$0xff]
        %v3593 = vld [vmem:[%s3571 + $0xa8] sm:$0xff]
        %v3594 = vld [vmem:[%s3571 + $0xb0] sm:$0xff]
        %v3595 = vld [vmem:[%s3571 + $0xb8] sm:$0xff]
        %v3596 = vld [vmem:[%s3571 + $0xc0] sm:$0xff]
        %v3597 = vld [vmem:[%s3571 + $0xc8] sm:$0xff]
        %v3598 = vld [vmem:[%s3571 + $0xd0] sm:$0xff]
        %v3599 = vld [vmem:[%s3571 + $0xd8] sm:$0xff]
        %v3600 = vld [vmem:[%s3571 + $0xe0] sm:$0xff]
        %v3601 = vld [vmem:[%s3571 + $0xe8] sm:$0xff]
        %v3602 = vld [vmem:[%s3571 + $0xf0] sm:$0xff]
        %v3603 = vld [vmem:[%s3571 + $0xf8] sm:$0xff]
        %v3604 = vld [vmem:[%s3571 + $0x100] sm:$0xff]
        %v3605 = vld [vmem:[%s3571 + $0x108] sm:$0xff]
        %v3606 = vld [vmem:[%s3571 + $0x110] sm:$0xff]
        %v3607 = vld [vmem:[%s3571 + $0x118] sm:$0xff]
        %v3608 = vld [vmem:[%s3571 + $0x120] sm:$0xff]
        %v3609 = vld [vmem:[%s3571 + $0x128] sm:$0xff]
        %v3610 = vld [vmem:[%s3571 + $0x130] sm:$0xff]
        %v3611 = vld [vmem:[%s3571 + $0x138] sm:$0xff]
        %v3612 = vld [vmem:[%s3571 + $0x140] sm:$0xff]
        %v3613 = vld [vmem:[%s3571 + $0x148] sm:$0xff]
        %v3614 = vld [vmem:[%s3571 + $0x150] sm:$0xff]
        %v3615 = vld [vmem:[%s3571 + $0x158] sm:$0xff]
        %v3616 = vld [vmem:[%s3571 + $0x160] sm:$0xff]
        %v3617 = vld [vmem:[%s3571 + $0x168] sm:$0xff]
        %v3618 = vld [vmem:[%s3571 + $0x170] sm:$0xff]
        %v3619 = vld [vmem:[%s3571 + $0x178] sm:$0xff]
        %v3620 = vld [vmem:[%s3571 + $0x180] sm:$0xff]
        %v3621 = vld [vmem:[%s3571 + $0x188] sm:$0xff]
        %v3622 = vld [vmem:[%s3571 + $0x190] sm:$0xff]
        %v3623 = vld [vmem:[%s3571 + $0x198] sm:$0xff]
        %v3624 = vld [vmem:[%s3571 + $0x1a0] sm:$0xff]
        %v3625 = vld [vmem:[%s3571 + $0x1a8] sm:$0xff]
        %v3626 = vld [vmem:[%s3571 + $0x1b0] sm:$0xff]
        %v3627 = vld [vmem:[%s3571 + $0x1b8] sm:$0xff]
        %v3628 = vld [vmem:[%s3571 + $0x1c0] sm:$0xff]
        %v3629 = vld [vmem:[%s3571 + $0x1c8] sm:$0xff]
        %v3630 = vld [vmem:[%s3571 + $0x1d0] sm:$0xff]
        %v3631 = vld [vmem:[%s3571 + $0x1d8] sm:$0xff]
        %v3632 = vld [vmem:[%s3571 + $0x1e0] sm:$0xff]
        %v3633 = vld [vmem:[%s3571 + $0x1e8] sm:$0xff]
        %v3634 = vld [vmem:[%s3571 + $0x1f0] sm:$0xff]
        %v3635 = vld [vmem:[%s3571 + $0x1f8] sm:$0xff]
        %v3636 = vld [vmem:[%s3571 + $0x200] sm:$0xff]
        %v3637 = vld [vmem:[%s3571 + $0x208] sm:$0xff]
        %v3638 = vld [vmem:[%s3571 + $0x210] sm:$0xff]
        %v3639 = vld [vmem:[%s3571 + $0x218] sm:$0xff]
        %v3640 = vld [vmem:[%s3571 + $0x220] sm:$0xff]
        %v3641 = vld [vmem:[%s3571 + $0x228] sm:$0xff]
        %v3642 = vld [vmem:[%s3571 + $0x230] sm:$0xff]
        %v3643 = vld [vmem:[%s3571 + $0x238] sm:$0xff]
        %v3644 = vld [vmem:[%s3571 + $0x240] sm:$0xff]
        %v3645 = vld [vmem:[%s3571 + $0x248] sm:$0xff]
        %v3646 = vld [vmem:[%s3571 + $0x250] sm:$0xff]
        %v3647 = vld [vmem:[%s3571 + $0x258] sm:$0xff]
        %v3648 = vld [vmem:[%s3571 + $0x260] sm:$0xff]
        %v3649 = vld [vmem:[%s3571 + $0x268] sm:$0xff]
        %v3650 = vld [vmem:[%s3571 + $0x270] sm:$0xff]
        %v3651 = vld [vmem:[%s3571 + $0x278] sm:$0xff]
        %v3652 = vld [vmem:[%s3571 + $0x280] sm:$0xff]
        %v3653 = vld [vmem:[%s3571 + $0x288] sm:$0xff]
        %v3654 = vld [vmem:[%s3571 + $0x290] sm:$0xff]
        %v3655 = vld [vmem:[%s3571 + $0x298] sm:$0xff]
        %v3656 = vld [vmem:[%s3571 + $0x2a0] sm:$0xff]
        %v3657 = vld [vmem:[%s3571 + $0x2a8] sm:$0xff]
        %v3658 = vld [vmem:[%s3571 + $0x2b0] sm:$0xff]
        %v3659 = vld [vmem:[%s3571 + $0x2b8] sm:$0xff]
        %v3660 = vld [vmem:[%s3571 + $0x2c0] sm:$0xff]
        %v3661 = vld [vmem:[%s3571 + $0x2c8] sm:$0xff]
        %v3662 = vld [vmem:[%s3571 + $0x2d0] sm:$0xff]
        %v3663 = vld [vmem:[%s3571 + $0x2d8] sm:$0xff]
        %v3664 = vld [vmem:[%s3571 + $0x2e0] sm:$0xff]
        %v3665 = vld [vmem:[%s3571 + $0x2e8] sm:$0xff]
        %v3666 = vld [vmem:[%s3571 + $0x2f0] sm:$0xff]
        %v3667 = vld [vmem:[%s3571 + $0x2f8] sm:$0xff]
        %v3668 = vrot.slane %v2972, 2
        %v3669 = vrot.slane %v2974, 2
        %v3670 = vsel %vm1121, %v3668, %v3669
        %v3671 = vrot.slane %v2973, 2
        %v3672 = vrot.slane %v2975, 2
        %v3673 = vsel %vm1121, %v3671, %v3672
        %v3674 = vrot.slane %v2976, 2
        %v3675 = vsel %vm1121, %v3669, %v3674
        %v3676 = vrot.slane %v2977, 2
        %v3677 = vsel %vm1121, %v3672, %v3676
        %v3678 = vrot.slane %v2978, 2
        %v3679 = vsel %vm1121, %v3674, %v3678
        %v3680 = vrot.slane %v2979, 2
        %v3681 = vsel %vm1121, %v3676, %v3680
        %v3686 = vsel %vm627, %v3673, 0
        %v3688 = vsel %vm627, %v3677, 0
        %v3690 = vsel %vm627, %v3681, 0
        %v3692 = vsel %vm627, %v3680, 0
        %3694 = vmatprep.subr.mxu0 %v3573
        %3695 = vmatpush1.msra.mxu0 %v3572
        %3696 = vmatprep.subr.mxu0 %v3577
        %3697 = vmatpush1.msra.mxu0 %v3576
        %3698 = vmatprep.subr.mxu0 %v3581
        %3699 = vmatpush1.msra.mxu0 %v3580
        %3700 = vmatprep.subr.mxu0 %v3585
        %3701 = vmatpush1.msra.mxu0 %v3584
        %3702 = vmatprep.subr.mxu0 %v3589
        %3703 = vmatpush1.msra.mxu0 %v3588
        %3704 = vmatprep.subr.mxu0 %v3593
        %3705 = vmatpush1.msra.mxu0 %v3592
        %3706 = vmatprep.subr.mxu0 %v3597
        %3707 = vmatpush1.msra.mxu0 %v3596
        %3708 = vmatprep.subr.mxu0 %v3601
        %3709 = vmatpush1.msra.mxu0 %v3600
        %3710 = vmatprep.subr.mxu0 %v3605
        %3711 = vmatpush1.msra.mxu0 %v3604
        %3712 = vmatprep.subr.mxu0 %v3609
        %3713 = vmatpush1.msra.mxu0 %v3608
        %3714 = vmatprep.subr.mxu0 %v3613
        %3715 = vmatpush1.msra.mxu0 %v3612
        %3716 = vmatprep.subr.mxu0 %v3617
        %3717 = vmatpush1.msra.mxu0 %v3616
        %3718 = vmatprep.subr.mxu0 %v3621
        %3719 = vmatpush1.msra.mxu0 %v3620
        %3720 = vmatprep.subr.mxu0 %v3625
        %3721 = vmatpush1.msra.mxu0 %v3624
        %3722 = vmatprep.subr.mxu0 %v3629
        %3723 = vmatpush1.msra.mxu0 %v3628
        %3724 = vmatprep.subr.mxu0 %v3633
        %3725 = vmatpush1.msra.mxu0 %v3632
        %3726 = vmatprep.subr.mxu0 %v3637
        %3727 = vmatpush1.msra.mxu0 %v3636
        %3728 = vmatprep.subr.mxu0 %v3641
        %3729 = vmatpush1.msra.mxu0 %v3640
        %3730 = vmatprep.subr.mxu0 %v3645
        %3731 = vmatpush1.msra.mxu0 %v3644
        %3732 = vmatprep.subr.mxu0 %v3649
        %3733 = vmatpush1.msra.mxu0 %v3648
        %3734 = vmatprep.subr.mxu0 %v3653
        %3735 = vmatpush1.msra.mxu0 %v3652
        %3736 = vmatprep.subr.mxu0 %v3657
        %3737 = vmatpush1.msra.mxu0 %v3656
        %3738 = vmatprep.subr.mxu0 %v3661
        %3739 = vmatpush1.msra.mxu0 %v3660
        %3740 = vmatprep.subr.mxu0 %v3665
        %3741 = vmatpush1.msra.mxu0 %v3664
        %3742 = vmatprep.subr.mxu0 0.0
        %3743 = vmatpush1.msra.mxu0 0.0
        %3744 = vmatprep.subr.mxu0 0.0
        %3745 = vmatpush1.msra.mxu0 0.0
        %3746 = vmatprep.subr.mxu0 0.0
        %3747 = vmatpush1.msra.mxu0 0.0
        %3748 = vmatprep.subr.mxu0 0.0
        %3749 = vmatpush1.msra.mxu0 0.0
        %3750 = vmatprep.subr.mxu0 0.0
        %3751 = vmatpush1.msra.mxu0 0.0
        %3752 = vmatprep.subr.mxu0 0.0
        %3753 = vmatpush1.msra.mxu0 0.0
        %3754 = vmatprep.subr.mxu0 0.0
        %3755 = vmatpush1.msra.mxu0 0.0
        %3756 = vmatprep.subr.mxu0 0.0
        %3757 = vmatpush1.msra.mxu0 0.0
        %3758 = vmatprep.mubr.f32.mxu0 %v3686
        %3759 = vmatmul.mubr.f32.gmra.mrb[0].mxu0 %v3670
        %v3760 = vpop.f32.mrb[0].mxu0
        %v3761 = vadd.f32 0.0, %v3760
        %v3762 = vpop.f32.mrb[0].mxu0
        %v3763 = vadd.f32 0.0, %v3762
        %3764 = vmatprep.mubr.f32.mxu0 %v3688
        %3765 = vmatmul.mubr.f32.gmra.mrb[0].mxu0 %v3675
        %v3766 = vpop.f32.mrb[0].mxu0
        %v3767 = vadd.f32 0.0, %v3766
        %v3768 = vpop.f32.mrb[0].mxu0
        %v3769 = vadd.f32 0.0, %v3768
        %3770 = vmatprep.mubr.f32.mxu0 %v3690
        %3771 = vmatmul.mubr.f32.gmra.mrb[0].mxu0 %v3679
        %v3772 = vpop.f32.mrb[0].mxu0
        %v3773 = vadd.f32 0.0, %v3772
        %v3774 = vpop.f32.mrb[0].mxu0
        %v3775 = vadd.f32 0.0, %v3774
        %3776 = vmatprep.mubr.f32.mxu0 %v3692
        %3777 = vmatmul.mubr.f32.gmra.mrb[0].mxu0 %v3678
        %v3778 = vpop.f32.mrb[0].mxu0
        %v3779 = vadd.f32 0.0, %v3778
        %v3780 = vpop.f32.mrb[0].mxu0
        %v3781 = vadd.f32 0.0, %v3780
        %3782 = vdwg.mxu0
        %3783 = vmatprep.subr.mxu0 %v3575
        %3784 = vmatpush1.msra.mxu0 %v3574
        %3785 = vmatprep.subr.mxu0 %v3579
        %3786 = vmatpush1.msra.mxu0 %v3578
        %3787 = vmatprep.subr.mxu0 %v3583
        %3788 = vmatpush1.msra.mxu0 %v3582
        %3789 = vmatprep.subr.mxu0 %v3587
        %3790 = vmatpush1.msra.mxu0 %v3586
        %3791 = vmatprep.subr.mxu0 %v3591
        %3792 = vmatpush1.msra.mxu0 %v3590
        %3793 = vmatprep.subr.mxu0 %v3595
        %3794 = vmatpush1.msra.mxu0 %v3594
        %3795 = vmatprep.subr.mxu0 %v3599
        %3796 = vmatpush1.msra.mxu0 %v3598
        %3797 = vmatprep.subr.mxu0 %v3603
        %3798 = vmatpush1.msra.mxu0 %v3602
        %3799 = vmatprep.subr.mxu0 %v3607
        %3800 = vmatpush1.msra.mxu0 %v3606
        %3801 = vmatprep.subr.mxu0 %v3611
        %3802 = vmatpush1.msra.mxu0 %v3610
        %3803 = vmatprep.subr.mxu0 %v3615
        %3804 = vmatpush1.msra.mxu0 %v3614
        %3805 = vmatprep.subr.mxu0 %v3619
        %3806 = vmatpush1.msra.mxu0 %v3618
        %3807 = vmatprep.subr.mxu0 %v3623
        %3808 = vmatpush1.msra.mxu0 %v3622
        %3809 = vmatprep.subr.mxu0 %v3627
        %3810 = vmatpush1.msra.mxu0 %v3626
        %3811 = vmatprep.subr.mxu0 %v3631
        %3812 = vmatpush1.msra.mxu0 %v3630
        %3813 = vmatprep.subr.mxu0 %v3635
        %3814 = vmatpush1.msra.mxu0 %v3634
        %3815 = vmatprep.subr.mxu0 %v3639
        %3816 = vmatpush1.msra.mxu0 %v3638
        %3817 = vmatprep.subr.mxu0 %v3643
        %3818 = vmatpush1.msra.mxu0 %v3642
        %3819 = vmatprep.subr.mxu0 %v3647
        %3820 = vmatpush1.msra.mxu0 %v3646
        %3821 = vmatprep.subr.mxu0 %v3651
        %3822 = vmatpush1.msra.mxu0 %v3650
        %3823 = vmatprep.subr.mxu0 %v3655
        %3824 = vmatpush1.msra.mxu0 %v3654
        %3825 = vmatprep.subr.mxu0 %v3659
        %3826 = vmatpush1.msra.mxu0 %v3658
        %3827 = vmatprep.subr.mxu0 %v3663
        %3828 = vmatpush1.msra.mxu0 %v3662
        %3829 = vmatprep.subr.mxu0 %v3667
        %3830 = vmatpush1.msra.mxu0 %v3666
        %3831 = vmatprep.subr.mxu0 0.0
        %3832 = vmatpush1.msra.mxu0 0.0
        %3833 = vmatprep.subr.mxu0 0.0
        %3834 = vmatpush1.msra.mxu0 0.0
        %3835 = vmatprep.subr.mxu0 0.0
        %3836 = vmatpush1.msra.mxu0 0.0
        %3837 = vmatprep.subr.mxu0 0.0
        %3838 = vmatpush1.msra.mxu0 0.0
        %3839 = vmatprep.subr.mxu0 0.0
        %3840 = vmatpush1.msra.mxu0 0.0
        %3841 = vmatprep.subr.mxu0 0.0
        %3842 = vmatpush1.msra.mxu0 0.0
        %3843 = vmatprep.subr.mxu0 0.0
        %3844 = vmatpush1.msra.mxu0 0.0
        %3845 = vmatprep.subr.mxu0 0.0
        %3846 = vmatpush1.msra.mxu0 0.0
        %3847 = vmatprep.mubr.f32.mxu0 %v3686
        %3848 = vmatmul.mubr.f32.gmra.mrb[0].mxu0 %v3670
        %v3849 = vpop.f32.mrb[0].mxu0
        %v3850 = vadd.f32 0.0, %v3849
        %v3851 = vpop.f32.mrb[0].mxu0
        %v3852 = vadd.f32 0.0, %v3851
        %3853 = vmatprep.mubr.f32.mxu0 %v3688
        %3854 = vmatmul.mubr.f32.gmra.mrb[0].mxu0 %v3675
        %v3855 = vpop.f32.mrb[0].mxu0
        %v3856 = vadd.f32 0.0, %v3855
        %v3857 = vpop.f32.mrb[0].mxu0
        %v3858 = vadd.f32 0.0, %v3857
        %3859 = vmatprep.mubr.f32.mxu0 %v3690
        %3860 = vmatmul.mubr.f32.gmra.mrb[0].mxu0 %v3679
        %v3861 = vpop.f32.mrb[0].mxu0
        %v3862 = vadd.f32 0.0, %v3861
        %v3863 = vpop.f32.mrb[0].mxu0
        %v3864 = vadd.f32 0.0, %v3863
        %3865 = vmatprep.mubr.f32.mxu0 %v3692
        %3866 = vmatmul.mubr.f32.gmra.mrb[0].mxu0 %v3678
        %v3867 = vpop.f32.mrb[0].mxu0
        %v3868 = vadd.f32 0.0, %v3867
        %v3869 = vpop.f32.mrb[0].mxu0
        %v3870 = vadd.f32 0.0, %v3869
        %3871 = vdwg.mxu0
        %v3872 = vadd.f32 %v3460, %v3761
        %v3873 = vadd.f32 %v3462, %v3763
        %v3874 = vadd.f32 %v3549, %v3850
        %v3875 = vadd.f32 %v3551, %v3852
        %v3876 = vadd.f32 %v3466, %v3767
        %v3877 = vadd.f32 %v3468, %v3769
        %v3878 = vadd.f32 %v3555, %v3856
        %v3879 = vadd.f32 %v3557, %v3858
        %v3880 = vadd.f32 %v3472, %v3773
        %v3881 = vadd.f32 %v3474, %v3775
        %v3882 = vadd.f32 %v3561, %v3862
        %v3883 = vadd.f32 %v3563, %v3864
        %v3884 = vadd.f32 %v3478, %v3779
        %v3885 = vadd.f32 %v3480, %v3781
        %v3886 = vadd.f32 %v3567, %v3868
        %v3887 = vadd.f32 %v3569, %v3870
        %s3888 = scalar_lea.vmem %s6, 2304
        %v3889 = vld [vmem:[%s3888] sm:$0xff]
        %v3890 = vld [vmem:[%s3888 + $0x8] sm:$0xff]
        %v3891 = vld [vmem:[%s3888 + $0x10] sm:$0xff]
        %v3892 = vld [vmem:[%s3888 + $0x18] sm:$0xff]
        %v3893 = vld [vmem:[%s3888 + $0x20] sm:$0xff]
        %v3894 = vld [vmem:[%s3888 + $0x28] sm:$0xff]
        %v3895 = vld [vmem:[%s3888 + $0x30] sm:$0xff]
        %v3896 = vld [vmem:[%s3888 + $0x38] sm:$0xff]
        %v3897 = vld [vmem:[%s3888 + $0x40] sm:$0xff]
        %v3898 = vld [vmem:[%s3888 + $0x48] sm:$0xff]
        %v3899 = vld [vmem:[%s3888 + $0x50] sm:$0xff]
        %v3900 = vld [vmem:[%s3888 + $0x58] sm:$0xff]
        %v3901 = vld [vmem:[%s3888 + $0x60] sm:$0xff]
        %v3902 = vld [vmem:[%s3888 + $0x68] sm:$0xff]
        %v3903 = vld [vmem:[%s3888 + $0x70] sm:$0xff]
        %v3904 = vld [vmem:[%s3888 + $0x78] sm:$0xff]
        %v3905 = vld [vmem:[%s3888 + $0x80] sm:$0xff]
        %v3906 = vld [vmem:[%s3888 + $0x88] sm:$0xff]
        %v3907 = vld [vmem:[%s3888 + $0x90] sm:$0xff]
        %v3908 = vld [vmem:[%s3888 + $0x98] sm:$0xff]
        %v3909 = vld [vmem:[%s3888 + $0xa0] sm:$0xff]
        %v3910 = vld [vmem:[%s3888 + $0xa8] sm:$0xff]
        %v3911 = vld [vmem:[%s3888 + $0xb0] sm:$0xff]
        %v3912 = vld [vmem:[%s3888 + $0xb8] sm:$0xff]
        %v3913 = vld [vmem:[%s3888 + $0xc0] sm:$0xff]
        %v3914 = vld [vmem:[%s3888 + $0xc8] sm:$0xff]
        %v3915 = vld [vmem:[%s3888 + $0xd0] sm:$0xff]
        %v3916 = vld [vmem:[%s3888 + $0xd8] sm:$0xff]
        %v3917 = vld [vmem:[%s3888 + $0xe0] sm:$0xff]
        %v3918 = vld [vmem:[%s3888 + $0xe8] sm:$0xff]
        %v3919 = vld [vmem:[%s3888 + $0xf0] sm:$0xff]
        %v3920 = vld [vmem:[%s3888 + $0xf8] sm:$0xff]
        %v3921 = vld [vmem:[%s3888 + $0x100] sm:$0xff]
        %v3922 = vld [vmem:[%s3888 + $0x108] sm:$0xff]
        %v3923 = vld [vmem:[%s3888 + $0x110] sm:$0xff]
        %v3924 = vld [vmem:[%s3888 + $0x118] sm:$0xff]
        %v3925 = vld [vmem:[%s3888 + $0x120] sm:$0xff]
        %v3926 = vld [vmem:[%s3888 + $0x128] sm:$0xff]
        %v3927 = vld [vmem:[%s3888 + $0x130] sm:$0xff]
        %v3928 = vld [vmem:[%s3888 + $0x138] sm:$0xff]
        %v3929 = vld [vmem:[%s3888 + $0x140] sm:$0xff]
        %v3930 = vld [vmem:[%s3888 + $0x148] sm:$0xff]
        %v3931 = vld [vmem:[%s3888 + $0x150] sm:$0xff]
        %v3932 = vld [vmem:[%s3888 + $0x158] sm:$0xff]
        %v3933 = vld [vmem:[%s3888 + $0x160] sm:$0xff]
        %v3934 = vld [vmem:[%s3888 + $0x168] sm:$0xff]
        %v3935 = vld [vmem:[%s3888 + $0x170] sm:$0xff]
        %v3936 = vld [vmem:[%s3888 + $0x178] sm:$0xff]
        %v3937 = vld [vmem:[%s3888 + $0x180] sm:$0xff]
        %v3938 = vld [vmem:[%s3888 + $0x188] sm:$0xff]
        %v3939 = vld [vmem:[%s3888 + $0x190] sm:$0xff]
        %v3940 = vld [vmem:[%s3888 + $0x198] sm:$0xff]
        %v3941 = vld [vmem:[%s3888 + $0x1a0] sm:$0xff]
        %v3942 = vld [vmem:[%s3888 + $0x1a8] sm:$0xff]
        %v3943 = vld [vmem:[%s3888 + $0x1b0] sm:$0xff]
        %v3944 = vld [vmem:[%s3888 + $0x1b8] sm:$0xff]
        %v3945 = vld [vmem:[%s3888 + $0x1c0] sm:$0xff]
        %v3946 = vld [vmem:[%s3888 + $0x1c8] sm:$0xff]
        %v3947 = vld [vmem:[%s3888 + $0x1d0] sm:$0xff]
        %v3948 = vld [vmem:[%s3888 + $0x1d8] sm:$0xff]
        %v3949 = vld [vmem:[%s3888 + $0x1e0] sm:$0xff]
        %v3950 = vld [vmem:[%s3888 + $0x1e8] sm:$0xff]
        %v3951 = vld [vmem:[%s3888 + $0x1f0] sm:$0xff]
        %v3952 = vld [vmem:[%s3888 + $0x1f8] sm:$0xff]
        %v3953 = vld [vmem:[%s3888 + $0x200] sm:$0xff]
        %v3954 = vld [vmem:[%s3888 + $0x208] sm:$0xff]
        %v3955 = vld [vmem:[%s3888 + $0x210] sm:$0xff]
        %v3956 = vld [vmem:[%s3888 + $0x218] sm:$0xff]
        %v3957 = vld [vmem:[%s3888 + $0x220] sm:$0xff]
        %v3958 = vld [vmem:[%s3888 + $0x228] sm:$0xff]
        %v3959 = vld [vmem:[%s3888 + $0x230] sm:$0xff]
        %v3960 = vld [vmem:[%s3888 + $0x238] sm:$0xff]
        %v3961 = vld [vmem:[%s3888 + $0x240] sm:$0xff]
        %v3962 = vld [vmem:[%s3888 + $0x248] sm:$0xff]
        %v3963 = vld [vmem:[%s3888 + $0x250] sm:$0xff]
        %v3964 = vld [vmem:[%s3888 + $0x258] sm:$0xff]
        %v3965 = vld [vmem:[%s3888 + $0x260] sm:$0xff]
        %v3966 = vld [vmem:[%s3888 + $0x268] sm:$0xff]
        %v3967 = vld [vmem:[%s3888 + $0x270] sm:$0xff]
        %v3968 = vld [vmem:[%s3888 + $0x278] sm:$0xff]
        %v3969 = vld [vmem:[%s3888 + $0x280] sm:$0xff]
        %v3970 = vld [vmem:[%s3888 + $0x288] sm:$0xff]
        %v3971 = vld [vmem:[%s3888 + $0x290] sm:$0xff]
        %v3972 = vld [vmem:[%s3888 + $0x298] sm:$0xff]
        %v3973 = vld [vmem:[%s3888 + $0x2a0] sm:$0xff]
        %v3974 = vld [vmem:[%s3888 + $0x2a8] sm:$0xff]
        %v3975 = vld [vmem:[%s3888 + $0x2b0] sm:$0xff]
        %v3976 = vld [vmem:[%s3888 + $0x2b8] sm:$0xff]
        %v3977 = vld [vmem:[%s3888 + $0x2c0] sm:$0xff]
        %v3978 = vld [vmem:[%s3888 + $0x2c8] sm:$0xff]
        %v3979 = vld [vmem:[%s3888 + $0x2d0] sm:$0xff]
        %v3980 = vld [vmem:[%s3888 + $0x2d8] sm:$0xff]
        %v3981 = vld [vmem:[%s3888 + $0x2e0] sm:$0xff]
        %v3982 = vld [vmem:[%s3888 + $0x2e8] sm:$0xff]
        %v3983 = vld [vmem:[%s3888 + $0x2f0] sm:$0xff]
        %v3984 = vld [vmem:[%s3888 + $0x2f8] sm:$0xff]
        %v3985 = vrot.slane %v2972, 3
        %v3986 = vrot.slane %v2974, 3
        %v3987 = vsel %vm1420, %v3985, %v3986
        %v3988 = vrot.slane %v2973, 3
        %v3989 = vrot.slane %v2975, 3
        %v3990 = vsel %vm1420, %v3988, %v3989
        %v3991 = vrot.slane %v2976, 3
        %v3992 = vsel %vm1420, %v3986, %v3991
        %v3993 = vrot.slane %v2977, 3
        %v3994 = vsel %vm1420, %v3989, %v3993
        %v3995 = vrot.slane %v2978, 3
        %v3996 = vsel %vm1420, %v3991, %v3995
        %v3997 = vrot.slane %v2979, 3
        %v3998 = vsel %vm1420, %v3993, %v3997
        %v4003 = vsel %vm627, %v3990, 0
        %v4005 = vsel %vm627, %v3994, 0
        %v4007 = vsel %vm627, %v3998, 0
        %v4009 = vsel %vm627, %v3997, 0
        %4011 = vmatprep.subr.mxu0 %v3890
        %4012 = vmatpush1.msra.mxu0 %v3889
        %4013 = vmatprep.subr.mxu0 %v3894
        %4014 = vmatpush1.msra.mxu0 %v3893
        %4015 = vmatprep.subr.mxu0 %v3898
        %4016 = vmatpush1.msra.mxu0 %v3897
        %4017 = vmatprep.subr.mxu0 %v3902
        %4018 = vmatpush1.msra.mxu0 %v3901
        %4019 = vmatprep.subr.mxu0 %v3906
        %4020 = vmatpush1.msra.mxu0 %v3905
        %4021 = vmatprep.subr.mxu0 %v3910
        %4022 = vmatpush1.msra.mxu0 %v3909
        %4023 = vmatprep.subr.mxu0 %v3914
        %4024 = vmatpush1.msra.mxu0 %v3913
        %4025 = vmatprep.subr.mxu0 %v3918
        %4026 = vmatpush1.msra.mxu0 %v3917
        %4027 = vmatprep.subr.mxu0 %v3922
        %4028 = vmatpush1.msra.mxu0 %v3921
        %4029 = vmatprep.subr.mxu0 %v3926
        %4030 = vmatpush1.msra.mxu0 %v3925
        %4031 = vmatprep.subr.mxu0 %v3930
        %4032 = vmatpush1.msra.mxu0 %v3929
        %4033 = vmatprep.subr.mxu0 %v3934
        %4034 = vmatpush1.msra.mxu0 %v3933
        %4035 = vmatprep.subr.mxu0 %v3938
        %4036 = vmatpush1.msra.mxu0 %v3937
        %4037 = vmatprep.subr.mxu0 %v3942
        %4038 = vmatpush1.msra.mxu0 %v3941
        %4039 = vmatprep.subr.mxu0 %v3946
        %4040 = vmatpush1.msra.mxu0 %v3945
        %4041 = vmatprep.subr.mxu0 %v3950
        %4042 = vmatpush1.msra.mxu0 %v3949
        %4043 = vmatprep.subr.mxu0 %v3954
        %4044 = vmatpush1.msra.mxu0 %v3953
        %4045 = vmatprep.subr.mxu0 %v3958
        %4046 = vmatpush1.msra.mxu0 %v3957
        %4047 = vmatprep.subr.mxu0 %v3962
        %4048 = vmatpush1.msra.mxu0 %v3961
        %4049 = vmatprep.subr.mxu0 %v3966
        %4050 = vmatpush1.msra.mxu0 %v3965
        %4051 = vmatprep.subr.mxu0 %v3970
        %4052 = vmatpush1.msra.mxu0 %v3969
        %4053 = vmatprep.subr.mxu0 %v3974
        %4054 = vmatpush1.msra.mxu0 %v3973
        %4055 = vmatprep.subr.mxu0 %v3978
        %4056 = vmatpush1.msra.mxu0 %v3977
        %4057 = vmatprep.subr.mxu0 %v3982
        %4058 = vmatpush1.msra.mxu0 %v3981
        %4059 = vmatprep.subr.mxu0 0.0
        %4060 = vmatpush1.msra.mxu0 0.0
        %4061 = vmatprep.subr.mxu0 0.0
        %4062 = vmatpush1.msra.mxu0 0.0
        %4063 = vmatprep.subr.mxu0 0.0
        %4064 = vmatpush1.msra.mxu0 0.0
        %4065 = vmatprep.subr.mxu0 0.0
        %4066 = vmatpush1.msra.mxu0 0.0
        %4067 = vmatprep.subr.mxu0 0.0
        %4068 = vmatpush1.msra.mxu0 0.0
        %4069 = vmatprep.subr.mxu0 0.0
        %4070 = vmatpush1.msra.mxu0 0.0
        %4071 = vmatprep.subr.mxu0 0.0
        %4072 = vmatpush1.msra.mxu0 0.0
        %4073 = vmatprep.subr.mxu0 0.0
        %4074 = vmatpush1.msra.mxu0 0.0
        %4075 = vmatprep.mubr.f32.mxu0 %v4003
        %4076 = vmatmul.mubr.f32.gmra.mrb[0].mxu0 %v3987
        %v4077 = vpop.f32.mrb[0].mxu0
        %v4078 = vadd.f32 0.0, %v4077
        %v4079 = vpop.f32.mrb[0].mxu0
        %v4080 = vadd.f32 0.0, %v4079
        %4081 = vmatprep.mubr.f32.mxu0 %v4005
        %4082 = vmatmul.mubr.f32.gmra.mrb[0].mxu0 %v3992
        %v4083 = vpop.f32.mrb[0].mxu0
        %v4084 = vadd.f32 0.0, %v4083
        %v4085 = vpop.f32.mrb[0].mxu0
        %v4086 = vadd.f32 0.0, %v4085
        %4087 = vmatprep.mubr.f32.mxu0 %v4007
        %4088 = vmatmul.mubr.f32.gmra.mrb[0].mxu0 %v3996
        %v4089 = vpop.f32.mrb[0].mxu0
        %v4090 = vadd.f32 0.0, %v4089
        %v4091 = vpop.f32.mrb[0].mxu0
        %v4092 = vadd.f32 0.0, %v4091
        %4093 = vmatprep.mubr.f32.mxu0 %v4009
        %4094 = vmatmul.mubr.f32.gmra.mrb[0].mxu0 %v3995
        %v4095 = vpop.f32.mrb[0].mxu0
        %v4096 = vadd.f32 0.0, %v4095
        %v4097 = vpop.f32.mrb[0].mxu0
        %v4098 = vadd.f32 0.0, %v4097
        %4099 = vdwg.mxu0
        %4100 = vmatprep.subr.mxu0 %v3892
        %4101 = vmatpush1.msra.mxu0 %v3891
        %4102 = vmatprep.subr.mxu0 %v3896
        %4103 = vmatpush1.msra.mxu0 %v3895
        %4104 = vmatprep.subr.mxu0 %v3900
        %4105 = vmatpush1.msra.mxu0 %v3899
        %4106 = vmatprep.subr.mxu0 %v3904
        %4107 = vmatpush1.msra.mxu0 %v3903
        %4108 = vmatprep.subr.mxu0 %v3908
        %4109 = vmatpush1.msra.mxu0 %v3907
        %4110 = vmatprep.subr.mxu0 %v3912
        %4111 = vmatpush1.msra.mxu0 %v3911
        %4112 = vmatprep.subr.mxu0 %v3916
        %4113 = vmatpush1.msra.mxu0 %v3915
        %4114 = vmatprep.subr.mxu0 %v3920
        %4115 = vmatpush1.msra.mxu0 %v3919
        %4116 = vmatprep.subr.mxu0 %v3924
        %4117 = vmatpush1.msra.mxu0 %v3923
        %4118 = vmatprep.subr.mxu0 %v3928
        %4119 = vmatpush1.msra.mxu0 %v3927
        %4120 = vmatprep.subr.mxu0 %v3932
        %4121 = vmatpush1.msra.mxu0 %v3931
        %4122 = vmatprep.subr.mxu0 %v3936
        %4123 = vmatpush1.msra.mxu0 %v3935
        %4124 = vmatprep.subr.mxu0 %v3940
        %4125 = vmatpush1.msra.mxu0 %v3939
        %4126 = vmatprep.subr.mxu0 %v3944
        %4127 = vmatpush1.msra.mxu0 %v3943
        %4128 = vmatprep.subr.mxu0 %v3948
        %4129 = vmatpush1.msra.mxu0 %v3947
        %4130 = vmatprep.subr.mxu0 %v3952
        %4131 = vmatpush1.msra.mxu0 %v3951
        %4132 = vmatprep.subr.mxu0 %v3956
        %4133 = vmatpush1.msra.mxu0 %v3955
        %4134 = vmatprep.subr.mxu0 %v3960
        %4135 = vmatpush1.msra.mxu0 %v3959
        %4136 = vmatprep.subr.mxu0 %v3964
        %4137 = vmatpush1.msra.mxu0 %v3963
        %4138 = vmatprep.subr.mxu0 %v3968
        %4139 = vmatpush1.msra.mxu0 %v3967
        %4140 = vmatprep.subr.mxu0 %v3972
        %4141 = vmatpush1.msra.mxu0 %v3971
        %4142 = vmatprep.subr.mxu0 %v3976
        %4143 = vmatpush1.msra.mxu0 %v3975
        %4144 = vmatprep.subr.mxu0 %v3980
        %4145 = vmatpush1.msra.mxu0 %v3979
        %4146 = vmatprep.subr.mxu0 %v3984
        %4147 = vmatpush1.msra.mxu0 %v3983
        %4148 = vmatprep.subr.mxu0 0.0
        %4149 = vmatpush1.msra.mxu0 0.0
        %4150 = vmatprep.subr.mxu0 0.0
        %4151 = vmatpush1.msra.mxu0 0.0
        %4152 = vmatprep.subr.mxu0 0.0
        %4153 = vmatpush1.msra.mxu0 0.0
        %4154 = vmatprep.subr.mxu0 0.0
        %4155 = vmatpush1.msra.mxu0 0.0
        %4156 = vmatprep.subr.mxu0 0.0
        %4157 = vmatpush1.msra.mxu0 0.0
        %4158 = vmatprep.subr.mxu0 0.0
        %4159 = vmatpush1.msra.mxu0 0.0
        %4160 = vmatprep.subr.mxu0 0.0
        %4161 = vmatpush1.msra.mxu0 0.0
        %4162 = vmatprep.subr.mxu0 0.0
        %4163 = vmatpush1.msra.mxu0 0.0
        %4164 = vmatprep.mubr.f32.mxu0 %v4003
        %4165 = vmatmul.mubr.f32.gmra.mrb[0].mxu0 %v3987
        %v4166 = vpop.f32.mrb[0].mxu0
        %v4167 = vadd.f32 0.0, %v4166
        %v4168 = vpop.f32.mrb[0].mxu0
        %v4169 = vadd.f32 0.0, %v4168
        %4170 = vmatprep.mubr.f32.mxu0 %v4005
        %4171 = vmatmul.mubr.f32.gmra.mrb[0].mxu0 %v3992
        %v4172 = vpop.f32.mrb[0].mxu0
        %v4173 = vadd.f32 0.0, %v4172
        %v4174 = vpop.f32.mrb[0].mxu0
        %v4175 = vadd.f32 0.0, %v4174
        %4176 = vmatprep.mubr.f32.mxu0 %v4007
        %4177 = vmatmul.mubr.f32.gmra.mrb[0].mxu0 %v3996
        %v4178 = vpop.f32.mrb[0].mxu0
        %v4179 = vadd.f32 0.0, %v4178
        %v4180 = vpop.f32.mrb[0].mxu0
        %v4181 = vadd.f32 0.0, %v4180
        %4182 = vmatprep.mubr.f32.mxu0 %v4009
        %4183 = vmatmul.mubr.f32.gmra.mrb[0].mxu0 %v3995
        %v4184 = vpop.f32.mrb[0].mxu0
        %v4185 = vadd.f32 0.0, %v4184
        %v4186 = vpop.f32.mrb[0].mxu0
        %v4187 = vadd.f32 0.0, %v4186
        %4188 = vdwg.mxu0
        %v4189 = vadd.f32 %v3872, %v4078
        %v4190 = vadd.f32 %v3873, %v4080
        %v4191 = vadd.f32 %v3874, %v4167
        %v4192 = vadd.f32 %v3875, %v4169
        %v4193 = vadd.f32 %v3876, %v4084
        %v4194 = vadd.f32 %v3877, %v4086
        %v4195 = vadd.f32 %v3878, %v4173
        %v4196 = vadd.f32 %v3879, %v4175
        %v4197 = vadd.f32 %v3880, %v4090
        %v4198 = vadd.f32 %v3881, %v4092
        %v4199 = vadd.f32 %v3882, %v4179
        %v4200 = vadd.f32 %v3883, %v4181
        %v4201 = vadd.f32 %v3884, %v4096
        %v4202 = vadd.f32 %v3885, %v4098
        %v4203 = vadd.f32 %v3886, %v4185
        %v4204 = vadd.f32 %v3887, %v4187
        %s4205 = scalar_lea.vmem %s6, 3072
        %v4206 = vld [vmem:[%s4205] sm:$0xff]
        %v4207 = vld [vmem:[%s4205 + $0x8] sm:$0xff]
        %v4208 = vld [vmem:[%s4205 + $0x10] sm:$0xff]
        %v4209 = vld [vmem:[%s4205 + $0x18] sm:$0xff]
        %v4210 = vld [vmem:[%s4205 + $0x20] sm:$0xff]
        %v4211 = vld [vmem:[%s4205 + $0x28] sm:$0xff]
        %v4212 = vld [vmem:[%s4205 + $0x30] sm:$0xff]
        %v4213 = vld [vmem:[%s4205 + $0x38] sm:$0xff]
        %v4214 = vld [vmem:[%s4205 + $0x40] sm:$0xff]
        %v4215 = vld [vmem:[%s4205 + $0x48] sm:$0xff]
        %v4216 = vld [vmem:[%s4205 + $0x50] sm:$0xff]
        %v4217 = vld [vmem:[%s4205 + $0x58] sm:$0xff]
        %v4218 = vld [vmem:[%s4205 + $0x60] sm:$0xff]
        %v4219 = vld [vmem:[%s4205 + $0x68] sm:$0xff]
        %v4220 = vld [vmem:[%s4205 + $0x70] sm:$0xff]
        %v4221 = vld [vmem:[%s4205 + $0x78] sm:$0xff]
        %v4222 = vld [vmem:[%s4205 + $0x80] sm:$0xff]
        %v4223 = vld [vmem:[%s4205 + $0x88] sm:$0xff]
        %v4224 = vld [vmem:[%s4205 + $0x90] sm:$0xff]
        %v4225 = vld [vmem:[%s4205 + $0x98] sm:$0xff]
        %v4226 = vld [vmem:[%s4205 + $0xa0] sm:$0xff]
        %v4227 = vld [vmem:[%s4205 + $0xa8] sm:$0xff]
        %v4228 = vld [vmem:[%s4205 + $0xb0] sm:$0xff]
        %v4229 = vld [vmem:[%s4205 + $0xb8] sm:$0xff]
        %v4230 = vld [vmem:[%s4205 + $0xc0] sm:$0xff]
        %v4231 = vld [vmem:[%s4205 + $0xc8] sm:$0xff]
        %v4232 = vld [vmem:[%s4205 + $0xd0] sm:$0xff]
        %v4233 = vld [vmem:[%s4205 + $0xd8] sm:$0xff]
        %v4234 = vld [vmem:[%s4205 + $0xe0] sm:$0xff]
        %v4235 = vld [vmem:[%s4205 + $0xe8] sm:$0xff]
        %v4236 = vld [vmem:[%s4205 + $0xf0] sm:$0xff]
        %v4237 = vld [vmem:[%s4205 + $0xf8] sm:$0xff]
        %v4238 = vld [vmem:[%s4205 + $0x100] sm:$0xff]
        %v4239 = vld [vmem:[%s4205 + $0x108] sm:$0xff]
        %v4240 = vld [vmem:[%s4205 + $0x110] sm:$0xff]
        %v4241 = vld [vmem:[%s4205 + $0x118] sm:$0xff]
        %v4242 = vld [vmem:[%s4205 + $0x120] sm:$0xff]
        %v4243 = vld [vmem:[%s4205 + $0x128] sm:$0xff]
        %v4244 = vld [vmem:[%s4205 + $0x130] sm:$0xff]
        %v4245 = vld [vmem:[%s4205 + $0x138] sm:$0xff]
        %v4246 = vld [vmem:[%s4205 + $0x140] sm:$0xff]
        %v4247 = vld [vmem:[%s4205 + $0x148] sm:$0xff]
        %v4248 = vld [vmem:[%s4205 + $0x150] sm:$0xff]
        %v4249 = vld [vmem:[%s4205 + $0x158] sm:$0xff]
        %v4250 = vld [vmem:[%s4205 + $0x160] sm:$0xff]
        %v4251 = vld [vmem:[%s4205 + $0x168] sm:$0xff]
        %v4252 = vld [vmem:[%s4205 + $0x170] sm:$0xff]
        %v4253 = vld [vmem:[%s4205 + $0x178] sm:$0xff]
        %v4254 = vld [vmem:[%s4205 + $0x180] sm:$0xff]
        %v4255 = vld [vmem:[%s4205 + $0x188] sm:$0xff]
        %v4256 = vld [vmem:[%s4205 + $0x190] sm:$0xff]
        %v4257 = vld [vmem:[%s4205 + $0x198] sm:$0xff]
        %v4258 = vld [vmem:[%s4205 + $0x1a0] sm:$0xff]
        %v4259 = vld [vmem:[%s4205 + $0x1a8] sm:$0xff]
        %v4260 = vld [vmem:[%s4205 + $0x1b0] sm:$0xff]
        %v4261 = vld [vmem:[%s4205 + $0x1b8] sm:$0xff]
        %v4262 = vld [vmem:[%s4205 + $0x1c0] sm:$0xff]
        %v4263 = vld [vmem:[%s4205 + $0x1c8] sm:$0xff]
        %v4264 = vld [vmem:[%s4205 + $0x1d0] sm:$0xff]
        %v4265 = vld [vmem:[%s4205 + $0x1d8] sm:$0xff]
        %v4266 = vld [vmem:[%s4205 + $0x1e0] sm:$0xff]
        %v4267 = vld [vmem:[%s4205 + $0x1e8] sm:$0xff]
        %v4268 = vld [vmem:[%s4205 + $0x1f0] sm:$0xff]
        %v4269 = vld [vmem:[%s4205 + $0x1f8] sm:$0xff]
        %v4270 = vld [vmem:[%s4205 + $0x200] sm:$0xff]
        %v4271 = vld [vmem:[%s4205 + $0x208] sm:$0xff]
        %v4272 = vld [vmem:[%s4205 + $0x210] sm:$0xff]
        %v4273 = vld [vmem:[%s4205 + $0x218] sm:$0xff]
        %v4274 = vld [vmem:[%s4205 + $0x220] sm:$0xff]
        %v4275 = vld [vmem:[%s4205 + $0x228] sm:$0xff]
        %v4276 = vld [vmem:[%s4205 + $0x230] sm:$0xff]
        %v4277 = vld [vmem:[%s4205 + $0x238] sm:$0xff]
        %v4278 = vld [vmem:[%s4205 + $0x240] sm:$0xff]
        %v4279 = vld [vmem:[%s4205 + $0x248] sm:$0xff]
        %v4280 = vld [vmem:[%s4205 + $0x250] sm:$0xff]
        %v4281 = vld [vmem:[%s4205 + $0x258] sm:$0xff]
        %v4282 = vld [vmem:[%s4205 + $0x260] sm:$0xff]
        %v4283 = vld [vmem:[%s4205 + $0x268] sm:$0xff]
        %v4284 = vld [vmem:[%s4205 + $0x270] sm:$0xff]
        %v4285 = vld [vmem:[%s4205 + $0x278] sm:$0xff]
        %v4286 = vld [vmem:[%s4205 + $0x280] sm:$0xff]
        %v4287 = vld [vmem:[%s4205 + $0x288] sm:$0xff]
        %v4288 = vld [vmem:[%s4205 + $0x290] sm:$0xff]
        %v4289 = vld [vmem:[%s4205 + $0x298] sm:$0xff]
        %v4290 = vld [vmem:[%s4205 + $0x2a0] sm:$0xff]
        %v4291 = vld [vmem:[%s4205 + $0x2a8] sm:$0xff]
        %v4292 = vld [vmem:[%s4205 + $0x2b0] sm:$0xff]
        %v4293 = vld [vmem:[%s4205 + $0x2b8] sm:$0xff]
        %v4294 = vld [vmem:[%s4205 + $0x2c0] sm:$0xff]
        %v4295 = vld [vmem:[%s4205 + $0x2c8] sm:$0xff]
        %v4296 = vld [vmem:[%s4205 + $0x2d0] sm:$0xff]
        %v4297 = vld [vmem:[%s4205 + $0x2d8] sm:$0xff]
        %v4298 = vld [vmem:[%s4205 + $0x2e0] sm:$0xff]
        %v4299 = vld [vmem:[%s4205 + $0x2e8] sm:$0xff]
        %v4300 = vld [vmem:[%s4205 + $0x2f0] sm:$0xff]
        %v4301 = vld [vmem:[%s4205 + $0x2f8] sm:$0xff]
        %v4302 = vrot.slane %v2972, 4
        %v4303 = vrot.slane %v2974, 4
        %v4304 = vsel %vm1719, %v4302, %v4303
        %v4305 = vrot.slane %v2973, 4
        %v4306 = vrot.slane %v2975, 4
        %v4307 = vsel %vm1719, %v4305, %v4306
        %v4308 = vrot.slane %v2976, 4
        %v4309 = vsel %vm1719, %v4303, %v4308
        %v4310 = vrot.slane %v2977, 4
        %v4311 = vsel %vm1719, %v4306, %v4310
        %v4312 = vrot.slane %v2978, 4
        %v4313 = vsel %vm1719, %v4308, %v4312
        %v4314 = vrot.slane %v2979, 4
        %v4315 = vsel %vm1719, %v4310, %v4314
        %v4320 = vsel %vm627, %v4307, 0
        %v4322 = vsel %vm627, %v4311, 0
        %v4324 = vsel %vm627, %v4315, 0
        %v4326 = vsel %vm627, %v4314, 0
        %4328 = vmatprep.subr.mxu0 %v4207
        %4329 = vmatpush1.msra.mxu0 %v4206
        %4330 = vmatprep.subr.mxu0 %v4211
        %4331 = vmatpush1.msra.mxu0 %v4210
        %4332 = vmatprep.subr.mxu0 %v4215
        %4333 = vmatpush1.msra.mxu0 %v4214
        %4334 = vmatprep.subr.mxu0 %v4219
        %4335 = vmatpush1.msra.mxu0 %v4218
        %4336 = vmatprep.subr.mxu0 %v4223
        %4337 = vmatpush1.msra.mxu0 %v4222
        %4338 = vmatprep.subr.mxu0 %v4227
        %4339 = vmatpush1.msra.mxu0 %v4226
        %4340 = vmatprep.subr.mxu0 %v4231
        %4341 = vmatpush1.msra.mxu0 %v4230
        %4342 = vmatprep.subr.mxu0 %v4235
        %4343 = vmatpush1.msra.mxu0 %v4234
        %4344 = vmatprep.subr.mxu0 %v4239
        %4345 = vmatpush1.msra.mxu0 %v4238
        %4346 = vmatprep.subr.mxu0 %v4243
        %4347 = vmatpush1.msra.mxu0 %v4242
        %4348 = vmatprep.subr.mxu0 %v4247
        %4349 = vmatpush1.msra.mxu0 %v4246
        %4350 = vmatprep.subr.mxu0 %v4251
        %4351 = vmatpush1.msra.mxu0 %v4250
        %4352 = vmatprep.subr.mxu0 %v4255
        %4353 = vmatpush1.msra.mxu0 %v4254
        %4354 = vmatprep.subr.mxu0 %v4259
        %4355 = vmatpush1.msra.mxu0 %v4258
        %4356 = vmatprep.subr.mxu0 %v4263
        %4357 = vmatpush1.msra.mxu0 %v4262
        %4358 = vmatprep.subr.mxu0 %v4267
        %4359 = vmatpush1.msra.mxu0 %v4266
        %4360 = vmatprep.subr.mxu0 %v4271
        %4361 = vmatpush1.msra.mxu0 %v4270
        %4362 = vmatprep.subr.mxu0 %v4275
        %4363 = vmatpush1.msra.mxu0 %v4274
        %4364 = vmatprep.subr.mxu0 %v4279
        %4365 = vmatpush1.msra.mxu0 %v4278
        %4366 = vmatprep.subr.mxu0 %v4283
        %4367 = vmatpush1.msra.mxu0 %v4282
        %4368 = vmatprep.subr.mxu0 %v4287
        %4369 = vmatpush1.msra.mxu0 %v4286
        %4370 = vmatprep.subr.mxu0 %v4291
        %4371 = vmatpush1.msra.mxu0 %v4290
        %4372 = vmatprep.subr.mxu0 %v4295
        %4373 = vmatpush1.msra.mxu0 %v4294
        %4374 = vmatprep.subr.mxu0 %v4299
        %4375 = vmatpush1.msra.mxu0 %v4298
        %4376 = vmatprep.subr.mxu0 0.0
        %4377 = vmatpush1.msra.mxu0 0.0
        %4378 = vmatprep.subr.mxu0 0.0
        %4379 = vmatpush1.msra.mxu0 0.0
        %4380 = vmatprep.subr.mxu0 0.0
        %4381 = vmatpush1.msra.mxu0 0.0
        %4382 = vmatprep.subr.mxu0 0.0
        %4383 = vmatpush1.msra.mxu0 0.0
        %4384 = vmatprep.subr.mxu0 0.0
        %4385 = vmatpush1.msra.mxu0 0.0
        %4386 = vmatprep.subr.mxu0 0.0
        %4387 = vmatpush1.msra.mxu0 0.0
        %4388 = vmatprep.subr.mxu0 0.0
        %4389 = vmatpush1.msra.mxu0 0.0
        %4390 = vmatprep.subr.mxu0 0.0
        %4391 = vmatpush1.msra.mxu0 0.0
        %4392 = vmatprep.mubr.f32.mxu0 %v4320
        %4393 = vmatmul.mubr.f32.gmra.mrb[0].mxu0 %v4304
        %v4394 = vpop.f32.mrb[0].mxu0
        %v4395 = vadd.f32 0.0, %v4394
        %v4396 = vpop.f32.mrb[0].mxu0
        %v4397 = vadd.f32 0.0, %v4396
        %4398 = vmatprep.mubr.f32.mxu0 %v4322
        %4399 = vmatmul.mubr.f32.gmra.mrb[0].mxu0 %v4309
        %v4400 = vpop.f32.mrb[0].mxu0
        %v4401 = vadd.f32 0.0, %v4400
        %v4402 = vpop.f32.mrb[0].mxu0
        %v4403 = vadd.f32 0.0, %v4402
        %4404 = vmatprep.mubr.f32.mxu0 %v4324
        %4405 = vmatmul.mubr.f32.gmra.mrb[0].mxu0 %v4313
        %v4406 = vpop.f32.mrb[0].mxu0
        %v4407 = vadd.f32 0.0, %v4406
        %v4408 = vpop.f32.mrb[0].mxu0
        %v4409 = vadd.f32 0.0, %v4408
        %4410 = vmatprep.mubr.f32.mxu0 %v4326
        %4411 = vmatmul.mubr.f32.gmra.mrb[0].mxu0 %v4312
        %v4412 = vpop.f32.mrb[0].mxu0
        %v4413 = vadd.f32 0.0, %v4412
        %v4414 = vpop.f32.mrb[0].mxu0
        %v4415 = vadd.f32 0.0, %v4414
        %4416 = vdwg.mxu0
        %4417 = vmatprep.subr.mxu0 %v4209
        %4418 = vmatpush1.msra.mxu0 %v4208
        %4419 = vmatprep.subr.mxu0 %v4213
        %4420 = vmatpush1.msra.mxu0 %v4212
        %4421 = vmatprep.subr.mxu0 %v4217
        %4422 = vmatpush1.msra.mxu0 %v4216
        %4423 = vmatprep.subr.mxu0 %v4221
        %4424 = vmatpush1.msra.mxu0 %v4220
        %4425 = vmatprep.subr.mxu0 %v4225
        %4426 = vmatpush1.msra.mxu0 %v4224
        %4427 = vmatprep.subr.mxu0 %v4229
        %4428 = vmatpush1.msra.mxu0 %v4228
        %4429 = vmatprep.subr.mxu0 %v4233
        %4430 = vmatpush1.msra.mxu0 %v4232
        %4431 = vmatprep.subr.mxu0 %v4237
        %4432 = vmatpush1.msra.mxu0 %v4236
        %4433 = vmatprep.subr.mxu0 %v4241
        %4434 = vmatpush1.msra.mxu0 %v4240
        %4435 = vmatprep.subr.mxu0 %v4245
        %4436 = vmatpush1.msra.mxu0 %v4244
        %4437 = vmatprep.subr.mxu0 %v4249
        %4438 = vmatpush1.msra.mxu0 %v4248
        %4439 = vmatprep.subr.mxu0 %v4253
        %4440 = vmatpush1.msra.mxu0 %v4252
        %4441 = vmatprep.subr.mxu0 %v4257
        %4442 = vmatpush1.msra.mxu0 %v4256
        %4443 = vmatprep.subr.mxu0 %v4261
        %4444 = vmatpush1.msra.mxu0 %v4260
        %4445 = vmatprep.subr.mxu0 %v4265
        %4446 = vmatpush1.msra.mxu0 %v4264
        %4447 = vmatprep.subr.mxu0 %v4269
        %4448 = vmatpush1.msra.mxu0 %v4268
        %4449 = vmatprep.subr.mxu0 %v4273
        %4450 = vmatpush1.msra.mxu0 %v4272
        %4451 = vmatprep.subr.mxu0 %v4277
        %4452 = vmatpush1.msra.mxu0 %v4276
        %4453 = vmatprep.subr.mxu0 %v4281
        %4454 = vmatpush1.msra.mxu0 %v4280
        %4455 = vmatprep.subr.mxu0 %v4285
        %4456 = vmatpush1.msra.mxu0 %v4284
        %4457 = vmatprep.subr.mxu0 %v4289
        %4458 = vmatpush1.msra.mxu0 %v4288
        %4459 = vmatprep.subr.mxu0 %v4293
        %4460 = vmatpush1.msra.mxu0 %v4292
        %4461 = vmatprep.subr.mxu0 %v4297
        %4462 = vmatpush1.msra.mxu0 %v4296
        %4463 = vmatprep.subr.mxu0 %v4301
        %4464 = vmatpush1.msra.mxu0 %v4300
        %4465 = vmatprep.subr.mxu0 0.0
        %4466 = vmatpush1.msra.mxu0 0.0
        %4467 = vmatprep.subr.mxu0 0.0
        %4468 = vmatpush1.msra.mxu0 0.0
        %4469 = vmatprep.subr.mxu0 0.0
        %4470 = vmatpush1.msra.mxu0 0.0
        %4471 = vmatprep.subr.mxu0 0.0
        %4472 = vmatpush1.msra.mxu0 0.0
        %4473 = vmatprep.subr.mxu0 0.0
        %4474 = vmatpush1.msra.mxu0 0.0
        %4475 = vmatprep.subr.mxu0 0.0
        %4476 = vmatpush1.msra.mxu0 0.0
        %4477 = vmatprep.subr.mxu0 0.0
        %4478 = vmatpush1.msra.mxu0 0.0
        %4479 = vmatprep.subr.mxu0 0.0
        %4480 = vmatpush1.msra.mxu0 0.0
        %4481 = vmatprep.mubr.f32.mxu0 %v4320
        %4482 = vmatmul.mubr.f32.gmra.mrb[0].mxu0 %v4304
        %v4483 = vpop.f32.mrb[0].mxu0
        %v4484 = vadd.f32 0.0, %v4483
        %v4485 = vpop.f32.mrb[0].mxu0
        %v4486 = vadd.f32 0.0, %v4485
        %4487 = vmatprep.mubr.f32.mxu0 %v4322
        %4488 = vmatmul.mubr.f32.gmra.mrb[0].mxu0 %v4309
        %v4489 = vpop.f32.mrb[0].mxu0
        %v4490 = vadd.f32 0.0, %v4489
        %v4491 = vpop.f32.mrb[0].mxu0
        %v4492 = vadd.f32 0.0, %v4491
        %4493 = vmatprep.mubr.f32.mxu0 %v4324
        %4494 = vmatmul.mubr.f32.gmra.mrb[0].mxu0 %v4313
        %v4495 = vpop.f32.mrb[0].mxu0
        %v4496 = vadd.f32 0.0, %v4495
        %v4497 = vpop.f32.mrb[0].mxu0
        %v4498 = vadd.f32 0.0, %v4497
        %4499 = vmatprep.mubr.f32.mxu0 %v4326
        %4500 = vmatmul.mubr.f32.gmra.mrb[0].mxu0 %v4312
        %v4501 = vpop.f32.mrb[0].mxu0
        %v4502 = vadd.f32 0.0, %v4501
        %v4503 = vpop.f32.mrb[0].mxu0
        %v4504 = vadd.f32 0.0, %v4503
        %4505 = vdwg.mxu0
        %v4506 = vadd.f32 %v4189, %v4395
        %v4507 = vadd.f32 %v4190, %v4397
        %v4508 = vadd.f32 %v4191, %v4484
        %v4509 = vadd.f32 %v4192, %v4486
        %v4510 = vadd.f32 %v4193, %v4401
        %v4511 = vadd.f32 %v4194, %v4403
        %v4512 = vadd.f32 %v4195, %v4490
        %v4513 = vadd.f32 %v4196, %v4492
        %v4514 = vadd.f32 %v4197, %v4407
        %v4515 = vadd.f32 %v4198, %v4409
        %v4516 = vadd.f32 %v4199, %v4496
        %v4517 = vadd.f32 %v4200, %v4498
        %v4518 = vadd.f32 %v4201, %v4413
        %v4519 = vadd.f32 %v4202, %v4415
        %v4520 = vadd.f32 %v4203, %v4502
        %v4521 = vadd.f32 %v4204, %v4504
        %v4522 = vld [vmem:[%s7] sm:$0xf]
        %v4524 = vlaneseq
        %v4525 = vshrl.u32 %v4524, 7
        %v4526 = vsub.s32 0, %v4525
        %v4527 = vrot.slane %v4522, %v4526
        %v4528 = vlaneseq
        %v4529 = vshrl.u32 %v4528, 7
        %v4530 = vsub.s32 1, %v4529
        %v4531 = vrot.slane %v4522, %v4530
        %v4532 = vlaneseq
        %v4533 = vshrl.u32 %v4532, 7
        %v4534 = vsub.s32 2, %v4533
        %v4535 = vrot.slane %v4522, %v4534
        %v4536 = vlaneseq
        %v4537 = vshrl.u32 %v4536, 7
        %v4538 = vsub.s32 3, %v4537
        %v4539 = vrot.slane %v4522, %v4538
        %v4544 = vadd.f32 %v4506, %v4527
        %v4545 = vadd.f32 %v4507, %v4531
        %v4546 = vadd.f32 %v4508, %v4535
        %v4547 = vadd.f32 %v4509, %v4539
        %v4548 = vadd.f32 %v4510, %v4527
        %v4549 = vadd.f32 %v4511, %v4531
        %v4550 = vadd.f32 %v4512, %v4535
        %v4551 = vadd.f32 %v4513, %v4539
        %v4552 = vadd.f32 %v4514, %v4527
        %v4553 = vadd.f32 %v4515, %v4531
        %v4554 = vadd.f32 %v4516, %v4535
        %v4555 = vadd.f32 %v4517, %v4539
        %v4556 = vadd.f32 %v4518, %v4527
        %v4557 = vadd.f32 %v4519, %v4531
        %v4558 = vadd.f32 %v4520, %v4535
        %v4559 = vadd.f32 %v4521, %v4539
        %vm4560 = vcmp.gt.f32.partialorder %v4544, 0.0
        %vm4561 = vcmp.gt.f32.partialorder %v4545, 0.0
        %vm4562 = vcmp.gt.f32.partialorder %v4546, 0.0
        %vm4563 = vcmp.gt.f32.partialorder %v4547, 0.0
        %vm4564 = vcmp.gt.f32.partialorder %v4548, 0.0
        %vm4565 = vcmp.gt.f32.partialorder %v4549, 0.0
        %vm4566 = vcmp.gt.f32.partialorder %v4550, 0.0
        %vm4567 = vcmp.gt.f32.partialorder %v4551, 0.0
        %vm4568 = vcmp.gt.f32.partialorder %v4552, 0.0
        %vm4569 = vcmp.gt.f32.partialorder %v4553, 0.0
        %vm4570 = vcmp.gt.f32.partialorder %v4554, 0.0
        %vm4571 = vcmp.gt.f32.partialorder %v4555, 0.0
        %vm4572 = vcmp.gt.f32.partialorder %v4556, 0.0
        %vm4573 = vcmp.gt.f32.partialorder %v4557, 0.0
        %vm4574 = vcmp.gt.f32.partialorder %v4558, 0.0
        %vm4575 = vcmp.gt.f32.partialorder %v4559, 0.0
        %v4576 = vmul.f32 %v4544, 0.01
        %v4577 = vmul.f32 %v4545, 0.01
        %v4578 = vmul.f32 %v4546, 0.01
        %v4579 = vmul.f32 %v4547, 0.01
        %v4580 = vmul.f32 %v4548, 0.01
        %v4581 = vmul.f32 %v4549, 0.01
        %v4582 = vmul.f32 %v4550, 0.01
        %v4583 = vmul.f32 %v4551, 0.01
        %v4584 = vmul.f32 %v4552, 0.01
        %v4585 = vmul.f32 %v4553, 0.01
        %v4586 = vmul.f32 %v4554, 0.01
        %v4587 = vmul.f32 %v4555, 0.01
        %v4588 = vmul.f32 %v4556, 0.01
        %v4589 = vmul.f32 %v4557, 0.01
        %v4590 = vmul.f32 %v4558, 0.01
        %v4591 = vmul.f32 %v4559, 0.01
        %v4592 = vsel %vm4560, %v4544, %v4576
        %v4593 = vsel %vm4561, %v4545, %v4577
        %v4594 = vsel %vm4562, %v4546, %v4578
        %v4595 = vsel %vm4563, %v4547, %v4579
        %v4596 = vsel %vm4564, %v4548, %v4580
        %v4597 = vsel %vm4565, %v4549, %v4581
        %v4598 = vsel %vm4566, %v4550, %v4582
        %v4599 = vsel %vm4567, %v4551, %v4583
        %v4600 = vsel %vm4568, %v4552, %v4584
        %v4601 = vsel %vm4569, %v4553, %v4585
        %v4602 = vsel %vm4570, %v4554, %v4586
        %v4603 = vsel %vm4571, %v4555, %v4587
        %v4604 = vsel %vm4572, %v4556, %v4588
        %v4605 = vsel %vm4573, %v4557, %v4589
        %v4606 = vsel %vm4574, %v4558, %v4590
        %v4607 = vsel %vm4575, %v4559, %v4591
        %v4624 = vrot.slane %v4592, 1
        %v4625 = vrot.slane %v4596, 1
        %v4626 = vsel %vm611, %v4624, %v4625
        %v4627 = vrot.slane %v4593, 1
        %v4628 = vrot.slane %v4597, 1
        %v4629 = vsel %vm611, %v4627, %v4628
        %v4630 = vrot.slane %v4594, 1
        %v4631 = vrot.slane %v4598, 1
        %v4632 = vsel %vm611, %v4630, %v4631
        %v4633 = vrot.slane %v4595, 1
        %v4634 = vrot.slane %v4599, 1
        %v4635 = vsel %vm611, %v4633, %v4634
        %v4636 = vrot.slane %v4600, 1
        %v4637 = vsel %vm611, %v4625, %v4636
        %v4638 = vrot.slane %v4601, 1
        %v4639 = vsel %vm611, %v4628, %v4638
        %v4640 = vrot.slane %v4602, 1
        %v4641 = vsel %vm611, %v4631, %v4640
        %v4642 = vrot.slane %v4603, 1
        %v4643 = vsel %vm611, %v4634, %v4642
        %v4644 = vrot.slane %v4604, 1
        %v4645 = vsel %vm611, %v4636, %v4644
        %v4646 = vrot.slane %v4605, 1
        %v4647 = vsel %vm611, %v4638, %v4646
        %v4648 = vrot.slane %v4606, 1
        %v4649 = vsel %vm611, %v4640, %v4648
        %v4650 = vrot.slane %v4607, 1
        %v4651 = vsel %vm611, %v4642, %v4650
        %v4668 = vmax.f32 %v4592, %v4626
        %v4669 = vmax.f32 %v4593, %v4629
        %v4670 = vmax.f32 %v4594, %v4632
        %v4671 = vmax.f32 %v4595, %v4635
        %v4672 = vmax.f32 %v4596, %v4637
        %v4673 = vmax.f32 %v4597, %v4639
        %v4674 = vmax.f32 %v4598, %v4641
        %v4675 = vmax.f32 %v4599, %v4643
        %v4676 = vmax.f32 %v4600, %v4645
        %v4677 = vmax.f32 %v4601, %v4647
        %v4678 = vmax.f32 %v4602, %v4649
        %v4679 = vmax.f32 %v4603, %v4651
        %v4680 = vmax.f32 %v4604, %v4644
        %v4681 = vmax.f32 %v4605, %v4646
        %v4682 = vmax.f32 %v4606, %v4648
        %v4683 = vmax.f32 %v4607, %v4650
        %v4684 = vld [vmem:[%s8] sm:$0xff]
        %v4685 = vld [vmem:[%s8 + $0x8] sm:$0x1f]
        %vm4686 = vcmask 203776
        %v4688 = vsel %vm4686, %v4684, 0
        %v4691 = vsel %vm4686, %v4685, 0
        %vm4693 = vcmask 1040384
        %v4695 = vsel %vm4693, %v4680, 0
        %v4698 = vsel %vm4693, %v4681, 0
        %v4701 = vsel %vm4693, %v4682, 0
        %v4704 = vsel %vm4693, %v4683, 0
        %4706 = vmatprep.subr.mxu0 %v4669
        %4707 = vmatpush1.msra.mxu0 %v4668
        %4708 = vmatprep.subr.mxu0 %v4673
        %4709 = vmatpush1.msra.mxu0 %v4672
        %4710 = vmatprep.subr.mxu0 %v4677
        %4711 = vmatpush1.msra.mxu0 %v4676
        %4712 = vmatprep.subr.mxu0 %v4698
        %4713 = vmatpush1.msra.mxu0 %v4695
        %4714 = vmatprep.subr.mxu0 0.0
        %4715 = vmatpush1.msra.mxu0 0.0
        %4716 = vmatprep.subr.mxu0 0.0
        %4717 = vmatpush1.msra.mxu0 0.0
        %4718 = vmatprep.subr.mxu0 0.0
        %4719 = vmatpush1.msra.mxu0 0.0
        %4720 = vmatprep.subr.mxu0 0.0
        %4721 = vmatpush1.msra.mxu0 0.0
        %4722 = vmatprep.subr.mxu0 0.0
        %4723 = vmatpush1.msra.mxu0 0.0
        %4724 = vmatprep.subr.mxu0 0.0
        %4725 = vmatpush1.msra.mxu0 0.0
        %4726 = vmatprep.subr.mxu0 0.0
        %4727 = vmatpush1.msra.mxu0 0.0
        %4728 = vmatprep.subr.mxu0 0.0
        %4729 = vmatpush1.msra.mxu0 0.0
        %4730 = vmatprep.subr.mxu0 0.0
        %4731 = vmatpush1.msra.mxu0 0.0
        %4732 = vmatprep.subr.mxu0 0.0
        %4733 = vmatpush1.msra.mxu0 0.0
        %4734 = vmatprep.subr.mxu0 0.0
        %4735 = vmatpush1.msra.mxu0 0.0
        %4736 = vmatprep.subr.mxu0 0.0
        %4737 = vmatpush1.msra.mxu0 0.0
        %4738 = vmatprep.subr.mxu0 0.0
        %4739 = vmatpush1.msra.mxu0 0.0
        %4740 = vmatprep.subr.mxu0 0.0
        %4741 = vmatpush1.msra.mxu0 0.0
        %4742 = vmatprep.subr.mxu0 0.0
        %4743 = vmatpush1.msra.mxu0 0.0
        %4744 = vmatprep.subr.mxu0 0.0
        %4745 = vmatpush1.msra.mxu0 0.0
        %4746 = vmatprep.subr.mxu0 0.0
        %4747 = vmatpush1.msra.mxu0 0.0
        %4748 = vmatprep.subr.mxu0 0.0
        %4749 = vmatpush1.msra.mxu0 0.0
        %4750 = vmatprep.subr.mxu0 0.0
        %4751 = vmatpush1.msra.mxu0 0.0
        %4752 = vmatprep.subr.mxu0 0.0
        %4753 = vmatpush1.msra.mxu0 0.0
        %4754 = vmatprep.subr.mxu0 0.0
        %4755 = vmatpush1.msra.mxu0 0.0
        %4756 = vmatprep.subr.mxu0 0.0
        %4757 = vmatpush1.msra.mxu0 0.0
        %4758 = vmatprep.subr.mxu0 0.0
        %4759 = vmatpush1.msra.mxu0 0.0
        %4760 = vmatprep.subr.mxu0 0.0
        %4761 = vmatpush1.msra.mxu0 0.0
        %4762 = vmatprep.subr.mxu0 0.0
        %4763 = vmatpush1.msra.mxu0 0.0
        %4764 = vmatprep.subr.mxu0 0.0
        %4765 = vmatpush1.msra.mxu0 0.0
        %4766 = vmatprep.subr.mxu0 0.0
        %4767 = vmatpush1.msra.mxu0 0.0
        %4768 = vmatprep.subr.mxu0 0.0
        %4769 = vmatpush1.msra.mxu0 0.0
        %4770 = vmatprep.mubr.f32.mxu0 0.0
        %4771 = vmatmul.mubr.f32.gmra.mrb[0].mxu0 %v4688
        %v4772 = vpop.f32.mrb[0].mxu0
        %v4773 = vadd.f32 0.0, %v4772
        %v4774 = vpop.f32.mrb[0].mxu0
        %v4775 = vadd.f32 0.0, %v4774
        %4776 = vmatprep.mubr.f32.mxu0 0.0
        %4777 = vmatmul.mubr.f32.gmra.mrb[0].mxu0 %v4691
        %v4778 = vpop.f32.mrb[0].mxu0
        %v4779 = vadd.f32 0.0, %v4778
        %v4780 = vpop.f32.mrb[0].mxu0
        %v4781 = vadd.f32 0.0, %v4780
        %4782 = vdwg.mxu0
        %4783 = vmatprep.subr.mxu0 %v4671
        %4784 = vmatpush1.msra.mxu0 %v4670
        %4785 = vmatprep.subr.mxu0 %v4675
        %4786 = vmatpush1.msra.mxu0 %v4674
        %4787 = vmatprep.subr.mxu0 %v4679
        %4788 = vmatpush1.msra.mxu0 %v4678
        %4789 = vmatprep.subr.mxu0 %v4704
        %4790 = vmatpush1.msra.mxu0 %v4701
        %4791 = vmatprep.subr.mxu0 0.0
        %4792 = vmatpush1.msra.mxu0 0.0
        %4793 = vmatprep.subr.mxu0 0.0
        %4794 = vmatpush1.msra.mxu0 0.0
        %4795 = vmatprep.subr.mxu0 0.0
        %4796 = vmatpush1.msra.mxu0 0.0
        %4797 = vmatprep.subr.mxu0 0.0
        %4798 = vmatpush1.msra.mxu0 0.0
        %4799 = vmatprep.subr.mxu0 0.0
        %4800 = vmatpush1.msra.mxu0 0.0
        %4801 = vmatprep.subr.mxu0 0.0
        %4802 = vmatpush1.msra.mxu0 0.0
        %4803 = vmatprep.subr.mxu0 0.0
        %4804 = vmatpush1.msra.mxu0 0.0
        %4805 = vmatprep.subr.mxu0 0.0
        %4806 = vmatpush1.msra.mxu0 0.0
        %4807 = vmatprep.subr.mxu0 0.0
        %4808 = vmatpush1.msra.mxu0 0.0
        %4809 = vmatprep.subr.mxu0 0.0
        %4810 = vmatpush1.msra.mxu0 0.0
        %4811 = vmatprep.subr.mxu0 0.0
        %4812 = vmatpush1.msra.mxu0 0.0
        %4813 = vmatprep.subr.mxu0 0.0
        %4814 = vmatpush1.msra.mxu0 0.0
        %4815 = vmatprep.subr.mxu0 0.0
        %4816 = vmatpush1.msra.mxu0 0.0
        %4817 = vmatprep.subr.mxu0 0.0
        %4818 = vmatpush1.msra.mxu0 0.0
        %4819 = vmatprep.subr.mxu0 0.0
        %4820 = vmatpush1.msra.mxu0 0.0
        %4821 = vmatprep.subr.mxu0 0.0
        %4822 = vmatpush1.msra.mxu0 0.0
        %4823 = vmatprep.subr.mxu0 0.0
        %4824 = vmatpush1.msra.mxu0 0.0
        %4825 = vmatprep.subr.mxu0 0.0
        %4826 = vmatpush1.msra.mxu0 0.0
        %4827 = vmatprep.subr.mxu0 0.0
        %4828 = vmatpush1.msra.mxu0 0.0
        %4829 = vmatprep.subr.mxu0 0.0
        %4830 = vmatpush1.msra.mxu0 0.0
        %4831 = vmatprep.subr.mxu0 0.0
        %4832 = vmatpush1.msra.mxu0 0.0
        %4833 = vmatprep.subr.mxu0 0.0
        %4834 = vmatpush1.msra.mxu0 0.0
        %4835 = vmatprep.subr.mxu0 0.0
        %4836 = vmatpush1.msra.mxu0 0.0
        %4837 = vmatprep.subr.mxu0 0.0
        %4838 = vmatpush1.msra.mxu0 0.0
        %4839 = vmatprep.subr.mxu0 0.0
        %4840 = vmatpush1.msra.mxu0 0.0
        %4841 = vmatprep.subr.mxu0 0.0
        %4842 = vmatpush1.msra.mxu0 0.0
        %4843 = vmatprep.subr.mxu0 0.0
        %4844 = vmatpush1.msra.mxu0 0.0
        %4845 = vmatprep.subr.mxu0 0.0
        %4846 = vmatpush1.msra.mxu0 0.0
        %4847 = vmatprep.mubr.f32.mxu0 0.0
        %4848 = vmatmul.mubr.f32.gmra.mrb[0].mxu0 %v4688
        %v4849 = vpop.f32.mrb[0].mxu0
        %v4850 = vadd.f32 0.0, %v4849
        %v4851 = vpop.f32.mrb[0].mxu0
        %v4852 = vadd.f32 0.0, %v4851
        %4853 = vmatprep.mubr.f32.mxu0 0.0
        %4854 = vmatmul.mubr.f32.gmra.mrb[0].mxu0 %v4691
        %v4855 = vpop.f32.mrb[0].mxu0
        %v4856 = vadd.f32 0.0, %v4855
        %v4857 = vpop.f32.mrb[0].mxu0
        %v4858 = vadd.f32 0.0, %v4857
        %4859 = vdwg.mxu0
        %v4860 = vld [vmem:[%s9] sm:$0xff]
        %v4861 = vld [vmem:[%s9 + $0x8] sm:$0xff]
        %v4862 = vld [vmem:[%s9 + $0x10] sm:$0xff]
        %v4863 = vld [vmem:[%s9 + $0x18] sm:$0xff]
        %v4864 = vld [vmem:[%s9 + $0x20] sm:$0xff]
        %v4865 = vld [vmem:[%s9 + $0x28] sm:$0xff]
        %v4866 = vld [vmem:[%s9 + $0x30] sm:$0xff]
        %v4867 = vld [vmem:[%s9 + $0x38] sm:$0xff]
        %v4868 = vld [vmem:[%s9 + $0x40] sm:$0xff]
        %v4869 = vld [vmem:[%s9 + $0x48] sm:$0xff]
        %v4870 = vld [vmem:[%s9 + $0x50] sm:$0xff]
        %v4871 = vld [vmem:[%s9 + $0x58] sm:$0xff]
        %v4872 = vld [vmem:[%s9 + $0x60] sm:$0xff]
        %v4873 = vld [vmem:[%s9 + $0x68] sm:$0xff]
        %v4874 = vld [vmem:[%s9 + $0x70] sm:$0xff]
        %v4875 = vld [vmem:[%s9 + $0x78] sm:$0xff]
        %v4876 = vld [vmem:[%s9 + $0x80] sm:$0xff]
        %v4877 = vld [vmem:[%s9 + $0x88] sm:$0xff]
        %v4878 = vld [vmem:[%s9 + $0x90] sm:$0xff]
        %v4879 = vld [vmem:[%s9 + $0x98] sm:$0xff]
        %v4880 = vld [vmem:[%s9 + $0xa0] sm:$0xff]
        %v4881 = vld [vmem:[%s9 + $0xa8] sm:$0xff]
        %v4882 = vld [vmem:[%s9 + $0xb0] sm:$0xff]
        %v4883 = vld [vmem:[%s9 + $0xb8] sm:$0xff]
        %v4884 = vld [vmem:[%s9 + $0xc0] sm:$0xff]
        %v4885 = vld [vmem:[%s9 + $0xc8] sm:$0xff]
        %v4886 = vld [vmem:[%s9 + $0xd0] sm:$0xff]
        %v4887 = vld [vmem:[%s9 + $0xd8] sm:$0xff]
        %v4888 = vld [vmem:[%s9 + $0xe0] sm:$0xff]
        %v4889 = vld [vmem:[%s9 + $0xe8] sm:$0xff]
        %v4890 = vld [vmem:[%s9 + $0xf0] sm:$0xff]
        %v4891 = vld [vmem:[%s9 + $0xf8] sm:$0xff]
        %v4892 = vld [vmem:[%s9 + $0x100] sm:$0xff]
        %v4893 = vld [vmem:[%s9 + $0x108] sm:$0xff]
        %v4894 = vld [vmem:[%s9 + $0x110] sm:$0xff]
        %v4895 = vld [vmem:[%s9 + $0x118] sm:$0xff]
        %v4896 = vld [vmem:[%s9 + $0x120] sm:$0xff]
        %v4897 = vld [vmem:[%s9 + $0x128] sm:$0xff]
        %v4898 = vld [vmem:[%s9 + $0x130] sm:$0xff]
        %v4899 = vld [vmem:[%s9 + $0x138] sm:$0xff]
        %v4900 = vld [vmem:[%s9 + $0x140] sm:$0xff]
        %v4901 = vld [vmem:[%s9 + $0x148] sm:$0xff]
        %v4902 = vld [vmem:[%s9 + $0x150] sm:$0xff]
        %v4903 = vld [vmem:[%s9 + $0x158] sm:$0xff]
        %v4904 = vld [vmem:[%s9 + $0x160] sm:$0xff]
        %v4905 = vld [vmem:[%s9 + $0x168] sm:$0xff]
        %v4906 = vld [vmem:[%s9 + $0x170] sm:$0xff]
        %v4907 = vld [vmem:[%s9 + $0x178] sm:$0xff]
        %v4908 = vld [vmem:[%s9 + $0x180] sm:$0xff]
        %v4909 = vld [vmem:[%s9 + $0x188] sm:$0xff]
        %v4910 = vld [vmem:[%s9 + $0x190] sm:$0xff]
        %v4911 = vld [vmem:[%s9 + $0x198] sm:$0xff]
        %v4912 = vld [vmem:[%s9 + $0x1a0] sm:$0xff]
        %v4913 = vld [vmem:[%s9 + $0x1a8] sm:$0xff]
        %v4914 = vld [vmem:[%s9 + $0x1b0] sm:$0xff]
        %v4915 = vld [vmem:[%s9 + $0x1b8] sm:$0xff]
        %v4916 = vld [vmem:[%s9 + $0x1c0] sm:$0xff]
        %v4917 = vld [vmem:[%s9 + $0x1c8] sm:$0xff]
        %v4918 = vld [vmem:[%s9 + $0x1d0] sm:$0xff]
        %v4919 = vld [vmem:[%s9 + $0x1d8] sm:$0xff]
        %v4920 = vld [vmem:[%s9 + $0x1e0] sm:$0xff]
        %v4921 = vld [vmem:[%s9 + $0x1e8] sm:$0xff]
        %v4922 = vld [vmem:[%s9 + $0x1f0] sm:$0xff]
        %v4923 = vld [vmem:[%s9 + $0x1f8] sm:$0xff]
        %v4924 = vld [vmem:[%s9 + $0x200] sm:$0xff]
        %v4925 = vld [vmem:[%s9 + $0x208] sm:$0xff]
        %v4926 = vld [vmem:[%s9 + $0x210] sm:$0xff]
        %v4927 = vld [vmem:[%s9 + $0x218] sm:$0xff]
        %v4928 = vld [vmem:[%s9 + $0x220] sm:$0xff]
        %v4929 = vld [vmem:[%s9 + $0x228] sm:$0xff]
        %v4930 = vld [vmem:[%s9 + $0x230] sm:$0xff]
        %v4931 = vld [vmem:[%s9 + $0x238] sm:$0xff]
        %v4932 = vld [vmem:[%s9 + $0x240] sm:$0xff]
        %v4933 = vld [vmem:[%s9 + $0x248] sm:$0xff]
        %v4934 = vld [vmem:[%s9 + $0x250] sm:$0xff]
        %v4935 = vld [vmem:[%s9 + $0x258] sm:$0xff]
        %v4936 = vld [vmem:[%s9 + $0x260] sm:$0xff]
        %v4937 = vld [vmem:[%s9 + $0x268] sm:$0xff]
        %v4938 = vld [vmem:[%s9 + $0x270] sm:$0xff]
        %v4939 = vld [vmem:[%s9 + $0x278] sm:$0xff]
        %v4940 = vld [vmem:[%s9 + $0x280] sm:$0xff]
        %v4941 = vld [vmem:[%s9 + $0x288] sm:$0xff]
        %v4942 = vld [vmem:[%s9 + $0x290] sm:$0xff]
        %v4943 = vld [vmem:[%s9 + $0x298] sm:$0xff]
        %v4944 = vld [vmem:[%s9 + $0x2a0] sm:$0xff]
        %v4945 = vld [vmem:[%s9 + $0x2a8] sm:$0xff]
        %v4946 = vld [vmem:[%s9 + $0x2b0] sm:$0xff]
        %v4947 = vld [vmem:[%s9 + $0x2b8] sm:$0xff]
        %v4948 = vld [vmem:[%s9 + $0x2c0] sm:$0xff]
        %v4949 = vld [vmem:[%s9 + $0x2c8] sm:$0xff]
        %v4950 = vld [vmem:[%s9 + $0x2d0] sm:$0xff]
        %v4951 = vld [vmem:[%s9 + $0x2d8] sm:$0xff]
        %v4952 = vld [vmem:[%s9 + $0x2e0] sm:$0xff]
        %v4953 = vld [vmem:[%s9 + $0x2e8] sm:$0xff]
        %v4954 = vld [vmem:[%s9 + $0x2f0] sm:$0xff]
        %v4955 = vld [vmem:[%s9 + $0x2f8] sm:$0xff]
        %v4956 = vld [vmem:[%s9 + $0x300] sm:$0xff]
        %v4957 = vld [vmem:[%s9 + $0x308] sm:$0xff]
        %v4958 = vld [vmem:[%s9 + $0x310] sm:$0xff]
        %v4959 = vld [vmem:[%s9 + $0x318] sm:$0xff]
        %v4960 = vld [vmem:[%s9 + $0x320] sm:$0xff]
        %v4961 = vld [vmem:[%s9 + $0x328] sm:$0xff]
        %v4962 = vld [vmem:[%s9 + $0x330] sm:$0xff]
        %v4963 = vld [vmem:[%s9 + $0x338] sm:$0xff]
        %v4964 = vld [vmem:[%s9 + $0x340] sm:$0xff]
        %v4965 = vld [vmem:[%s9 + $0x348] sm:$0xff]
        %v4966 = vld [vmem:[%s9 + $0x350] sm:$0xff]
        %v4967 = vld [vmem:[%s9 + $0x358] sm:$0xff]
        %v4968 = vld [vmem:[%s9 + $0x360] sm:$0xff]
        %v4969 = vld [vmem:[%s9 + $0x368] sm:$0xff]
        %v4970 = vld [vmem:[%s9 + $0x370] sm:$0xff]
        %v4971 = vld [vmem:[%s9 + $0x378] sm:$0xff]
        %v4972 = vld [vmem:[%s9 + $0x380] sm:$0xff]
        %v4973 = vld [vmem:[%s9 + $0x388] sm:$0xff]
        %v4974 = vld [vmem:[%s9 + $0x390] sm:$0xff]
        %v4975 = vld [vmem:[%s9 + $0x398] sm:$0xff]
        %v4976 = vld [vmem:[%s9 + $0x3a0] sm:$0xff]
        %v4977 = vld [vmem:[%s9 + $0x3a8] sm:$0xff]
        %v4978 = vld [vmem:[%s9 + $0x3b0] sm:$0xff]
        %v4979 = vld [vmem:[%s9 + $0x3b8] sm:$0xff]
        %v4980 = vld [vmem:[%s9 + $0x3c0] sm:$0xff]
        %v4981 = vld [vmem:[%s9 + $0x3c8] sm:$0xff]
        %v4982 = vld [vmem:[%s9 + $0x3d0] sm:$0xff]
        %v4983 = vld [vmem:[%s9 + $0x3d8] sm:$0xff]
        %v4984 = vld [vmem:[%s9 + $0x3e0] sm:$0xff]
        %v4985 = vld [vmem:[%s9 + $0x3e8] sm:$0xff]
        %v4986 = vld [vmem:[%s9 + $0x3f0] sm:$0xff]
        %v4987 = vld [vmem:[%s9 + $0x3f8] sm:$0xff]
        %4988 = vmatprep.subr.mxu0 %v4861
        %4989 = vmatpush1.msra.mxu0 %v4860
        %4990 = vmatprep.subr.mxu0 %v4863
        %4991 = vmatpush1.msra.mxu0 %v4862
        %4992 = vmatprep.subr.mxu0 %v4865
        %4993 = vmatpush1.msra.mxu0 %v4864
        %4994 = vmatprep.subr.mxu0 %v4867
        %4995 = vmatpush1.msra.mxu0 %v4866
        %4996 = vmatprep.subr.mxu0 %v4869
        %4997 = vmatpush1.msra.mxu0 %v4868
        %4998 = vmatprep.subr.mxu0 %v4871
        %4999 = vmatpush1.msra.mxu0 %v4870
        %5000 = vmatprep.subr.mxu0 %v4873
        %5001 = vmatpush1.msra.mxu0 %v4872
        %5002 = vmatprep.subr.mxu0 %v4875
        %5003 = vmatpush1.msra.mxu0 %v4874
        %5004 = vmatprep.subr.mxu0 %v4877
        %5005 = vmatpush1.msra.mxu0 %v4876
        %5006 = vmatprep.subr.mxu0 %v4879
        %5007 = vmatpush1.msra.mxu0 %v4878
        %5008 = vmatprep.subr.mxu0 %v4881
        %5009 = vmatpush1.msra.mxu0 %v4880
        %5010 = vmatprep.subr.mxu0 %v4883
        %5011 = vmatpush1.msra.mxu0 %v4882
        %5012 = vmatprep.subr.mxu0 %v4885
        %5013 = vmatpush1.msra.mxu0 %v4884
        %5014 = vmatprep.subr.mxu0 %v4887
        %5015 = vmatpush1.msra.mxu0 %v4886
        %5016 = vmatprep.subr.mxu0 %v4889
        %5017 = vmatpush1.msra.mxu0 %v4888
        %5018 = vmatprep.subr.mxu0 %v4891
        %5019 = vmatpush1.msra.mxu0 %v4890
        %5020 = vmatprep.subr.mxu0 %v4893
        %5021 = vmatpush1.msra.mxu0 %v4892
        %5022 = vmatprep.subr.mxu0 %v4895
        %5023 = vmatpush1.msra.mxu0 %v4894
        %5024 = vmatprep.subr.mxu0 %v4897
        %5025 = vmatpush1.msra.mxu0 %v4896
        %5026 = vmatprep.subr.mxu0 %v4899
        %5027 = vmatpush1.msra.mxu0 %v4898
        %5028 = vmatprep.subr.mxu0 %v4901
        %5029 = vmatpush1.msra.mxu0 %v4900
        %5030 = vmatprep.subr.mxu0 %v4903
        %5031 = vmatpush1.msra.mxu0 %v4902
        %5032 = vmatprep.subr.mxu0 %v4905
        %5033 = vmatpush1.msra.mxu0 %v4904
        %5034 = vmatprep.subr.mxu0 %v4907
        %5035 = vmatpush1.msra.mxu0 %v4906
        %5036 = vmatprep.subr.mxu0 %v4909
        %5037 = vmatpush1.msra.mxu0 %v4908
        %5038 = vmatprep.subr.mxu0 %v4911
        %5039 = vmatpush1.msra.mxu0 %v4910
        %5040 = vmatprep.subr.mxu0 %v4913
        %5041 = vmatpush1.msra.mxu0 %v4912
        %5042 = vmatprep.subr.mxu0 %v4915
        %5043 = vmatpush1.msra.mxu0 %v4914
        %5044 = vmatprep.subr.mxu0 %v4917
        %5045 = vmatpush1.msra.mxu0 %v4916
        %5046 = vmatprep.subr.mxu0 %v4919
        %5047 = vmatpush1.msra.mxu0 %v4918
        %5048 = vmatprep.subr.mxu0 %v4921
        %5049 = vmatpush1.msra.mxu0 %v4920
        %5050 = vmatprep.subr.mxu0 %v4923
        %5051 = vmatpush1.msra.mxu0 %v4922
        %5052 = vmatprep.mubr.f32.mxu0 %v4775
        %5053 = vmatmul.mubr.f32.gmra.mrb[0].mxu0 %v4773
        %v5054 = vpop.f32.mrb[0].mxu0
        %v5055 = vadd.f32 0.0, %v5054
        %v5056 = vpop.f32.mrb[0].mxu0
        %v5057 = vadd.f32 0.0, %v5056
        %5058 = vmatprep.mubr.f32.mxu0 %v4781
        %5059 = vmatmul.mubr.f32.gmra.mrb[0].mxu0 %v4779
        %v5060 = vpop.f32.mrb[0].mxu0
        %v5061 = vadd.f32 0.0, %v5060
        %v5062 = vpop.f32.mrb[0].mxu0
        %v5063 = vadd.f32 0.0, %v5062
        %5064 = vdwg.mxu0
        %5065 = vmatprep.subr.mxu0 %v4925
        %5066 = vmatpush1.msra.mxu0 %v4924
        %5067 = vmatprep.subr.mxu0 %v4927
        %5068 = vmatpush1.msra.mxu0 %v4926
        %5069 = vmatprep.subr.mxu0 %v4929
        %5070 = vmatpush1.msra.mxu0 %v4928
        %5071 = vmatprep.subr.mxu0 %v4931
        %5072 = vmatpush1.msra.mxu0 %v4930
        %5073 = vmatprep.subr.mxu0 %v4933
        %5074 = vmatpush1.msra.mxu0 %v4932
        %5075 = vmatprep.subr.mxu0 %v4935
        %5076 = vmatpush1.msra.mxu0 %v4934
        %5077 = vmatprep.subr.mxu0 %v4937
        %5078 = vmatpush1.msra.mxu0 %v4936
        %5079 = vmatprep.subr.mxu0 %v4939
        %5080 = vmatpush1.msra.mxu0 %v4938
        %5081 = vmatprep.subr.mxu0 %v4941
        %5082 = vmatpush1.msra.mxu0 %v4940
        %5083 = vmatprep.subr.mxu0 %v4943
        %5084 = vmatpush1.msra.mxu0 %v4942
        %5085 = vmatprep.subr.mxu0 %v4945
        %5086 = vmatpush1.msra.mxu0 %v4944
        %5087 = vmatprep.subr.mxu0 %v4947
        %5088 = vmatpush1.msra.mxu0 %v4946
        %5089 = vmatprep.subr.mxu0 %v4949
        %5090 = vmatpush1.msra.mxu0 %v4948
        %5091 = vmatprep.subr.mxu0 %v4951
        %5092 = vmatpush1.msra.mxu0 %v4950
        %5093 = vmatprep.subr.mxu0 %v4953
        %5094 = vmatpush1.msra.mxu0 %v4952
        %5095 = vmatprep.subr.mxu0 %v4955
        %5096 = vmatpush1.msra.mxu0 %v4954
        %5097 = vmatprep.subr.mxu0 %v4957
        %5098 = vmatpush1.msra.mxu0 %v4956
        %5099 = vmatprep.subr.mxu0 %v4959
        %5100 = vmatpush1.msra.mxu0 %v4958
        %5101 = vmatprep.subr.mxu0 %v4961
        %5102 = vmatpush1.msra.mxu0 %v4960
        %5103 = vmatprep.subr.mxu0 %v4963
        %5104 = vmatpush1.msra.mxu0 %v4962
        %5105 = vmatprep.subr.mxu0 %v4965
        %5106 = vmatpush1.msra.mxu0 %v4964
        %5107 = vmatprep.subr.mxu0 %v4967
        %5108 = vmatpush1.msra.mxu0 %v4966
        %5109 = vmatprep.subr.mxu0 %v4969
        %5110 = vmatpush1.msra.mxu0 %v4968
        %5111 = vmatprep.subr.mxu0 %v4971
        %5112 = vmatpush1.msra.mxu0 %v4970
        %5113 = vmatprep.subr.mxu0 %v4973
        %5114 = vmatpush1.msra.mxu0 %v4972
        %5115 = vmatprep.subr.mxu0 %v4975
        %5116 = vmatpush1.msra.mxu0 %v4974
        %5117 = vmatprep.subr.mxu0 %v4977
        %5118 = vmatpush1.msra.mxu0 %v4976
        %5119 = vmatprep.subr.mxu0 %v4979
        %5120 = vmatpush1.msra.mxu0 %v4978
        %5121 = vmatprep.subr.mxu0 %v4981
        %5122 = vmatpush1.msra.mxu0 %v4980
        %5123 = vmatprep.subr.mxu0 %v4983
        %5124 = vmatpush1.msra.mxu0 %v4982
        %5125 = vmatprep.subr.mxu0 %v4985
        %5126 = vmatpush1.msra.mxu0 %v4984
        %5127 = vmatprep.subr.mxu0 %v4987
        %5128 = vmatpush1.msra.mxu0 %v4986
        %5129 = vmatprep.mubr.f32.mxu0 %v4852
        %5130 = vmatmul.mubr.f32.gmra.mrb[0].mxu0 %v4850
        %v5131 = vpop.f32.mrb[0].mxu0
        %v5132 = vadd.f32 %v5055, %v5131
        %v5133 = vpop.f32.mrb[0].mxu0
        %v5134 = vadd.f32 %v5057, %v5133
        %5135 = vmatprep.mubr.f32.mxu0 %v4858
        %5136 = vmatmul.mubr.f32.gmra.mrb[0].mxu0 %v4856
        %v5137 = vpop.f32.mrb[0].mxu0
        %v5138 = vadd.f32 %v5061, %v5137
        %v5139 = vpop.f32.mrb[0].mxu0
        %v5140 = vadd.f32 %v5063, %v5139
        %5141 = vdwg.mxu0
        %v5142 = vld [vmem:[%s10] sm:$0xff]
        %v5143 = vld [vmem:[%s10 + $0x8] sm:$0xff]
        %v5144 = vld [vmem:[%s10 + $0x10] sm:$0xff]
        %v5145 = vld [vmem:[%s10 + $0x18] sm:$0xff]
        %v5146 = vld [vmem:[%s10 + $0x20] sm:$0xff]
        %v5147 = vld [vmem:[%s10 + $0x28] sm:$0xff]
        %v5148 = vld [vmem:[%s10 + $0x30] sm:$0xff]
        %v5149 = vld [vmem:[%s10 + $0x38] sm:$0xff]
        %v5150 = vld [vmem:[%s10 + $0x40] sm:$0xff]
        %v5151 = vld [vmem:[%s10 + $0x48] sm:$0xff]
        %v5152 = vld [vmem:[%s10 + $0x50] sm:$0xff]
        %v5153 = vld [vmem:[%s10 + $0x58] sm:$0xff]
        %v5154 = vld [vmem:[%s10 + $0x60] sm:$0xff]
        %v5155 = vld [vmem:[%s10 + $0x68] sm:$0xff]
        %v5156 = vld [vmem:[%s10 + $0x70] sm:$0xff]
        %v5157 = vld [vmem:[%s10 + $0x78] sm:$0xff]
        %v5158 = vld [vmem:[%s10 + $0x80] sm:$0xff]
        %v5159 = vld [vmem:[%s10 + $0x88] sm:$0xff]
        %v5160 = vld [vmem:[%s10 + $0x90] sm:$0xff]
        %v5161 = vld [vmem:[%s10 + $0x98] sm:$0xff]
        %v5162 = vld [vmem:[%s10 + $0xa0] sm:$0xff]
        %v5163 = vld [vmem:[%s10 + $0xa8] sm:$0xff]
        %v5164 = vld [vmem:[%s10 + $0xb0] sm:$0xff]
        %v5165 = vld [vmem:[%s10 + $0xb8] sm:$0xff]
        %v5166 = vld [vmem:[%s10 + $0xc0] sm:$0xff]
        %v5167 = vld [vmem:[%s10 + $0xc8] sm:$0xff]
        %v5168 = vld [vmem:[%s10 + $0xd0] sm:$0xff]
        %v5169 = vld [vmem:[%s10 + $0xd8] sm:$0xff]
        %v5170 = vld [vmem:[%s10 + $0xe0] sm:$0xff]
        %v5171 = vld [vmem:[%s10 + $0xe8] sm:$0xff]
        %v5172 = vld [vmem:[%s10 + $0xf0] sm:$0xff]
        %v5173 = vld [vmem:[%s10 + $0xf8] sm:$0xff]
        %v5174 = vld [vmem:[%s10 + $0x100] sm:$0xff]
        %v5175 = vld [vmem:[%s10 + $0x108] sm:$0xff]
        %v5176 = vld [vmem:[%s10 + $0x110] sm:$0xff]
        %v5177 = vld [vmem:[%s10 + $0x118] sm:$0xff]
        %v5178 = vld [vmem:[%s10 + $0x120] sm:$0xff]
        %v5179 = vld [vmem:[%s10 + $0x128] sm:$0xff]
        %v5180 = vld [vmem:[%s10 + $0x130] sm:$0xff]
        %v5181 = vld [vmem:[%s10 + $0x138] sm:$0xff]
        %v5182 = vld [vmem:[%s10 + $0x140] sm:$0xff]
        %v5183 = vld [vmem:[%s10 + $0x148] sm:$0xff]
        %v5184 = vld [vmem:[%s10 + $0x150] sm:$0xff]
        %v5185 = vld [vmem:[%s10 + $0x158] sm:$0xff]
        %v5186 = vld [vmem:[%s10 + $0x160] sm:$0xff]
        %v5187 = vld [vmem:[%s10 + $0x168] sm:$0xff]
        %v5188 = vld [vmem:[%s10 + $0x170] sm:$0xff]
        %v5189 = vld [vmem:[%s10 + $0x178] sm:$0xff]
        %v5190 = vld [vmem:[%s10 + $0x180] sm:$0xff]
        %v5191 = vld [vmem:[%s10 + $0x188] sm:$0xff]
        %v5192 = vld [vmem:[%s10 + $0x190] sm:$0xff]
        %v5193 = vld [vmem:[%s10 + $0x198] sm:$0xff]
        %v5194 = vld [vmem:[%s10 + $0x1a0] sm:$0xff]
        %v5195 = vld [vmem:[%s10 + $0x1a8] sm:$0xff]
        %v5196 = vld [vmem:[%s10 + $0x1b0] sm:$0xff]
        %v5197 = vld [vmem:[%s10 + $0x1b8] sm:$0xff]
        %v5198 = vld [vmem:[%s10 + $0x1c0] sm:$0xff]
        %v5199 = vld [vmem:[%s10 + $0x1c8] sm:$0xff]
        %v5200 = vld [vmem:[%s10 + $0x1d0] sm:$0xff]
        %v5201 = vld [vmem:[%s10 + $0x1d8] sm:$0xff]
        %v5202 = vld [vmem:[%s10 + $0x1e0] sm:$0xff]
        %v5203 = vld [vmem:[%s10 + $0x1e8] sm:$0xff]
        %v5204 = vld [vmem:[%s10 + $0x1f0] sm:$0xff]
        %v5205 = vld [vmem:[%s10 + $0x1f8] sm:$0xff]
        %v5206 = vld [vmem:[%s10 + $0x200] sm:$0xff]
        %v5207 = vld [vmem:[%s10 + $0x208] sm:$0xff]
        %v5208 = vld [vmem:[%s10 + $0x210] sm:$0xff]
        %v5209 = vld [vmem:[%s10 + $0x218] sm:$0xff]
        %v5210 = vld [vmem:[%s10 + $0x220] sm:$0xff]
        %v5211 = vld [vmem:[%s10 + $0x228] sm:$0xff]
        %v5212 = vld [vmem:[%s10 + $0x230] sm:$0xff]
        %v5213 = vld [vmem:[%s10 + $0x238] sm:$0xff]
        %v5214 = vld [vmem:[%s10 + $0x240] sm:$0xff]
        %v5215 = vld [vmem:[%s10 + $0x248] sm:$0xff]
        %v5216 = vld [vmem:[%s10 + $0x250] sm:$0xff]
        %v5217 = vld [vmem:[%s10 + $0x258] sm:$0xff]
        %v5218 = vld [vmem:[%s10 + $0x260] sm:$0xff]
        %v5219 = vld [vmem:[%s10 + $0x268] sm:$0xff]
        %v5220 = vld [vmem:[%s10 + $0x270] sm:$0xff]
        %v5221 = vld [vmem:[%s10 + $0x278] sm:$0xff]
        %v5222 = vld [vmem:[%s10 + $0x280] sm:$0xff]
        %v5223 = vld [vmem:[%s10 + $0x288] sm:$0xff]
        %v5224 = vld [vmem:[%s10 + $0x290] sm:$0xff]
        %v5225 = vld [vmem:[%s10 + $0x298] sm:$0xff]
        %v5226 = vld [vmem:[%s10 + $0x2a0] sm:$0xff]
        %v5227 = vld [vmem:[%s10 + $0x2a8] sm:$0xff]
        %v5228 = vld [vmem:[%s10 + $0x2b0] sm:$0xff]
        %v5229 = vld [vmem:[%s10 + $0x2b8] sm:$0xff]
        %v5230 = vld [vmem:[%s10 + $0x2c0] sm:$0xff]
        %v5231 = vld [vmem:[%s10 + $0x2c8] sm:$0xff]
        %v5232 = vld [vmem:[%s10 + $0x2d0] sm:$0xff]
        %v5233 = vld [vmem:[%s10 + $0x2d8] sm:$0xff]
        %v5234 = vld [vmem:[%s10 + $0x2e0] sm:$0xff]
        %v5235 = vld [vmem:[%s10 + $0x2e8] sm:$0xff]
        %v5236 = vld [vmem:[%s10 + $0x2f0] sm:$0xff]
        %v5237 = vld [vmem:[%s10 + $0x2f8] sm:$0xff]
        %v5238 = vld [vmem:[%s10 + $0x300] sm:$0xff]
        %v5239 = vld [vmem:[%s10 + $0x308] sm:$0xff]
        %v5240 = vld [vmem:[%s10 + $0x310] sm:$0xff]
        %v5241 = vld [vmem:[%s10 + $0x318] sm:$0xff]
        %v5242 = vld [vmem:[%s10 + $0x320] sm:$0xff]
        %v5243 = vld [vmem:[%s10 + $0x328] sm:$0xff]
        %v5244 = vld [vmem:[%s10 + $0x330] sm:$0xff]
        %v5245 = vld [vmem:[%s10 + $0x338] sm:$0xff]
        %v5246 = vld [vmem:[%s10 + $0x340] sm:$0xff]
        %v5247 = vld [vmem:[%s10 + $0x348] sm:$0xff]
        %v5248 = vld [vmem:[%s10 + $0x350] sm:$0xff]
        %v5249 = vld [vmem:[%s10 + $0x358] sm:$0xff]
        %v5250 = vld [vmem:[%s10 + $0x360] sm:$0xff]
        %v5251 = vld [vmem:[%s10 + $0x368] sm:$0xff]
        %v5252 = vld [vmem:[%s10 + $0x370] sm:$0xff]
        %v5253 = vld [vmem:[%s10 + $0x378] sm:$0xff]
        %v5254 = vld [vmem:[%s10 + $0x380] sm:$0xff]
        %v5255 = vld [vmem:[%s10 + $0x388] sm:$0xff]
        %v5256 = vld [vmem:[%s10 + $0x390] sm:$0xff]
        %v5257 = vld [vmem:[%s10 + $0x398] sm:$0xff]
        %v5258 = vld [vmem:[%s10 + $0x3a0] sm:$0xff]
        %v5259 = vld [vmem:[%s10 + $0x3a8] sm:$0xff]
        %v5260 = vld [vmem:[%s10 + $0x3b0] sm:$0xff]
        %v5261 = vld [vmem:[%s10 + $0x3b8] sm:$0xff]
        %v5262 = vld [vmem:[%s10 + $0x3c0] sm:$0xff]
        %v5263 = vld [vmem:[%s10 + $0x3c8] sm:$0xff]
        %v5264 = vld [vmem:[%s10 + $0x3d0] sm:$0xff]
        %v5265 = vld [vmem:[%s10 + $0x3d8] sm:$0xff]
        %v5266 = vld [vmem:[%s10 + $0x3e0] sm:$0xff]
        %v5267 = vld [vmem:[%s10 + $0x3e8] sm:$0xff]
        %v5268 = vld [vmem:[%s10 + $0x3f0] sm:$0xff]
        %v5269 = vld [vmem:[%s10 + $0x3f8] sm:$0xff]
        %5270 = vmatprep.subr.mxu0 %v5143
        %5271 = vmatpush1.msra.mxu0 %v5142
        %5272 = vmatprep.subr.mxu0 %v5145
        %5273 = vmatpush1.msra.mxu0 %v5144
        %5274 = vmatprep.subr.mxu0 %v5147
        %5275 = vmatpush1.msra.mxu0 %v5146
        %5276 = vmatprep.subr.mxu0 %v5149
        %5277 = vmatpush1.msra.mxu0 %v5148
        %5278 = vmatprep.subr.mxu0 %v5151
        %5279 = vmatpush1.msra.mxu0 %v5150
        %5280 = vmatprep.subr.mxu0 %v5153
        %5281 = vmatpush1.msra.mxu0 %v5152
        %5282 = vmatprep.subr.mxu0 %v5155
        %5283 = vmatpush1.msra.mxu0 %v5154
        %5284 = vmatprep.subr.mxu0 %v5157
        %5285 = vmatpush1.msra.mxu0 %v5156
        %5286 = vmatprep.subr.mxu0 %v5159
        %5287 = vmatpush1.msra.mxu0 %v5158
        %5288 = vmatprep.subr.mxu0 %v5161
        %5289 = vmatpush1.msra.mxu0 %v5160
        %5290 = vmatprep.subr.mxu0 %v5163
        %5291 = vmatpush1.msra.mxu0 %v5162
        %5292 = vmatprep.subr.mxu0 %v5165
        %5293 = vmatpush1.msra.mxu0 %v5164
        %5294 = vmatprep.subr.mxu0 %v5167
        %5295 = vmatpush1.msra.mxu0 %v5166
        %5296 = vmatprep.subr.mxu0 %v5169
        %5297 = vmatpush1.msra.mxu0 %v5168
        %5298 = vmatprep.subr.mxu0 %v5171
        %5299 = vmatpush1.msra.mxu0 %v5170
        %5300 = vmatprep.subr.mxu0 %v5173
        %5301 = vmatpush1.msra.mxu0 %v5172
        %5302 = vmatprep.subr.mxu0 %v5175
        %5303 = vmatpush1.msra.mxu0 %v5174
        %5304 = vmatprep.subr.mxu0 %v5177
        %5305 = vmatpush1.msra.mxu0 %v5176
        %5306 = vmatprep.subr.mxu0 %v5179
        %5307 = vmatpush1.msra.mxu0 %v5178
        %5308 = vmatprep.subr.mxu0 %v5181
        %5309 = vmatpush1.msra.mxu0 %v5180
        %5310 = vmatprep.subr.mxu0 %v5183
        %5311 = vmatpush1.msra.mxu0 %v5182
        %5312 = vmatprep.subr.mxu0 %v5185
        %5313 = vmatpush1.msra.mxu0 %v5184
        %5314 = vmatprep.subr.mxu0 %v5187
        %5315 = vmatpush1.msra.mxu0 %v5186
        %5316 = vmatprep.subr.mxu0 %v5189
        %5317 = vmatpush1.msra.mxu0 %v5188
        %5318 = vmatprep.subr.mxu0 %v5191
        %5319 = vmatpush1.msra.mxu0 %v5190
        %5320 = vmatprep.subr.mxu0 %v5193
        %5321 = vmatpush1.msra.mxu0 %v5192
        %5322 = vmatprep.subr.mxu0 %v5195
        %5323 = vmatpush1.msra.mxu0 %v5194
        %5324 = vmatprep.subr.mxu0 %v5197
        %5325 = vmatpush1.msra.mxu0 %v5196
        %5326 = vmatprep.subr.mxu0 %v5199
        %5327 = vmatpush1.msra.mxu0 %v5198
        %5328 = vmatprep.subr.mxu0 %v5201
        %5329 = vmatpush1.msra.mxu0 %v5200
        %5330 = vmatprep.subr.mxu0 %v5203
        %5331 = vmatpush1.msra.mxu0 %v5202
        %5332 = vmatprep.subr.mxu0 %v5205
        %5333 = vmatpush1.msra.mxu0 %v5204
        %5334 = vmatprep.mubr.f32.mxu0 %v4775
        %5335 = vmatmul.mubr.f32.gmra.mrb[0].mxu0 %v4773
        %v5336 = vpop.f32.mrb[0].mxu0
        %v5337 = vadd.f32 0.0, %v5336
        %v5338 = vpop.f32.mrb[0].mxu0
        %v5339 = vadd.f32 0.0, %v5338
        %5340 = vmatprep.mubr.f32.mxu0 %v4781
        %5341 = vmatmul.mubr.f32.gmra.mrb[0].mxu0 %v4779
        %v5342 = vpop.f32.mrb[0].mxu0
        %v5343 = vadd.f32 0.0, %v5342
        %v5344 = vpop.f32.mrb[0].mxu0
        %v5345 = vadd.f32 0.0, %v5344
        %5346 = vdwg.mxu0
        %5347 = vmatprep.subr.mxu0 %v5207
        %5348 = vmatpush1.msra.mxu0 %v5206
        %5349 = vmatprep.subr.mxu0 %v5209
        %5350 = vmatpush1.msra.mxu0 %v5208
        %5351 = vmatprep.subr.mxu0 %v5211
        %5352 = vmatpush1.msra.mxu0 %v5210
        %5353 = vmatprep.subr.mxu0 %v5213
        %5354 = vmatpush1.msra.mxu0 %v5212
        %5355 = vmatprep.subr.mxu0 %v5215
        %5356 = vmatpush1.msra.mxu0 %v5214
        %5357 = vmatprep.subr.mxu0 %v5217
        %5358 = vmatpush1.msra.mxu0 %v5216
        %5359 = vmatprep.subr.mxu0 %v5219
        %5360 = vmatpush1.msra.mxu0 %v5218
        %5361 = vmatprep.subr.mxu0 %v5221
        %5362 = vmatpush1.msra.mxu0 %v5220
        %5363 = vmatprep.subr.mxu0 %v5223
        %5364 = vmatpush1.msra.mxu0 %v5222
        %5365 = vmatprep.subr.mxu0 %v5225
        %5366 = vmatpush1.msra.mxu0 %v5224
        %5367 = vmatprep.subr.mxu0 %v5227
        %5368 = vmatpush1.msra.mxu0 %v5226
        %5369 = vmatprep.subr.mxu0 %v5229
        %5370 = vmatpush1.msra.mxu0 %v5228
        %5371 = vmatprep.subr.mxu0 %v5231
        %5372 = vmatpush1.msra.mxu0 %v5230
        %5373 = vmatprep.subr.mxu0 %v5233
        %5374 = vmatpush1.msra.mxu0 %v5232
        %5375 = vmatprep.subr.mxu0 %v5235
        %5376 = vmatpush1.msra.mxu0 %v5234
        %5377 = vmatprep.subr.mxu0 %v5237
        %5378 = vmatpush1.msra.mxu0 %v5236
        %5379 = vmatprep.subr.mxu0 %v5239
        %5380 = vmatpush1.msra.mxu0 %v5238
        %5381 = vmatprep.subr.mxu0 %v5241
        %5382 = vmatpush1.msra.mxu0 %v5240
        %5383 = vmatprep.subr.mxu0 %v5243
        %5384 = vmatpush1.msra.mxu0 %v5242
        %5385 = vmatprep.subr.mxu0 %v5245
        %5386 = vmatpush1.msra.mxu0 %v5244
        %5387 = vmatprep.subr.mxu0 %v5247
        %5388 = vmatpush1.msra.mxu0 %v5246
        %5389 = vmatprep.subr.mxu0 %v5249
        %5390 = vmatpush1.msra.mxu0 %v5248
        %5391 = vmatprep.subr.mxu0 %v5251
        %5392 = vmatpush1.msra.mxu0 %v5250
        %5393 = vmatprep.subr.mxu0 %v5253
        %5394 = vmatpush1.msra.mxu0 %v5252
        %5395 = vmatprep.subr.mxu0 %v5255
        %5396 = vmatpush1.msra.mxu0 %v5254
        %5397 = vmatprep.subr.mxu0 %v5257
        %5398 = vmatpush1.msra.mxu0 %v5256
        %5399 = vmatprep.subr.mxu0 %v5259
        %5400 = vmatpush1.msra.mxu0 %v5258
        %5401 = vmatprep.subr.mxu0 %v5261
        %5402 = vmatpush1.msra.mxu0 %v5260
        %5403 = vmatprep.subr.mxu0 %v5263
        %5404 = vmatpush1.msra.mxu0 %v5262
        %5405 = vmatprep.subr.mxu0 %v5265
        %5406 = vmatpush1.msra.mxu0 %v5264
        %5407 = vmatprep.subr.mxu0 %v5267
        %5408 = vmatpush1.msra.mxu0 %v5266
        %5409 = vmatprep.subr.mxu0 %v5269
        %5410 = vmatpush1.msra.mxu0 %v5268
        %5411 = vmatprep.mubr.f32.mxu0 %v4852
        %5412 = vmatmul.mubr.f32.gmra.mrb[0].mxu0 %v4850
        %v5413 = vpop.f32.mrb[0].mxu0
        %v5414 = vadd.f32 %v5337, %v5413
        %v5415 = vpop.f32.mrb[0].mxu0
        %v5416 = vadd.f32 %v5339, %v5415
        %5417 = vmatprep.mubr.f32.mxu0 %v4858
        %5418 = vmatmul.mubr.f32.gmra.mrb[0].mxu0 %v4856
        %v5419 = vpop.f32.mrb[0].mxu0
        %v5420 = vadd.f32 %v5343, %v5419
        %v5421 = vpop.f32.mrb[0].mxu0
        %v5422 = vadd.f32 %v5345, %v5421
        %5423 = vdwg.mxu0
        %v5424 = vmax.f32 %v5132, %v5414
        %v5425 = vmax.f32 %v5134, %v5416
        %v5426 = vmax.f32 %v5138, %v5420
        %v5427 = vmax.f32 %v5140, %v5422
        %v5428 = vld [vmem:[%s12] sm:$0x1]
        %v5429 = vld [vmem:[%s11] sm:$0xff]
        %v5430 = vld [vmem:[%s11 + $0x8] sm:$0xff]
        %v5431 = vld [vmem:[%s11 + $0x10] sm:$0xff]
        %v5432 = vld [vmem:[%s11 + $0x18] sm:$0xff]
        %v5433 = vld [vmem:[%s11 + $0x20] sm:$0xff]
        %v5434 = vld [vmem:[%s11 + $0x28] sm:$0xff]
        %v5435 = vld [vmem:[%s11 + $0x30] sm:$0xff]
        %v5436 = vld [vmem:[%s11 + $0x38] sm:$0xff]
        %v5437 = vld [vmem:[%s11 + $0x40] sm:$0xff]
        %v5438 = vld [vmem:[%s11 + $0x48] sm:$0xff]
        %v5439 = vld [vmem:[%s11 + $0x50] sm:$0xff]
        %v5440 = vld [vmem:[%s11 + $0x58] sm:$0xff]
        %v5441 = vld [vmem:[%s11 + $0x60] sm:$0xff]
        %v5442 = vld [vmem:[%s11 + $0x68] sm:$0xff]
        %v5443 = vld [vmem:[%s11 + $0x70] sm:$0xff]
        %v5444 = vld [vmem:[%s11 + $0x78] sm:$0xff]
        %v5445 = vld [vmem:[%s11 + $0x80] sm:$0xff]
        %v5446 = vld [vmem:[%s11 + $0x88] sm:$0xff]
        %v5447 = vld [vmem:[%s11 + $0x90] sm:$0xff]
        %v5448 = vld [vmem:[%s11 + $0x98] sm:$0xff]
        %v5449 = vld [vmem:[%s11 + $0xa0] sm:$0xff]
        %v5450 = vld [vmem:[%s11 + $0xa8] sm:$0xff]
        %v5451 = vld [vmem:[%s11 + $0xb0] sm:$0xff]
        %v5452 = vld [vmem:[%s11 + $0xb8] sm:$0xff]
        %v5453 = vld [vmem:[%s11 + $0xc0] sm:$0xff]
        %v5454 = vld [vmem:[%s11 + $0xc8] sm:$0xff]
        %v5455 = vld [vmem:[%s11 + $0xd0] sm:$0xff]
        %v5456 = vld [vmem:[%s11 + $0xd8] sm:$0xff]
        %v5457 = vld [vmem:[%s11 + $0xe0] sm:$0xff]
        %v5458 = vld [vmem:[%s11 + $0xe8] sm:$0xff]
        %v5459 = vld [vmem:[%s11 + $0xf0] sm:$0xff]
        %v5460 = vld [vmem:[%s11 + $0xf8] sm:$0xff]
        %5461 = vmatprep.subr.mxu0 0.0
        %5462 = vmatpush1.msra.mxu0 %v5429
        %5463 = vmatprep.subr.mxu0 0.0
        %5464 = vmatpush1.msra.mxu0 %v5430
        %5465 = vmatprep.subr.mxu0 0.0
        %5466 = vmatpush1.msra.mxu0 %v5431
        %5467 = vmatprep.subr.mxu0 0.0
        %5468 = vmatpush1.msra.mxu0 %v5432
        %5469 = vmatprep.subr.mxu0 0.0
        %5470 = vmatpush1.msra.mxu0 %v5433
        %5471 = vmatprep.subr.mxu0 0.0
        %5472 = vmatpush1.msra.mxu0 %v5434
        %5473 = vmatprep.subr.mxu0 0.0
        %5474 = vmatpush1.msra.mxu0 %v5435
        %5475 = vmatprep.subr.mxu0 0.0
        %5476 = vmatpush1.msra.mxu0 %v5436
        %5477 = vmatprep.subr.mxu0 0.0
        %5478 = vmatpush1.msra.mxu0 %v5437
        %5479 = vmatprep.subr.mxu0 0.0
        %5480 = vmatpush1.msra.mxu0 %v5438
        %5481 = vmatprep.subr.mxu0 0.0
        %5482 = vmatpush1.msra.mxu0 %v5439
        %5483 = vmatprep.subr.mxu0 0.0
        %5484 = vmatpush1.msra.mxu0 %v5440
        %5485 = vmatprep.subr.mxu0 0.0
        %5486 = vmatpush1.msra.mxu0 %v5441
        %5487 = vmatprep.subr.mxu0 0.0
        %5488 = vmatpush1.msra.mxu0 %v5442
        %5489 = vmatprep.subr.mxu0 0.0
        %5490 = vmatpush1.msra.mxu0 %v5443
        %5491 = vmatprep.subr.mxu0 0.0
        %5492 = vmatpush1.msra.mxu0 %v5444
        %5493 = vmatprep.subr.mxu0 0.0
        %5494 = vmatpush1.msra.mxu0 %v5445
        %5495 = vmatprep.subr.mxu0 0.0
        %5496 = vmatpush1.msra.mxu0 %v5446
        %5497 = vmatprep.subr.mxu0 0.0
        %5498 = vmatpush1.msra.mxu0 %v5447
        %5499 = vmatprep.subr.mxu0 0.0
        %5500 = vmatpush1.msra.mxu0 %v5448
        %5501 = vmatprep.subr.mxu0 0.0
        %5502 = vmatpush1.msra.mxu0 %v5449
        %5503 = vmatprep.subr.mxu0 0.0
        %5504 = vmatpush1.msra.mxu0 %v5450
        %5505 = vmatprep.subr.mxu0 0.0
        %5506 = vmatpush1.msra.mxu0 %v5451
        %5507 = vmatprep.subr.mxu0 0.0
        %5508 = vmatpush1.msra.mxu0 %v5452
        %5509 = vmatprep.subr.mxu0 0.0
        %5510 = vmatpush1.msra.mxu0 %v5453
        %5511 = vmatprep.subr.mxu0 0.0
        %5512 = vmatpush1.msra.mxu0 %v5454
        %5513 = vmatprep.subr.mxu0 0.0
        %5514 = vmatpush1.msra.mxu0 %v5455
        %5515 = vmatprep.subr.mxu0 0.0
        %5516 = vmatpush1.msra.mxu0 %v5456
        %5517 = vmatprep.subr.mxu0 0.0
        %5518 = vmatpush1.msra.mxu0 %v5457
        %5519 = vmatprep.subr.mxu0 0.0
        %5520 = vmatpush1.msra.mxu0 %v5458
        %5521 = vmatprep.subr.mxu0 0.0
        %5522 = vmatpush1.msra.mxu0 %v5459
        %5523 = vmatprep.subr.mxu0 0.0
        %5524 = vmatpush1.msra.mxu0 %v5460
        %5525 = vmatprep.mubr.f32.mxu0 %v5425
        %5526 = vmatmul.mubr.f32.gmra.mrb[0].mxu0 %v5424
        %v5527 = vpop.f32.mrb[0].mxu0
        %v5528 = vadd.f32 0.0, %v5527
        %v5529 = vpop.f32.mrb[0].mxu0
        %5530 = vdwg.mxu0
        %v5531 = vadd.f32 %v5428, %v5528
        %s5532 = scalar_lea.vmem %s11, 256
        %v5533 = vld [vmem:[%s5532] sm:$0xff]
        %v5534 = vld [vmem:[%s5532 + $0x8] sm:$0xff]
        %v5535 = vld [vmem:[%s5532 + $0x10] sm:$0xff]
        %v5536 = vld [vmem:[%s5532 + $0x18] sm:$0xff]
        %v5537 = vld [vmem:[%s5532 + $0x20] sm:$0xff]
        %v5538 = vld [vmem:[%s5532 + $0x28] sm:$0xff]
        %v5539 = vld [vmem:[%s5532 + $0x30] sm:$0xff]
        %v5540 = vld [vmem:[%s5532 + $0x38] sm:$0xff]
        %v5541 = vld [vmem:[%s5532 + $0x40] sm:$0xff]
        %v5542 = vld [vmem:[%s5532 + $0x48] sm:$0xff]
        %v5543 = vld [vmem:[%s5532 + $0x50] sm:$0xff]
        %v5544 = vld [vmem:[%s5532 + $0x58] sm:$0xff]
        %v5545 = vld [vmem:[%s5532 + $0x60] sm:$0xff]
        %v5546 = vld [vmem:[%s5532 + $0x68] sm:$0xff]
        %v5547 = vld [vmem:[%s5532 + $0x70] sm:$0xff]
        %v5548 = vld [vmem:[%s5532 + $0x78] sm:$0xff]
        %v5549 = vld [vmem:[%s5532 + $0x80] sm:$0xff]
        %v5550 = vld [vmem:[%s5532 + $0x88] sm:$0xff]
        %v5551 = vld [vmem:[%s5532 + $0x90] sm:$0xff]
        %v5552 = vld [vmem:[%s5532 + $0x98] sm:$0xff]
        %v5553 = vld [vmem:[%s5532 + $0xa0] sm:$0xff]
        %v5554 = vld [vmem:[%s5532 + $0xa8] sm:$0xff]
        %v5555 = vld [vmem:[%s5532 + $0xb0] sm:$0xff]
        %v5556 = vld [vmem:[%s5532 + $0xb8] sm:$0xff]
        %v5557 = vld [vmem:[%s5532 + $0xc0] sm:$0xff]
        %v5558 = vld [vmem:[%s5532 + $0xc8] sm:$0xff]
        %v5559 = vld [vmem:[%s5532 + $0xd0] sm:$0xff]
        %v5560 = vld [vmem:[%s5532 + $0xd8] sm:$0xff]
        %v5561 = vld [vmem:[%s5532 + $0xe0] sm:$0xff]
        %v5562 = vld [vmem:[%s5532 + $0xe8] sm:$0xff]
        %v5563 = vld [vmem:[%s5532 + $0xf0] sm:$0xff]
        %v5564 = vld [vmem:[%s5532 + $0xf8] sm:$0xff]
        %v5567 = vrot.slane %v5424, 1
        %v5568 = vrot.slane %v5425, 1
        %5571 = vmatprep.subr.mxu0 0.0
        %5572 = vmatpush1.msra.mxu0 %v5533
        %5573 = vmatprep.subr.mxu0 0.0
        %5574 = vmatpush1.msra.mxu0 %v5534
        %5575 = vmatprep.subr.mxu0 0.0
        %5576 = vmatpush1.msra.mxu0 %v5535
        %5577 = vmatprep.subr.mxu0 0.0
        %5578 = vmatpush1.msra.mxu0 %v5536
        %5579 = vmatprep.subr.mxu0 0.0
        %5580 = vmatpush1.msra.mxu0 %v5537
        %5581 = vmatprep.subr.mxu0 0.0
        %5582 = vmatpush1.msra.mxu0 %v5538
        %5583 = vmatprep.subr.mxu0 0.0
        %5584 = vmatpush1.msra.mxu0 %v5539
        %5585 = vmatprep.subr.mxu0 0.0
        %5586 = vmatpush1.msra.mxu0 %v5540
        %5587 = vmatprep.subr.mxu0 0.0
        %5588 = vmatpush1.msra.mxu0 %v5541
        %5589 = vmatprep.subr.mxu0 0.0
        %5590 = vmatpush1.msra.mxu0 %v5542
        %5591 = vmatprep.subr.mxu0 0.0
        %5592 = vmatpush1.msra.mxu0 %v5543
        %5593 = vmatprep.subr.mxu0 0.0
        %5594 = vmatpush1.msra.mxu0 %v5544
        %5595 = vmatprep.subr.mxu0 0.0
        %5596 = vmatpush1.msra.mxu0 %v5545
        %5597 = vmatprep.subr.mxu0 0.0
        %5598 = vmatpush1.msra.mxu0 %v5546
        %5599 = vmatprep.subr.mxu0 0.0
        %5600 = vmatpush1.msra.mxu0 %v5547
        %5601 = vmatprep.subr.mxu0 0.0
        %5602 = vmatpush1.msra.mxu0 %v5548
        %5603 = vmatprep.subr.mxu0 0.0
        %5604 = vmatpush1.msra.mxu0 %v5549
        %5605 = vmatprep.subr.mxu0 0.0
        %5606 = vmatpush1.msra.mxu0 %v5550
        %5607 = vmatprep.subr.mxu0 0.0
        %5608 = vmatpush1.msra.mxu0 %v5551
        %5609 = vmatprep.subr.mxu0 0.0
        %5610 = vmatpush1.msra.mxu0 %v5552
        %5611 = vmatprep.subr.mxu0 0.0
        %5612 = vmatpush1.msra.mxu0 %v5553
        %5613 = vmatprep.subr.mxu0 0.0
        %5614 = vmatpush1.msra.mxu0 %v5554
        %5615 = vmatprep.subr.mxu0 0.0
        %5616 = vmatpush1.msra.mxu0 %v5555
        %5617 = vmatprep.subr.mxu0 0.0
        %5618 = vmatpush1.msra.mxu0 %v5556
        %5619 = vmatprep.subr.mxu0 0.0
        %5620 = vmatpush1.msra.mxu0 %v5557
        %5621 = vmatprep.subr.mxu0 0.0
        %5622 = vmatpush1.msra.mxu0 %v5558
        %5623 = vmatprep.subr.mxu0 0.0
        %5624 = vmatpush1.msra.mxu0 %v5559
        %5625 = vmatprep.subr.mxu0 0.0
        %5626 = vmatpush1.msra.mxu0 %v5560
        %5627 = vmatprep.subr.mxu0 0.0
        %5628 = vmatpush1.msra.mxu0 %v5561
        %5629 = vmatprep.subr.mxu0 0.0
        %5630 = vmatpush1.msra.mxu0 %v5562
        %5631 = vmatprep.subr.mxu0 0.0
        %5632 = vmatpush1.msra.mxu0 %v5563
        %5633 = vmatprep.subr.mxu0 0.0
        %5634 = vmatpush1.msra.mxu0 %v5564
        %5635 = vmatprep.mubr.f32.mxu0 %v5568
        %5636 = vmatmul.mubr.f32.gmra.mrb[0].mxu0 %v5567
        %v5637 = vpop.f32.mrb[0].mxu0
        %v5638 = vadd.f32 0.0, %v5637
        %v5639 = vpop.f32.mrb[0].mxu0
        %5640 = vdwg.mxu0
        %v5641 = vadd.f32 %v5531, %v5638
        %s5642 = scalar_lea.vmem %s11, 512
        %v5643 = vld [vmem:[%s5642] sm:$0xff]
        %v5644 = vld [vmem:[%s5642 + $0x8] sm:$0xff]
        %v5645 = vld [vmem:[%s5642 + $0x10] sm:$0xff]
        %v5646 = vld [vmem:[%s5642 + $0x18] sm:$0xff]
        %v5647 = vld [vmem:[%s5642 + $0x20] sm:$0xff]
        %v5648 = vld [vmem:[%s5642 + $0x28] sm:$0xff]
        %v5649 = vld [vmem:[%s5642 + $0x30] sm:$0xff]
        %v5650 = vld [vmem:[%s5642 + $0x38] sm:$0xff]
        %v5651 = vld [vmem:[%s5642 + $0x40] sm:$0xff]
        %v5652 = vld [vmem:[%s5642 + $0x48] sm:$0xff]
        %v5653 = vld [vmem:[%s5642 + $0x50] sm:$0xff]
        %v5654 = vld [vmem:[%s5642 + $0x58] sm:$0xff]
        %v5655 = vld [vmem:[%s5642 + $0x60] sm:$0xff]
        %v5656 = vld [vmem:[%s5642 + $0x68] sm:$0xff]
        %v5657 = vld [vmem:[%s5642 + $0x70] sm:$0xff]
        %v5658 = vld [vmem:[%s5642 + $0x78] sm:$0xff]
        %v5659 = vld [vmem:[%s5642 + $0x80] sm:$0xff]
        %v5660 = vld [vmem:[%s5642 + $0x88] sm:$0xff]
        %v5661 = vld [vmem:[%s5642 + $0x90] sm:$0xff]
        %v5662 = vld [vmem:[%s5642 + $0x98] sm:$0xff]
        %v5663 = vld [vmem:[%s5642 + $0xa0] sm:$0xff]
        %v5664 = vld [vmem:[%s5642 + $0xa8] sm:$0xff]
        %v5665 = vld [vmem:[%s5642 + $0xb0] sm:$0xff]
        %v5666 = vld [vmem:[%s5642 + $0xb8] sm:$0xff]
        %v5667 = vld [vmem:[%s5642 + $0xc0] sm:$0xff]
        %v5668 = vld [vmem:[%s5642 + $0xc8] sm:$0xff]
        %v5669 = vld [vmem:[%s5642 + $0xd0] sm:$0xff]
        %v5670 = vld [vmem:[%s5642 + $0xd8] sm:$0xff]
        %v5671 = vld [vmem:[%s5642 + $0xe0] sm:$0xff]
        %v5672 = vld [vmem:[%s5642 + $0xe8] sm:$0xff]
        %v5673 = vld [vmem:[%s5642 + $0xf0] sm:$0xff]
        %v5674 = vld [vmem:[%s5642 + $0xf8] sm:$0xff]
        %v5675 = vrot.slane %v5424, 2
        %v5676 = vrot.slane %v5425, 2
        %5679 = vmatprep.subr.mxu0 0.0
        %5680 = vmatpush1.msra.mxu0 %v5643
        %5681 = vmatprep.subr.mxu0 0.0
        %5682 = vmatpush1.msra.mxu0 %v5644
        %5683 = vmatprep.subr.mxu0 0.0
        %5684 = vmatpush1.msra.mxu0 %v5645
        %5685 = vmatprep.subr.mxu0 0.0
        %5686 = vmatpush1.msra.mxu0 %v5646
        %5687 = vmatprep.subr.mxu0 0.0
        %5688 = vmatpush1.msra.mxu0 %v5647
        %5689 = vmatprep.subr.mxu0 0.0
        %5690 = vmatpush1.msra.mxu0 %v5648
        %5691 = vmatprep.subr.mxu0 0.0
        %5692 = vmatpush1.msra.mxu0 %v5649
        %5693 = vmatprep.subr.mxu0 0.0
        %5694 = vmatpush1.msra.mxu0 %v5650
        %5695 = vmatprep.subr.mxu0 0.0
        %5696 = vmatpush1.msra.mxu0 %v5651
        %5697 = vmatprep.subr.mxu0 0.0
        %5698 = vmatpush1.msra.mxu0 %v5652
        %5699 = vmatprep.subr.mxu0 0.0
        %5700 = vmatpush1.msra.mxu0 %v5653
        %5701 = vmatprep.subr.mxu0 0.0
        %5702 = vmatpush1.msra.mxu0 %v5654
        %5703 = vmatprep.subr.mxu0 0.0
        %5704 = vmatpush1.msra.mxu0 %v5655
        %5705 = vmatprep.subr.mxu0 0.0
        %5706 = vmatpush1.msra.mxu0 %v5656
        %5707 = vmatprep.subr.mxu0 0.0
        %5708 = vmatpush1.msra.mxu0 %v5657
        %5709 = vmatprep.subr.mxu0 0.0
        %5710 = vmatpush1.msra.mxu0 %v5658
        %5711 = vmatprep.subr.mxu0 0.0
        %5712 = vmatpush1.msra.mxu0 %v5659
        %5713 = vmatprep.subr.mxu0 0.0
        %5714 = vmatpush1.msra.mxu0 %v5660
        %5715 = vmatprep.subr.mxu0 0.0
        %5716 = vmatpush1.msra.mxu0 %v5661
        %5717 = vmatprep.subr.mxu0 0.0
        %5718 = vmatpush1.msra.mxu0 %v5662
        %5719 = vmatprep.subr.mxu0 0.0
        %5720 = vmatpush1.msra.mxu0 %v5663
        %5721 = vmatprep.subr.mxu0 0.0
        %5722 = vmatpush1.msra.mxu0 %v5664
        %5723 = vmatprep.subr.mxu0 0.0
        %5724 = vmatpush1.msra.mxu0 %v5665
        %5725 = vmatprep.subr.mxu0 0.0
        %5726 = vmatpush1.msra.mxu0 %v5666
        %5727 = vmatprep.subr.mxu0 0.0
        %5728 = vmatpush1.msra.mxu0 %v5667
        %5729 = vmatprep.subr.mxu0 0.0
        %5730 = vmatpush1.msra.mxu0 %v5668
        %5731 = vmatprep.subr.mxu0 0.0
        %5732 = vmatpush1.msra.mxu0 %v5669
        %5733 = vmatprep.subr.mxu0 0.0
        %5734 = vmatpush1.msra.mxu0 %v5670
        %5735 = vmatprep.subr.mxu0 0.0
        %5736 = vmatpush1.msra.mxu0 %v5671
        %5737 = vmatprep.subr.mxu0 0.0
        %5738 = vmatpush1.msra.mxu0 %v5672
        %5739 = vmatprep.subr.mxu0 0.0
        %5740 = vmatpush1.msra.mxu0 %v5673
        %5741 = vmatprep.subr.mxu0 0.0
        %5742 = vmatpush1.msra.mxu0 %v5674
        %5743 = vmatprep.mubr.f32.mxu0 %v5676
        %5744 = vmatmul.mubr.f32.gmra.mrb[0].mxu0 %v5675
        %v5745 = vpop.f32.mrb[0].mxu0
        %v5746 = vadd.f32 0.0, %v5745
        %v5747 = vpop.f32.mrb[0].mxu0
        %5748 = vdwg.mxu0
        %v5749 = vadd.f32 %v5641, %v5746
        %s5750 = scalar_lea.vmem %s11, 768
        %v5751 = vld [vmem:[%s5750] sm:$0xff]
        %v5752 = vld [vmem:[%s5750 + $0x8] sm:$0xff]
        %v5753 = vld [vmem:[%s5750 + $0x10] sm:$0xff]
        %v5754 = vld [vmem:[%s5750 + $0x18] sm:$0xff]
        %v5755 = vld [vmem:[%s5750 + $0x20] sm:$0xff]
        %v5756 = vld [vmem:[%s5750 + $0x28] sm:$0xff]
        %v5757 = vld [vmem:[%s5750 + $0x30] sm:$0xff]
        %v5758 = vld [vmem:[%s5750 + $0x38] sm:$0xff]
        %v5759 = vld [vmem:[%s5750 + $0x40] sm:$0xff]
        %v5760 = vld [vmem:[%s5750 + $0x48] sm:$0xff]
        %v5761 = vld [vmem:[%s5750 + $0x50] sm:$0xff]
        %v5762 = vld [vmem:[%s5750 + $0x58] sm:$0xff]
        %v5763 = vld [vmem:[%s5750 + $0x60] sm:$0xff]
        %v5764 = vld [vmem:[%s5750 + $0x68] sm:$0xff]
        %v5765 = vld [vmem:[%s5750 + $0x70] sm:$0xff]
        %v5766 = vld [vmem:[%s5750 + $0x78] sm:$0xff]
        %v5767 = vld [vmem:[%s5750 + $0x80] sm:$0xff]
        %v5768 = vld [vmem:[%s5750 + $0x88] sm:$0xff]
        %v5769 = vld [vmem:[%s5750 + $0x90] sm:$0xff]
        %v5770 = vld [vmem:[%s5750 + $0x98] sm:$0xff]
        %v5771 = vld [vmem:[%s5750 + $0xa0] sm:$0xff]
        %v5772 = vld [vmem:[%s5750 + $0xa8] sm:$0xff]
        %v5773 = vld [vmem:[%s5750 + $0xb0] sm:$0xff]
        %v5774 = vld [vmem:[%s5750 + $0xb8] sm:$0xff]
        %v5775 = vld [vmem:[%s5750 + $0xc0] sm:$0xff]
        %v5776 = vld [vmem:[%s5750 + $0xc8] sm:$0xff]
        %v5777 = vld [vmem:[%s5750 + $0xd0] sm:$0xff]
        %v5778 = vld [vmem:[%s5750 + $0xd8] sm:$0xff]
        %v5779 = vld [vmem:[%s5750 + $0xe0] sm:$0xff]
        %v5780 = vld [vmem:[%s5750 + $0xe8] sm:$0xff]
        %v5781 = vld [vmem:[%s5750 + $0xf0] sm:$0xff]
        %v5782 = vld [vmem:[%s5750 + $0xf8] sm:$0xff]
        %v5783 = vrot.slane %v5424, 3
        %v5784 = vrot.slane %v5425, 3
        %5787 = vmatprep.subr.mxu0 0.0
        %5788 = vmatpush1.msra.mxu0 %v5751
        %5789 = vmatprep.subr.mxu0 0.0
        %5790 = vmatpush1.msra.mxu0 %v5752
        %5791 = vmatprep.subr.mxu0 0.0
        %5792 = vmatpush1.msra.mxu0 %v5753
        %5793 = vmatprep.subr.mxu0 0.0
        %5794 = vmatpush1.msra.mxu0 %v5754
        %5795 = vmatprep.subr.mxu0 0.0
        %5796 = vmatpush1.msra.mxu0 %v5755
        %5797 = vmatprep.subr.mxu0 0.0
        %5798 = vmatpush1.msra.mxu0 %v5756
        %5799 = vmatprep.subr.mxu0 0.0
        %5800 = vmatpush1.msra.mxu0 %v5757
        %5801 = vmatprep.subr.mxu0 0.0
        %5802 = vmatpush1.msra.mxu0 %v5758
        %5803 = vmatprep.subr.mxu0 0.0
        %5804 = vmatpush1.msra.mxu0 %v5759
        %5805 = vmatprep.subr.mxu0 0.0
        %5806 = vmatpush1.msra.mxu0 %v5760
        %5807 = vmatprep.subr.mxu0 0.0
        %5808 = vmatpush1.msra.mxu0 %v5761
        %5809 = vmatprep.subr.mxu0 0.0
        %5810 = vmatpush1.msra.mxu0 %v5762
        %5811 = vmatprep.subr.mxu0 0.0
        %5812 = vmatpush1.msra.mxu0 %v5763
        %5813 = vmatprep.subr.mxu0 0.0
        %5814 = vmatpush1.msra.mxu0 %v5764
        %5815 = vmatprep.subr.mxu0 0.0
        %5816 = vmatpush1.msra.mxu0 %v5765
        %5817 = vmatprep.subr.mxu0 0.0
        %5818 = vmatpush1.msra.mxu0 %v5766
        %5819 = vmatprep.subr.mxu0 0.0
        %5820 = vmatpush1.msra.mxu0 %v5767
        %5821 = vmatprep.subr.mxu0 0.0
        %5822 = vmatpush1.msra.mxu0 %v5768
        %5823 = vmatprep.subr.mxu0 0.0
        %5824 = vmatpush1.msra.mxu0 %v5769
        %5825 = vmatprep.subr.mxu0 0.0
        %5826 = vmatpush1.msra.mxu0 %v5770
        %5827 = vmatprep.subr.mxu0 0.0
        %5828 = vmatpush1.msra.mxu0 %v5771
        %5829 = vmatprep.subr.mxu0 0.0
        %5830 = vmatpush1.msra.mxu0 %v5772
        %5831 = vmatprep.subr.mxu0 0.0
        %5832 = vmatpush1.msra.mxu0 %v5773
        %5833 = vmatprep.subr.mxu0 0.0
        %5834 = vmatpush1.msra.mxu0 %v5774
        %5835 = vmatprep.subr.mxu0 0.0
        %5836 = vmatpush1.msra.mxu0 %v5775
        %5837 = vmatprep.subr.mxu0 0.0
        %5838 = vmatpush1.msra.mxu0 %v5776
        %5839 = vmatprep.subr.mxu0 0.0
        %5840 = vmatpush1.msra.mxu0 %v5777
        %5841 = vmatprep.subr.mxu0 0.0
        %5842 = vmatpush1.msra.mxu0 %v5778
        %5843 = vmatprep.subr.mxu0 0.0
        %5844 = vmatpush1.msra.mxu0 %v5779
        %5845 = vmatprep.subr.mxu0 0.0
        %5846 = vmatpush1.msra.mxu0 %v5780
        %5847 = vmatprep.subr.mxu0 0.0
        %5848 = vmatpush1.msra.mxu0 %v5781
        %5849 = vmatprep.subr.mxu0 0.0
        %5850 = vmatpush1.msra.mxu0 %v5782
        %5851 = vmatprep.mubr.f32.mxu0 %v5784
        %5852 = vmatmul.mubr.f32.gmra.mrb[0].mxu0 %v5783
        %v5853 = vpop.f32.mrb[0].mxu0
        %v5854 = vadd.f32 0.0, %v5853
        %v5855 = vpop.f32.mrb[0].mxu0
        %5856 = vdwg.mxu0
        %v5857 = vadd.f32 %v5749, %v5854
        %s5858 = scalar_lea.vmem %s11, 1024
        %v5859 = vld [vmem:[%s5858] sm:$0xff]
        %v5860 = vld [vmem:[%s5858 + $0x8] sm:$0xff]
        %v5861 = vld [vmem:[%s5858 + $0x10] sm:$0xff]
        %v5862 = vld [vmem:[%s5858 + $0x18] sm:$0xff]
        %v5863 = vld [vmem:[%s5858 + $0x20] sm:$0xff]
        %v5864 = vld [vmem:[%s5858 + $0x28] sm:$0xff]
        %v5865 = vld [vmem:[%s5858 + $0x30] sm:$0xff]
        %v5866 = vld [vmem:[%s5858 + $0x38] sm:$0xff]
        %v5867 = vld [vmem:[%s5858 + $0x40] sm:$0xff]
        %v5868 = vld [vmem:[%s5858 + $0x48] sm:$0xff]
        %v5869 = vld [vmem:[%s5858 + $0x50] sm:$0xff]
        %v5870 = vld [vmem:[%s5858 + $0x58] sm:$0xff]
        %v5871 = vld [vmem:[%s5858 + $0x60] sm:$0xff]
        %v5872 = vld [vmem:[%s5858 + $0x68] sm:$0xff]
        %v5873 = vld [vmem:[%s5858 + $0x70] sm:$0xff]
        %v5874 = vld [vmem:[%s5858 + $0x78] sm:$0xff]
        %v5875 = vld [vmem:[%s5858 + $0x80] sm:$0xff]
        %v5876 = vld [vmem:[%s5858 + $0x88] sm:$0xff]
        %v5877 = vld [vmem:[%s5858 + $0x90] sm:$0xff]
        %v5878 = vld [vmem:[%s5858 + $0x98] sm:$0xff]
        %v5879 = vld [vmem:[%s5858 + $0xa0] sm:$0xff]
        %v5880 = vld [vmem:[%s5858 + $0xa8] sm:$0xff]
        %v5881 = vld [vmem:[%s5858 + $0xb0] sm:$0xff]
        %v5882 = vld [vmem:[%s5858 + $0xb8] sm:$0xff]
        %v5883 = vld [vmem:[%s5858 + $0xc0] sm:$0xff]
        %v5884 = vld [vmem:[%s5858 + $0xc8] sm:$0xff]
        %v5885 = vld [vmem:[%s5858 + $0xd0] sm:$0xff]
        %v5886 = vld [vmem:[%s5858 + $0xd8] sm:$0xff]
        %v5887 = vld [vmem:[%s5858 + $0xe0] sm:$0xff]
        %v5888 = vld [vmem:[%s5858 + $0xe8] sm:$0xff]
        %v5889 = vld [vmem:[%s5858 + $0xf0] sm:$0xff]
        %v5890 = vld [vmem:[%s5858 + $0xf8] sm:$0xff]
        %v5891 = vrot.slane %v5424, 4
        %v5892 = vrot.slane %v5425, 4
        %5895 = vmatprep.subr.mxu0 0.0
        %5896 = vmatpush1.msra.mxu0 %v5859
        %5897 = vmatprep.subr.mxu0 0.0
        %5898 = vmatpush1.msra.mxu0 %v5860
        %5899 = vmatprep.subr.mxu0 0.0
        %5900 = vmatpush1.msra.mxu0 %v5861
        %5901 = vmatprep.subr.mxu0 0.0
        %5902 = vmatpush1.msra.mxu0 %v5862
        %5903 = vmatprep.subr.mxu0 0.0
        %5904 = vmatpush1.msra.mxu0 %v5863
        %5905 = vmatprep.subr.mxu0 0.0
        %5906 = vmatpush1.msra.mxu0 %v5864
        %5907 = vmatprep.subr.mxu0 0.0
        %5908 = vmatpush1.msra.mxu0 %v5865
        %5909 = vmatprep.subr.mxu0 0.0
        %5910 = vmatpush1.msra.mxu0 %v5866
        %5911 = vmatprep.subr.mxu0 0.0
        %5912 = vmatpush1.msra.mxu0 %v5867
        %5913 = vmatprep.subr.mxu0 0.0
        %5914 = vmatpush1.msra.mxu0 %v5868
        %5915 = vmatprep.subr.mxu0 0.0
        %5916 = vmatpush1.msra.mxu0 %v5869
        %5917 = vmatprep.subr.mxu0 0.0
        %5918 = vmatpush1.msra.mxu0 %v5870
        %5919 = vmatprep.subr.mxu0 0.0
        %5920 = vmatpush1.msra.mxu0 %v5871
        %5921 = vmatprep.subr.mxu0 0.0
        %5922 = vmatpush1.msra.mxu0 %v5872
        %5923 = vmatprep.subr.mxu0 0.0
        %5924 = vmatpush1.msra.mxu0 %v5873
        %5925 = vmatprep.subr.mxu0 0.0
        %5926 = vmatpush1.msra.mxu0 %v5874
        %5927 = vmatprep.subr.mxu0 0.0
        %5928 = vmatpush1.msra.mxu0 %v5875
        %5929 = vmatprep.subr.mxu0 0.0
        %5930 = vmatpush1.msra.mxu0 %v5876
        %5931 = vmatprep.subr.mxu0 0.0
        %5932 = vmatpush1.msra.mxu0 %v5877
        %5933 = vmatprep.subr.mxu0 0.0
        %5934 = vmatpush1.msra.mxu0 %v5878
        %5935 = vmatprep.subr.mxu0 0.0
        %5936 = vmatpush1.msra.mxu0 %v5879
        %5937 = vmatprep.subr.mxu0 0.0
        %5938 = vmatpush1.msra.mxu0 %v5880
        %5939 = vmatprep.subr.mxu0 0.0
        %5940 = vmatpush1.msra.mxu0 %v5881
        %5941 = vmatprep.subr.mxu0 0.0
        %5942 = vmatpush1.msra.mxu0 %v5882
        %5943 = vmatprep.subr.mxu0 0.0
        %5944 = vmatpush1.msra.mxu0 %v5883
        %5945 = vmatprep.subr.mxu0 0.0
        %5946 = vmatpush1.msra.mxu0 %v5884
        %5947 = vmatprep.subr.mxu0 0.0
        %5948 = vmatpush1.msra.mxu0 %v5885
        %5949 = vmatprep.subr.mxu0 0.0
        %5950 = vmatpush1.msra.mxu0 %v5886
        %5951 = vmatprep.subr.mxu0 0.0
        %5952 = vmatpush1.msra.mxu0 %v5887
        %5953 = vmatprep.subr.mxu0 0.0
        %5954 = vmatpush1.msra.mxu0 %v5888
        %5955 = vmatprep.subr.mxu0 0.0
        %5956 = vmatpush1.msra.mxu0 %v5889
        %5957 = vmatprep.subr.mxu0 0.0
        %5958 = vmatpush1.msra.mxu0 %v5890
        %5959 = vmatprep.mubr.f32.mxu0 %v5892
        %5960 = vmatmul.mubr.f32.gmra.mrb[0].mxu0 %v5891
        %v5961 = vpop.f32.mrb[0].mxu0
        %v5962 = vadd.f32 0.0, %v5961
        %v5963 = vpop.f32.mrb[0].mxu0
        %5964 = vdwg.mxu0
        %v5965 = vadd.f32 %v5857, %v5962
        %s5966 = scalar_lea.vmem %s11, 1280
        %v5967 = vld [vmem:[%s5966] sm:$0xff]
        %v5968 = vld [vmem:[%s5966 + $0x8] sm:$0xff]
        %v5969 = vld [vmem:[%s5966 + $0x10] sm:$0xff]
        %v5970 = vld [vmem:[%s5966 + $0x18] sm:$0xff]
        %v5971 = vld [vmem:[%s5966 + $0x20] sm:$0xff]
        %v5972 = vld [vmem:[%s5966 + $0x28] sm:$0xff]
        %v5973 = vld [vmem:[%s5966 + $0x30] sm:$0xff]
        %v5974 = vld [vmem:[%s5966 + $0x38] sm:$0xff]
        %v5975 = vld [vmem:[%s5966 + $0x40] sm:$0xff]
        %v5976 = vld [vmem:[%s5966 + $0x48] sm:$0xff]
        %v5977 = vld [vmem:[%s5966 + $0x50] sm:$0xff]
        %v5978 = vld [vmem:[%s5966 + $0x58] sm:$0xff]
        %v5979 = vld [vmem:[%s5966 + $0x60] sm:$0xff]
        %v5980 = vld [vmem:[%s5966 + $0x68] sm:$0xff]
        %v5981 = vld [vmem:[%s5966 + $0x70] sm:$0xff]
        %v5982 = vld [vmem:[%s5966 + $0x78] sm:$0xff]
        %v5983 = vld [vmem:[%s5966 + $0x80] sm:$0xff]
        %v5984 = vld [vmem:[%s5966 + $0x88] sm:$0xff]
        %v5985 = vld [vmem:[%s5966 + $0x90] sm:$0xff]
        %v5986 = vld [vmem:[%s5966 + $0x98] sm:$0xff]
        %v5987 = vld [vmem:[%s5966 + $0xa0] sm:$0xff]
        %v5988 = vld [vmem:[%s5966 + $0xa8] sm:$0xff]
        %v5989 = vld [vmem:[%s5966 + $0xb0] sm:$0xff]
        %v5990 = vld [vmem:[%s5966 + $0xb8] sm:$0xff]
        %v5991 = vld [vmem:[%s5966 + $0xc0] sm:$0xff]
        %v5992 = vld [vmem:[%s5966 + $0xc8] sm:$0xff]
        %v5993 = vld [vmem:[%s5966 + $0xd0] sm:$0xff]
        %v5994 = vld [vmem:[%s5966 + $0xd8] sm:$0xff]
        %v5995 = vld [vmem:[%s5966 + $0xe0] sm:$0xff]
        %v5996 = vld [vmem:[%s5966 + $0xe8] sm:$0xff]
        %v5997 = vld [vmem:[%s5966 + $0xf0] sm:$0xff]
        %v5998 = vld [vmem:[%s5966 + $0xf8] sm:$0xff]
        %v5999 = vrot.slane %v5424, 5
        %v6000 = vrot.slane %v5425, 5
        %6003 = vmatprep.subr.mxu0 0.0
        %6004 = vmatpush1.msra.mxu0 %v5967
        %6005 = vmatprep.subr.mxu0 0.0
        %6006 = vmatpush1.msra.mxu0 %v5968
        %6007 = vmatprep.subr.mxu0 0.0
        %6008 = vmatpush1.msra.mxu0 %v5969
        %6009 = vmatprep.subr.mxu0 0.0
        %6010 = vmatpush1.msra.mxu0 %v5970
        %6011 = vmatprep.subr.mxu0 0.0
        %6012 = vmatpush1.msra.mxu0 %v5971
        %6013 = vmatprep.subr.mxu0 0.0
        %6014 = vmatpush1.msra.mxu0 %v5972
        %6015 = vmatprep.subr.mxu0 0.0
        %6016 = vmatpush1.msra.mxu0 %v5973
        %6017 = vmatprep.subr.mxu0 0.0
        %6018 = vmatpush1.msra.mxu0 %v5974
        %6019 = vmatprep.subr.mxu0 0.0
        %6020 = vmatpush1.msra.mxu0 %v5975
        %6021 = vmatprep.subr.mxu0 0.0
        %6022 = vmatpush1.msra.mxu0 %v5976
        %6023 = vmatprep.subr.mxu0 0.0
        %6024 = vmatpush1.msra.mxu0 %v5977
        %6025 = vmatprep.subr.mxu0 0.0
        %6026 = vmatpush1.msra.mxu0 %v5978
        %6027 = vmatprep.subr.mxu0 0.0
        %6028 = vmatpush1.msra.mxu0 %v5979
        %6029 = vmatprep.subr.mxu0 0.0
        %6030 = vmatpush1.msra.mxu0 %v5980
        %6031 = vmatprep.subr.mxu0 0.0
        %6032 = vmatpush1.msra.mxu0 %v5981
        %6033 = vmatprep.subr.mxu0 0.0
        %6034 = vmatpush1.msra.mxu0 %v5982
        %6035 = vmatprep.subr.mxu0 0.0
        %6036 = vmatpush1.msra.mxu0 %v5983
        %6037 = vmatprep.subr.mxu0 0.0
        %6038 = vmatpush1.msra.mxu0 %v5984
        %6039 = vmatprep.subr.mxu0 0.0
        %6040 = vmatpush1.msra.mxu0 %v5985
        %6041 = vmatprep.subr.mxu0 0.0
        %6042 = vmatpush1.msra.mxu0 %v5986
        %6043 = vmatprep.subr.mxu0 0.0
        %6044 = vmatpush1.msra.mxu0 %v5987
        %6045 = vmatprep.subr.mxu0 0.0
        %6046 = vmatpush1.msra.mxu0 %v5988
        %6047 = vmatprep.subr.mxu0 0.0
        %6048 = vmatpush1.msra.mxu0 %v5989
        %6049 = vmatprep.subr.mxu0 0.0
        %6050 = vmatpush1.msra.mxu0 %v5990
        %6051 = vmatprep.subr.mxu0 0.0
        %6052 = vmatpush1.msra.mxu0 %v5991
        %6053 = vmatprep.subr.mxu0 0.0
        %6054 = vmatpush1.msra.mxu0 %v5992
        %6055 = vmatprep.subr.mxu0 0.0
        %6056 = vmatpush1.msra.mxu0 %v5993
        %6057 = vmatprep.subr.mxu0 0.0
        %6058 = vmatpush1.msra.mxu0 %v5994
        %6059 = vmatprep.subr.mxu0 0.0
        %6060 = vmatpush1.msra.mxu0 %v5995
        %6061 = vmatprep.subr.mxu0 0.0
        %6062 = vmatpush1.msra.mxu0 %v5996
        %6063 = vmatprep.subr.mxu0 0.0
        %6064 = vmatpush1.msra.mxu0 %v5997
        %6065 = vmatprep.subr.mxu0 0.0
        %6066 = vmatpush1.msra.mxu0 %v5998
        %6067 = vmatprep.mubr.f32.mxu0 %v6000
        %6068 = vmatmul.mubr.f32.gmra.mrb[0].mxu0 %v5999
        %v6069 = vpop.f32.mrb[0].mxu0
        %v6070 = vadd.f32 0.0, %v6069
        %v6071 = vpop.f32.mrb[0].mxu0
        %6072 = vdwg.mxu0
        %v6073 = vadd.f32 %v5965, %v6070
        %s6074 = scalar_lea.vmem %s11, 1536
        %v6075 = vld [vmem:[%s6074] sm:$0xff]
        %v6076 = vld [vmem:[%s6074 + $0x8] sm:$0xff]
        %v6077 = vld [vmem:[%s6074 + $0x10] sm:$0xff]
        %v6078 = vld [vmem:[%s6074 + $0x18] sm:$0xff]
        %v6079 = vld [vmem:[%s6074 + $0x20] sm:$0xff]
        %v6080 = vld [vmem:[%s6074 + $0x28] sm:$0xff]
        %v6081 = vld [vmem:[%s6074 + $0x30] sm:$0xff]
        %v6082 = vld [vmem:[%s6074 + $0x38] sm:$0xff]
        %v6083 = vld [vmem:[%s6074 + $0x40] sm:$0xff]
        %v6084 = vld [vmem:[%s6074 + $0x48] sm:$0xff]
        %v6085 = vld [vmem:[%s6074 + $0x50] sm:$0xff]
        %v6086 = vld [vmem:[%s6074 + $0x58] sm:$0xff]
        %v6087 = vld [vmem:[%s6074 + $0x60] sm:$0xff]
        %v6088 = vld [vmem:[%s6074 + $0x68] sm:$0xff]
        %v6089 = vld [vmem:[%s6074 + $0x70] sm:$0xff]
        %v6090 = vld [vmem:[%s6074 + $0x78] sm:$0xff]
        %v6091 = vld [vmem:[%s6074 + $0x80] sm:$0xff]
        %v6092 = vld [vmem:[%s6074 + $0x88] sm:$0xff]
        %v6093 = vld [vmem:[%s6074 + $0x90] sm:$0xff]
        %v6094 = vld [vmem:[%s6074 + $0x98] sm:$0xff]
        %v6095 = vld [vmem:[%s6074 + $0xa0] sm:$0xff]
        %v6096 = vld [vmem:[%s6074 + $0xa8] sm:$0xff]
        %v6097 = vld [vmem:[%s6074 + $0xb0] sm:$0xff]
        %v6098 = vld [vmem:[%s6074 + $0xb8] sm:$0xff]
        %v6099 = vld [vmem:[%s6074 + $0xc0] sm:$0xff]
        %v6100 = vld [vmem:[%s6074 + $0xc8] sm:$0xff]
        %v6101 = vld [vmem:[%s6074 + $0xd0] sm:$0xff]
        %v6102 = vld [vmem:[%s6074 + $0xd8] sm:$0xff]
        %v6103 = vld [vmem:[%s6074 + $0xe0] sm:$0xff]
        %v6104 = vld [vmem:[%s6074 + $0xe8] sm:$0xff]
        %v6105 = vld [vmem:[%s6074 + $0xf0] sm:$0xff]
        %v6106 = vld [vmem:[%s6074 + $0xf8] sm:$0xff]
        %v6107 = vrot.slane %v5424, 6
        %v6108 = vrot.slane %v5425, 6
        %6111 = vmatprep.subr.mxu0 0.0
        %6112 = vmatpush1.msra.mxu0 %v6075
        %6113 = vmatprep.subr.mxu0 0.0
        %6114 = vmatpush1.msra.mxu0 %v6076
        %6115 = vmatprep.subr.mxu0 0.0
        %6116 = vmatpush1.msra.mxu0 %v6077
        %6117 = vmatprep.subr.mxu0 0.0
        %6118 = vmatpush1.msra.mxu0 %v6078
        %6119 = vmatprep.subr.mxu0 0.0
        %6120 = vmatpush1.msra.mxu0 %v6079
        %6121 = vmatprep.subr.mxu0 0.0
        %6122 = vmatpush1.msra.mxu0 %v6080
        %6123 = vmatprep.subr.mxu0 0.0
        %6124 = vmatpush1.msra.mxu0 %v6081
        %6125 = vmatprep.subr.mxu0 0.0
        %6126 = vmatpush1.msra.mxu0 %v6082
        %6127 = vmatprep.subr.mxu0 0.0
        %6128 = vmatpush1.msra.mxu0 %v6083
        %6129 = vmatprep.subr.mxu0 0.0
        %6130 = vmatpush1.msra.mxu0 %v6084
        %6131 = vmatprep.subr.mxu0 0.0
        %6132 = vmatpush1.msra.mxu0 %v6085
        %6133 = vmatprep.subr.mxu0 0.0
        %6134 = vmatpush1.msra.mxu0 %v6086
        %6135 = vmatprep.subr.mxu0 0.0
        %6136 = vmatpush1.msra.mxu0 %v6087
        %6137 = vmatprep.subr.mxu0 0.0
        %6138 = vmatpush1.msra.mxu0 %v6088
        %6139 = vmatprep.subr.mxu0 0.0
        %6140 = vmatpush1.msra.mxu0 %v6089
        %6141 = vmatprep.subr.mxu0 0.0
        %6142 = vmatpush1.msra.mxu0 %v6090
        %6143 = vmatprep.subr.mxu0 0.0
        %6144 = vmatpush1.msra.mxu0 %v6091
        %6145 = vmatprep.subr.mxu0 0.0
        %6146 = vmatpush1.msra.mxu0 %v6092
        %6147 = vmatprep.subr.mxu0 0.0
        %6148 = vmatpush1.msra.mxu0 %v6093
        %6149 = vmatprep.subr.mxu0 0.0
        %6150 = vmatpush1.msra.mxu0 %v6094
        %6151 = vmatprep.subr.mxu0 0.0
        %6152 = vmatpush1.msra.mxu0 %v6095
        %6153 = vmatprep.subr.mxu0 0.0
        %6154 = vmatpush1.msra.mxu0 %v6096
        %6155 = vmatprep.subr.mxu0 0.0
        %6156 = vmatpush1.msra.mxu0 %v6097
        %6157 = vmatprep.subr.mxu0 0.0
        %6158 = vmatpush1.msra.mxu0 %v6098
        %6159 = vmatprep.subr.mxu0 0.0
        %6160 = vmatpush1.msra.mxu0 %v6099
        %6161 = vmatprep.subr.mxu0 0.0
        %6162 = vmatpush1.msra.mxu0 %v6100
        %6163 = vmatprep.subr.mxu0 0.0
        %6164 = vmatpush1.msra.mxu0 %v6101
        %6165 = vmatprep.subr.mxu0 0.0
        %6166 = vmatpush1.msra.mxu0 %v6102
        %6167 = vmatprep.subr.mxu0 0.0
        %6168 = vmatpush1.msra.mxu0 %v6103
        %6169 = vmatprep.subr.mxu0 0.0
        %6170 = vmatpush1.msra.mxu0 %v6104
        %6171 = vmatprep.subr.mxu0 0.0
        %6172 = vmatpush1.msra.mxu0 %v6105
        %6173 = vmatprep.subr.mxu0 0.0
        %6174 = vmatpush1.msra.mxu0 %v6106
        %6175 = vmatprep.mubr.f32.mxu0 %v6108
        %6176 = vmatmul.mubr.f32.gmra.mrb[0].mxu0 %v6107
        %v6177 = vpop.f32.mrb[0].mxu0
        %v6178 = vadd.f32 0.0, %v6177
        %v6179 = vpop.f32.mrb[0].mxu0
        %6180 = vdwg.mxu0
        %v6181 = vadd.f32 %v6073, %v6178
        %s6182 = scalar_lea.vmem %s11, 1792
        %v6183 = vld [vmem:[%s6182] sm:$0xff]
        %v6184 = vld [vmem:[%s6182 + $0x8] sm:$0xff]
        %v6185 = vld [vmem:[%s6182 + $0x10] sm:$0xff]
        %v6186 = vld [vmem:[%s6182 + $0x18] sm:$0xff]
        %v6187 = vld [vmem:[%s6182 + $0x20] sm:$0xff]
        %v6188 = vld [vmem:[%s6182 + $0x28] sm:$0xff]
        %v6189 = vld [vmem:[%s6182 + $0x30] sm:$0xff]
        %v6190 = vld [vmem:[%s6182 + $0x38] sm:$0xff]
        %v6191 = vld [vmem:[%s6182 + $0x40] sm:$0xff]
        %v6192 = vld [vmem:[%s6182 + $0x48] sm:$0xff]
        %v6193 = vld [vmem:[%s6182 + $0x50] sm:$0xff]
        %v6194 = vld [vmem:[%s6182 + $0x58] sm:$0xff]
        %v6195 = vld [vmem:[%s6182 + $0x60] sm:$0xff]
        %v6196 = vld [vmem:[%s6182 + $0x68] sm:$0xff]
        %v6197 = vld [vmem:[%s6182 + $0x70] sm:$0xff]
        %v6198 = vld [vmem:[%s6182 + $0x78] sm:$0xff]
        %v6199 = vld [vmem:[%s6182 + $0x80] sm:$0xff]
        %v6200 = vld [vmem:[%s6182 + $0x88] sm:$0xff]
        %v6201 = vld [vmem:[%s6182 + $0x90] sm:$0xff]
        %v6202 = vld [vmem:[%s6182 + $0x98] sm:$0xff]
        %v6203 = vld [vmem:[%s6182 + $0xa0] sm:$0xff]
        %v6204 = vld [vmem:[%s6182 + $0xa8] sm:$0xff]
        %v6205 = vld [vmem:[%s6182 + $0xb0] sm:$0xff]
        %v6206 = vld [vmem:[%s6182 + $0xb8] sm:$0xff]
        %v6207 = vld [vmem:[%s6182 + $0xc0] sm:$0xff]
        %v6208 = vld [vmem:[%s6182 + $0xc8] sm:$0xff]
        %v6209 = vld [vmem:[%s6182 + $0xd0] sm:$0xff]
        %v6210 = vld [vmem:[%s6182 + $0xd8] sm:$0xff]
        %v6211 = vld [vmem:[%s6182 + $0xe0] sm:$0xff]
        %v6212 = vld [vmem:[%s6182 + $0xe8] sm:$0xff]
        %v6213 = vld [vmem:[%s6182 + $0xf0] sm:$0xff]
        %v6214 = vld [vmem:[%s6182 + $0xf8] sm:$0xff]
        %v6215 = vrot.slane %v5424, 7
        %v6216 = vrot.slane %v5425, 7
        %6219 = vmatprep.subr.mxu0 0.0
        %6220 = vmatpush1.msra.mxu0 %v6183
        %6221 = vmatprep.subr.mxu0 0.0
        %6222 = vmatpush1.msra.mxu0 %v6184
        %6223 = vmatprep.subr.mxu0 0.0
        %6224 = vmatpush1.msra.mxu0 %v6185
        %6225 = vmatprep.subr.mxu0 0.0
        %6226 = vmatpush1.msra.mxu0 %v6186
        %6227 = vmatprep.subr.mxu0 0.0
        %6228 = vmatpush1.msra.mxu0 %v6187
        %6229 = vmatprep.subr.mxu0 0.0
        %6230 = vmatpush1.msra.mxu0 %v6188
        %6231 = vmatprep.subr.mxu0 0.0
        %6232 = vmatpush1.msra.mxu0 %v6189
        %6233 = vmatprep.subr.mxu0 0.0
        %6234 = vmatpush1.msra.mxu0 %v6190
        %6235 = vmatprep.subr.mxu0 0.0
        %6236 = vmatpush1.msra.mxu0 %v6191
        %6237 = vmatprep.subr.mxu0 0.0
        %6238 = vmatpush1.msra.mxu0 %v6192
        %6239 = vmatprep.subr.mxu0 0.0
        %6240 = vmatpush1.msra.mxu0 %v6193
        %6241 = vmatprep.subr.mxu0 0.0
        %6242 = vmatpush1.msra.mxu0 %v6194
        %6243 = vmatprep.subr.mxu0 0.0
        %6244 = vmatpush1.msra.mxu0 %v6195
        %6245 = vmatprep.subr.mxu0 0.0
        %6246 = vmatpush1.msra.mxu0 %v6196
        %6247 = vmatprep.subr.mxu0 0.0
        %6248 = vmatpush1.msra.mxu0 %v6197
        %6249 = vmatprep.subr.mxu0 0.0
        %6250 = vmatpush1.msra.mxu0 %v6198
        %6251 = vmatprep.subr.mxu0 0.0
        %6252 = vmatpush1.msra.mxu0 %v6199
        %6253 = vmatprep.subr.mxu0 0.0
        %6254 = vmatpush1.msra.mxu0 %v6200
        %6255 = vmatprep.subr.mxu0 0.0
        %6256 = vmatpush1.msra.mxu0 %v6201
        %6257 = vmatprep.subr.mxu0 0.0
        %6258 = vmatpush1.msra.mxu0 %v6202
        %6259 = vmatprep.subr.mxu0 0.0
        %6260 = vmatpush1.msra.mxu0 %v6203
        %6261 = vmatprep.subr.mxu0 0.0
        %6262 = vmatpush1.msra.mxu0 %v6204
        %6263 = vmatprep.subr.mxu0 0.0
        %6264 = vmatpush1.msra.mxu0 %v6205
        %6265 = vmatprep.subr.mxu0 0.0
        %6266 = vmatpush1.msra.mxu0 %v6206
        %6267 = vmatprep.subr.mxu0 0.0
        %6268 = vmatpush1.msra.mxu0 %v6207
        %6269 = vmatprep.subr.mxu0 0.0
        %6270 = vmatpush1.msra.mxu0 %v6208
        %6271 = vmatprep.subr.mxu0 0.0
        %6272 = vmatpush1.msra.mxu0 %v6209
        %6273 = vmatprep.subr.mxu0 0.0
        %6274 = vmatpush1.msra.mxu0 %v6210
        %6275 = vmatprep.subr.mxu0 0.0
        %6276 = vmatpush1.msra.mxu0 %v6211
        %6277 = vmatprep.subr.mxu0 0.0
        %6278 = vmatpush1.msra.mxu0 %v6212
        %6279 = vmatprep.subr.mxu0 0.0
        %6280 = vmatpush1.msra.mxu0 %v6213
        %6281 = vmatprep.subr.mxu0 0.0
        %6282 = vmatpush1.msra.mxu0 %v6214
        %6283 = vmatprep.mubr.f32.mxu0 %v6216
        %6284 = vmatmul.mubr.f32.gmra.mrb[0].mxu0 %v6215
        %v6285 = vpop.f32.mrb[0].mxu0
        %v6286 = vadd.f32 0.0, %v6285
        %v6287 = vpop.f32.mrb[0].mxu0
        %6288 = vdwg.mxu0
        %v6289 = vadd.f32 %v6181, %v6286
        %s6290 = scalar_lea.vmem %s11, 2048
        %v6291 = vld [vmem:[%s6290] sm:$0xff]
        %v6292 = vld [vmem:[%s6290 + $0x8] sm:$0xff]
        %v6293 = vld [vmem:[%s6290 + $0x10] sm:$0xff]
        %v6294 = vld [vmem:[%s6290 + $0x18] sm:$0xff]
        %v6295 = vld [vmem:[%s6290 + $0x20] sm:$0xff]
        %v6296 = vld [vmem:[%s6290 + $0x28] sm:$0xff]
        %v6297 = vld [vmem:[%s6290 + $0x30] sm:$0xff]
        %v6298 = vld [vmem:[%s6290 + $0x38] sm:$0xff]
        %v6299 = vld [vmem:[%s6290 + $0x40] sm:$0xff]
        %v6300 = vld [vmem:[%s6290 + $0x48] sm:$0xff]
        %v6301 = vld [vmem:[%s6290 + $0x50] sm:$0xff]
        %v6302 = vld [vmem:[%s6290 + $0x58] sm:$0xff]
        %v6303 = vld [vmem:[%s6290 + $0x60] sm:$0xff]
        %v6304 = vld [vmem:[%s6290 + $0x68] sm:$0xff]
        %v6305 = vld [vmem:[%s6290 + $0x70] sm:$0xff]
        %v6306 = vld [vmem:[%s6290 + $0x78] sm:$0xff]
        %v6307 = vld [vmem:[%s6290 + $0x80] sm:$0xff]
        %v6308 = vld [vmem:[%s6290 + $0x88] sm:$0xff]
        %v6309 = vld [vmem:[%s6290 + $0x90] sm:$0xff]
        %v6310 = vld [vmem:[%s6290 + $0x98] sm:$0xff]
        %v6311 = vld [vmem:[%s6290 + $0xa0] sm:$0xff]
        %v6312 = vld [vmem:[%s6290 + $0xa8] sm:$0xff]
        %v6313 = vld [vmem:[%s6290 + $0xb0] sm:$0xff]
        %v6314 = vld [vmem:[%s6290 + $0xb8] sm:$0xff]
        %v6315 = vld [vmem:[%s6290 + $0xc0] sm:$0xff]
        %v6316 = vld [vmem:[%s6290 + $0xc8] sm:$0xff]
        %v6317 = vld [vmem:[%s6290 + $0xd0] sm:$0xff]
        %v6318 = vld [vmem:[%s6290 + $0xd8] sm:$0xff]
        %v6319 = vld [vmem:[%s6290 + $0xe0] sm:$0xff]
        %v6320 = vld [vmem:[%s6290 + $0xe8] sm:$0xff]
        %v6321 = vld [vmem:[%s6290 + $0xf0] sm:$0xff]
        %v6322 = vld [vmem:[%s6290 + $0xf8] sm:$0xff]
        %6323 = vmatprep.subr.mxu0 0.0
        %6324 = vmatpush1.msra.mxu0 %v6291
        %6325 = vmatprep.subr.mxu0 0.0
        %6326 = vmatpush1.msra.mxu0 %v6292
        %6327 = vmatprep.subr.mxu0 0.0
        %6328 = vmatpush1.msra.mxu0 %v6293
        %6329 = vmatprep.subr.mxu0 0.0
        %6330 = vmatpush1.msra.mxu0 %v6294
        %6331 = vmatprep.subr.mxu0 0.0
        %6332 = vmatpush1.msra.mxu0 %v6295
        %6333 = vmatprep.subr.mxu0 0.0
        %6334 = vmatpush1.msra.mxu0 %v6296
        %6335 = vmatprep.subr.mxu0 0.0
        %6336 = vmatpush1.msra.mxu0 %v6297
        %6337 = vmatprep.subr.mxu0 0.0
        %6338 = vmatpush1.msra.mxu0 %v6298
        %6339 = vmatprep.subr.mxu0 0.0
        %6340 = vmatpush1.msra.mxu0 %v6299
        %6341 = vmatprep.subr.mxu0 0.0
        %6342 = vmatpush1.msra.mxu0 %v6300
        %6343 = vmatprep.subr.mxu0 0.0
        %6344 = vmatpush1.msra.mxu0 %v6301
        %6345 = vmatprep.subr.mxu0 0.0
        %6346 = vmatpush1.msra.mxu0 %v6302
        %6347 = vmatprep.subr.mxu0 0.0
        %6348 = vmatpush1.msra.mxu0 %v6303
        %6349 = vmatprep.subr.mxu0 0.0
        %6350 = vmatpush1.msra.mxu0 %v6304
        %6351 = vmatprep.subr.mxu0 0.0
        %6352 = vmatpush1.msra.mxu0 %v6305
        %6353 = vmatprep.subr.mxu0 0.0
        %6354 = vmatpush1.msra.mxu0 %v6306
        %6355 = vmatprep.subr.mxu0 0.0
        %6356 = vmatpush1.msra.mxu0 %v6307
        %6357 = vmatprep.subr.mxu0 0.0
        %6358 = vmatpush1.msra.mxu0 %v6308
        %6359 = vmatprep.subr.mxu0 0.0
        %6360 = vmatpush1.msra.mxu0 %v6309
        %6361 = vmatprep.subr.mxu0 0.0
        %6362 = vmatpush1.msra.mxu0 %v6310
        %6363 = vmatprep.subr.mxu0 0.0
        %6364 = vmatpush1.msra.mxu0 %v6311
        %6365 = vmatprep.subr.mxu0 0.0
        %6366 = vmatpush1.msra.mxu0 %v6312
        %6367 = vmatprep.subr.mxu0 0.0
        %6368 = vmatpush1.msra.mxu0 %v6313
        %6369 = vmatprep.subr.mxu0 0.0
        %6370 = vmatpush1.msra.mxu0 %v6314
        %6371 = vmatprep.subr.mxu0 0.0
        %6372 = vmatpush1.msra.mxu0 %v6315
        %6373 = vmatprep.subr.mxu0 0.0
        %6374 = vmatpush1.msra.mxu0 %v6316
        %6375 = vmatprep.subr.mxu0 0.0
        %6376 = vmatpush1.msra.mxu0 %v6317
        %6377 = vmatprep.subr.mxu0 0.0
        %6378 = vmatpush1.msra.mxu0 %v6318
        %6379 = vmatprep.subr.mxu0 0.0
        %6380 = vmatpush1.msra.mxu0 %v6319
        %6381 = vmatprep.subr.mxu0 0.0
        %6382 = vmatpush1.msra.mxu0 %v6320
        %6383 = vmatprep.subr.mxu0 0.0
        %6384 = vmatpush1.msra.mxu0 %v6321
        %6385 = vmatprep.subr.mxu0 0.0
        %6386 = vmatpush1.msra.mxu0 %v6322
        %6387 = vmatprep.mubr.f32.mxu0 %v5427
        %6388 = vmatmul.mubr.f32.gmra.mrb[0].mxu0 %v5426
        %v6389 = vpop.f32.mrb[0].mxu0
        %v6390 = vadd.f32 0.0, %v6389
        %v6391 = vpop.f32.mrb[0].mxu0
        %6392 = vdwg.mxu0
        %v6393 = vadd.f32 %v6289, %v6390
        %s6394 = scalar_lea.vmem %s11, 2304
        %v6395 = vld [vmem:[%s6394] sm:$0xff]
        %v6396 = vld [vmem:[%s6394 + $0x8] sm:$0xff]
        %v6397 = vld [vmem:[%s6394 + $0x10] sm:$0xff]
        %v6398 = vld [vmem:[%s6394 + $0x18] sm:$0xff]
        %v6399 = vld [vmem:[%s6394 + $0x20] sm:$0xff]
        %v6400 = vld [vmem:[%s6394 + $0x28] sm:$0xff]
        %v6401 = vld [vmem:[%s6394 + $0x30] sm:$0xff]
        %v6402 = vld [vmem:[%s6394 + $0x38] sm:$0xff]
        %v6403 = vld [vmem:[%s6394 + $0x40] sm:$0xff]
        %v6404 = vld [vmem:[%s6394 + $0x48] sm:$0xff]
        %v6405 = vld [vmem:[%s6394 + $0x50] sm:$0xff]
        %v6406 = vld [vmem:[%s6394 + $0x58] sm:$0xff]
        %v6407 = vld [vmem:[%s6394 + $0x60] sm:$0xff]
        %v6408 = vld [vmem:[%s6394 + $0x68] sm:$0xff]
        %v6409 = vld [vmem:[%s6394 + $0x70] sm:$0xff]
        %v6410 = vld [vmem:[%s6394 + $0x78] sm:$0xff]
        %v6411 = vld [vmem:[%s6394 + $0x80] sm:$0xff]
        %v6412 = vld [vmem:[%s6394 + $0x88] sm:$0xff]
        %v6413 = vld [vmem:[%s6394 + $0x90] sm:$0xff]
        %v6414 = vld [vmem:[%s6394 + $0x98] sm:$0xff]
        %v6415 = vld [vmem:[%s6394 + $0xa0] sm:$0xff]
        %v6416 = vld [vmem:[%s6394 + $0xa8] sm:$0xff]
        %v6417 = vld [vmem:[%s6394 + $0xb0] sm:$0xff]
        %v6418 = vld [vmem:[%s6394 + $0xb8] sm:$0xff]
        %v6419 = vld [vmem:[%s6394 + $0xc0] sm:$0xff]
        %v6420 = vld [vmem:[%s6394 + $0xc8] sm:$0xff]
        %v6421 = vld [vmem:[%s6394 + $0xd0] sm:$0xff]
        %v6422 = vld [vmem:[%s6394 + $0xd8] sm:$0xff]
        %v6423 = vld [vmem:[%s6394 + $0xe0] sm:$0xff]
        %v6424 = vld [vmem:[%s6394 + $0xe8] sm:$0xff]
        %v6425 = vld [vmem:[%s6394 + $0xf0] sm:$0xff]
        %v6426 = vld [vmem:[%s6394 + $0xf8] sm:$0xff]
        %v6429 = vrot.slane %v5426, 1
        %v6430 = vrot.slane %v5427, 1
        %6433 = vmatprep.subr.mxu0 0.0
        %6434 = vmatpush1.msra.mxu0 %v6395
        %6435 = vmatprep.subr.mxu0 0.0
        %6436 = vmatpush1.msra.mxu0 %v6396
        %6437 = vmatprep.subr.mxu0 0.0
        %6438 = vmatpush1.msra.mxu0 %v6397
        %6439 = vmatprep.subr.mxu0 0.0
        %6440 = vmatpush1.msra.mxu0 %v6398
        %6441 = vmatprep.subr.mxu0 0.0
        %6442 = vmatpush1.msra.mxu0 %v6399
        %6443 = vmatprep.subr.mxu0 0.0
        %6444 = vmatpush1.msra.mxu0 %v6400
        %6445 = vmatprep.subr.mxu0 0.0
        %6446 = vmatpush1.msra.mxu0 %v6401
        %6447 = vmatprep.subr.mxu0 0.0
        %6448 = vmatpush1.msra.mxu0 %v6402
        %6449 = vmatprep.subr.mxu0 0.0
        %6450 = vmatpush1.msra.mxu0 %v6403
        %6451 = vmatprep.subr.mxu0 0.0
        %6452 = vmatpush1.msra.mxu0 %v6404
        %6453 = vmatprep.subr.mxu0 0.0
        %6454 = vmatpush1.msra.mxu0 %v6405
        %6455 = vmatprep.subr.mxu0 0.0
        %6456 = vmatpush1.msra.mxu0 %v6406
        %6457 = vmatprep.subr.mxu0 0.0
        %6458 = vmatpush1.msra.mxu0 %v6407
        %6459 = vmatprep.subr.mxu0 0.0
        %6460 = vmatpush1.msra.mxu0 %v6408
        %6461 = vmatprep.subr.mxu0 0.0
        %6462 = vmatpush1.msra.mxu0 %v6409
        %6463 = vmatprep.subr.mxu0 0.0
        %6464 = vmatpush1.msra.mxu0 %v6410
        %6465 = vmatprep.subr.mxu0 0.0
        %6466 = vmatpush1.msra.mxu0 %v6411
        %6467 = vmatprep.subr.mxu0 0.0
        %6468 = vmatpush1.msra.mxu0 %v6412
        %6469 = vmatprep.subr.mxu0 0.0
        %6470 = vmatpush1.msra.mxu0 %v6413
        %6471 = vmatprep.subr.mxu0 0.0
        %6472 = vmatpush1.msra.mxu0 %v6414
        %6473 = vmatprep.subr.mxu0 0.0
        %6474 = vmatpush1.msra.mxu0 %v6415
        %6475 = vmatprep.subr.mxu0 0.0
        %6476 = vmatpush1.msra.mxu0 %v6416
        %6477 = vmatprep.subr.mxu0 0.0
        %6478 = vmatpush1.msra.mxu0 %v6417
        %6479 = vmatprep.subr.mxu0 0.0
        %6480 = vmatpush1.msra.mxu0 %v6418
        %6481 = vmatprep.subr.mxu0 0.0
        %6482 = vmatpush1.msra.mxu0 %v6419
        %6483 = vmatprep.subr.mxu0 0.0
        %6484 = vmatpush1.msra.mxu0 %v6420
        %6485 = vmatprep.subr.mxu0 0.0
        %6486 = vmatpush1.msra.mxu0 %v6421
        %6487 = vmatprep.subr.mxu0 0.0
        %6488 = vmatpush1.msra.mxu0 %v6422
        %6489 = vmatprep.subr.mxu0 0.0
        %6490 = vmatpush1.msra.mxu0 %v6423
        %6491 = vmatprep.subr.mxu0 0.0
        %6492 = vmatpush1.msra.mxu0 %v6424
        %6493 = vmatprep.subr.mxu0 0.0
        %6494 = vmatpush1.msra.mxu0 %v6425
        %6495 = vmatprep.subr.mxu0 0.0
        %6496 = vmatpush1.msra.mxu0 %v6426
        %6497 = vmatprep.mubr.f32.mxu0 %v6430
        %6498 = vmatmul.mubr.f32.gmra.mrb[0].mxu0 %v6429
        %v6499 = vpop.f32.mrb[0].mxu0
        %v6500 = vadd.f32 0.0, %v6499
        %v6501 = vpop.f32.mrb[0].mxu0
        %6502 = vdwg.mxu0
        %v6503 = vadd.f32 %v6393, %v6500
        %s6504 = scalar_lea.vmem %s11, 2560
        %v6505 = vld [vmem:[%s6504] sm:$0xff]
        %v6506 = vld [vmem:[%s6504 + $0x8] sm:$0xff]
        %v6507 = vld [vmem:[%s6504 + $0x10] sm:$0xff]
        %v6508 = vld [vmem:[%s6504 + $0x18] sm:$0xff]
        %v6509 = vld [vmem:[%s6504 + $0x20] sm:$0xff]
        %v6510 = vld [vmem:[%s6504 + $0x28] sm:$0xff]
        %v6511 = vld [vmem:[%s6504 + $0x30] sm:$0xff]
        %v6512 = vld [vmem:[%s6504 + $0x38] sm:$0xff]
        %v6513 = vld [vmem:[%s6504 + $0x40] sm:$0xff]
        %v6514 = vld [vmem:[%s6504 + $0x48] sm:$0xff]
        %v6515 = vld [vmem:[%s6504 + $0x50] sm:$0xff]
        %v6516 = vld [vmem:[%s6504 + $0x58] sm:$0xff]
        %v6517 = vld [vmem:[%s6504 + $0x60] sm:$0xff]
        %v6518 = vld [vmem:[%s6504 + $0x68] sm:$0xff]
        %v6519 = vld [vmem:[%s6504 + $0x70] sm:$0xff]
        %v6520 = vld [vmem:[%s6504 + $0x78] sm:$0xff]
        %v6521 = vld [vmem:[%s6504 + $0x80] sm:$0xff]
        %v6522 = vld [vmem:[%s6504 + $0x88] sm:$0xff]
        %v6523 = vld [vmem:[%s6504 + $0x90] sm:$0xff]
        %v6524 = vld [vmem:[%s6504 + $0x98] sm:$0xff]
        %v6525 = vld [vmem:[%s6504 + $0xa0] sm:$0xff]
        %v6526 = vld [vmem:[%s6504 + $0xa8] sm:$0xff]
        %v6527 = vld [vmem:[%s6504 + $0xb0] sm:$0xff]
        %v6528 = vld [vmem:[%s6504 + $0xb8] sm:$0xff]
        %v6529 = vld [vmem:[%s6504 + $0xc0] sm:$0xff]
        %v6530 = vld [vmem:[%s6504 + $0xc8] sm:$0xff]
        %v6531 = vld [vmem:[%s6504 + $0xd0] sm:$0xff]
        %v6532 = vld [vmem:[%s6504 + $0xd8] sm:$0xff]
        %v6533 = vld [vmem:[%s6504 + $0xe0] sm:$0xff]
        %v6534 = vld [vmem:[%s6504 + $0xe8] sm:$0xff]
        %v6535 = vld [vmem:[%s6504 + $0xf0] sm:$0xff]
        %v6536 = vld [vmem:[%s6504 + $0xf8] sm:$0xff]
        %v6537 = vrot.slane %v5426, 2
        %v6538 = vrot.slane %v5427, 2
        %6541 = vmatprep.subr.mxu0 0.0
        %6542 = vmatpush1.msra.mxu0 %v6505
        %6543 = vmatprep.subr.mxu0 0.0
        %6544 = vmatpush1.msra.mxu0 %v6506
        %6545 = vmatprep.subr.mxu0 0.0
        %6546 = vmatpush1.msra.mxu0 %v6507
        %6547 = vmatprep.subr.mxu0 0.0
        %6548 = vmatpush1.msra.mxu0 %v6508
        %6549 = vmatprep.subr.mxu0 0.0
        %6550 = vmatpush1.msra.mxu0 %v6509
        %6551 = vmatprep.subr.mxu0 0.0
        %6552 = vmatpush1.msra.mxu0 %v6510
        %6553 = vmatprep.subr.mxu0 0.0
        %6554 = vmatpush1.msra.mxu0 %v6511
        %6555 = vmatprep.subr.mxu0 0.0
        %6556 = vmatpush1.msra.mxu0 %v6512
        %6557 = vmatprep.subr.mxu0 0.0
        %6558 = vmatpush1.msra.mxu0 %v6513
        %6559 = vmatprep.subr.mxu0 0.0
        %6560 = vmatpush1.msra.mxu0 %v6514
        %6561 = vmatprep.subr.mxu0 0.0
        %6562 = vmatpush1.msra.mxu0 %v6515
        %6563 = vmatprep.subr.mxu0 0.0
        %6564 = vmatpush1.msra.mxu0 %v6516
        %6565 = vmatprep.subr.mxu0 0.0
        %6566 = vmatpush1.msra.mxu0 %v6517
        %6567 = vmatprep.subr.mxu0 0.0
        %6568 = vmatpush1.msra.mxu0 %v6518
        %6569 = vmatprep.subr.mxu0 0.0
        %6570 = vmatpush1.msra.mxu0 %v6519
        %6571 = vmatprep.subr.mxu0 0.0
        %6572 = vmatpush1.msra.mxu0 %v6520
        %6573 = vmatprep.subr.mxu0 0.0
        %6574 = vmatpush1.msra.mxu0 %v6521
        %6575 = vmatprep.subr.mxu0 0.0
        %6576 = vmatpush1.msra.mxu0 %v6522
        %6577 = vmatprep.subr.mxu0 0.0
        %6578 = vmatpush1.msra.mxu0 %v6523
        %6579 = vmatprep.subr.mxu0 0.0
        %6580 = vmatpush1.msra.mxu0 %v6524
        %6581 = vmatprep.subr.mxu0 0.0
        %6582 = vmatpush1.msra.mxu0 %v6525
        %6583 = vmatprep.subr.mxu0 0.0
        %6584 = vmatpush1.msra.mxu0 %v6526
        %6585 = vmatprep.subr.mxu0 0.0
        %6586 = vmatpush1.msra.mxu0 %v6527
        %6587 = vmatprep.subr.mxu0 0.0
        %6588 = vmatpush1.msra.mxu0 %v6528
        %6589 = vmatprep.subr.mxu0 0.0
        %6590 = vmatpush1.msra.mxu0 %v6529
        %6591 = vmatprep.subr.mxu0 0.0
        %6592 = vmatpush1.msra.mxu0 %v6530
        %6593 = vmatprep.subr.mxu0 0.0
        %6594 = vmatpush1.msra.mxu0 %v6531
        %6595 = vmatprep.subr.mxu0 0.0
        %6596 = vmatpush1.msra.mxu0 %v6532
        %6597 = vmatprep.subr.mxu0 0.0
        %6598 = vmatpush1.msra.mxu0 %v6533
        %6599 = vmatprep.subr.mxu0 0.0
        %6600 = vmatpush1.msra.mxu0 %v6534
        %6601 = vmatprep.subr.mxu0 0.0
        %6602 = vmatpush1.msra.mxu0 %v6535
        %6603 = vmatprep.subr.mxu0 0.0
        %6604 = vmatpush1.msra.mxu0 %v6536
        %6605 = vmatprep.mubr.f32.mxu0 %v6538
        %6606 = vmatmul.mubr.f32.gmra.mrb[0].mxu0 %v6537
        %v6607 = vpop.f32.mrb[0].mxu0
        %v6608 = vadd.f32 0.0, %v6607
        %v6609 = vpop.f32.mrb[0].mxu0
        %6610 = vdwg.mxu0
        %v6611 = vadd.f32 %v6503, %v6608
        %s6612 = scalar_lea.vmem %s11, 2816
        %v6613 = vld [vmem:[%s6612] sm:$0xff]
        %v6614 = vld [vmem:[%s6612 + $0x8] sm:$0xff]
        %v6615 = vld [vmem:[%s6612 + $0x10] sm:$0xff]
        %v6616 = vld [vmem:[%s6612 + $0x18] sm:$0xff]
        %v6617 = vld [vmem:[%s6612 + $0x20] sm:$0xff]
        %v6618 = vld [vmem:[%s6612 + $0x28] sm:$0xff]
        %v6619 = vld [vmem:[%s6612 + $0x30] sm:$0xff]
        %v6620 = vld [vmem:[%s6612 + $0x38] sm:$0xff]
        %v6621 = vld [vmem:[%s6612 + $0x40] sm:$0xff]
        %v6622 = vld [vmem:[%s6612 + $0x48] sm:$0xff]
        %v6623 = vld [vmem:[%s6612 + $0x50] sm:$0xff]
        %v6624 = vld [vmem:[%s6612 + $0x58] sm:$0xff]
        %v6625 = vld [vmem:[%s6612 + $0x60] sm:$0xff]
        %v6626 = vld [vmem:[%s6612 + $0x68] sm:$0xff]
        %v6627 = vld [vmem:[%s6612 + $0x70] sm:$0xff]
        %v6628 = vld [vmem:[%s6612 + $0x78] sm:$0xff]
        %v6629 = vld [vmem:[%s6612 + $0x80] sm:$0xff]
        %v6630 = vld [vmem:[%s6612 + $0x88] sm:$0xff]
        %v6631 = vld [vmem:[%s6612 + $0x90] sm:$0xff]
        %v6632 = vld [vmem:[%s6612 + $0x98] sm:$0xff]
        %v6633 = vld [vmem:[%s6612 + $0xa0] sm:$0xff]
        %v6634 = vld [vmem:[%s6612 + $0xa8] sm:$0xff]
        %v6635 = vld [vmem:[%s6612 + $0xb0] sm:$0xff]
        %v6636 = vld [vmem:[%s6612 + $0xb8] sm:$0xff]
        %v6637 = vld [vmem:[%s6612 + $0xc0] sm:$0xff]
        %v6638 = vld [vmem:[%s6612 + $0xc8] sm:$0xff]
        %v6639 = vld [vmem:[%s6612 + $0xd0] sm:$0xff]
        %v6640 = vld [vmem:[%s6612 + $0xd8] sm:$0xff]
        %v6641 = vld [vmem:[%s6612 + $0xe0] sm:$0xff]
        %v6642 = vld [vmem:[%s6612 + $0xe8] sm:$0xff]
        %v6643 = vld [vmem:[%s6612 + $0xf0] sm:$0xff]
        %v6644 = vld [vmem:[%s6612 + $0xf8] sm:$0xff]
        %v6645 = vrot.slane %v5426, 3
        %v6646 = vrot.slane %v5427, 3
        %6649 = vmatprep.subr.mxu0 0.0
        %6650 = vmatpush1.msra.mxu0 %v6613
        %6651 = vmatprep.subr.mxu0 0.0
        %6652 = vmatpush1.msra.mxu0 %v6614
        %6653 = vmatprep.subr.mxu0 0.0
        %6654 = vmatpush1.msra.mxu0 %v6615
        %6655 = vmatprep.subr.mxu0 0.0
        %6656 = vmatpush1.msra.mxu0 %v6616
        %6657 = vmatprep.subr.mxu0 0.0
        %6658 = vmatpush1.msra.mxu0 %v6617
        %6659 = vmatprep.subr.mxu0 0.0
        %6660 = vmatpush1.msra.mxu0 %v6618
        %6661 = vmatprep.subr.mxu0 0.0
        %6662 = vmatpush1.msra.mxu0 %v6619
        %6663 = vmatprep.subr.mxu0 0.0
        %6664 = vmatpush1.msra.mxu0 %v6620
        %6665 = vmatprep.subr.mxu0 0.0
        %6666 = vmatpush1.msra.mxu0 %v6621
        %6667 = vmatprep.subr.mxu0 0.0
        %6668 = vmatpush1.msra.mxu0 %v6622
        %6669 = vmatprep.subr.mxu0 0.0
        %6670 = vmatpush1.msra.mxu0 %v6623
        %6671 = vmatprep.subr.mxu0 0.0
        %6672 = vmatpush1.msra.mxu0 %v6624
        %6673 = vmatprep.subr.mxu0 0.0
        %6674 = vmatpush1.msra.mxu0 %v6625
        %6675 = vmatprep.subr.mxu0 0.0
        %6676 = vmatpush1.msra.mxu0 %v6626
        %6677 = vmatprep.subr.mxu0 0.0
        %6678 = vmatpush1.msra.mxu0 %v6627
        %6679 = vmatprep.subr.mxu0 0.0
        %6680 = vmatpush1.msra.mxu0 %v6628
        %6681 = vmatprep.subr.mxu0 0.0
        %6682 = vmatpush1.msra.mxu0 %v6629
        %6683 = vmatprep.subr.mxu0 0.0
        %6684 = vmatpush1.msra.mxu0 %v6630
        %6685 = vmatprep.subr.mxu0 0.0
        %6686 = vmatpush1.msra.mxu0 %v6631
        %6687 = vmatprep.subr.mxu0 0.0
        %6688 = vmatpush1.msra.mxu0 %v6632
        %6689 = vmatprep.subr.mxu0 0.0
        %6690 = vmatpush1.msra.mxu0 %v6633
        %6691 = vmatprep.subr.mxu0 0.0
        %6692 = vmatpush1.msra.mxu0 %v6634
        %6693 = vmatprep.subr.mxu0 0.0
        %6694 = vmatpush1.msra.mxu0 %v6635
        %6695 = vmatprep.subr.mxu0 0.0
        %6696 = vmatpush1.msra.mxu0 %v6636
        %6697 = vmatprep.subr.mxu0 0.0
        %6698 = vmatpush1.msra.mxu0 %v6637
        %6699 = vmatprep.subr.mxu0 0.0
        %6700 = vmatpush1.msra.mxu0 %v6638
        %6701 = vmatprep.subr.mxu0 0.0
        %6702 = vmatpush1.msra.mxu0 %v6639
        %6703 = vmatprep.subr.mxu0 0.0
        %6704 = vmatpush1.msra.mxu0 %v6640
        %6705 = vmatprep.subr.mxu0 0.0
        %6706 = vmatpush1.msra.mxu0 %v6641
        %6707 = vmatprep.subr.mxu0 0.0
        %6708 = vmatpush1.msra.mxu0 %v6642
        %6709 = vmatprep.subr.mxu0 0.0
        %6710 = vmatpush1.msra.mxu0 %v6643
        %6711 = vmatprep.subr.mxu0 0.0
        %6712 = vmatpush1.msra.mxu0 %v6644
        %6713 = vmatprep.mubr.f32.mxu0 %v6646
        %6714 = vmatmul.mubr.f32.gmra.mrb[0].mxu0 %v6645
        %v6715 = vpop.f32.mrb[0].mxu0
        %v6716 = vadd.f32 0.0, %v6715
        %v6717 = vpop.f32.mrb[0].mxu0
        %6718 = vdwg.mxu0
        %v6719 = vadd.f32 %v6611, %v6716
        %s6720 = scalar_lea.vmem %s11, 3072
        %v6721 = vld [vmem:[%s6720] sm:$0xff]
        %v6722 = vld [vmem:[%s6720 + $0x8] sm:$0xff]
        %v6723 = vld [vmem:[%s6720 + $0x10] sm:$0xff]
        %v6724 = vld [vmem:[%s6720 + $0x18] sm:$0xff]
        %v6725 = vld [vmem:[%s6720 + $0x20] sm:$0xff]
        %v6726 = vld [vmem:[%s6720 + $0x28] sm:$0xff]
        %v6727 = vld [vmem:[%s6720 + $0x30] sm:$0xff]
        %v6728 = vld [vmem:[%s6720 + $0x38] sm:$0xff]
        %v6729 = vld [vmem:[%s6720 + $0x40] sm:$0xff]
        %v6730 = vld [vmem:[%s6720 + $0x48] sm:$0xff]
        %v6731 = vld [vmem:[%s6720 + $0x50] sm:$0xff]
        %v6732 = vld [vmem:[%s6720 + $0x58] sm:$0xff]
        %v6733 = vld [vmem:[%s6720 + $0x60] sm:$0xff]
        %v6734 = vld [vmem:[%s6720 + $0x68] sm:$0xff]
        %v6735 = vld [vmem:[%s6720 + $0x70] sm:$0xff]
        %v6736 = vld [vmem:[%s6720 + $0x78] sm:$0xff]
        %v6737 = vld [vmem:[%s6720 + $0x80] sm:$0xff]
        %v6738 = vld [vmem:[%s6720 + $0x88] sm:$0xff]
        %v6739 = vld [vmem:[%s6720 + $0x90] sm:$0xff]
        %v6740 = vld [vmem:[%s6720 + $0x98] sm:$0xff]
        %v6741 = vld [vmem:[%s6720 + $0xa0] sm:$0xff]
        %v6742 = vld [vmem:[%s6720 + $0xa8] sm:$0xff]
        %v6743 = vld [vmem:[%s6720 + $0xb0] sm:$0xff]
        %v6744 = vld [vmem:[%s6720 + $0xb8] sm:$0xff]
        %v6745 = vld [vmem:[%s6720 + $0xc0] sm:$0xff]
        %v6746 = vld [vmem:[%s6720 + $0xc8] sm:$0xff]
        %v6747 = vld [vmem:[%s6720 + $0xd0] sm:$0xff]
        %v6748 = vld [vmem:[%s6720 + $0xd8] sm:$0xff]
        %v6749 = vld [vmem:[%s6720 + $0xe0] sm:$0xff]
        %v6750 = vld [vmem:[%s6720 + $0xe8] sm:$0xff]
        %v6751 = vld [vmem:[%s6720 + $0xf0] sm:$0xff]
        %v6752 = vld [vmem:[%s6720 + $0xf8] sm:$0xff]
        %v6753 = vrot.slane %v5426, 4
        %v6754 = vrot.slane %v5427, 4
        %6757 = vmatprep.subr.mxu0 0.0
        %6758 = vmatpush1.msra.mxu0 %v6721
        %6759 = vmatprep.subr.mxu0 0.0
        %6760 = vmatpush1.msra.mxu0 %v6722
        %6761 = vmatprep.subr.mxu0 0.0
        %6762 = vmatpush1.msra.mxu0 %v6723
        %6763 = vmatprep.subr.mxu0 0.0
        %6764 = vmatpush1.msra.mxu0 %v6724
        %6765 = vmatprep.subr.mxu0 0.0
        %6766 = vmatpush1.msra.mxu0 %v6725
        %6767 = vmatprep.subr.mxu0 0.0
        %6768 = vmatpush1.msra.mxu0 %v6726
        %6769 = vmatprep.subr.mxu0 0.0
        %6770 = vmatpush1.msra.mxu0 %v6727
        %6771 = vmatprep.subr.mxu0 0.0
        %6772 = vmatpush1.msra.mxu0 %v6728
        %6773 = vmatprep.subr.mxu0 0.0
        %6774 = vmatpush1.msra.mxu0 %v6729
        %6775 = vmatprep.subr.mxu0 0.0
        %6776 = vmatpush1.msra.mxu0 %v6730
        %6777 = vmatprep.subr.mxu0 0.0
        %6778 = vmatpush1.msra.mxu0 %v6731
        %6779 = vmatprep.subr.mxu0 0.0
        %6780 = vmatpush1.msra.mxu0 %v6732
        %6781 = vmatprep.subr.mxu0 0.0
        %6782 = vmatpush1.msra.mxu0 %v6733
        %6783 = vmatprep.subr.mxu0 0.0
        %6784 = vmatpush1.msra.mxu0 %v6734
        %6785 = vmatprep.subr.mxu0 0.0
        %6786 = vmatpush1.msra.mxu0 %v6735
        %6787 = vmatprep.subr.mxu0 0.0
        %6788 = vmatpush1.msra.mxu0 %v6736
        %6789 = vmatprep.subr.mxu0 0.0
        %6790 = vmatpush1.msra.mxu0 %v6737
        %6791 = vmatprep.subr.mxu0 0.0
        %6792 = vmatpush1.msra.mxu0 %v6738
        %6793 = vmatprep.subr.mxu0 0.0
        %6794 = vmatpush1.msra.mxu0 %v6739
        %6795 = vmatprep.subr.mxu0 0.0
        %6796 = vmatpush1.msra.mxu0 %v6740
        %6797 = vmatprep.subr.mxu0 0.0
        %6798 = vmatpush1.msra.mxu0 %v6741
        %6799 = vmatprep.subr.mxu0 0.0
        %6800 = vmatpush1.msra.mxu0 %v6742
        %6801 = vmatprep.subr.mxu0 0.0
        %6802 = vmatpush1.msra.mxu0 %v6743
        %6803 = vmatprep.subr.mxu0 0.0
        %6804 = vmatpush1.msra.mxu0 %v6744
        %6805 = vmatprep.subr.mxu0 0.0
        %6806 = vmatpush1.msra.mxu0 %v6745
        %6807 = vmatprep.subr.mxu0 0.0
        %6808 = vmatpush1.msra.mxu0 %v6746
        %6809 = vmatprep.subr.mxu0 0.0
        %6810 = vmatpush1.msra.mxu0 %v6747
        %6811 = vmatprep.subr.mxu0 0.0
        %6812 = vmatpush1.msra.mxu0 %v6748
        %6813 = vmatprep.subr.mxu0 0.0
        %6814 = vmatpush1.msra.mxu0 %v6749
        %6815 = vmatprep.subr.mxu0 0.0
        %6816 = vmatpush1.msra.mxu0 %v6750
        %6817 = vmatprep.subr.mxu0 0.0
        %6818 = vmatpush1.msra.mxu0 %v6751
        %6819 = vmatprep.subr.mxu0 0.0
        %6820 = vmatpush1.msra.mxu0 %v6752
        %6821 = vmatprep.mubr.f32.mxu0 %v6754
        %6822 = vmatmul.mubr.f32.gmra.mrb[0].mxu0 %v6753
        %v6823 = vpop.f32.mrb[0].mxu0
        %v6824 = vadd.f32 0.0, %v6823
        %v6825 = vpop.f32.mrb[0].mxu0
        %6826 = vdwg.mxu0
        %v6827 = vadd.f32 %v6719, %v6824
        %vm6828 = vcmp.gt.f32.partialorder %v6827, 0.0
        %v6829 = vmul.f32 %v6827, 0.01
        %v6830 = vsel %vm6828, %v6827, %v6829
        %v6831 = vld [vmem:[%s13] sm:$0xff]
        %v6832 = vld [vmem:[%s13 + $0x8] sm:$0xff]
        %v6833 = vld [vmem:[%s13 + $0x10] sm:$0xff]
        %v6834 = vld [vmem:[%s13 + $0x18] sm:$0xff]
        %v6835 = vld [vmem:[%s13 + $0x20] sm:$0xff]
        %v6836 = vld [vmem:[%s13 + $0x28] sm:$0xff]
        %v6837 = vld [vmem:[%s13 + $0x30] sm:$0xff]
        %v6838 = vld [vmem:[%s13 + $0x38] sm:$0xff]
        %v6839 = vld [vmem:[%s13 + $0x40] sm:$0xff]
        %v6840 = vld [vmem:[%s13 + $0x48] sm:$0xff]
        %v6841 = vld [vmem:[%s13 + $0x50] sm:$0xff]
        %v6842 = vld [vmem:[%s13 + $0x58] sm:$0xff]
        %v6843 = vld [vmem:[%s13 + $0x60] sm:$0xff]
        %v6844 = vld [vmem:[%s13 + $0x68] sm:$0xff]
        %v6845 = vld [vmem:[%s13 + $0x70] sm:$0xff]
        %v6846 = vld [vmem:[%s14] sm:$0x1]
        %vm6847 = vcmask 982016
        %v6849 = vsel %vm6847, %v6830, 0
        %6851 = vmatprep.subr.mxu0 0.0
        %6852 = vmatpush1.msra.mxu0 %v6831
        %6853 = vmatprep.subr.mxu0 0.0
        %6854 = vmatpush1.msra.mxu0 %v6832
        %6855 = vmatprep.subr.mxu0 0.0
        %6856 = vmatpush1.msra.mxu0 %v6833
        %6857 = vmatprep.subr.mxu0 0.0
        %6858 = vmatpush1.msra.mxu0 %v6834
        %6859 = vmatprep.subr.mxu0 0.0
        %6860 = vmatpush1.msra.mxu0 %v6835
        %6861 = vmatprep.subr.mxu0 0.0
        %6862 = vmatpush1.msra.mxu0 %v6836
        %6863 = vmatprep.subr.mxu0 0.0
        %6864 = vmatpush1.msra.mxu0 %v6837
        %6865 = vmatprep.subr.mxu0 0.0
        %6866 = vmatpush1.msra.mxu0 %v6838
        %6867 = vmatprep.subr.mxu0 0.0
        %6868 = vmatpush1.msra.mxu0 %v6839
        %6869 = vmatprep.subr.mxu0 0.0
        %6870 = vmatpush1.msra.mxu0 %v6840
        %6871 = vmatprep.subr.mxu0 0.0
        %6872 = vmatpush1.msra.mxu0 %v6841
        %6873 = vmatprep.subr.mxu0 0.0
        %6874 = vmatpush1.msra.mxu0 %v6842
        %6875 = vmatprep.subr.mxu0 0.0
        %6876 = vmatpush1.msra.mxu0 %v6843
        %6877 = vmatprep.subr.mxu0 0.0
        %6878 = vmatpush1.msra.mxu0 %v6844
        %6879 = vmatprep.subr.mxu0 0.0
        %6880 = vmatpush1.msra.mxu0 %v6845
        %6881 = vmatprep.subr.mxu0 0.0
        %6882 = vmatpush1.msra.mxu0 0.0
        %6883 = vmatprep.subr.mxu0 0.0
        %6884 = vmatpush1.msra.mxu0 0.0
        %6885 = vmatprep.subr.mxu0 0.0
        %6886 = vmatpush1.msra.mxu0 0.0
        %6887 = vmatprep.subr.mxu0 0.0
        %6888 = vmatpush1.msra.mxu0 0.0
        %6889 = vmatprep.subr.mxu0 0.0
        %6890 = vmatpush1.msra.mxu0 0.0
        %6891 = vmatprep.subr.mxu0 0.0
        %6892 = vmatpush1.msra.mxu0 0.0
        %6893 = vmatprep.subr.mxu0 0.0
        %6894 = vmatpush1.msra.mxu0 0.0
        %6895 = vmatprep.subr.mxu0 0.0
        %6896 = vmatpush1.msra.mxu0 0.0
        %6897 = vmatprep.subr.mxu0 0.0
        %6898 = vmatpush1.msra.mxu0 0.0
        %6899 = vmatprep.subr.mxu0 0.0
        %6900 = vmatpush1.msra.mxu0 0.0
        %6901 = vmatprep.subr.mxu0 0.0
        %6902 = vmatpush1.msra.mxu0 0.0
        %6903 = vmatprep.subr.mxu0 0.0
        %6904 = vmatpush1.msra.mxu0 0.0
        %6905 = vmatprep.subr.mxu0 0.0
        %6906 = vmatpush1.msra.mxu0 0.0
        %6907 = vmatprep.subr.mxu0 0.0
        %6908 = vmatpush1.msra.mxu0 0.0
        %6909 = vmatprep.subr.mxu0 0.0
        %6910 = vmatpush1.msra.mxu0 0.0
        %6911 = vmatprep.subr.mxu0 0.0
        %6912 = vmatpush1.msra.mxu0 0.0
        %6913 = vmatprep.subr.mxu0 0.0
        %6914 = vmatpush1.msra.mxu0 0.0
        %6915 = vmatprep.mubr.f32.mxu0 0.0
        %6916 = vmatmul.mubr.f32.gmra.mrb[0].mxu0 %v6849
        %v6917 = vpop.f32.mrb[0].mxu0
        %v6918 = vadd.f32 %v6846, %v6917
        %v6919 = vpop.f32.mrb[0].mxu0
        %6920 = vdwg.mxu0
        %vm6921 = vcmp.gt.f32.partialorder %v6918, 0.0
        %v6922 = vmul.f32 %v6918, 0.01
        %v6923 = vsel %vm6921, %v6918, %v6922
        %v6924 = vld [vmem:[%s15] sm:$0xff]
        %v6925 = vld [vmem:[%s15 + $0x8] sm:$0xff]
        %v6926 = vld [vmem:[%s15 + $0x10] sm:$0xff]
        %v6927 = vld [vmem:[%s15 + $0x18] sm:$0xff]
        %v6928 = vld [vmem:[%s15 + $0x20] sm:$0xff]
        %v6929 = vld [vmem:[%s15 + $0x28] sm:$0xff]
        %v6930 = vld [vmem:[%s15 + $0x30] sm:$0xff]
        %v6931 = vld [vmem:[%s15 + $0x38] sm:$0xff]
        %v6932 = vld [vmem:[%s15 + $0x40] sm:$0xff]
        %v6933 = vld [vmem:[%s15 + $0x48] sm:$0xff]
        %v6934 = vld [vmem:[%s15 + $0x50] sm:$0xf]
        %v6935 = vld [vmem:[%s16] sm:$0x1]
        %vm6936 = vcmask 687104
        %v6938 = vsel %vm6936, %v6923, 0
        %v6941 = vsel %vm1719, %v6934, 0
        %6943 = vmatprep.subr.mxu0 0.0
        %6944 = vmatpush1.msra.mxu0 %v6924
        %6945 = vmatprep.subr.mxu0 0.0
        %6946 = vmatpush1.msra.mxu0 %v6925
        %6947 = vmatprep.subr.mxu0 0.0
        %6948 = vmatpush1.msra.mxu0 %v6926
        %6949 = vmatprep.subr.mxu0 0.0
        %6950 = vmatpush1.msra.mxu0 %v6927
        %6951 = vmatprep.subr.mxu0 0.0
        %6952 = vmatpush1.msra.mxu0 %v6928
        %6953 = vmatprep.subr.mxu0 0.0
        %6954 = vmatpush1.msra.mxu0 %v6929
        %6955 = vmatprep.subr.mxu0 0.0
        %6956 = vmatpush1.msra.mxu0 %v6930
        %6957 = vmatprep.subr.mxu0 0.0
        %6958 = vmatpush1.msra.mxu0 %v6931
        %6959 = vmatprep.subr.mxu0 0.0
        %6960 = vmatpush1.msra.mxu0 %v6932
        %6961 = vmatprep.subr.mxu0 0.0
        %6962 = vmatpush1.msra.mxu0 %v6933
        %6963 = vmatprep.subr.mxu0 0.0
        %6964 = vmatpush1.msra.mxu0 %v6941
        %6965 = vmatprep.subr.mxu0 0.0
        %6966 = vmatpush1.msra.mxu0 0.0
        %6967 = vmatprep.subr.mxu0 0.0
        %6968 = vmatpush1.msra.mxu0 0.0
        %6969 = vmatprep.subr.mxu0 0.0
        %6970 = vmatpush1.msra.mxu0 0.0
        %6971 = vmatprep.subr.mxu0 0.0
        %6972 = vmatpush1.msra.mxu0 0.0
        %6973 = vmatprep.subr.mxu0 0.0
        %6974 = vmatpush1.msra.mxu0 0.0
        %6975 = vmatprep.subr.mxu0 0.0
        %6976 = vmatpush1.msra.mxu0 0.0
        %6977 = vmatprep.subr.mxu0 0.0
        %6978 = vmatpush1.msra.mxu0 0.0
        %6979 = vmatprep.subr.mxu0 0.0
        %6980 = vmatpush1.msra.mxu0 0.0
        %6981 = vmatprep.subr.mxu0 0.0
        %6982 = vmatpush1.msra.mxu0 0.0
        %6983 = vmatprep.subr.mxu0 0.0
        %6984 = vmatpush1.msra.mxu0 0.0
        %6985 = vmatprep.subr.mxu0 0.0
        %6986 = vmatpush1.msra.mxu0 0.0
        %6987 = vmatprep.subr.mxu0 0.0
        %6988 = vmatpush1.msra.mxu0 0.0
        %6989 = vmatprep.subr.mxu0 0.0
        %6990 = vmatpush1.msra.mxu0 0.0
        %6991 = vmatprep.subr.mxu0 0.0
        %6992 = vmatpush1.msra.mxu0 0.0
        %6993 = vmatprep.subr.mxu0 0.0
        %6994 = vmatpush1.msra.mxu0 0.0
        %6995 = vmatprep.subr.mxu0 0.0
        %6996 = vmatpush1.msra.mxu0 0.0
        %6997 = vmatprep.subr.mxu0 0.0
        %6998 = vmatpush1.msra.mxu0 0.0
        %6999 = vmatprep.subr.mxu0 0.0
        %7000 = vmatpush1.msra.mxu0 0.0
        %7001 = vmatprep.subr.mxu0 0.0
        %7002 = vmatpush1.msra.mxu0 0.0
        %7003 = vmatprep.subr.mxu0 0.0
        %7004 = vmatpush1.msra.mxu0 0.0
        %7005 = vmatprep.subr.mxu0 0.0
        %7006 = vmatpush1.msra.mxu0 0.0
        %7007 = vmatprep.mubr.f32.mxu0 0.0
        %7008 = vmatmul.mubr.f32.gmra.mrb[0].mxu0 %v6938
        %v7009 = vpop.f32.mrb[0].mxu0
        %v7010 = vadd.f32 %v6935, %v7009
        %v7011 = vpop.f32.mrb[0].mxu0
        %7012 = vdwg.mxu0
        %vm7013 = vcmask 65536
        %7014 = vst.msk [vmem:[%s540] sm:$0x1] %vm7013, %v7010
        %s7015 = sand.u32 %s401, 1
        %s7016 = scalar_lea.sflag [#allocation3], %s7015
        %s7017 = sand.u32 %s401, 1
        %s7018 = scalar_lea.vmem [#allocation2], %s7017
        // Predicated region
        $region89: #{net_forward.1} parent=87 // pred_check
          %p7019 = pneg %p411
        $region90: #{net_forward.1} parent=87 // pred_check_branch
          %7021 = sbr.rel (%p7019) target = $region92
        $region91: #{net_forward.1} parent=87 // pred_region
          %s7023 = ssub.s32 16, 16
          %7024 = vsyncadd %s7016, %s7023
          %s7025 = smul.addr %s31, 16
          %s7026 = scalar_lea.hbm %s17, %s7025
          %s7028 = sshll.u32 %s7018, 4
          %s7029 = int_to_ptr.vmem [resolvable:$true] %s7028
          %7031 = dma.vmem_to_hbm [thread:$0]  %s7029, 16, %s7026, %s7016
        $region92: #{net_forward.1} parent=87 // pred_fallthru
          _
      $region88: #{net_forward.1} parent=5 // pred_fallthru
        _
      %p7032 = scmp.le.s32.totalorder 2, %s26
      // Predicated region
      $region93: #{net_forward.1} parent=5 // pred_check
        %p7033 = pneg %p7032
      $region94: #{net_forward.1} parent=5 // pred_check_branch
        %7035 = sbr.rel (%p7033) target = $region96
      $region95: #{net_forward.1} parent=5 // pred_region
        %s7036 = ssub.s32 %s26, 2
        // Predicated region
        $region97: #{net_forward.1} parent=95 // pred_check
          %p7037 = pneg %p417
        $region98: #{net_forward.1} parent=95 // pred_check_branch
          %7039 = sbr.rel (%p7037) target = $region100
        $region99: #{net_forward.1} parent=95 // pred_region
          %s7040 = sand.u32 %s402, 1
          %s7041 = scalar_lea.sflag [#allocation3], %s7040
          %s7042 = sand.u32 %s402, 1
          %s7043 = scalar_lea.vmem [#allocation2], %s7042
          %7044 = dma.done %s7041, 16
        $region100: #{net_forward.1} parent=95 // pred_fallthru
          _
      $region96: #{net_forward.1} parent=5 // pred_fallthru
        _
    $region6: #{net_forward.1} parent=1 // loop_footer
      %s30 = sadd.s32 1, %s26
    $region7: #{net_forward.1} parent=1 // loop_footer_branch
      %25 = sbr.rel target = $region3
    $region8: #{net_forward.1} parent=1 // loop_exit
      _
    %7045 = vsyncpa [#allocation3], 1
    %s7046 = scalar_lea.sflag [#allocation3], 1
    %7047 = vsyncpa %s7046, 1

</llo_original>
